<compile_context>
chip_gen: v7x
topology: tpu7x:2x2x1
jax: 0.10.0
libtpu: 0.0.40
codegen_flags: <defaults>
</compile_context>

<pallas_src>
import math
import numpy as np
import jax
import jax.numpy as jnp
from jax import lax
from jax.experimental import pallas as pl
from jax.experimental.pallas import tpu as pltpu


# ----------------------------------------------------------------------------- glue

def get_shift_list(T, window):
    """Identical to STAttention_Adp.get_shift_list (numpy, static)."""
    idxs = np.arange(T)
    window_list = np.arange(-(window - 1) // 2, (window - 1) // 2 + 1, 1)
    shift_list = []
    for i in window_list:
        tmp = idxs + i
        tmp[tmp < 0] = tmp[tmp < 0] + window
        tmp[tmp > T - 1] = tmp[tmp > T - 1] - window
        shift_list.append(tmp)
    return np.array(shift_list, dtype=np.int32)            # (n_shifts, T)


def make_adp_mask(nodevec1, nodevec2, max_num_neigh=40):
    """Dense {0,1} adjacency; mask[i, j] = 1 <=> edge i -> j (src -> dst)."""
    N = nodevec1.shape[0]
    adp_A = jax.nn.softmax(jnp.maximum(nodevec1 @ nodevec2, 0.0), axis=1)
    keep = adp_A > (1.0 / N)
    if N > max_num_neigh:
        kth = -jnp.sort(-adp_A, axis=1)[:, max_num_neigh:max_num_neigh + 1]
        keep = jnp.logical_and(keep, adp_A > kth)
    return keep.astype(jnp.float32)


# ----------------------------------------------------------------------------- kernel

def st_attention_adp(x, ste, params, shift_list, K, d, ln_eps=1e-12):
    B, T, N, D = x.shape
    assert D == K * d
    TN = T * N
    D2 = 2 * D
    shift_np = np.asarray(shift_list, dtype=np.int32)
    n_shifts = int(shift_np.shape[0])
    scale = 1.0 / math.sqrt(d)

    # ---- wrapper-side layout plumbing: flat (T*N, feat) slabs per batch ----
    x_ste = jnp.concatenate([x, ste], axis=-1).reshape(B, TN, D2)
    x_ste = x_ste.astype(jnp.bfloat16)                      # bf16 MXU inputs
    x_res = x.reshape(B, TN, D)                             # residual stays f32

    # Per-shift combined (time-shift x adjacency) mask, precomputed once:
    #   big_mask[s, t*N + j, u*N + i] = adj(i -> j) if u == shift[s, t] else 0
    mask_ds = params["mask_src_dst"].T                      # (dst j, src i)
    tsel = np.zeros((n_shifts, T, T), np.float32)
    for s in range(n_shifts):
        for t in range(T):
            tsel[s, t, shift_np[s, t]] = 1.0
    big_mask = jnp.einsum("stu,ji->stjui", jnp.asarray(tsel), mask_ds)
    big_mask = big_mask.reshape(n_shifts, TN, TN)

    wq = params["wq"].astype(jnp.bfloat16); bq = params["bq"].reshape(1, D)
    wk = params["wk"].astype(jnp.bfloat16); bk = params["bk"].reshape(1, D)
    wv = params["wv"].astype(jnp.bfloat16); bv = params["bv"].reshape(1, D)
    wo = params["wo"];                      bo = params["bo"].reshape(1, D)
    gamma = params["gamma"].reshape(1, D)
    beta = params["beta"].reshape(1, D)

    def kernel(xste_ref, xres_ref, mask_ref,
               wq_ref, bq_ref, wk_ref, bk_ref, wv_ref, bv_ref,
               wo_ref, bo_ref, g_ref, beta_ref, out_ref):
        xs = xste_ref[...]                                  # (TN, 2D) bf16

        # QKV projections: computed once per batch slab (hoisted out of shift loop).
        q = jnp.dot(xs, wq_ref[...], preferred_element_type=jnp.float32) + bq_ref[...]
        k = jnp.dot(xs, wk_ref[...], preferred_element_type=jnp.float32) + bk_ref[...]
        v = jnp.dot(xs, wv_ref[...], preferred_element_type=jnp.float32) + bv_ref[...]

        head_outs = []
        for h in range(K):
            sl = slice(h * d, (h + 1) * d)
            qh = q[:, sl] * scale                           # (TN, d)
            kh = k[:, sl]                                   # (TN, d)
            vh = v[:, sl]                                   # (TN, d)
            # Full (TN, TN) score matrix, shared by all shifts (one MXU matmul).
            # s_full[t*N+j, u*N+i] = q[t, j] . k[u, i]
            s_full = lax.dot_general(qh, kh, (((1,), (1,)), ((), ())),
                                     preferred_element_type=jnp.float32)
            acc_h = jnp.zeros((TN, d), jnp.float32)
            for s in range(n_shifts):                       # unrolled, all in VMEM
                m = mask_ref[s]                             # (TN, TN)
                sc = jnp.where(m > 0, s_full, jnp.float32(-1e30))
                rowmax = jnp.max(sc, axis=-1, keepdims=True)
                p = jnp.exp(sc - rowmax) * m
                den = jnp.sum(p, axis=-1, keepdims=True)
                inv = jnp.where(den > 0.0,
                                pl.reciprocal(jnp.maximum(den, 1e-30), approx=True),
                                0.0)
                p = p * inv                                 # edge-softmax over in-edges
                # P is zero outside block (t, shift[s,t]) so P @ V applies the
                # time-shifted values without gathering V.
                acc_h = acc_h + jnp.dot(p, vh, preferred_element_type=jnp.float32)
            head_outs.append(acc_h)

        res = jnp.concatenate(head_outs, axis=-1) * (1.0 / n_shifts)   # (TN, D)

        # TransformerSelfOutput: dense + residual(X) + LayerNorm (eps=1e-12)
        y = jnp.dot(res, wo_ref[...], preferred_element_type=jnp.float32) + bo_ref[...]
        y = y + xres_ref[...]
        mu = jnp.mean(y, axis=-1, keepdims=True)
        var = jnp.mean((y - mu) ** 2, axis=-1, keepdims=True)
        yn = (y - mu) * lax.rsqrt(var + ln_eps)
        out_ref[...] = (yn * g_ref[...] + beta_ref[...]).astype(out_ref.dtype)

    def full2d(shape):
        return pl.BlockSpec(shape, lambda b: (0, 0))

    def full3d(shape):
        return pl.BlockSpec(shape, lambda b: (0, 0, 0))

    grid_spec = pltpu.PrefetchScalarGridSpec(
        num_scalar_prefetch=0,
        grid=(B,),
        in_specs=[
            pl.BlockSpec((None, TN, D2), lambda b: (b, 0, 0)),   # x_ste slab (bf16)
            pl.BlockSpec((None, TN, D), lambda b: (b, 0, 0)),    # residual X slab
            full3d((n_shifts, TN, TN)),                          # per-shift masks
            full2d((D2, D)), full2d((1, D)),                     # Wq, bq
            full2d((D2, D)), full2d((1, D)),                     # Wk, bk
            full2d((D2, D)), full2d((1, D)),                     # Wv, bv
            full2d((D, D)),  full2d((1, D)),                     # Wo, bo
            full2d((1, D)),  full2d((1, D)),                     # ln gamma, beta
        ],
        out_specs=pl.BlockSpec((None, TN, D), lambda b: (b, 0, 0)),
    )

    out = pl.pallas_call(
        kernel,
        out_shape=jax.ShapeDtypeStruct((B, TN, D), jnp.float32),
        grid_spec=grid_spec,
        compiler_params=pltpu.CompilerParams(
            dimension_semantics=("parallel",)),
    )(x_ste, x_res, big_mask, wq, bq, wk, bk, wv, bv, wo, bo, gamma, beta)

    return out.reshape(B, T, N, D)


# ----------------------------------------------------------------------------- reference (pure JAX)

def reference(x, ste, params, shift_list, K, d, ln_eps=1e-12):
    B, T, N, D = x.shape
    scale = 1.0 / math.sqrt(d)
    x_ste = jnp.concatenate([x, ste], axis=-1)
    q = x_ste @ params["wq"] + params["bq"]
    k = x_ste @ params["wk"] + params["bk"]
    v = x_ste @ params["wv"] + params["bv"]
    mask_ds = params["mask_src_dst"].T
    qh = q.reshape(B, T, N, K, d)
    res = jnp.zeros((B, T, N, D), jnp.float32)
    for s in range(shift_list.shape[0]):
        kh = k[:, shift_list[s]].reshape(B, T, N, K, d)
        vh = v[:, shift_list[s]].reshape(B, T, N, K, d)
        sc = jnp.einsum("btjhd,btihd->bthji", qh * scale, kh)
        sc = jnp.where(mask_ds > 0, sc, -1e30)
        m = sc.max(-1, keepdims=True)
        p = jnp.exp(sc - m) * mask_ds
        den = p.sum(-1, keepdims=True)
        p = p * jnp.where(den > 0, 1.0 / jnp.maximum(den, 1e-30), 0.0)
        res = res + jnp.einsum("bthji,btihd->btjhd", p, vh).reshape(B, T, N, D)
    res = res / shift_list.shape[0]
    y = res @ params["wo"] + params["bo"] + x
    mu = y.mean(-1, keepdims=True)
    var = ((y - mu) ** 2).mean(-1, keepdims=True)
    return (y - mu) / jnp.sqrt(var + ln_eps) * params["gamma"] + params["beta"]


# ----------------------------------------------------------------------------- main

if __name__ == "__main__":
    B, T, N, K, d = 2, 8, 16, 2, 16
    D = K * d
    window = 5

    key = jax.random.PRNGKey(0)
    ks = jax.random.split(key, 8)
    x = jax.random.normal(ks[0], (B, T, N, D), jnp.float32)
    ste = jax.random.normal(ks[1], (B, T, N, D), jnp.float32)

    def lin_init(k, fan_in, fan_out):
        bound = 1.0 / math.sqrt(fan_in)
        kw, kb = jax.random.split(k)
        w = jax.random.uniform(kw, (fan_in, fan_out), jnp.float32, -bound, bound)
        b = jax.random.uniform(kb, (fan_out,), jnp.float32, -bound, bound)
        return w, b

    wq, bq = lin_init(ks[2], 2 * D, D)
    wk, bk = lin_init(ks[3], 2 * D, D)
    wv, bv = lin_init(ks[4], 2 * D, D)
    wo, bo = lin_init(ks[5], D, D)
    nodevec1 = jax.random.normal(ks[6], (N, 20), jnp.float32)
    nodevec2 = jax.random.normal(ks[7], (20, N), jnp.float32)

    params = dict(
        wq=wq, bq=bq, wk=wk, bk=bk, wv=wv, bv=bv, wo=wo, bo=bo,
        gamma=jnp.ones((D,), jnp.float32), beta=jnp.zeros((D,), jnp.float32),
        mask_src_dst=make_adp_mask(nodevec1, nodevec2, max_num_neigh=40),
    )
    shift_list = get_shift_list(T, window)

    out = st_attention_adp(x, ste, params, shift_list, K, d)
    out = jax.block_until_ready(out)

    ref = jax.block_until_ready(reference(x, ste, params, shift_list, K, d))
    assert out.shape == (B, T, N, D)
    assert np.allclose(np.asarray(out), np.asarray(ref), atol=5e-2, rtol=5e-2), \
        "kernel output does not match JAX reference"

    print("KERNEL_OK")
</pallas_src>

<mosaic_0001>
module attributes {stable_mosaic.version = 11 : i64} {
  func.func @kernel(%arg0: i32, %arg1: memref<1x128x64xbf16, #tpu.memory_space<vmem>>, %arg2: memref<1x128x32xf32, #tpu.memory_space<vmem>>, %arg3: memref<5x128x128xf32, #tpu.memory_space<vmem>>, %arg4: memref<64x32xbf16, #tpu.memory_space<vmem>>, %arg5: memref<1x32xf32, #tpu.memory_space<vmem>>, %arg6: memref<64x32xbf16, #tpu.memory_space<vmem>>, %arg7: memref<1x32xf32, #tpu.memory_space<vmem>>, %arg8: memref<64x32xbf16, #tpu.memory_space<vmem>>, %arg9: memref<1x32xf32, #tpu.memory_space<vmem>>, %arg10: memref<32x32xf32, #tpu.memory_space<vmem>>, %arg11: memref<1x32xf32, #tpu.memory_space<vmem>>, %arg12: memref<1x32xf32, #tpu.memory_space<vmem>>, %arg13: memref<1x32xf32, #tpu.memory_space<vmem>>, %arg14: memref<1x128x32xf32, #tpu.memory_space<vmem>>) attributes {dimension_semantics = [#tpu.dimension_semantics<parallel>], iteration_bounds = array<i64: 2>, scalar_prefetch = 0 : i64, scratch_operands = 0 : i64, tpu.core_type = #tpu.core_type<tc>, window_params = [{transform_indices = @transform_0, window_bounds = array<i64: 1, 128, 64>}, {transform_indices = @transform_1, window_bounds = array<i64: 1, 128, 32>}, {pipeline_mode = #tpu.pipeline_mode<synchronous>, transform_indices = @transform_2, window_bounds = array<i64: 5, 128, 128>}, {pipeline_mode = #tpu.pipeline_mode<synchronous>, transform_indices = @transform_3, window_bounds = array<i64: 64, 32>}, {pipeline_mode = #tpu.pipeline_mode<synchronous>, transform_indices = @transform_4, window_bounds = array<i64: 1, 32>}, {pipeline_mode = #tpu.pipeline_mode<synchronous>, transform_indices = @transform_5, window_bounds = array<i64: 64, 32>}, {pipeline_mode = #tpu.pipeline_mode<synchronous>, transform_indices = @transform_6, window_bounds = array<i64: 1, 32>}, {pipeline_mode = #tpu.pipeline_mode<synchronous>, transform_indices = @transform_7, window_bounds = array<i64: 64, 32>}, {pipeline_mode = #tpu.pipeline_mode<synchronous>, transform_indices = @transform_8, window_bounds = array<i64: 1, 32>}, {pipeline_mode = #tpu.pipeline_mode<synchronous>, transform_indices = @transform_9, window_bounds = array<i64: 32, 32>}, {pipeline_mode = #tpu.pipeline_mode<synchronous>, transform_indices = @transform_10, window_bounds = array<i64: 1, 32>}, {pipeline_mode = #tpu.pipeline_mode<synchronous>, transform_indices = @transform_11, window_bounds = array<i64: 1, 32>}, {pipeline_mode = #tpu.pipeline_mode<synchronous>, transform_indices = @transform_12, window_bounds = array<i64: 1, 32>}, {transform_indices = @transform_13, window_bounds = array<i64: 1, 128, 32>}]} {
    %c0 = arith.constant 0 : index
    %c0_0 = arith.constant 0 : index
    %c0_1 = arith.constant 0 : index
    %0 = vector.load %arg1[%c0, %c0_0, %c0_1] : memref<1x128x64xbf16, #tpu.memory_space<vmem>>, vector<1x128x64xbf16>
    %1 = vector.shape_cast %0 : vector<1x128x64xbf16> to vector<128x64xbf16>
    %c0_2 = arith.constant 0 : index
    %c0_3 = arith.constant 0 : index
    %2 = vector.load %arg4[%c0_2, %c0_3] : memref<64x32xbf16, #tpu.memory_space<vmem>>, vector<64x32xbf16>
    %cst = arith.constant dense<0.000000e+00> : vector<128x32xf32>
    %3 = tpu.matmul %1, %2, %cst {dimension_numbers = #tpu.dot_dimension_numbers<[1], [0], [0], [1], [0, 0, 1, 1], [], []>} : vector<128x64xbf16>, vector<64x32xbf16>, vector<128x32xf32> -> vector<128x32xf32>
    %c0_4 = arith.constant 0 : index
    %c0_5 = arith.constant 0 : index
    %4 = vector.load %arg5[%c0_4, %c0_5] : memref<1x32xf32, #tpu.memory_space<vmem>>, vector<1x32xf32>
    %5 = vector.broadcast %4 : vector<1x32xf32> to vector<128x32xf32>
    %6 = arith.addf %3, %5 : vector<128x32xf32>
    %c0_6 = arith.constant 0 : index
    %c0_7 = arith.constant 0 : index
    %7 = vector.load %arg6[%c0_6, %c0_7] : memref<64x32xbf16, #tpu.memory_space<vmem>>, vector<64x32xbf16>
    %cst_8 = arith.constant dense<0.000000e+00> : vector<128x32xf32>
    %8 = tpu.matmul %1, %7, %cst_8 {dimension_numbers = #tpu.dot_dimension_numbers<[1], [0], [0], [1], [0, 0, 1, 1], [], []>} : vector<128x64xbf16>, vector<64x32xbf16>, vector<128x32xf32> -> vector<128x32xf32>
    %c0_9 = arith.constant 0 : index
    %c0_10 = arith.constant 0 : index
    %9 = vector.load %arg7[%c0_9, %c0_10] : memref<1x32xf32, #tpu.memory_space<vmem>>, vector<1x32xf32>
    %10 = vector.broadcast %9 : vector<1x32xf32> to vector<128x32xf32>
    %11 = arith.addf %8, %10 : vector<128x32xf32>
    %c0_11 = arith.constant 0 : index
    %c0_12 = arith.constant 0 : index
    %12 = vector.load %arg8[%c0_11, %c0_12] : memref<64x32xbf16, #tpu.memory_space<vmem>>, vector<64x32xbf16>
    %cst_13 = arith.constant dense<0.000000e+00> : vector<128x32xf32>
    %13 = tpu.matmul %1, %12, %cst_13 {dimension_numbers = #tpu.dot_dimension_numbers<[1], [0], [0], [1], [0, 0, 1, 1], [], []>} : vector<128x64xbf16>, vector<64x32xbf16>, vector<128x32xf32> -> vector<128x32xf32>
    %c0_14 = arith.constant 0 : index
    %c0_15 = arith.constant 0 : index
    %14 = vector.load %arg9[%c0_14, %c0_15] : memref<1x32xf32, #tpu.memory_space<vmem>>, vector<1x32xf32>
    %15 = vector.broadcast %14 : vector<1x32xf32> to vector<128x32xf32>
    %16 = arith.addf %13, %15 : vector<128x32xf32>
    %17 = vector.extract_strided_slice %6 {offsets = [0, 0], sizes = [128, 16], strides = [1, 1]} : vector<128x32xf32> to vector<128x16xf32>
    %cst_16 = arith.constant 2.500000e-01 : f32
    %18 = vector.broadcast %cst_16 : f32 to vector<128x16xf32>
    %19 = arith.mulf %17, %18 : vector<128x16xf32>
    %20 = vector.extract_strided_slice %11 {offsets = [0, 0], sizes = [128, 16], strides = [1, 1]} : vector<128x32xf32> to vector<128x16xf32>
    %21 = vector.extract_strided_slice %16 {offsets = [0, 0], sizes = [128, 16], strides = [1, 1]} : vector<128x32xf32> to vector<128x16xf32>
    %cst_17 = arith.constant dense<0.000000e+00> : vector<128x128xf32>
    %22 = tpu.matmul %19, %20, %cst_17 {dimension_numbers = #tpu.dot_dimension_numbers<[1], [1], [0], [0], [0, 0, 1, 0], [], []>} : vector<128x16xf32>, vector<128x16xf32>, vector<128x128xf32> -> vector<128x128xf32>
    %cst_18 = arith.constant 0.000000e+00 : f32
    %23 = vector.broadcast %cst_18 : f32 to vector<128x16xf32>
    %c0_19 = arith.constant 0 : index
    %c0_20 = arith.constant 0 : index
    %c0_21 = arith.constant 0 : index
    %24 = vector.load %arg3[%c0_19, %c0_20, %c0_21] : memref<5x128x128xf32, #tpu.memory_space<vmem>>, vector<1x128x128xf32>
    %25 = vector.shape_cast %24 : vector<1x128x128xf32> to vector<128x128xf32>
    %cst_22 = arith.constant 0.000000e+00 : f32
    %26 = vector.broadcast %cst_22 : f32 to vector<128x128xf32>
    %27 = arith.cmpf ogt, %25, %26 : vector<128x128xf32>
    %cst_23 = arith.constant -1.000000e+30 : f32
    %28 = vector.broadcast %cst_23 : f32 to vector<128x128xf32>
    %29 = arith.select %27, %22, %28 : vector<128x128xi1>, vector<128x128xf32>
    %cst_24 = arith.constant dense<0xFF800000> : vector<128xf32>
    %30 = vector.multi_reduction <maximumf>, %29, %cst_24 [1] : vector<128x128xf32> to vector<128xf32>
    %31 = vector.shape_cast %30 : vector<128xf32> to vector<128x1xf32>
    %32 = vector.broadcast %31 : vector<128x1xf32> to vector<128x128xf32>
    %33 = arith.subf %29, %32 : vector<128x128xf32>
    %34 = math.exp %33 : vector<128x128xf32>
    %35 = arith.mulf %34, %25 : vector<128x128xf32>
    %cst_25 = arith.constant dense<0.000000e+00> : vector<128xf32>
    %36 = vector.multi_reduction <add>, %35, %cst_25 [1] : vector<128x128xf32> to vector<128xf32>
    %37 = vector.shape_cast %36 : vector<128xf32> to vector<128x1xf32>
    %cst_26 = arith.constant 0.000000e+00 : f32
    %38 = vector.broadcast %cst_26 : f32 to vector<128x1xf32>
    %39 = arith.cmpf ogt, %37, %38 : vector<128x1xf32>
    %cst_27 = arith.constant 1.000000e-30 : f32
    %40 = vector.broadcast %cst_27 : f32 to vector<128x1xf32>
    %41 = arith.maximumf %37, %40 : vector<128x1xf32>
    %42 = tpu.reciprocal %41 {approx = true} : vector<128x1xf32> -> vector<128x1xf32>
    %cst_28 = arith.constant 0.000000e+00 : f32
    %43 = vector.broadcast %cst_28 : f32 to vector<128x1xf32>
    %44 = arith.select %39, %42, %43 : vector<128x1xi1>, vector<128x1xf32>
    %45 = vector.broadcast %44 : vector<128x1xf32> to vector<128x128xf32>
    %46 = arith.mulf %35, %45 : vector<128x128xf32>
    %cst_29 = arith.constant dense<0.000000e+00> : vector<128x16xf32>
    %47 = tpu.matmul %46, %21, %cst_29 {dimension_numbers = #tpu.dot_dimension_numbers<[1], [0], [0], [1], [0, 0, 1, 1], [], []>} : vector<128x128xf32>, vector<128x16xf32>, vector<128x16xf32> -> vector<128x16xf32>
    %48 = arith.addf %23, %47 : vector<128x16xf32>
    %c1 = arith.constant 1 : index
    %c0_30 = arith.constant 0 : index
    %c0_31 = arith.constant 0 : index
    %49 = vector.load %arg3[%c1, %c0_30, %c0_31] : memref<5x128x128xf32, #tpu.memory_space<vmem>>, vector<1x128x128xf32>
    %50 = vector.shape_cast %49 : vector<1x128x128xf32> to vector<128x128xf32>
    %cst_32 = arith.constant 0.000000e+00 : f32
    %51 = vector.broadcast %cst_32 : f32 to vector<128x128xf32>
    %52 = arith.cmpf ogt, %50, %51 : vector<128x128xf32>
    %cst_33 = arith.constant -1.000000e+30 : f32
    %53 = vector.broadcast %cst_33 : f32 to vector<128x128xf32>
    %54 = arith.select %52, %22, %53 : vector<128x128xi1>, vector<128x128xf32>
    %cst_34 = arith.constant dense<0xFF800000> : vector<128xf32>
    %55 = vector.multi_reduction <maximumf>, %54, %cst_34 [1] : vector<128x128xf32> to vector<128xf32>
    %56 = vector.shape_cast %55 : vector<128xf32> to vector<128x1xf32>
    %57 = vector.broadcast %56 : vector<128x1xf32> to vector<128x128xf32>
    %58 = arith.subf %54, %57 : vector<128x128xf32>
    %59 = math.exp %58 : vector<128x128xf32>
    %60 = arith.mulf %59, %50 : vector<128x128xf32>
    %cst_35 = arith.constant dense<0.000000e+00> : vector<128xf32>
    %61 = vector.multi_reduction <add>, %60, %cst_35 [1] : vector<128x128xf32> to vector<128xf32>
    %62 = vector.shape_cast %61 : vector<128xf32> to vector<128x1xf32>
    %cst_36 = arith.constant 0.000000e+00 : f32
    %63 = vector.broadcast %cst_36 : f32 to vector<128x1xf32>
    %64 = arith.cmpf ogt, %62, %63 : vector<128x1xf32>
    %cst_37 = arith.constant 1.000000e-30 : f32
    %65 = vector.broadcast %cst_37 : f32 to vector<128x1xf32>
    %66 = arith.maximumf %62, %65 : vector<128x1xf32>
    %67 = tpu.reciprocal %66 {approx = true} : vector<128x1xf32> -> vector<128x1xf32>
    %cst_38 = arith.constant 0.000000e+00 : f32
    %68 = vector.broadcast %cst_38 : f32 to vector<128x1xf32>
    %69 = arith.select %64, %67, %68 : vector<128x1xi1>, vector<128x1xf32>
    %70 = vector.broadcast %69 : vector<128x1xf32> to vector<128x128xf32>
    %71 = arith.mulf %60, %70 : vector<128x128xf32>
    %cst_39 = arith.constant dense<0.000000e+00> : vector<128x16xf32>
    %72 = tpu.matmul %71, %21, %cst_39 {dimension_numbers = #tpu.dot_dimension_numbers<[1], [0], [0], [1], [0, 0, 1, 1], [], []>} : vector<128x128xf32>, vector<128x16xf32>, vector<128x16xf32> -> vector<128x16xf32>
    %73 = arith.addf %48, %72 : vector<128x16xf32>
    %c2 = arith.constant 2 : index
    %c0_40 = arith.constant 0 : index
    %c0_41 = arith.constant 0 : index
    %74 = vector.load %arg3[%c2, %c0_40, %c0_41] : memref<5x128x128xf32, #tpu.memory_space<vmem>>, vector<1x128x128xf32>
    %75 = vector.shape_cast %74 : vector<1x128x128xf32> to vector<128x128xf32>
    %cst_42 = arith.constant 0.000000e+00 : f32
    %76 = vector.broadcast %cst_42 : f32 to vector<128x128xf32>
    %77 = arith.cmpf ogt, %75, %76 : vector<128x128xf32>
    %cst_43 = arith.constant -1.000000e+30 : f32
    %78 = vector.broadcast %cst_43 : f32 to vector<128x128xf32>
    %79 = arith.select %77, %22, %78 : vector<128x128xi1>, vector<128x128xf32>
    %cst_44 = arith.constant dense<0xFF800000> : vector<128xf32>
    %80 = vector.multi_reduction <maximumf>, %79, %cst_44 [1] : vector<128x128xf32> to vector<128xf32>
    %81 = vector.shape_cast %80 : vector<128xf32> to vector<128x1xf32>
    %82 = vector.broadcast %81 : vector<128x1xf32> to vector<128x128xf32>
    %83 = arith.subf %79, %82 : vector<128x128xf32>
    %84 = math.exp %83 : vector<128x128xf32>
    %85 = arith.mulf %84, %75 : vector<128x128xf32>
    %cst_45 = arith.constant dense<0.000000e+00> : vector<128xf32>
    %86 = vector.multi_reduction <add>, %85, %cst_45 [1] : vector<128x128xf32> to vector<128xf32>
    %87 = vector.shape_cast %86 : vector<128xf32> to vector<128x1xf32>
    %cst_46 = arith.constant 0.000000e+00 : f32
    %88 = vector.broadcast %cst_46 : f32 to vector<128x1xf32>
    %89 = arith.cmpf ogt, %87, %88 : vector<128x1xf32>
    %cst_47 = arith.constant 1.000000e-30 : f32
    %90 = vector.broadcast %cst_47 : f32 to vector<128x1xf32>
    %91 = arith.maximumf %87, %90 : vector<128x1xf32>
    %92 = tpu.reciprocal %91 {approx = true} : vector<128x1xf32> -> vector<128x1xf32>
    %cst_48 = arith.constant 0.000000e+00 : f32
    %93 = vector.broadcast %cst_48 : f32 to vector<128x1xf32>
    %94 = arith.select %89, %92, %93 : vector<128x1xi1>, vector<128x1xf32>
    %95 = vector.broadcast %94 : vector<128x1xf32> to vector<128x128xf32>
    %96 = arith.mulf %85, %95 : vector<128x128xf32>
    %cst_49 = arith.constant dense<0.000000e+00> : vector<128x16xf32>
    %97 = tpu.matmul %96, %21, %cst_49 {dimension_numbers = #tpu.dot_dimension_numbers<[1], [0], [0], [1], [0, 0, 1, 1], [], []>} : vector<128x128xf32>, vector<128x16xf32>, vector<128x16xf32> -> vector<128x16xf32>
    %98 = arith.addf %73, %97 : vector<128x16xf32>
    %c3 = arith.constant 3 : index
    %c0_50 = arith.constant 0 : index
    %c0_51 = arith.constant 0 : index
    %99 = vector.load %arg3[%c3, %c0_50, %c0_51] : memref<5x128x128xf32, #tpu.memory_space<vmem>>, vector<1x128x128xf32>
    %100 = vector.shape_cast %99 : vector<1x128x128xf32> to vector<128x128xf32>
    %cst_52 = arith.constant 0.000000e+00 : f32
    %101 = vector.broadcast %cst_52 : f32 to vector<128x128xf32>
    %102 = arith.cmpf ogt, %100, %101 : vector<128x128xf32>
    %cst_53 = arith.constant -1.000000e+30 : f32
    %103 = vector.broadcast %cst_53 : f32 to vector<128x128xf32>
    %104 = arith.select %102, %22, %103 : vector<128x128xi1>, vector<128x128xf32>
    %cst_54 = arith.constant dense<0xFF800000> : vector<128xf32>
    %105 = vector.multi_reduction <maximumf>, %104, %cst_54 [1] : vector<128x128xf32> to vector<128xf32>
    %106 = vector.shape_cast %105 : vector<128xf32> to vector<128x1xf32>
    %107 = vector.broadcast %106 : vector<128x1xf32> to vector<128x128xf32>
    %108 = arith.subf %104, %107 : vector<128x128xf32>
    %109 = math.exp %108 : vector<128x128xf32>
    %110 = arith.mulf %109, %100 : vector<128x128xf32>
    %cst_55 = arith.constant dense<0.000000e+00> : vector<128xf32>
    %111 = vector.multi_reduction <add>, %110, %cst_55 [1] : vector<128x128xf32> to vector<128xf32>
    %112 = vector.shape_cast %111 : vector<128xf32> to vector<128x1xf32>
    %cst_56 = arith.constant 0.000000e+00 : f32
    %113 = vector.broadcast %cst_56 : f32 to vector<128x1xf32>
    %114 = arith.cmpf ogt, %112, %113 : vector<128x1xf32>
    %cst_57 = arith.constant 1.000000e-30 : f32
    %115 = vector.broadcast %cst_57 : f32 to vector<128x1xf32>
    %116 = arith.maximumf %112, %115 : vector<128x1xf32>
    %117 = tpu.reciprocal %116 {approx = true} : vector<128x1xf32> -> vector<128x1xf32>
    %cst_58 = arith.constant 0.000000e+00 : f32
    %118 = vector.broadcast %cst_58 : f32 to vector<128x1xf32>
    %119 = arith.select %114, %117, %118 : vector<128x1xi1>, vector<128x1xf32>
    %120 = vector.broadcast %119 : vector<128x1xf32> to vector<128x128xf32>
    %121 = arith.mulf %110, %120 : vector<128x128xf32>
    %cst_59 = arith.constant dense<0.000000e+00> : vector<128x16xf32>
    %122 = tpu.matmul %121, %21, %cst_59 {dimension_numbers = #tpu.dot_dimension_numbers<[1], [0], [0], [1], [0, 0, 1, 1], [], []>} : vector<128x128xf32>, vector<128x16xf32>, vector<128x16xf32> -> vector<128x16xf32>
    %123 = arith.addf %98, %122 : vector<128x16xf32>
    %c4 = arith.constant 4 : index
    %c0_60 = arith.constant 0 : index
    %c0_61 = arith.constant 0 : index
    %124 = vector.load %arg3[%c4, %c0_60, %c0_61] : memref<5x128x128xf32, #tpu.memory_space<vmem>>, vector<1x128x128xf32>
    %125 = vector.shape_cast %124 : vector<1x128x128xf32> to vector<128x128xf32>
    %cst_62 = arith.constant 0.000000e+00 : f32
    %126 = vector.broadcast %cst_62 : f32 to vector<128x128xf32>
    %127 = arith.cmpf ogt, %125, %126 : vector<128x128xf32>
    %cst_63 = arith.constant -1.000000e+30 : f32
    %128 = vector.broadcast %cst_63 : f32 to vector<128x128xf32>
    %129 = arith.select %127, %22, %128 : vector<128x128xi1>, vector<128x128xf32>
    %cst_64 = arith.constant dense<0xFF800000> : vector<128xf32>
    %130 = vector.multi_reduction <maximumf>, %129, %cst_64 [1] : vector<128x128xf32> to vector<128xf32>
    %131 = vector.shape_cast %130 : vector<128xf32> to vector<128x1xf32>
    %132 = vector.broadcast %131 : vector<128x1xf32> to vector<128x128xf32>
    %133 = arith.subf %129, %132 : vector<128x128xf32>
    %134 = math.exp %133 : vector<128x128xf32>
    %135 = arith.mulf %134, %125 : vector<128x128xf32>
    %cst_65 = arith.constant dense<0.000000e+00> : vector<128xf32>
    %136 = vector.multi_reduction <add>, %135, %cst_65 [1] : vector<128x128xf32> to vector<128xf32>
    %137 = vector.shape_cast %136 : vector<128xf32> to vector<128x1xf32>
    %cst_66 = arith.constant 0.000000e+00 : f32
    %138 = vector.broadcast %cst_66 : f32 to vector<128x1xf32>
    %139 = arith.cmpf ogt, %137, %138 : vector<128x1xf32>
    %cst_67 = arith.constant 1.000000e-30 : f32
    %140 = vector.broadcast %cst_67 : f32 to vector<128x1xf32>
    %141 = arith.maximumf %137, %140 : vector<128x1xf32>
    %142 = tpu.reciprocal %141 {approx = true} : vector<128x1xf32> -> vector<128x1xf32>
    %cst_68 = arith.constant 0.000000e+00 : f32
    %143 = vector.broadcast %cst_68 : f32 to vector<128x1xf32>
    %144 = arith.select %139, %142, %143 : vector<128x1xi1>, vector<128x1xf32>
    %145 = vector.broadcast %144 : vector<128x1xf32> to vector<128x128xf32>
    %146 = arith.mulf %135, %145 : vector<128x128xf32>
    %cst_69 = arith.constant dense<0.000000e+00> : vector<128x16xf32>
    %147 = tpu.matmul %146, %21, %cst_69 {dimension_numbers = #tpu.dot_dimension_numbers<[1], [0], [0], [1], [0, 0, 1, 1], [], []>} : vector<128x128xf32>, vector<128x16xf32>, vector<128x16xf32> -> vector<128x16xf32>
    %148 = arith.addf %123, %147 : vector<128x16xf32>
    %149 = vector.extract_strided_slice %6 {offsets = [0, 16], sizes = [128, 16], strides = [1, 1]} : vector<128x32xf32> to vector<128x16xf32>
    %cst_70 = arith.constant 2.500000e-01 : f32
    %150 = vector.broadcast %cst_70 : f32 to vector<128x16xf32>
    %151 = arith.mulf %149, %150 : vector<128x16xf32>
    %152 = vector.extract_strided_slice %11 {offsets = [0, 16], sizes = [128, 16], strides = [1, 1]} : vector<128x32xf32> to vector<128x16xf32>
    %153 = vector.extract_strided_slice %16 {offsets = [0, 16], sizes = [128, 16], strides = [1, 1]} : vector<128x32xf32> to vector<128x16xf32>
    %cst_71 = arith.constant dense<0.000000e+00> : vector<128x128xf32>
    %154 = tpu.matmul %151, %152, %cst_71 {dimension_numbers = #tpu.dot_dimension_numbers<[1], [1], [0], [0], [0, 0, 1, 0], [], []>} : vector<128x16xf32>, vector<128x16xf32>, vector<128x128xf32> -> vector<128x128xf32>
    %cst_72 = arith.constant 0.000000e+00 : f32
    %155 = vector.broadcast %cst_72 : f32 to vector<128x16xf32>
    %c0_73 = arith.constant 0 : index
    %c0_74 = arith.constant 0 : index
    %c0_75 = arith.constant 0 : index
    %156 = vector.load %arg3[%c0_73, %c0_74, %c0_75] : memref<5x128x128xf32, #tpu.memory_space<vmem>>, vector<1x128x128xf32>
    %157 = vector.shape_cast %156 : vector<1x128x128xf32> to vector<128x128xf32>
    %cst_76 = arith.constant 0.000000e+00 : f32
    %158 = vector.broadcast %cst_76 : f32 to vector<128x128xf32>
    %159 = arith.cmpf ogt, %157, %158 : vector<128x128xf32>
    %cst_77 = arith.constant -1.000000e+30 : f32
    %160 = vector.broadcast %cst_77 : f32 to vector<128x128xf32>
    %161 = arith.select %159, %154, %160 : vector<128x128xi1>, vector<128x128xf32>
    %cst_78 = arith.constant dense<0xFF800000> : vector<128xf32>
    %162 = vector.multi_reduction <maximumf>, %161, %cst_78 [1] : vector<128x128xf32> to vector<128xf32>
    %163 = vector.shape_cast %162 : vector<128xf32> to vector<128x1xf32>
    %164 = vector.broadcast %163 : vector<128x1xf32> to vector<128x128xf32>
    %165 = arith.subf %161, %164 : vector<128x128xf32>
    %166 = math.exp %165 : vector<128x128xf32>
    %167 = arith.mulf %166, %157 : vector<128x128xf32>
    %cst_79 = arith.constant dense<0.000000e+00> : vector<128xf32>
    %168 = vector.multi_reduction <add>, %167, %cst_79 [1] : vector<128x128xf32> to vector<128xf32>
    %169 = vector.shape_cast %168 : vector<128xf32> to vector<128x1xf32>
    %cst_80 = arith.constant 0.000000e+00 : f32
    %170 = vector.broadcast %cst_80 : f32 to vector<128x1xf32>
    %171 = arith.cmpf ogt, %169, %170 : vector<128x1xf32>
    %cst_81 = arith.constant 1.000000e-30 : f32
    %172 = vector.broadcast %cst_81 : f32 to vector<128x1xf32>
    %173 = arith.maximumf %169, %172 : vector<128x1xf32>
    %174 = tpu.reciprocal %173 {approx = true} : vector<128x1xf32> -> vector<128x1xf32>
    %cst_82 = arith.constant 0.000000e+00 : f32
    %175 = vector.broadcast %cst_82 : f32 to vector<128x1xf32>
    %176 = arith.select %171, %174, %175 : vector<128x1xi1>, vector<128x1xf32>
    %177 = vector.broadcast %176 : vector<128x1xf32> to vector<128x128xf32>
    %178 = arith.mulf %167, %177 : vector<128x128xf32>
    %cst_83 = arith.constant dense<0.000000e+00> : vector<128x16xf32>
    %179 = tpu.matmul %178, %153, %cst_83 {dimension_numbers = #tpu.dot_dimension_numbers<[1], [0], [0], [1], [0, 0, 1, 1], [], []>} : vector<128x128xf32>, vector<128x16xf32>, vector<128x16xf32> -> vector<128x16xf32>
    %180 = arith.addf %155, %179 : vector<128x16xf32>
    %c1_84 = arith.constant 1 : index
    %c0_85 = arith.constant 0 : index
    %c0_86 = arith.constant 0 : index
    %181 = vector.load %arg3[%c1_84, %c0_85, %c0_86] : memref<5x128x128xf32, #tpu.memory_space<vmem>>, vector<1x128x128xf32>
    %182 = vector.shape_cast %181 : vector<1x128x128xf32> to vector<128x128xf32>
    %cst_87 = arith.constant 0.000000e+00 : f32
    %183 = vector.broadcast %cst_87 : f32 to vector<128x128xf32>
    %184 = arith.cmpf ogt, %182, %183 : vector<128x128xf32>
    %cst_88 = arith.constant -1.000000e+30 : f32
    %185 = vector.broadcast %cst_88 : f32 to vector<128x128xf32>
    %186 = arith.select %184, %154, %185 : vector<128x128xi1>, vector<128x128xf32>
    %cst_89 = arith.constant dense<0xFF800000> : vector<128xf32>
    %187 = vector.multi_reduction <maximumf>, %186, %cst_89 [1] : vector<128x128xf32> to vector<128xf32>
    %188 = vector.shape_cast %187 : vector<128xf32> to vector<128x1xf32>
    %189 = vector.broadcast %188 : vector<128x1xf32> to vector<128x128xf32>
    %190 = arith.subf %186, %189 : vector<128x128xf32>
    %191 = math.exp %190 : vector<128x128xf32>
    %192 = arith.mulf %191, %182 : vector<128x128xf32>
    %cst_90 = arith.constant dense<0.000000e+00> : vector<128xf32>
    %193 = vector.multi_reduction <add>, %192, %cst_90 [1] : vector<128x128xf32> to vector<128xf32>
    %194 = vector.shape_cast %193 : vector<128xf32> to vector<128x1xf32>
    %cst_91 = arith.constant 0.000000e+00 : f32
    %195 = vector.broadcast %cst_91 : f32 to vector<128x1xf32>
    %196 = arith.cmpf ogt, %194, %195 : vector<128x1xf32>
    %cst_92 = arith.constant 1.000000e-30 : f32
    %197 = vector.broadcast %cst_92 : f32 to vector<128x1xf32>
    %198 = arith.maximumf %194, %197 : vector<128x1xf32>
    %199 = tpu.reciprocal %198 {approx = true} : vector<128x1xf32> -> vector<128x1xf32>
    %cst_93 = arith.constant 0.000000e+00 : f32
    %200 = vector.broadcast %cst_93 : f32 to vector<128x1xf32>
    %201 = arith.select %196, %199, %200 : vector<128x1xi1>, vector<128x1xf32>
    %202 = vector.broadcast %201 : vector<128x1xf32> to vector<128x128xf32>
    %203 = arith.mulf %192, %202 : vector<128x128xf32>
    %cst_94 = arith.constant dense<0.000000e+00> : vector<128x16xf32>
    %204 = tpu.matmul %203, %153, %cst_94 {dimension_numbers = #tpu.dot_dimension_numbers<[1], [0], [0], [1], [0, 0, 1, 1], [], []>} : vector<128x128xf32>, vector<128x16xf32>, vector<128x16xf32> -> vector<128x16xf32>
    %205 = arith.addf %180, %204 : vector<128x16xf32>
    %c2_95 = arith.constant 2 : index
    %c0_96 = arith.constant 0 : index
    %c0_97 = arith.constant 0 : index
    %206 = vector.load %arg3[%c2_95, %c0_96, %c0_97] : memref<5x128x128xf32, #tpu.memory_space<vmem>>, vector<1x128x128xf32>
    %207 = vector.shape_cast %206 : vector<1x128x128xf32> to vector<128x128xf32>
    %cst_98 = arith.constant 0.000000e+00 : f32
    %208 = vector.broadcast %cst_98 : f32 to vector<128x128xf32>
    %209 = arith.cmpf ogt, %207, %208 : vector<128x128xf32>
    %cst_99 = arith.constant -1.000000e+30 : f32
    %210 = vector.broadcast %cst_99 : f32 to vector<128x128xf32>
    %211 = arith.select %209, %154, %210 : vector<128x128xi1>, vector<128x128xf32>
    %cst_100 = arith.constant dense<0xFF800000> : vector<128xf32>
    %212 = vector.multi_reduction <maximumf>, %211, %cst_100 [1] : vector<128x128xf32> to vector<128xf32>
    %213 = vector.shape_cast %212 : vector<128xf32> to vector<128x1xf32>
    %214 = vector.broadcast %213 : vector<128x1xf32> to vector<128x128xf32>
    %215 = arith.subf %211, %214 : vector<128x128xf32>
    %216 = math.exp %215 : vector<128x128xf32>
    %217 = arith.mulf %216, %207 : vector<128x128xf32>
    %cst_101 = arith.constant dense<0.000000e+00> : vector<128xf32>
    %218 = vector.multi_reduction <add>, %217, %cst_101 [1] : vector<128x128xf32> to vector<128xf32>
    %219 = vector.shape_cast %218 : vector<128xf32> to vector<128x1xf32>
    %cst_102 = arith.constant 0.000000e+00 : f32
    %220 = vector.broadcast %cst_102 : f32 to vector<128x1xf32>
    %221 = arith.cmpf ogt, %219, %220 : vector<128x1xf32>
    %cst_103 = arith.constant 1.000000e-30 : f32
    %222 = vector.broadcast %cst_103 : f32 to vector<128x1xf32>
    %223 = arith.maximumf %219, %222 : vector<128x1xf32>
    %224 = tpu.reciprocal %223 {approx = true} : vector<128x1xf32> -> vector<128x1xf32>
    %cst_104 = arith.constant 0.000000e+00 : f32
    %225 = vector.broadcast %cst_104 : f32 to vector<128x1xf32>
    %226 = arith.select %221, %224, %225 : vector<128x1xi1>, vector<128x1xf32>
    %227 = vector.broadcast %226 : vector<128x1xf32> to vector<128x128xf32>
    %228 = arith.mulf %217, %227 : vector<128x128xf32>
    %cst_105 = arith.constant dense<0.000000e+00> : vector<128x16xf32>
    %229 = tpu.matmul %228, %153, %cst_105 {dimension_numbers = #tpu.dot_dimension_numbers<[1], [0], [0], [1], [0, 0, 1, 1], [], []>} : vector<128x128xf32>, vector<128x16xf32>, vector<128x16xf32> -> vector<128x16xf32>
    %230 = arith.addf %205, %229 : vector<128x16xf32>
    %c3_106 = arith.constant 3 : index
    %c0_107 = arith.constant 0 : index
    %c0_108 = arith.constant 0 : index
    %231 = vector.load %arg3[%c3_106, %c0_107, %c0_108] : memref<5x128x128xf32, #tpu.memory_space<vmem>>, vector<1x128x128xf32>
    %232 = vector.shape_cast %231 : vector<1x128x128xf32> to vector<128x128xf32>
    %cst_109 = arith.constant 0.000000e+00 : f32
    %233 = vector.broadcast %cst_109 : f32 to vector<128x128xf32>
    %234 = arith.cmpf ogt, %232, %233 : vector<128x128xf32>
    %cst_110 = arith.constant -1.000000e+30 : f32
    %235 = vector.broadcast %cst_110 : f32 to vector<128x128xf32>
    %236 = arith.select %234, %154, %235 : vector<128x128xi1>, vector<128x128xf32>
    %cst_111 = arith.constant dense<0xFF800000> : vector<128xf32>
    %237 = vector.multi_reduction <maximumf>, %236, %cst_111 [1] : vector<128x128xf32> to vector<128xf32>
    %238 = vector.shape_cast %237 : vector<128xf32> to vector<128x1xf32>
    %239 = vector.broadcast %238 : vector<128x1xf32> to vector<128x128xf32>
    %240 = arith.subf %236, %239 : vector<128x128xf32>
    %241 = math.exp %240 : vector<128x128xf32>
    %242 = arith.mulf %241, %232 : vector<128x128xf32>
    %cst_112 = arith.constant dense<0.000000e+00> : vector<128xf32>
    %243 = vector.multi_reduction <add>, %242, %cst_112 [1] : vector<128x128xf32> to vector<128xf32>
    %244 = vector.shape_cast %243 : vector<128xf32> to vector<128x1xf32>
    %cst_113 = arith.constant 0.000000e+00 : f32
    %245 = vector.broadcast %cst_113 : f32 to vector<128x1xf32>
    %246 = arith.cmpf ogt, %244, %245 : vector<128x1xf32>
    %cst_114 = arith.constant 1.000000e-30 : f32
    %247 = vector.broadcast %cst_114 : f32 to vector<128x1xf32>
    %248 = arith.maximumf %244, %247 : vector<128x1xf32>
    %249 = tpu.reciprocal %248 {approx = true} : vector<128x1xf32> -> vector<128x1xf32>
    %cst_115 = arith.constant 0.000000e+00 : f32
    %250 = vector.broadcast %cst_115 : f32 to vector<128x1xf32>
    %251 = arith.select %246, %249, %250 : vector<128x1xi1>, vector<128x1xf32>
    %252 = vector.broadcast %251 : vector<128x1xf32> to vector<128x128xf32>
    %253 = arith.mulf %242, %252 : vector<128x128xf32>
    %cst_116 = arith.constant dense<0.000000e+00> : vector<128x16xf32>
    %254 = tpu.matmul %253, %153, %cst_116 {dimension_numbers = #tpu.dot_dimension_numbers<[1], [0], [0], [1], [0, 0, 1, 1], [], []>} : vector<128x128xf32>, vector<128x16xf32>, vector<128x16xf32> -> vector<128x16xf32>
    %255 = arith.addf %230, %254 : vector<128x16xf32>
    %c4_117 = arith.constant 4 : index
    %c0_118 = arith.constant 0 : index
    %c0_119 = arith.constant 0 : index
    %256 = vector.load %arg3[%c4_117, %c0_118, %c0_119] : memref<5x128x128xf32, #tpu.memory_space<vmem>>, vector<1x128x128xf32>
    %257 = vector.shape_cast %256 : vector<1x128x128xf32> to vector<128x128xf32>
    %cst_120 = arith.constant 0.000000e+00 : f32
    %258 = vector.broadcast %cst_120 : f32 to vector<128x128xf32>
    %259 = arith.cmpf ogt, %257, %258 : vector<128x128xf32>
    %cst_121 = arith.constant -1.000000e+30 : f32
    %260 = vector.broadcast %cst_121 : f32 to vector<128x128xf32>
    %261 = arith.select %259, %154, %260 : vector<128x128xi1>, vector<128x128xf32>
    %cst_122 = arith.constant dense<0xFF800000> : vector<128xf32>
    %262 = vector.multi_reduction <maximumf>, %261, %cst_122 [1] : vector<128x128xf32> to vector<128xf32>
    %263 = vector.shape_cast %262 : vector<128xf32> to vector<128x1xf32>
    %264 = vector.broadcast %263 : vector<128x1xf32> to vector<128x128xf32>
    %265 = arith.subf %261, %264 : vector<128x128xf32>
    %266 = math.exp %265 : vector<128x128xf32>
    %267 = arith.mulf %266, %257 : vector<128x128xf32>
    %cst_123 = arith.constant dense<0.000000e+00> : vector<128xf32>
    %268 = vector.multi_reduction <add>, %267, %cst_123 [1] : vector<128x128xf32> to vector<128xf32>
    %269 = vector.shape_cast %268 : vector<128xf32> to vector<128x1xf32>
    %cst_124 = arith.constant 0.000000e+00 : f32
    %270 = vector.broadcast %cst_124 : f32 to vector<128x1xf32>
    %271 = arith.cmpf ogt, %269, %270 : vector<128x1xf32>
    %cst_125 = arith.constant 1.000000e-30 : f32
    %272 = vector.broadcast %cst_125 : f32 to vector<128x1xf32>
    %273 = arith.maximumf %269, %272 : vector<128x1xf32>
    %274 = tpu.reciprocal %273 {approx = true} : vector<128x1xf32> -> vector<128x1xf32>
    %cst_126 = arith.constant 0.000000e+00 : f32
    %275 = vector.broadcast %cst_126 : f32 to vector<128x1xf32>
    %276 = arith.select %271, %274, %275 : vector<128x1xi1>, vector<128x1xf32>
    %277 = vector.broadcast %276 : vector<128x1xf32> to vector<128x128xf32>
    %278 = arith.mulf %267, %277 : vector<128x128xf32>
    %cst_127 = arith.constant dense<0.000000e+00> : vector<128x16xf32>
    %279 = tpu.matmul %278, %153, %cst_127 {dimension_numbers = #tpu.dot_dimension_numbers<[1], [0], [0], [1], [0, 0, 1, 1], [], []>} : vector<128x128xf32>, vector<128x16xf32>, vector<128x16xf32> -> vector<128x16xf32>
    %280 = arith.addf %255, %279 : vector<128x16xf32>
    %281 = tpu.concatenate %148, %280 in 1 : vector<128x16xf32>, vector<128x16xf32> -> vector<128x32xf32>
    %cst_128 = arith.constant 2.000000e-01 : f32
    %282 = vector.broadcast %cst_128 : f32 to vector<128x32xf32>
    %283 = arith.mulf %281, %282 : vector<128x32xf32>
    %c0_129 = arith.constant 0 : index
    %c0_130 = arith.constant 0 : index
    %284 = vector.load %arg10[%c0_129, %c0_130] : memref<32x32xf32, #tpu.memory_space<vmem>>, vector<32x32xf32>
    %cst_131 = arith.constant dense<0.000000e+00> : vector<128x32xf32>
    %285 = tpu.matmul %283, %284, %cst_131 {dimension_numbers = #tpu.dot_dimension_numbers<[1], [0], [0], [1], [0, 0, 1, 1], [], []>} : vector<128x32xf32>, vector<32x32xf32>, vector<128x32xf32> -> vector<128x32xf32>
    %c0_132 = arith.constant 0 : index
    %c0_133 = arith.constant 0 : index
    %286 = vector.load %arg11[%c0_132, %c0_133] : memref<1x32xf32, #tpu.memory_space<vmem>>, vector<1x32xf32>
    %287 = vector.broadcast %286 : vector<1x32xf32> to vector<128x32xf32>
    %288 = arith.addf %285, %287 : vector<128x32xf32>
    %c0_134 = arith.constant 0 : index
    %c0_135 = arith.constant 0 : index
    %c0_136 = arith.constant 0 : index
    %289 = vector.load %arg2[%c0_134, %c0_135, %c0_136] : memref<1x128x32xf32, #tpu.memory_space<vmem>>, vector<1x128x32xf32>
    %290 = vector.shape_cast %289 : vector<1x128x32xf32> to vector<128x32xf32>
    %291 = arith.addf %288, %290 : vector<128x32xf32>
    %cst_137 = arith.constant dense<0.000000e+00> : vector<128xf32>
    %292 = vector.multi_reduction <add>, %291, %cst_137 [1] : vector<128x32xf32> to vector<128xf32>
    %293 = vector.shape_cast %292 : vector<128xf32> to vector<128x1xf32>
    %cst_138 = arith.constant 3.200000e+01 : f32
    %294 = vector.broadcast %cst_138 : f32 to vector<128x1xf32>
    %295 = arith.divf %293, %294 : vector<128x1xf32>
    %296 = vector.broadcast %295 : vector<128x1xf32> to vector<128x32xf32>
    %297 = arith.subf %291, %296 : vector<128x32xf32>
    %298 = arith.mulf %297, %297 : vector<128x32xf32>
    %cst_139 = arith.constant dense<0.000000e+00> : vector<128xf32>
    %299 = vector.multi_reduction <add>, %298, %cst_139 [1] : vector<128x32xf32> to vector<128xf32>
    %300 = vector.shape_cast %299 : vector<128xf32> to vector<128x1xf32>
    %cst_140 = arith.constant 3.200000e+01 : f32
    %301 = vector.broadcast %cst_140 : f32 to vector<128x1xf32>
    %302 = arith.divf %300, %301 : vector<128x1xf32>
    %303 = vector.broadcast %295 : vector<128x1xf32> to vector<128x32xf32>
    %304 = arith.subf %291, %303 : vector<128x32xf32>
    %cst_141 = arith.constant 9.99999996E-13 : f32
    %305 = vector.broadcast %cst_141 : f32 to vector<128x1xf32>
    %306 = arith.addf %302, %305 : vector<128x1xf32>
    %307 = math.rsqrt %306 : vector<128x1xf32>
    %308 = vector.broadcast %307 : vector<128x1xf32> to vector<128x32xf32>
    %309 = arith.mulf %304, %308 : vector<128x32xf32>
    %c0_142 = arith.constant 0 : index
    %c0_143 = arith.constant 0 : index
    %310 = vector.load %arg12[%c0_142, %c0_143] : memref<1x32xf32, #tpu.memory_space<vmem>>, vector<1x32xf32>
    %311 = vector.broadcast %310 : vector<1x32xf32> to vector<128x32xf32>
    %312 = arith.mulf %309, %311 : vector<128x32xf32>
    %c0_144 = arith.constant 0 : index
    %c0_145 = arith.constant 0 : index
    %313 = vector.load %arg13[%c0_144, %c0_145] : memref<1x32xf32, #tpu.memory_space<vmem>>, vector<1x32xf32>
    %314 = vector.broadcast %313 : vector<1x32xf32> to vector<128x32xf32>
    %315 = arith.addf %312, %314 : vector<128x32xf32>
    %c0_146 = arith.constant 0 : index
    %c0_147 = arith.constant 0 : index
    %c0_148 = arith.constant 0 : index
    %316 = vector.load %arg14[%c0_146, %c0_147, %c0_148] : memref<1x128x32xf32, #tpu.memory_space<vmem>>, vector<1x128x32xf32>
    %317 = vector.shape_cast %316 : vector<1x128x32xf32> to vector<128x32xf32>
    %318 = vector.shape_cast %315 : vector<128x32xf32> to vector<1x128x32xf32>
    tpu.vector_store %arg14[%c0_146, %c0_147, %c0_148], %318 {strides = array<i32>} : memref<1x128x32xf32, #tpu.memory_space<vmem>>, vector<1x128x32xf32>,
    return
  }
  func.func @transform_0(%arg0: i32) -> (i32, i32, i32) {
    %c0_i32 = arith.constant 0 : i32
    %c0_i32_0 = arith.constant 0 : i32
    %c0_i32_1 = arith.constant 0 : i32
    return %arg0, %c0_i32, %c0_i32_0 : i32, i32, i32
  }
  func.func @transform_1(%arg0: i32) -> (i32, i32, i32) {
    %c0_i32 = arith.constant 0 : i32
    %c0_i32_0 = arith.constant 0 : i32
    %c0_i32_1 = arith.constant 0 : i32
    return %arg0, %c0_i32, %c0_i32_0 : i32, i32, i32
  }
  func.func @transform_2(%arg0: i32) -> (i32, i32, i32) {
    %c0_i32 = arith.constant 0 : i32
    %c0_i32_0 = arith.constant 0 : i32
    %c0_i32_1 = arith.constant 0 : i32
    %c0_i32_2 = arith.constant 0 : i32
    return %c0_i32, %c0_i32_0, %c0_i32_1 : i32, i32, i32
  }
  func.func @transform_3(%arg0: i32) -> (i32, i32) {
    %c0_i32 = arith.constant 0 : i32
    %c0_i32_0 = arith.constant 0 : i32
    %c0_i32_1 = arith.constant 0 : i32
    return %c0_i32, %c0_i32_0 : i32, i32
  }
  func.func @transform_4(%arg0: i32) -> (i32, i32) {
    %c0_i32 = arith.constant 0 : i32
    %c0_i32_0 = arith.constant 0 : i32
    %c0_i32_1 = arith.constant 0 : i32
    return %c0_i32, %c0_i32_0 : i32, i32
  }
  func.func @transform_5(%arg0: i32) -> (i32, i32) {
    %c0_i32 = arith.constant 0 : i32
    %c0_i32_0 = arith.constant 0 : i32
    %c0_i32_1 = arith.constant 0 : i32
    return %c0_i32, %c0_i32_0 : i32, i32
  }
  func.func @transform_6(%arg0: i32) -> (i32, i32) {
    %c0_i32 = arith.constant 0 : i32
    %c0_i32_0 = arith.constant 0 : i32
    %c0_i32_1 = arith.constant 0 : i32
    return %c0_i32, %c0_i32_0 : i32, i32
  }
  func.func @transform_7(%arg0: i32) -> (i32, i32) {
    %c0_i32 = arith.constant 0 : i32
    %c0_i32_0 = arith.constant 0 : i32
    %c0_i32_1 = arith.constant 0 : i32
    return %c0_i32, %c0_i32_0 : i32, i32
  }
  func.func @transform_8(%arg0: i32) -> (i32, i32) {
    %c0_i32 = arith.constant 0 : i32
    %c0_i32_0 = arith.constant 0 : i32
    %c0_i32_1 = arith.constant 0 : i32
    return %c0_i32, %c0_i32_0 : i32, i32
  }
  func.func @transform_9(%arg0: i32) -> (i32, i32) {
    %c0_i32 = arith.constant 0 : i32
    %c0_i32_0 = arith.constant 0 : i32
    %c0_i32_1 = arith.constant 0 : i32
    return %c0_i32, %c0_i32_0 : i32, i32
  }
  func.func @transform_10(%arg0: i32) -> (i32, i32) {
    %c0_i32 = arith.constant 0 : i32
    %c0_i32_0 = arith.constant 0 : i32
    %c0_i32_1 = arith.constant 0 : i32
    return %c0_i32, %c0_i32_0 : i32, i32
  }
  func.func @transform_11(%arg0: i32) -> (i32, i32) {
    %c0_i32 = arith.constant 0 : i32
    %c0_i32_0 = arith.constant 0 : i32
    %c0_i32_1 = arith.constant 0 : i32
    return %c0_i32, %c0_i32_0 : i32, i32
  }
  func.func @transform_12(%arg0: i32) -> (i32, i32) {
    %c0_i32 = arith.constant 0 : i32
    %c0_i32_0 = arith.constant 0 : i32
    %c0_i32_1 = arith.constant 0 : i32
    return %c0_i32, %c0_i32_0 : i32, i32
  }
  func.func @transform_13(%arg0: i32) -> (i32, i32, i32) {
    %c0_i32 = arith.constant 0 : i32
    %c0_i32_0 = arith.constant 0 : i32
    %c0_i32_1 = arith.constant 0 : i32
    return %arg0, %c0_i32, %c0_i32_0 : i32, i32, i32
  }
}

</mosaic_0001>

<llo_original>
// kernel: tpu_custom_call.1
$region0: #{tpu_custom_call.1}
  #allocation0 [shape = 'u32[]', space=smem, size = 0x4, offset = 0x4, fixed_abs, tag = 'smem constant byte address 0x4 - core index']
  #allocation1 [shape = 'u32[144,128]{1,0:T(1,128)}', space=vmem, size = 0x12000, scoped, tag = 'internal scratch']
  %s0 = inlined_call_operand.vmem [shape: bf16[2,128,64], index: 0, kind: input, shape index: {}]
  %s1 = inlined_call_operand.vmem [shape: f32[2,128,32], index: 1, kind: input, shape index: {}]
  %s2 = inlined_call_operand.vmem [shape: f32[5,128,128], index: 2, kind: input, shape index: {}]
  %s3 = inlined_call_operand.vmem [shape: bf16[64,32], index: 3, kind: input, shape index: {}]
  %s4 = inlined_call_operand.vmem [shape: f32[1,32], index: 4, kind: input, shape index: {}]
  %s5 = inlined_call_operand.vmem [shape: bf16[64,32], index: 5, kind: input, shape index: {}]
  %s6 = inlined_call_operand.vmem [shape: f32[1,32], index: 6, kind: input, shape index: {}]
  %s7 = inlined_call_operand.vmem [shape: bf16[64,32], index: 7, kind: input, shape index: {}]
  %s8 = inlined_call_operand.vmem [shape: f32[1,32], index: 8, kind: input, shape index: {}]
  %s9 = inlined_call_operand.vmem [shape: f32[32,32], index: 9, kind: input, shape index: {}]
  %s10 = inlined_call_operand.vmem [shape: f32[1,32], index: 10, kind: input, shape index: {}]
  %s11 = inlined_call_operand.vmem [shape: f32[1,32], index: 11, kind: input, shape index: {}]
  %s12 = inlined_call_operand.vmem [shape: f32[1,32], index: 12, kind: input, shape index: {}]
  %s13 = inlined_call_operand.vmem [shape: f32[2,128,32], index: 13, kind: output, shape index: {}]
  %s14 = sld [smem:[#allocation0]]
  $region85: #{tpu_custom_call.1} parent=0
    _
  %s16 = ssub.s32 1, %s14
  %s17 = scalar_select 0, %s16, %s14
  loop: start=0, step=1, limit=4
  $region2: #{tpu_custom_call.1} parent=0 // loop_pre_header
    _
  $region3: #{tpu_custom_call.1} parent=0 // loop_header
    %s19 = sphi 0, %s23
    %p20 = scmp.ge.s32.totalorder %s19, 4
    %s29 = sphi 0, %s31
    %s32 = sphi 0, %s29
    %s33 = sphi 0, %s32
    %s49 = sphi 0, %s33
    %s55 = sphi 0, %s57
    %s58 = sphi 0, %s55
    %s59 = sphi 0, %s58
    %s75 = sphi 0, %s59
    %s79 = sphi 0, %s79
    %s81 = sphi 0, %s79
    %s82 = sphi 0, %s81
    %s96 = sphi 0, %s82
    %s100 = sphi 0, %s100
    %s102 = sphi 0, %s100
    %s103 = sphi 0, %s102
    %s117 = sphi 0, %s103
    %s121 = sphi 0, %s121
    %s123 = sphi 0, %s121
    %s124 = sphi 0, %s123
    %s138 = sphi 0, %s124
    %s142 = sphi 0, %s142
    %s144 = sphi 0, %s142
    %s145 = sphi 0, %s144
    %s159 = sphi 0, %s145
    %s163 = sphi 0, %s163
    %s165 = sphi 0, %s163
    %s166 = sphi 0, %s165
    %s180 = sphi 0, %s166
    %s184 = sphi 0, %s184
    %s186 = sphi 0, %s184
    %s187 = sphi 0, %s186
    %s201 = sphi 0, %s187
    %s205 = sphi 0, %s205
    %s207 = sphi 0, %s205
    %s208 = sphi 0, %s207
    %s222 = sphi 0, %s208
    %s226 = sphi 0, %s226
    %s228 = sphi 0, %s226
    %s229 = sphi 0, %s228
    %s243 = sphi 0, %s229
    %s247 = sphi 0, %s247
    %s249 = sphi 0, %s247
    %s250 = sphi 0, %s249
    %s264 = sphi 0, %s250
    %s268 = sphi 0, %s268
    %s270 = sphi 0, %s268
    %s271 = sphi 0, %s270
    %s285 = sphi 0, %s271
    %s289 = sphi 0, %s289
    %s291 = sphi 0, %s289
    %s292 = sphi 0, %s291
    %s306 = sphi 0, %s292
    %s312 = sphi 0, %s314
    %s315 = sphi 0, %s312
    %s316 = sphi 0, %s315
    %s332 = sphi 0, %s316
  $region4: #{tpu_custom_call.1} parent=0 // loop_header_branch
    %22 = sbr.rel (%p20) target = $region8
  $region5: #{tpu_custom_call.1} parent=0 // loop_body
    %s24 = ssub.s32 %s19, 1
    %s25 = ssub.s32 %s19, 2
    %s26 = sadd.s32 %s19, 1
    %s27 = ssub.s32 %s19, %s26
    %p28 = scmp.eq.s32.totalorder %s27, 0
    %s30 = sadd.s32 %s29, 1
    %s31 = scalar_select %p28, %s29, %s30
    %p34 = pneg %p28
    %p35 = scmp.eq.s32.totalorder %s19, 1
    %p36 = por %p34, %p35
    %p37 = scmp.ne.s32.totalorder %s29, %s32
    %p38 = scmp.eq.s32.totalorder %s19, 0
    %p39 = por %p37, %p38
    %p40 = scmp.ne.s32.totalorder %s29, %s32
    %p41 = scmp.eq.s32.totalorder %s24, 1
    %p42 = por %p40, %p41
    %p43 = scmp.ne.s32.totalorder %s32, %s33
    %p44 = scmp.eq.s32.totalorder %s24, 0
    %p45 = por %p43, %p44
    %p46 = scmp.ne.s32.totalorder %s32, %s33
    %p47 = scmp.eq.s32.totalorder %s25, 1
    %p48 = por %p46, %p47
    %p50 = scmp.ne.s32.totalorder %s33, %s49
    %p51 = scmp.eq.s32.totalorder %s25, 0
    %p52 = por %p50, %p51
    %s53 = ssub.s32 %s19, %s26
    %p54 = scmp.eq.s32.totalorder %s53, 0
    %s56 = sadd.s32 %s55, 1
    %s57 = scalar_select %p54, %s55, %s56
    %p60 = pneg %p54
    %p61 = scmp.eq.s32.totalorder %s19, 1
    %p62 = por %p60, %p61
    %p63 = scmp.ne.s32.totalorder %s55, %s58
    %p64 = scmp.eq.s32.totalorder %s19, 0
    %p65 = por %p63, %p64
    %p66 = scmp.ne.s32.totalorder %s55, %s58
    %p67 = scmp.eq.s32.totalorder %s24, 1
    %p68 = por %p66, %p67
    %p69 = scmp.ne.s32.totalorder %s58, %s59
    %p70 = scmp.eq.s32.totalorder %s24, 0
    %p71 = por %p69, %p70
    %p72 = scmp.ne.s32.totalorder %s58, %s59
    %p73 = scmp.eq.s32.totalorder %s25, 1
    %p74 = por %p72, %p73
    %p76 = scmp.ne.s32.totalorder %s59, %s75
    %p77 = scmp.eq.s32.totalorder %s25, 0
    %p78 = por %p76, %p77
    %s80 = sadd.s32 %s79, 1
    %p83 = scmp.eq.s32.totalorder %s19, 1
    %p84 = scmp.ne.s32.totalorder %s79, %s81
    %p85 = scmp.eq.s32.totalorder %s19, 0
    %p86 = por %p84, %p85
    %p87 = scmp.ne.s32.totalorder %s79, %s81
    %p88 = scmp.eq.s32.totalorder %s24, 1
    %p89 = por %p87, %p88
    %p90 = scmp.ne.s32.totalorder %s81, %s82
    %p91 = scmp.eq.s32.totalorder %s24, 0
    %p92 = por %p90, %p91
    %p93 = scmp.ne.s32.totalorder %s81, %s82
    %p94 = scmp.eq.s32.totalorder %s25, 1
    %p95 = por %p93, %p94
    %p97 = scmp.ne.s32.totalorder %s82, %s96
    %p98 = scmp.eq.s32.totalorder %s25, 0
    %p99 = por %p97, %p98
    %s101 = sadd.s32 %s100, 1
    %p104 = scmp.eq.s32.totalorder %s19, 1
    %p105 = scmp.ne.s32.totalorder %s100, %s102
    %p106 = scmp.eq.s32.totalorder %s19, 0
    %p107 = por %p105, %p106
    %p108 = scmp.ne.s32.totalorder %s100, %s102
    %p109 = scmp.eq.s32.totalorder %s24, 1
    %p110 = por %p108, %p109
    %p111 = scmp.ne.s32.totalorder %s102, %s103
    %p112 = scmp.eq.s32.totalorder %s24, 0
    %p113 = por %p111, %p112
    %p114 = scmp.ne.s32.totalorder %s102, %s103
    %p115 = scmp.eq.s32.totalorder %s25, 1
    %p116 = por %p114, %p115
    %p118 = scmp.ne.s32.totalorder %s103, %s117
    %p119 = scmp.eq.s32.totalorder %s25, 0
    %p120 = por %p118, %p119
    %s122 = sadd.s32 %s121, 1
    %p125 = scmp.eq.s32.totalorder %s19, 1
    %p126 = scmp.ne.s32.totalorder %s121, %s123
    %p127 = scmp.eq.s32.totalorder %s19, 0
    %p128 = por %p126, %p127
    %p129 = scmp.ne.s32.totalorder %s121, %s123
    %p130 = scmp.eq.s32.totalorder %s24, 1
    %p131 = por %p129, %p130
    %p132 = scmp.ne.s32.totalorder %s123, %s124
    %p133 = scmp.eq.s32.totalorder %s24, 0
    %p134 = por %p132, %p133
    %p135 = scmp.ne.s32.totalorder %s123, %s124
    %p136 = scmp.eq.s32.totalorder %s25, 1
    %p137 = por %p135, %p136
    %p139 = scmp.ne.s32.totalorder %s124, %s138
    %p140 = scmp.eq.s32.totalorder %s25, 0
    %p141 = por %p139, %p140
    %s143 = sadd.s32 %s142, 1
    %p146 = scmp.eq.s32.totalorder %s19, 1
    %p147 = scmp.ne.s32.totalorder %s142, %s144
    %p148 = scmp.eq.s32.totalorder %s19, 0
    %p149 = por %p147, %p148
    %p150 = scmp.ne.s32.totalorder %s142, %s144
    %p151 = scmp.eq.s32.totalorder %s24, 1
    %p152 = por %p150, %p151
    %p153 = scmp.ne.s32.totalorder %s144, %s145
    %p154 = scmp.eq.s32.totalorder %s24, 0
    %p155 = por %p153, %p154
    %p156 = scmp.ne.s32.totalorder %s144, %s145
    %p157 = scmp.eq.s32.totalorder %s25, 1
    %p158 = por %p156, %p157
    %p160 = scmp.ne.s32.totalorder %s145, %s159
    %p161 = scmp.eq.s32.totalorder %s25, 0
    %p162 = por %p160, %p161
    %s164 = sadd.s32 %s163, 1
    %p167 = scmp.eq.s32.totalorder %s19, 1
    %p168 = scmp.ne.s32.totalorder %s163, %s165
    %p169 = scmp.eq.s32.totalorder %s19, 0
    %p170 = por %p168, %p169
    %p171 = scmp.ne.s32.totalorder %s163, %s165
    %p172 = scmp.eq.s32.totalorder %s24, 1
    %p173 = por %p171, %p172
    %p174 = scmp.ne.s32.totalorder %s165, %s166
    %p175 = scmp.eq.s32.totalorder %s24, 0
    %p176 = por %p174, %p175
    %p177 = scmp.ne.s32.totalorder %s165, %s166
    %p178 = scmp.eq.s32.totalorder %s25, 1
    %p179 = por %p177, %p178
    %p181 = scmp.ne.s32.totalorder %s166, %s180
    %p182 = scmp.eq.s32.totalorder %s25, 0
    %p183 = por %p181, %p182
    %s185 = sadd.s32 %s184, 1
    %p188 = scmp.eq.s32.totalorder %s19, 1
    %p189 = scmp.ne.s32.totalorder %s184, %s186
    %p190 = scmp.eq.s32.totalorder %s19, 0
    %p191 = por %p189, %p190
    %p192 = scmp.ne.s32.totalorder %s184, %s186
    %p193 = scmp.eq.s32.totalorder %s24, 1
    %p194 = por %p192, %p193
    %p195 = scmp.ne.s32.totalorder %s186, %s187
    %p196 = scmp.eq.s32.totalorder %s24, 0
    %p197 = por %p195, %p196
    %p198 = scmp.ne.s32.totalorder %s186, %s187
    %p199 = scmp.eq.s32.totalorder %s25, 1
    %p200 = por %p198, %p199
    %p202 = scmp.ne.s32.totalorder %s187, %s201
    %p203 = scmp.eq.s32.totalorder %s25, 0
    %p204 = por %p202, %p203
    %s206 = sadd.s32 %s205, 1
    %p209 = scmp.eq.s32.totalorder %s19, 1
    %p210 = scmp.ne.s32.totalorder %s205, %s207
    %p211 = scmp.eq.s32.totalorder %s19, 0
    %p212 = por %p210, %p211
    %p213 = scmp.ne.s32.totalorder %s205, %s207
    %p214 = scmp.eq.s32.totalorder %s24, 1
    %p215 = por %p213, %p214
    %p216 = scmp.ne.s32.totalorder %s207, %s208
    %p217 = scmp.eq.s32.totalorder %s24, 0
    %p218 = por %p216, %p217
    %p219 = scmp.ne.s32.totalorder %s207, %s208
    %p220 = scmp.eq.s32.totalorder %s25, 1
    %p221 = por %p219, %p220
    %p223 = scmp.ne.s32.totalorder %s208, %s222
    %p224 = scmp.eq.s32.totalorder %s25, 0
    %p225 = por %p223, %p224
    %s227 = sadd.s32 %s226, 1
    %p230 = scmp.eq.s32.totalorder %s19, 1
    %p231 = scmp.ne.s32.totalorder %s226, %s228
    %p232 = scmp.eq.s32.totalorder %s19, 0
    %p233 = por %p231, %p232
    %p234 = scmp.ne.s32.totalorder %s226, %s228
    %p235 = scmp.eq.s32.totalorder %s24, 1
    %p236 = por %p234, %p235
    %p237 = scmp.ne.s32.totalorder %s228, %s229
    %p238 = scmp.eq.s32.totalorder %s24, 0
    %p239 = por %p237, %p238
    %p240 = scmp.ne.s32.totalorder %s228, %s229
    %p241 = scmp.eq.s32.totalorder %s25, 1
    %p242 = por %p240, %p241
    %p244 = scmp.ne.s32.totalorder %s229, %s243
    %p245 = scmp.eq.s32.totalorder %s25, 0
    %p246 = por %p244, %p245
    %s248 = sadd.s32 %s247, 1
    %p251 = scmp.eq.s32.totalorder %s19, 1
    %p252 = scmp.ne.s32.totalorder %s247, %s249
    %p253 = scmp.eq.s32.totalorder %s19, 0
    %p254 = por %p252, %p253
    %p255 = scmp.ne.s32.totalorder %s247, %s249
    %p256 = scmp.eq.s32.totalorder %s24, 1
    %p257 = por %p255, %p256
    %p258 = scmp.ne.s32.totalorder %s249, %s250
    %p259 = scmp.eq.s32.totalorder %s24, 0
    %p260 = por %p258, %p259
    %p261 = scmp.ne.s32.totalorder %s249, %s250
    %p262 = scmp.eq.s32.totalorder %s25, 1
    %p263 = por %p261, %p262
    %p265 = scmp.ne.s32.totalorder %s250, %s264
    %p266 = scmp.eq.s32.totalorder %s25, 0
    %p267 = por %p265, %p266
    %s269 = sadd.s32 %s268, 1
    %p272 = scmp.eq.s32.totalorder %s19, 1
    %p273 = scmp.ne.s32.totalorder %s268, %s270
    %p274 = scmp.eq.s32.totalorder %s19, 0
    %p275 = por %p273, %p274
    %p276 = scmp.ne.s32.totalorder %s268, %s270
    %p277 = scmp.eq.s32.totalorder %s24, 1
    %p278 = por %p276, %p277
    %p279 = scmp.ne.s32.totalorder %s270, %s271
    %p280 = scmp.eq.s32.totalorder %s24, 0
    %p281 = por %p279, %p280
    %p282 = scmp.ne.s32.totalorder %s270, %s271
    %p283 = scmp.eq.s32.totalorder %s25, 1
    %p284 = por %p282, %p283
    %p286 = scmp.ne.s32.totalorder %s271, %s285
    %p287 = scmp.eq.s32.totalorder %s25, 0
    %p288 = por %p286, %p287
    %s290 = sadd.s32 %s289, 1
    %p293 = scmp.eq.s32.totalorder %s19, 1
    %p294 = scmp.ne.s32.totalorder %s289, %s291
    %p295 = scmp.eq.s32.totalorder %s19, 0
    %p296 = por %p294, %p295
    %p297 = scmp.ne.s32.totalorder %s289, %s291
    %p298 = scmp.eq.s32.totalorder %s24, 1
    %p299 = por %p297, %p298
    %p300 = scmp.ne.s32.totalorder %s291, %s292
    %p301 = scmp.eq.s32.totalorder %s24, 0
    %p302 = por %p300, %p301
    %p303 = scmp.ne.s32.totalorder %s291, %s292
    %p304 = scmp.eq.s32.totalorder %s25, 1
    %p305 = por %p303, %p304
    %p307 = scmp.ne.s32.totalorder %s292, %s306
    %p308 = scmp.eq.s32.totalorder %s25, 0
    %p309 = por %p307, %p308
    %s310 = ssub.s32 %s19, %s26
    %p311 = scmp.eq.s32.totalorder %s310, 0
    %s313 = sadd.s32 %s312, 1
    %s314 = scalar_select %p311, %s312, %s313
    %p317 = pneg %p311
    %p318 = scmp.eq.s32.totalorder %s19, 1
    %p319 = por %p317, %p318
    %p320 = scmp.ne.s32.totalorder %s312, %s315
    %p321 = scmp.eq.s32.totalorder %s19, 0
    %p322 = por %p320, %p321
    %p323 = scmp.ne.s32.totalorder %s312, %s315
    %p324 = scmp.eq.s32.totalorder %s24, 1
    %p325 = por %p323, %p324
    %p326 = scmp.ne.s32.totalorder %s315, %s316
    %p327 = scmp.eq.s32.totalorder %s24, 0
    %p328 = por %p326, %p327
    %p329 = scmp.ne.s32.totalorder %s315, %s316
    %p330 = scmp.eq.s32.totalorder %s25, 1
    %p331 = por %p329, %p330
    %p333 = scmp.ne.s32.totalorder %s316, %s332
    %p334 = scmp.eq.s32.totalorder %s25, 0
    %p335 = por %p333, %p334
    %p336 = scmp.le.s32.totalorder 1, %s19
    %p337 = scmp.lt.s32.totalorder %s19, 3
    %p338 = pnand %p336, %p337
    %p339 = pneg %p338
    // Predicated region
    $region9: #{tpu_custom_call.1} parent=5 // pred_check
      _
    $region10: #{tpu_custom_call.1} parent=5 // pred_check_branch
      %341 = sbr.rel (%p338) target = $region12
    $region11: #{tpu_custom_call.1} parent=5 // pred_region
      %s342 = ssub.s32 %s19, 1
      // Predicated region
      $region13: #{tpu_custom_call.1} parent=11 // pred_check
        %p343 = pneg %p92
      $region14: #{tpu_custom_call.1} parent=11 // pred_check_branch
        %345 = sbr.rel (%p343) target = $region16
      $region15: #{tpu_custom_call.1} parent=11 // pred_region
        _
      $region16: #{tpu_custom_call.1} parent=11 // pred_fallthru
        _
      // Predicated region
      $region17: #{tpu_custom_call.1} parent=11 // pred_check
        %p346 = pneg %p113
      $region18: #{tpu_custom_call.1} parent=11 // pred_check_branch
        %348 = sbr.rel (%p346) target = $region20
      $region19: #{tpu_custom_call.1} parent=11 // pred_region
        _
      $region20: #{tpu_custom_call.1} parent=11 // pred_fallthru
        _
      // Predicated region
      $region21: #{tpu_custom_call.1} parent=11 // pred_check
        %p349 = pneg %p134
      $region22: #{tpu_custom_call.1} parent=11 // pred_check_branch
        %351 = sbr.rel (%p349) target = $region24
      $region23: #{tpu_custom_call.1} parent=11 // pred_region
        _
      $region24: #{tpu_custom_call.1} parent=11 // pred_fallthru
        _
      // Predicated region
      $region25: #{tpu_custom_call.1} parent=11 // pred_check
        %p352 = pneg %p155
      $region26: #{tpu_custom_call.1} parent=11 // pred_check_branch
        %354 = sbr.rel (%p352) target = $region28
      $region27: #{tpu_custom_call.1} parent=11 // pred_region
        _
      $region28: #{tpu_custom_call.1} parent=11 // pred_fallthru
        _
      // Predicated region
      $region29: #{tpu_custom_call.1} parent=11 // pred_check
        %p355 = pneg %p176
      $region30: #{tpu_custom_call.1} parent=11 // pred_check_branch
        %357 = sbr.rel (%p355) target = $region32
      $region31: #{tpu_custom_call.1} parent=11 // pred_region
        _
      $region32: #{tpu_custom_call.1} parent=11 // pred_fallthru
        _
      // Predicated region
      $region33: #{tpu_custom_call.1} parent=11 // pred_check
        %p358 = pneg %p197
      $region34: #{tpu_custom_call.1} parent=11 // pred_check_branch
        %360 = sbr.rel (%p358) target = $region36
      $region35: #{tpu_custom_call.1} parent=11 // pred_region
        _
      $region36: #{tpu_custom_call.1} parent=11 // pred_fallthru
        _
      // Predicated region
      $region37: #{tpu_custom_call.1} parent=11 // pred_check
        %p361 = pneg %p218
      $region38: #{tpu_custom_call.1} parent=11 // pred_check_branch
        %363 = sbr.rel (%p361) target = $region40
      $region39: #{tpu_custom_call.1} parent=11 // pred_region
        _
      $region40: #{tpu_custom_call.1} parent=11 // pred_fallthru
        _
      // Predicated region
      $region41: #{tpu_custom_call.1} parent=11 // pred_check
        %p364 = pneg %p239
      $region42: #{tpu_custom_call.1} parent=11 // pred_check_branch
        %366 = sbr.rel (%p364) target = $region44
      $region43: #{tpu_custom_call.1} parent=11 // pred_region
        _
      $region44: #{tpu_custom_call.1} parent=11 // pred_fallthru
        _
      // Predicated region
      $region45: #{tpu_custom_call.1} parent=11 // pred_check
        %p367 = pneg %p260
      $region46: #{tpu_custom_call.1} parent=11 // pred_check_branch
        %369 = sbr.rel (%p367) target = $region48
      $region47: #{tpu_custom_call.1} parent=11 // pred_region
        _
      $region48: #{tpu_custom_call.1} parent=11 // pred_fallthru
        _
      // Predicated region
      $region49: #{tpu_custom_call.1} parent=11 // pred_check
        %p370 = pneg %p281
      $region50: #{tpu_custom_call.1} parent=11 // pred_check_branch
        %372 = sbr.rel (%p370) target = $region52
      $region51: #{tpu_custom_call.1} parent=11 // pred_region
        _
      $region52: #{tpu_custom_call.1} parent=11 // pred_fallthru
        _
      // Predicated region
      $region53: #{tpu_custom_call.1} parent=11 // pred_check
        %p373 = pneg %p302
      $region54: #{tpu_custom_call.1} parent=11 // pred_check_branch
        %375 = sbr.rel (%p373) target = $region56
      $region55: #{tpu_custom_call.1} parent=11 // pred_region
        _
      $region56: #{tpu_custom_call.1} parent=11 // pred_fallthru
        _
    $region12: #{tpu_custom_call.1} parent=5 // pred_fallthru
      _
    %p376 = scmp.lt.s32.totalorder %s19, 2
    // Predicated region
    $region57: #{tpu_custom_call.1} parent=5 // pred_check
      %p377 = pneg %p376
    $region58: #{tpu_custom_call.1} parent=5 // pred_check_branch
      %379 = sbr.rel (%p377) target = $region60
    $region59: #{tpu_custom_call.1} parent=5 // pred_region
      // Predicated region
      $region61: #{tpu_custom_call.1} parent=59 // pred_check
        %p380 = pneg %p39
      $region62: #{tpu_custom_call.1} parent=59 // pred_check_branch
        %382 = sbr.rel (%p380) target = $region64
      $region63: #{tpu_custom_call.1} parent=59 // pred_region
        %p383 = scmp.lt.s32.totalorder %s19, 1
        %s384 = scalar_select %p383, %s19, 1
        %s385 = smul.addr %s384, 16
        %s386 = smul.addr %s385, 4
        %s387 = scalar_lea.vmem %s0, %s386
      $region64: #{tpu_custom_call.1} parent=59 // pred_fallthru
        _
      // Predicated region
      $region65: #{tpu_custom_call.1} parent=59 // pred_check
        %p388 = pneg %p65
      $region66: #{tpu_custom_call.1} parent=59 // pred_check_branch
        %390 = sbr.rel (%p388) target = $region68
      $region67: #{tpu_custom_call.1} parent=59 // pred_region
        %p391 = scmp.lt.s32.totalorder %s19, 1
        %s392 = scalar_select %p391, %s19, 1
        %s393 = smul.addr %s392, 16
        %s394 = smul.addr %s393, 8
        %s395 = scalar_lea.vmem %s1, %s394
      $region68: #{tpu_custom_call.1} parent=59 // pred_fallthru
        _
    $region60: #{tpu_custom_call.1} parent=5 // pred_fallthru
      _
    %p396 = scmp.le.s32.totalorder 1, %s19
    %p397 = scmp.lt.s32.totalorder %s19, 3
    %p398 = pnand %p396, %p397
    %p399 = pneg %p398
    // Predicated region
    $region69: #{tpu_custom_call.1} parent=5 // pred_check
      _
    $region70: #{tpu_custom_call.1} parent=5 // pred_check_branch
      %401 = sbr.rel (%p398) target = $region72
    $region71: #{tpu_custom_call.1} parent=5 // pred_region
      %s402 = ssub.s32 %s19, 1
      %p403 = scmp.lt.s32.totalorder %s24, 1
      %s404 = scalar_select %p403, %s24, 1
      %s405 = smul.addr %s404, 16
      %s406 = smul.addr %s405, 4
      %s407 = scalar_lea.vmem %s0, %s406
      %p408 = pneg %p45
      %p409 = pneg %p42
      %p410 = scmp.lt.s32.totalorder %s24, 1
      %s411 = scalar_select %p410, %s24, 1
      %s412 = smul.addr %s411, 16
      %s413 = smul.addr %s412, 8
      %s414 = scalar_lea.vmem %s1, %s413
      %p415 = pneg %p71
      %p416 = pneg %p68
      %p417 = pneg %p92
      %p418 = pneg %p89
      %p419 = pneg %p113
      %p420 = pneg %p110
      %p421 = pneg %p134
      %p422 = pneg %p131
      %p423 = pneg %p155
      %p424 = pneg %p152
      %p425 = pneg %p176
      %p426 = pneg %p173
      %p427 = pneg %p197
      %p428 = pneg %p194
      %p429 = pneg %p218
      %p430 = pneg %p215
      %p431 = pneg %p239
      %p432 = pneg %p236
      %p433 = pneg %p260
      %p434 = pneg %p257
      %p435 = pneg %p281
      %p436 = pneg %p278
      %p437 = pneg %p302
      %p438 = pneg %p299
      %p439 = pneg %p328
      %p440 = pneg %p325
      %p441 = scmp.lt.s32.totalorder %s24, 1
      %s442 = scalar_select %p441, %s24, 1
      %s443 = smul.addr %s442, 16
      %s444 = smul.addr %s443, 8
      %s445 = scalar_lea.vmem %s13, %s444
      %p446 = scmp.lt.s32.totalorder %s24, 1
      %s447 = scalar_select %p446, %s24, 1
      %s448 = smul.addr %s447, 16
      %s449 = smul.addr %s448, 4
      %s450 = scalar_lea.vmem %s0, %s449
      %p451 = scmp.lt.s32.totalorder %s24, 1
      %s452 = scalar_select %p451, %s24, 1
      %s453 = smul.addr %s452, 16
      %s454 = smul.addr %s453, 8
      %s455 = scalar_lea.vmem %s1, %s454
      %p456 = scmp.lt.s32.totalorder %s24, 1
      %s457 = scalar_select %p456, %s24, 1
      %s458 = smul.addr %s457, 16
      %s459 = smul.addr %s458, 8
      %s460 = scalar_lea.vmem %s13, %s459
      %v462 = vld [vmem:[%s450] sm:$0xf]
      %v463 = vld [vmem:[%s450 + $0x4] sm:$0xf]
      %v464 = vld [vmem:[%s450 + $0x8] sm:$0xf]
      %v465 = vld [vmem:[%s450 + $0xc] sm:$0xf]
      %v466 = vld [vmem:[%s450 + $0x10] sm:$0xf]
      %v467 = vld [vmem:[%s450 + $0x14] sm:$0xf]
      %v468 = vld [vmem:[%s450 + $0x18] sm:$0xf]
      %v469 = vld [vmem:[%s450 + $0x1c] sm:$0xf]
      %v470 = vld [vmem:[%s450 + $0x20] sm:$0xf]
      %v471 = vld [vmem:[%s450 + $0x24] sm:$0xf]
      %v472 = vld [vmem:[%s450 + $0x28] sm:$0xf]
      %v473 = vld [vmem:[%s450 + $0x2c] sm:$0xf]
      %v474 = vld [vmem:[%s450 + $0x30] sm:$0xf]
      %v475 = vld [vmem:[%s450 + $0x34] sm:$0xf]
      %v476 = vld [vmem:[%s450 + $0x38] sm:$0xf]
      %v477 = vld [vmem:[%s450 + $0x3c] sm:$0xf]
      %v478 = vld [vmem:[%s3] sm:$0xf]
      %v479 = vld [vmem:[%s3 + $0x4] sm:$0xf]
      %v480 = vld [vmem:[%s3 + $0x8] sm:$0xf]
      %v481 = vld [vmem:[%s3 + $0xc] sm:$0xf]
      %v482 = vld [vmem:[%s3 + $0x10] sm:$0xf]
      %v483 = vld [vmem:[%s3 + $0x14] sm:$0xf]
      %v484 = vld [vmem:[%s3 + $0x18] sm:$0xf]
      %v485 = vld [vmem:[%s3 + $0x1c] sm:$0xf]
      %v486 = vld [vmem:[%s4] sm:$0x1]
      %v488 = vlaneseq
      %v489 = vshrl.u32 %v488, 7
      %v490 = vsub.s32 0, %v489
      %v491 = vrot.slane %v486, %v490
      %v509 = vunpack.c.l.b16 %v462
      %v510 = vunpack.c.l.b16 %v463
      %v511 = vunpack.c.l.b16 %v464
      %v512 = vunpack.c.l.b16 %v465
      %v513 = vunpack.c.l.b16 %v466
      %v514 = vunpack.c.l.b16 %v467
      %v515 = vunpack.c.l.b16 %v468
      %v516 = vunpack.c.l.b16 %v469
      %v517 = vunpack.c.l.b16 %v470
      %v518 = vunpack.c.l.b16 %v471
      %v519 = vunpack.c.l.b16 %v472
      %v520 = vunpack.c.l.b16 %v473
      %v521 = vunpack.c.l.b16 %v474
      %v522 = vunpack.c.l.b16 %v475
      %v523 = vunpack.c.l.b16 %v476
      %v524 = vunpack.c.l.b16 %v477
      %v525 = vpack.c.b16 %v510, %v509
      %v526 = vpack.c.b16 %v512, %v511
      %v527 = vpack.c.b16 %v514, %v513
      %v528 = vpack.c.b16 %v516, %v515
      %v529 = vpack.c.b16 %v518, %v517
      %v530 = vpack.c.b16 %v520, %v519
      %v531 = vpack.c.b16 %v522, %v521
      %v532 = vpack.c.b16 %v524, %v523
      %v541 = vunpack.c.l.b16 %v478
      %v542 = vunpack.c.l.b16 %v479
      %v543 = vunpack.c.l.b16 %v480
      %v544 = vunpack.c.l.b16 %v481
      %v545 = vunpack.c.l.b16 %v482
      %v546 = vunpack.c.l.b16 %v483
      %v547 = vunpack.c.l.b16 %v484
      %v548 = vunpack.c.l.b16 %v485
      %v549 = vpack.c.b16 %v542, %v541
      %v550 = vpack.c.b16 %v544, %v543
      %v551 = vpack.c.b16 %v546, %v545
      %v552 = vpack.c.b16 %v548, %v547
      %vm557 = vcmask 523264
      %v559 = vsel %vm557, %v525, 0
      %v562 = vsel %vm557, %v526, 0
      %v565 = vsel %vm557, %v527, 0
      %v568 = vsel %vm557, %v528, 0
      %v571 = vsel %vm557, %v529, 0
      %v574 = vsel %vm557, %v530, 0
      %v577 = vsel %vm557, %v531, 0
      %v580 = vsel %vm557, %v532, 0
      %582 = vmatprep.subr.bf16.mxu0 0
      %583 = vmatpush1.bf16.msra.mxu0 %v549
      %584 = vmatprep.subr.bf16.mxu0 0
      %585 = vmatpush1.bf16.msra.mxu0 %v550
      %586 = vmatprep.subr.bf16.mxu0 0
      %587 = vmatpush1.bf16.msra.mxu0 %v551
      %588 = vmatprep.subr.bf16.mxu0 0
      %589 = vmatpush1.bf16.msra.mxu0 %v552
      %590 = vmatprep.subr.bf16.mxu0 0
      %591 = vmatpush1.bf16.msra.mxu0 0
      %592 = vmatprep.subr.bf16.mxu0 0
      %593 = vmatpush1.bf16.msra.mxu0 0
      %594 = vmatprep.subr.bf16.mxu0 0
      %595 = vmatpush1.bf16.msra.mxu0 0
      %596 = vmatprep.subr.bf16.mxu0 0
      %597 = vmatpush1.bf16.msra.mxu0 0
      %598 = vmatprep.subr.bf16.mxu0 0
      %599 = vmatpush1.bf16.msra.mxu0 0
      %600 = vmatprep.subr.bf16.mxu0 0
      %601 = vmatpush1.bf16.msra.mxu0 0
      %602 = vmatprep.subr.bf16.mxu0 0
      %603 = vmatpush1.bf16.msra.mxu0 0
      %604 = vmatprep.subr.bf16.mxu0 0
      %605 = vmatpush1.bf16.msra.mxu0 0
      %606 = vmatprep.subr.bf16.mxu0 0
      %607 = vmatpush1.bf16.msra.mxu0 0
      %608 = vmatprep.subr.bf16.mxu0 0
      %609 = vmatpush1.bf16.msra.mxu0 0
      %610 = vmatprep.subr.bf16.mxu0 0
      %611 = vmatpush1.bf16.msra.mxu0 0
      %612 = vmatprep.subr.bf16.mxu0 0
      %613 = vmatpush1.bf16.msra.mxu0 0
      %614 = vmatprep.mubr.bf16.mxu0 0
      %615 = vmatmul.mubr.bf16.gmra.mrb[0].mxu0 %v559
      %v616 = vpop.f32.mrb[0].mxu0
      %v617 = vadd.f32 %v491, %v616
      %v618 = vpop.f32.mrb[0].mxu0
      %v619 = vpop.f32.mrb[0].mxu0
      %v620 = vadd.f32 %v491, %v619
      %v621 = vpop.f32.mrb[0].mxu0
      %622 = vmatprep.mubr.bf16.mxu0 0
      %623 = vmatmul.mubr.bf16.gmra.mrb[0].mxu0 %v562
      %v624 = vpop.f32.mrb[0].mxu0
      %v625 = vadd.f32 %v491, %v624
      %v626 = vpop.f32.mrb[0].mxu0
      %v627 = vpop.f32.mrb[0].mxu0
      %v628 = vadd.f32 %v491, %v627
      %v629 = vpop.f32.mrb[0].mxu0
      %630 = vmatprep.mubr.bf16.mxu0 0
      %631 = vmatmul.mubr.bf16.gmra.mrb[0].mxu0 %v565
      %v632 = vpop.f32.mrb[0].mxu0
      %v633 = vadd.f32 %v491, %v632
      %v634 = vpop.f32.mrb[0].mxu0
      %v635 = vpop.f32.mrb[0].mxu0
      %v636 = vadd.f32 %v491, %v635
      %v637 = vpop.f32.mrb[0].mxu0
      %638 = vmatprep.mubr.bf16.mxu0 0
      %639 = vmatmul.mubr.bf16.gmra.mrb[0].mxu0 %v568
      %v640 = vpop.f32.mrb[0].mxu0
      %v641 = vadd.f32 %v491, %v640
      %v642 = vpop.f32.mrb[0].mxu0
      %v643 = vpop.f32.mrb[0].mxu0
      %v644 = vadd.f32 %v491, %v643
      %v645 = vpop.f32.mrb[0].mxu0
      %646 = vmatprep.mubr.bf16.mxu0 0
      %647 = vmatmul.mubr.bf16.gmra.mrb[0].mxu0 %v571
      %v648 = vpop.f32.mrb[0].mxu0
      %v649 = vadd.f32 %v491, %v648
      %v650 = vpop.f32.mrb[0].mxu0
      %v651 = vpop.f32.mrb[0].mxu0
      %v652 = vadd.f32 %v491, %v651
      %v653 = vpop.f32.mrb[0].mxu0
      %654 = vmatprep.mubr.bf16.mxu0 0
      %655 = vmatmul.mubr.bf16.gmra.mrb[0].mxu0 %v574
      %v656 = vpop.f32.mrb[0].mxu0
      %v657 = vadd.f32 %v491, %v656
      %v658 = vpop.f32.mrb[0].mxu0
      %v659 = vpop.f32.mrb[0].mxu0
      %v660 = vadd.f32 %v491, %v659
      %v661 = vpop.f32.mrb[0].mxu0
      %662 = vmatprep.mubr.bf16.mxu0 0
      %663 = vmatmul.mubr.bf16.gmra.mrb[0].mxu0 %v577
      %v664 = vpop.f32.mrb[0].mxu0
      %v665 = vadd.f32 %v491, %v664
      %v666 = vpop.f32.mrb[0].mxu0
      %v667 = vpop.f32.mrb[0].mxu0
      %v668 = vadd.f32 %v491, %v667
      %v669 = vpop.f32.mrb[0].mxu0
      %670 = vmatprep.mubr.bf16.mxu0 0
      %671 = vmatmul.mubr.bf16.gmra.mrb[0].mxu0 %v580
      %v672 = vpop.f32.mrb[0].mxu0
      %v673 = vadd.f32 %v491, %v672
      %v674 = vpop.f32.mrb[0].mxu0
      %v675 = vpop.f32.mrb[0].mxu0
      %v676 = vadd.f32 %v491, %v675
      %v677 = vpop.f32.mrb[0].mxu0
      %678 = vdwg.mxu0
      %v679 = vld [vmem:[%s5] sm:$0xf]
      %v680 = vld [vmem:[%s5 + $0x4] sm:$0xf]
      %v681 = vld [vmem:[%s5 + $0x8] sm:$0xf]
      %v682 = vld [vmem:[%s5 + $0xc] sm:$0xf]
      %v683 = vld [vmem:[%s5 + $0x10] sm:$0xf]
      %v684 = vld [vmem:[%s5 + $0x14] sm:$0xf]
      %v685 = vld [vmem:[%s5 + $0x18] sm:$0xf]
      %v686 = vld [vmem:[%s5 + $0x1c] sm:$0xf]
      %v687 = vld [vmem:[%s6] sm:$0x1]
      %v689 = vlaneseq
      %v690 = vshrl.u32 %v689, 7
      %v691 = vsub.s32 0, %v690
      %v692 = vrot.slane %v687, %v691
      %v702 = vunpack.c.l.b16 %v679
      %v703 = vunpack.c.l.b16 %v680
      %v704 = vunpack.c.l.b16 %v681
      %v705 = vunpack.c.l.b16 %v682
      %v706 = vunpack.c.l.b16 %v683
      %v707 = vunpack.c.l.b16 %v684
      %v708 = vunpack.c.l.b16 %v685
      %v709 = vunpack.c.l.b16 %v686
      %v710 = vpack.c.b16 %v703, %v702
      %v711 = vpack.c.b16 %v705, %v704
      %v712 = vpack.c.b16 %v707, %v706
      %v713 = vpack.c.b16 %v709, %v708
      %718 = vmatprep.subr.bf16.mxu0 0
      %719 = vmatpush1.bf16.msra.mxu0 %v710
      %720 = vmatprep.subr.bf16.mxu0 0
      %721 = vmatpush1.bf16.msra.mxu0 %v711
      %722 = vmatprep.subr.bf16.mxu0 0
      %723 = vmatpush1.bf16.msra.mxu0 %v712
      %724 = vmatprep.subr.bf16.mxu0 0
      %725 = vmatpush1.bf16.msra.mxu0 %v713
      %726 = vmatprep.subr.bf16.mxu0 0
      %727 = vmatpush1.bf16.msra.mxu0 0
      %728 = vmatprep.subr.bf16.mxu0 0
      %729 = vmatpush1.bf16.msra.mxu0 0
      %730 = vmatprep.subr.bf16.mxu0 0
      %731 = vmatpush1.bf16.msra.mxu0 0
      %732 = vmatprep.subr.bf16.mxu0 0
      %733 = vmatpush1.bf16.msra.mxu0 0
      %734 = vmatprep.subr.bf16.mxu0 0
      %735 = vmatpush1.bf16.msra.mxu0 0
      %736 = vmatprep.subr.bf16.mxu0 0
      %737 = vmatpush1.bf16.msra.mxu0 0
      %738 = vmatprep.subr.bf16.mxu0 0
      %739 = vmatpush1.bf16.msra.mxu0 0
      %740 = vmatprep.subr.bf16.mxu0 0
      %741 = vmatpush1.bf16.msra.mxu0 0
      %742 = vmatprep.subr.bf16.mxu0 0
      %743 = vmatpush1.bf16.msra.mxu0 0
      %744 = vmatprep.subr.bf16.mxu0 0
      %745 = vmatpush1.bf16.msra.mxu0 0
      %746 = vmatprep.subr.bf16.mxu0 0
      %747 = vmatpush1.bf16.msra.mxu0 0
      %748 = vmatprep.subr.bf16.mxu0 0
      %749 = vmatpush1.bf16.msra.mxu0 0
      %750 = vmatprep.mubr.bf16.mxu0 0
      %751 = vmatmul.mubr.bf16.gmra.mrb[0].mxu0 %v559
      %v752 = vpop.f32.mrb[0].mxu0
      %v753 = vadd.f32 %v692, %v752
      %v754 = vpop.f32.mrb[0].mxu0
      %v755 = vpop.f32.mrb[0].mxu0
      %v756 = vadd.f32 %v692, %v755
      %v757 = vpop.f32.mrb[0].mxu0
      %758 = vmatprep.mubr.bf16.mxu0 0
      %759 = vmatmul.mubr.bf16.gmra.mrb[0].mxu0 %v562
      %v760 = vpop.f32.mrb[0].mxu0
      %v761 = vadd.f32 %v692, %v760
      %v762 = vpop.f32.mrb[0].mxu0
      %v763 = vpop.f32.mrb[0].mxu0
      %v764 = vadd.f32 %v692, %v763
      %v765 = vpop.f32.mrb[0].mxu0
      %766 = vmatprep.mubr.bf16.mxu0 0
      %767 = vmatmul.mubr.bf16.gmra.mrb[0].mxu0 %v565
      %v768 = vpop.f32.mrb[0].mxu0
      %v769 = vadd.f32 %v692, %v768
      %v770 = vpop.f32.mrb[0].mxu0
      %v771 = vpop.f32.mrb[0].mxu0
      %v772 = vadd.f32 %v692, %v771
      %v773 = vpop.f32.mrb[0].mxu0
      %774 = vmatprep.mubr.bf16.mxu0 0
      %775 = vmatmul.mubr.bf16.gmra.mrb[0].mxu0 %v568
      %v776 = vpop.f32.mrb[0].mxu0
      %v777 = vadd.f32 %v692, %v776
      %v778 = vpop.f32.mrb[0].mxu0
      %v779 = vpop.f32.mrb[0].mxu0
      %v780 = vadd.f32 %v692, %v779
      %v781 = vpop.f32.mrb[0].mxu0
      %782 = vmatprep.mubr.bf16.mxu0 0
      %783 = vmatmul.mubr.bf16.gmra.mrb[0].mxu0 %v571
      %v784 = vpop.f32.mrb[0].mxu0
      %v785 = vadd.f32 %v692, %v784
      %v786 = vpop.f32.mrb[0].mxu0
      %v787 = vpop.f32.mrb[0].mxu0
      %v788 = vadd.f32 %v692, %v787
      %v789 = vpop.f32.mrb[0].mxu0
      %790 = vmatprep.mubr.bf16.mxu0 0
      %791 = vmatmul.mubr.bf16.gmra.mrb[0].mxu0 %v574
      %v792 = vpop.f32.mrb[0].mxu0
      %v793 = vadd.f32 %v692, %v792
      %v794 = vpop.f32.mrb[0].mxu0
      %v795 = vpop.f32.mrb[0].mxu0
      %v796 = vadd.f32 %v692, %v795
      %v797 = vpop.f32.mrb[0].mxu0
      %798 = vmatprep.mubr.bf16.mxu0 0
      %799 = vmatmul.mubr.bf16.gmra.mrb[0].mxu0 %v577
      %v800 = vpop.f32.mrb[0].mxu0
      %v801 = vadd.f32 %v692, %v800
      %v802 = vpop.f32.mrb[0].mxu0
      %v803 = vpop.f32.mrb[0].mxu0
      %v804 = vadd.f32 %v692, %v803
      %v805 = vpop.f32.mrb[0].mxu0
      %806 = vmatprep.mubr.bf16.mxu0 0
      %807 = vmatmul.mubr.bf16.gmra.mrb[0].mxu0 %v580
      %v808 = vpop.f32.mrb[0].mxu0
      %v809 = vadd.f32 %v692, %v808
      %v810 = vpop.f32.mrb[0].mxu0
      %v811 = vpop.f32.mrb[0].mxu0
      %v812 = vadd.f32 %v692, %v811
      %v813 = vpop.f32.mrb[0].mxu0
      %814 = vdwg.mxu0
      %v815 = vld [vmem:[%s7] sm:$0xf]
      %v816 = vld [vmem:[%s7 + $0x4] sm:$0xf]
      %v817 = vld [vmem:[%s7 + $0x8] sm:$0xf]
      %v818 = vld [vmem:[%s7 + $0xc] sm:$0xf]
      %v819 = vld [vmem:[%s7 + $0x10] sm:$0xf]
      %v820 = vld [vmem:[%s7 + $0x14] sm:$0xf]
      %v821 = vld [vmem:[%s7 + $0x18] sm:$0xf]
      %v822 = vld [vmem:[%s7 + $0x1c] sm:$0xf]
      %v823 = vld [vmem:[%s8] sm:$0x1]
      %v825 = vlaneseq
      %v826 = vshrl.u32 %v825, 7
      %v827 = vsub.s32 0, %v826
      %v828 = vrot.slane %v823, %v827
      %v838 = vunpack.c.l.b16 %v815
      %v839 = vunpack.c.l.b16 %v816
      %v840 = vunpack.c.l.b16 %v817
      %v841 = vunpack.c.l.b16 %v818
      %v842 = vunpack.c.l.b16 %v819
      %v843 = vunpack.c.l.b16 %v820
      %v844 = vunpack.c.l.b16 %v821
      %v845 = vunpack.c.l.b16 %v822
      %v846 = vpack.c.b16 %v839, %v838
      %v847 = vpack.c.b16 %v841, %v840
      %v848 = vpack.c.b16 %v843, %v842
      %v849 = vpack.c.b16 %v845, %v844
      %854 = vmatprep.subr.bf16.mxu0 0
      %855 = vmatpush1.bf16.msra.mxu0 %v846
      %856 = vmatprep.subr.bf16.mxu0 0
      %857 = vmatpush1.bf16.msra.mxu0 %v847
      %858 = vmatprep.subr.bf16.mxu0 0
      %859 = vmatpush1.bf16.msra.mxu0 %v848
      %860 = vmatprep.subr.bf16.mxu0 0
      %861 = vmatpush1.bf16.msra.mxu0 %v849
      %862 = vmatprep.subr.bf16.mxu0 0
      %863 = vmatpush1.bf16.msra.mxu0 0
      %864 = vmatprep.subr.bf16.mxu0 0
      %865 = vmatpush1.bf16.msra.mxu0 0
      %866 = vmatprep.subr.bf16.mxu0 0
      %867 = vmatpush1.bf16.msra.mxu0 0
      %868 = vmatprep.subr.bf16.mxu0 0
      %869 = vmatpush1.bf16.msra.mxu0 0
      %870 = vmatprep.subr.bf16.mxu0 0
      %871 = vmatpush1.bf16.msra.mxu0 0
      %872 = vmatprep.subr.bf16.mxu0 0
      %873 = vmatpush1.bf16.msra.mxu0 0
      %874 = vmatprep.subr.bf16.mxu0 0
      %875 = vmatpush1.bf16.msra.mxu0 0
      %876 = vmatprep.subr.bf16.mxu0 0
      %877 = vmatpush1.bf16.msra.mxu0 0
      %878 = vmatprep.subr.bf16.mxu0 0
      %879 = vmatpush1.bf16.msra.mxu0 0
      %880 = vmatprep.subr.bf16.mxu0 0
      %881 = vmatpush1.bf16.msra.mxu0 0
      %882 = vmatprep.subr.bf16.mxu0 0
      %883 = vmatpush1.bf16.msra.mxu0 0
      %884 = vmatprep.subr.bf16.mxu0 0
      %885 = vmatpush1.bf16.msra.mxu0 0
      %886 = vmatprep.mubr.bf16.mxu0 0
      %887 = vmatmul.mubr.bf16.gmra.mrb[0].mxu0 %v559
      %v888 = vpop.f32.mrb[0].mxu0
      %v889 = vadd.f32 %v828, %v888
      %v890 = vpop.f32.mrb[0].mxu0
      %v891 = vpop.f32.mrb[0].mxu0
      %v892 = vadd.f32 %v828, %v891
      %v893 = vpop.f32.mrb[0].mxu0
      %894 = vmatprep.mubr.bf16.mxu0 0
      %895 = vmatmul.mubr.bf16.gmra.mrb[0].mxu0 %v562
      %v896 = vpop.f32.mrb[0].mxu0
      %v897 = vadd.f32 %v828, %v896
      %v898 = vpop.f32.mrb[0].mxu0
      %v899 = vpop.f32.mrb[0].mxu0
      %v900 = vadd.f32 %v828, %v899
      %v901 = vpop.f32.mrb[0].mxu0
      %902 = vmatprep.mubr.bf16.mxu0 0
      %903 = vmatmul.mubr.bf16.gmra.mrb[0].mxu0 %v565
      %v904 = vpop.f32.mrb[0].mxu0
      %v905 = vadd.f32 %v828, %v904
      %v906 = vpop.f32.mrb[0].mxu0
      %v907 = vpop.f32.mrb[0].mxu0
      %v908 = vadd.f32 %v828, %v907
      %v909 = vpop.f32.mrb[0].mxu0
      %910 = vmatprep.mubr.bf16.mxu0 0
      %911 = vmatmul.mubr.bf16.gmra.mrb[0].mxu0 %v568
      %v912 = vpop.f32.mrb[0].mxu0
      %v913 = vadd.f32 %v828, %v912
      %v914 = vpop.f32.mrb[0].mxu0
      %v915 = vpop.f32.mrb[0].mxu0
      %v916 = vadd.f32 %v828, %v915
      %v917 = vpop.f32.mrb[0].mxu0
      %918 = vmatprep.mubr.bf16.mxu0 0
      %919 = vmatmul.mubr.bf16.gmra.mrb[0].mxu0 %v571
      %v920 = vpop.f32.mrb[0].mxu0
      %v921 = vadd.f32 %v828, %v920
      %v922 = vpop.f32.mrb[0].mxu0
      %v923 = vpop.f32.mrb[0].mxu0
      %v924 = vadd.f32 %v828, %v923
      %v925 = vpop.f32.mrb[0].mxu0
      %926 = vmatprep.mubr.bf16.mxu0 0
      %927 = vmatmul.mubr.bf16.gmra.mrb[0].mxu0 %v574
      %v928 = vpop.f32.mrb[0].mxu0
      %v929 = vadd.f32 %v828, %v928
      %v930 = vpop.f32.mrb[0].mxu0
      %v931 = vpop.f32.mrb[0].mxu0
      %v932 = vadd.f32 %v828, %v931
      %v933 = vpop.f32.mrb[0].mxu0
      %934 = vmatprep.mubr.bf16.mxu0 0
      %935 = vmatmul.mubr.bf16.gmra.mrb[0].mxu0 %v577
      %v936 = vpop.f32.mrb[0].mxu0
      %v937 = vadd.f32 %v828, %v936
      %v938 = vpop.f32.mrb[0].mxu0
      %v939 = vpop.f32.mrb[0].mxu0
      %v940 = vadd.f32 %v828, %v939
      %v941 = vpop.f32.mrb[0].mxu0
      %942 = vmatprep.mubr.bf16.mxu0 0
      %943 = vmatmul.mubr.bf16.gmra.mrb[0].mxu0 %v580
      %v944 = vpop.f32.mrb[0].mxu0
      %v945 = vadd.f32 %v828, %v944
      %v946 = vpop.f32.mrb[0].mxu0
      %v947 = vpop.f32.mrb[0].mxu0
      %v948 = vadd.f32 %v828, %v947
      %v949 = vpop.f32.mrb[0].mxu0
      %950 = vdwg.mxu0
      %v951 = vmul.f32 %v617, 0.25
      %v952 = vmul.f32 %v620, 0.25
      %v953 = vmul.f32 %v625, 0.25
      %v954 = vmul.f32 %v628, 0.25
      %v955 = vmul.f32 %v633, 0.25
      %v956 = vmul.f32 %v636, 0.25
      %v957 = vmul.f32 %v641, 0.25
      %v958 = vmul.f32 %v644, 0.25
      %v959 = vmul.f32 %v649, 0.25
      %v960 = vmul.f32 %v652, 0.25
      %v961 = vmul.f32 %v657, 0.25
      %v962 = vmul.f32 %v660, 0.25
      %v963 = vmul.f32 %v665, 0.25
      %v964 = vmul.f32 %v668, 0.25
      %v965 = vmul.f32 %v673, 0.25
      %v966 = vmul.f32 %v676, 0.25
      %vm967 = vcmask 130048
      %v969 = vsel %vm967, %v951, 0
      %v972 = vsel %vm967, %v952, 0
      %v975 = vsel %vm967, %v953, 0
      %v978 = vsel %vm967, %v954, 0
      %v981 = vsel %vm967, %v955, 0
      %v984 = vsel %vm967, %v956, 0
      %v987 = vsel %vm967, %v957, 0
      %v990 = vsel %vm967, %v958, 0
      %v993 = vsel %vm967, %v959, 0
      %v996 = vsel %vm967, %v960, 0
      %v999 = vsel %vm967, %v961, 0
      %v1002 = vsel %vm967, %v962, 0
      %v1005 = vsel %vm967, %v963, 0
      %v1008 = vsel %vm967, %v964, 0
      %v1011 = vsel %vm967, %v965, 0
      %v1014 = vsel %vm967, %v966, 0
      %v1017 = vsel %vm967, %v753, 0
      %v1020 = vsel %vm967, %v756, 0
      %v1023 = vsel %vm967, %v761, 0
      %v1026 = vsel %vm967, %v764, 0
      %v1029 = vsel %vm967, %v769, 0
      %v1032 = vsel %vm967, %v772, 0
      %v1035 = vsel %vm967, %v777, 0
      %v1038 = vsel %vm967, %v780, 0
      %v1041 = vsel %vm967, %v785, 0
      %v1044 = vsel %vm967, %v788, 0
      %v1047 = vsel %vm967, %v793, 0
      %v1050 = vsel %vm967, %v796, 0
      %v1053 = vsel %vm967, %v801, 0
      %v1056 = vsel %vm967, %v804, 0
      %v1059 = vsel %vm967, %v809, 0
      %v1062 = vsel %vm967, %v812, 0
      %1064 = vmatprep.subr.mxu0 0.0
      %1065 = vmatpush1.xpose.msra.mxu0 %v1017
      %1066 = vmatprep.subr.mxu0 0.0
      %1067 = vmatpush1.xpose.msra.mxu0 %v1020
      %1068 = vmatprep.subr.mxu0 0.0
      %1069 = vmatpush1.xpose.msra.mxu0 %v1023
      %1070 = vmatprep.subr.mxu0 0.0
      %1071 = vmatpush1.xpose.msra.mxu0 %v1026
      %1072 = vmatprep.subr.mxu0 0.0
      %1073 = vmatpush1.xpose.msra.mxu0 %v1029
      %1074 = vmatprep.subr.mxu0 0.0
      %1075 = vmatpush1.xpose.msra.mxu0 %v1032
      %1076 = vmatprep.subr.mxu0 0.0
      %1077 = vmatpush1.xpose.msra.mxu0 %v1035
      %1078 = vmatprep.subr.mxu0 0.0
      %1079 = vmatpush1.xpose.msra.mxu0 %v1038
      %1080 = vmatprep.subr.mxu0 0.0
      %1081 = vmatpush1.xpose.msra.mxu0 %v1041
      %1082 = vmatprep.subr.mxu0 0.0
      %1083 = vmatpush1.xpose.msra.mxu0 %v1044
      %1084 = vmatprep.subr.mxu0 0.0
      %1085 = vmatpush1.xpose.msra.mxu0 %v1047
      %1086 = vmatprep.subr.mxu0 0.0
      %1087 = vmatpush1.xpose.msra.mxu0 %v1050
      %1088 = vmatprep.subr.mxu0 0.0
      %1089 = vmatpush1.xpose.msra.mxu0 %v1053
      %1090 = vmatprep.subr.mxu0 0.0
      %1091 = vmatpush1.xpose.msra.mxu0 %v1056
      %1092 = vmatprep.subr.mxu0 0.0
      %1093 = vmatpush1.xpose.msra.mxu0 %v1059
      %1094 = vmatprep.subr.mxu0 0.0
      %1095 = vmatpush1.xpose.msra.mxu0 %v1062
      %1096 = vmatprep.subr.mxu0 0.0
      %1097 = vmatpush1.xpose.msra.mxu0 0.0
      %1098 = vmatprep.subr.mxu0 0.0
      %1099 = vmatpush1.xpose.msra.mxu0 0.0
      %1100 = vmatprep.subr.mxu0 0.0
      %1101 = vmatpush1.xpose.msra.mxu0 0.0
      %1102 = vmatprep.subr.mxu0 0.0
      %1103 = vmatpush1.xpose.msra.mxu0 0.0
      %1104 = vmatprep.subr.mxu0 0.0
      %1105 = vmatpush1.xpose.msra.mxu0 0.0
      %1106 = vmatprep.subr.mxu0 0.0
      %1107 = vmatpush1.xpose.msra.mxu0 0.0
      %1108 = vmatprep.subr.mxu0 0.0
      %1109 = vmatpush1.xpose.msra.mxu0 0.0
      %1110 = vmatprep.subr.mxu0 0.0
      %1111 = vmatpush1.xpose.msra.mxu0 0.0
      %1112 = vmatprep.subr.mxu0 0.0
      %1113 = vmatpush1.xpose.msra.mxu0 0.0
      %1114 = vmatprep.subr.mxu0 0.0
      %1115 = vmatpush1.xpose.msra.mxu0 0.0
      %1116 = vmatprep.subr.mxu0 0.0
      %1117 = vmatpush1.xpose.msra.mxu0 0.0
      %1118 = vmatprep.subr.mxu0 0.0
      %1119 = vmatpush1.xpose.msra.mxu0 0.0
      %1120 = vmatprep.subr.mxu0 0.0
      %1121 = vmatpush1.xpose.msra.mxu0 0.0
      %1122 = vmatprep.subr.mxu0 0.0
      %1123 = vmatpush1.xpose.msra.mxu0 0.0
      %1124 = vmatprep.subr.mxu0 0.0
      %1125 = vmatpush1.xpose.msra.mxu0 0.0
      %1126 = vmatprep.subr.mxu0 0.0
      %1127 = vmatpush1.xpose.msra.mxu0 0.0
      %1128 = vmatprep.mubr.f32.mxu0 0.0
      %1129 = vmatmul.mubr.f32.gmra.mrb[0].mxu0 %v969
      %v1130 = vpop.f32.mrb[0].mxu0
      %v1131 = vadd.f32 0.0, %v1130
      %v1132 = vpop.f32.mrb[0].mxu0
      %1133 = vmatprep.mubr.f32.mxu0 0.0
      %1134 = vmatmul.mubr.f32.gmra.mrb[0].mxu0 %v972
      %v1135 = vpop.f32.mrb[0].mxu0
      %v1136 = vadd.f32 0.0, %v1135
      %v1137 = vpop.f32.mrb[0].mxu0
      %1138 = vmatprep.mubr.f32.mxu0 0.0
      %1139 = vmatmul.mubr.f32.gmra.mrb[0].mxu0 %v975
      %v1140 = vpop.f32.mrb[0].mxu0
      %v1141 = vadd.f32 0.0, %v1140
      %v1142 = vpop.f32.mrb[0].mxu0
      %1143 = vmatprep.mubr.f32.mxu0 0.0
      %1144 = vmatmul.mubr.f32.gmra.mrb[0].mxu0 %v978
      %v1145 = vpop.f32.mrb[0].mxu0
      %v1146 = vadd.f32 0.0, %v1145
      %v1147 = vpop.f32.mrb[0].mxu0
      %1148 = vmatprep.mubr.f32.mxu0 0.0
      %1149 = vmatmul.mubr.f32.gmra.mrb[0].mxu0 %v981
      %v1150 = vpop.f32.mrb[0].mxu0
      %v1151 = vadd.f32 0.0, %v1150
      %v1152 = vpop.f32.mrb[0].mxu0
      %1153 = vmatprep.mubr.f32.mxu0 0.0
      %1154 = vmatmul.mubr.f32.gmra.mrb[0].mxu0 %v984
      %v1155 = vpop.f32.mrb[0].mxu0
      %v1156 = vadd.f32 0.0, %v1155
      %v1157 = vpop.f32.mrb[0].mxu0
      %1158 = vmatprep.mubr.f32.mxu0 0.0
      %1159 = vmatmul.mubr.f32.gmra.mrb[0].mxu0 %v987
      %v1160 = vpop.f32.mrb[0].mxu0
      %v1161 = vadd.f32 0.0, %v1160
      %v1162 = vpop.f32.mrb[0].mxu0
      %1163 = vmatprep.mubr.f32.mxu0 0.0
      %1164 = vmatmul.mubr.f32.gmra.mrb[0].mxu0 %v990
      %v1165 = vpop.f32.mrb[0].mxu0
      %v1166 = vadd.f32 0.0, %v1165
      %v1167 = vpop.f32.mrb[0].mxu0
      %1168 = vmatprep.mubr.f32.mxu0 0.0
      %1169 = vmatmul.mubr.f32.gmra.mrb[0].mxu0 %v993
      %v1170 = vpop.f32.mrb[0].mxu0
      %v1171 = vadd.f32 0.0, %v1170
      %v1172 = vpop.f32.mrb[0].mxu0
      %1173 = vmatprep.mubr.f32.mxu0 0.0
      %1174 = vmatmul.mubr.f32.gmra.mrb[0].mxu0 %v996
      %v1175 = vpop.f32.mrb[0].mxu0
      %v1176 = vadd.f32 0.0, %v1175
      %v1177 = vpop.f32.mrb[0].mxu0
      %1178 = vmatprep.mubr.f32.mxu0 0.0
      %1179 = vmatmul.mubr.f32.gmra.mrb[0].mxu0 %v999
      %v1180 = vpop.f32.mrb[0].mxu0
      %v1181 = vadd.f32 0.0, %v1180
      %v1182 = vpop.f32.mrb[0].mxu0
      %1183 = vmatprep.mubr.f32.mxu0 0.0
      %1184 = vmatmul.mubr.f32.gmra.mrb[0].mxu0 %v1002
      %v1185 = vpop.f32.mrb[0].mxu0
      %v1186 = vadd.f32 0.0, %v1185
      %v1187 = vpop.f32.mrb[0].mxu0
      %1188 = vmatprep.mubr.f32.mxu0 0.0
      %1189 = vmatmul.mubr.f32.gmra.mrb[0].mxu0 %v1005
      %v1190 = vpop.f32.mrb[0].mxu0
      %v1191 = vadd.f32 0.0, %v1190
      %v1192 = vpop.f32.mrb[0].mxu0
      %1193 = vmatprep.mubr.f32.mxu0 0.0
      %1194 = vmatmul.mubr.f32.gmra.mrb[0].mxu0 %v1008
      %v1195 = vpop.f32.mrb[0].mxu0
      %v1196 = vadd.f32 0.0, %v1195
      %v1197 = vpop.f32.mrb[0].mxu0
      %1198 = vmatprep.mubr.f32.mxu0 0.0
      %1199 = vmatmul.mubr.f32.gmra.mrb[0].mxu0 %v1011
      %v1200 = vpop.f32.mrb[0].mxu0
      %v1201 = vadd.f32 0.0, %v1200
      %v1202 = vpop.f32.mrb[0].mxu0
      %1203 = vmatprep.mubr.f32.mxu0 0.0
      %1204 = vmatmul.mubr.f32.gmra.mrb[0].mxu0 %v1014
      %v1205 = vpop.f32.mrb[0].mxu0
      %v1206 = vadd.f32 0.0, %v1205
      %v1207 = vpop.f32.mrb[0].mxu0
      %1208 = vdwg.mxu0
      %v1209 = vld [vmem:[%s2] sm:$0xff]
      %v1210 = vld [vmem:[%s2 + $0x8] sm:$0xff]
      %v1211 = vld [vmem:[%s2 + $0x10] sm:$0xff]
      %v1212 = vld [vmem:[%s2 + $0x18] sm:$0xff]
      %v1213 = vld [vmem:[%s2 + $0x20] sm:$0xff]
      %v1214 = vld [vmem:[%s2 + $0x28] sm:$0xff]
      %v1215 = vld [vmem:[%s2 + $0x30] sm:$0xff]
      %v1216 = vld [vmem:[%s2 + $0x38] sm:$0xff]
      %v1217 = vld [vmem:[%s2 + $0x40] sm:$0xff]
      %v1218 = vld [vmem:[%s2 + $0x48] sm:$0xff]
      %v1219 = vld [vmem:[%s2 + $0x50] sm:$0xff]
      %v1220 = vld [vmem:[%s2 + $0x58] sm:$0xff]
      %v1221 = vld [vmem:[%s2 + $0x60] sm:$0xff]
      %v1222 = vld [vmem:[%s2 + $0x68] sm:$0xff]
      %v1223 = vld [vmem:[%s2 + $0x70] sm:$0xff]
      %v1224 = vld [vmem:[%s2 + $0x78] sm:$0xff]
      %vm1225 = vcmp.gt.f32.partialorder %v1209, 0.0
      %vm1226 = vcmp.gt.f32.partialorder %v1210, 0.0
      %vm1227 = vcmp.gt.f32.partialorder %v1211, 0.0
      %vm1228 = vcmp.gt.f32.partialorder %v1212, 0.0
      %vm1229 = vcmp.gt.f32.partialorder %v1213, 0.0
      %vm1230 = vcmp.gt.f32.partialorder %v1214, 0.0
      %vm1231 = vcmp.gt.f32.partialorder %v1215, 0.0
      %vm1232 = vcmp.gt.f32.partialorder %v1216, 0.0
      %vm1233 = vcmp.gt.f32.partialorder %v1217, 0.0
      %vm1234 = vcmp.gt.f32.partialorder %v1218, 0.0
      %vm1235 = vcmp.gt.f32.partialorder %v1219, 0.0
      %vm1236 = vcmp.gt.f32.partialorder %v1220, 0.0
      %vm1237 = vcmp.gt.f32.partialorder %v1221, 0.0
      %vm1238 = vcmp.gt.f32.partialorder %v1222, 0.0
      %vm1239 = vcmp.gt.f32.partialorder %v1223, 0.0
      %vm1240 = vcmp.gt.f32.partialorder %v1224, 0.0
      %v1241 = vsel %vm1225, %v1131, -1e+30
      %v1242 = vsel %vm1226, %v1136, -1e+30
      %v1243 = vsel %vm1227, %v1141, -1e+30
      %v1244 = vsel %vm1228, %v1146, -1e+30
      %v1245 = vsel %vm1229, %v1151, -1e+30
      %v1246 = vsel %vm1230, %v1156, -1e+30
      %v1247 = vsel %vm1231, %v1161, -1e+30
      %v1248 = vsel %vm1232, %v1166, -1e+30
      %v1249 = vsel %vm1233, %v1171, -1e+30
      %v1250 = vsel %vm1234, %v1176, -1e+30
      %v1251 = vsel %vm1235, %v1181, -1e+30
      %v1252 = vsel %vm1236, %v1186, -1e+30
      %v1253 = vsel %vm1237, %v1191, -1e+30
      %v1254 = vsel %vm1238, %v1196, -1e+30
      %v1255 = vsel %vm1239, %v1201, -1e+30
      %v1256 = vsel %vm1240, %v1206, -1e+30
      %1257 = vmax.xlane.f32.xlu0 %v1241
      %v1258 = vpop.xlane.xlu0 %1257
      %1259 = vmax.xlane.f32.xlu0 %v1242
      %v1260 = vpop.xlane.xlu0 %1259
      %1261 = vmax.xlane.f32.xlu0 %v1243
      %v1262 = vpop.xlane.xlu0 %1261
      %1263 = vmax.xlane.f32.xlu0 %v1244
      %v1264 = vpop.xlane.xlu0 %1263
      %1265 = vmax.xlane.f32.xlu0 %v1245
      %v1266 = vpop.xlane.xlu0 %1265
      %1267 = vmax.xlane.f32.xlu0 %v1246
      %v1268 = vpop.xlane.xlu0 %1267
      %1269 = vmax.xlane.f32.xlu0 %v1247
      %v1270 = vpop.xlane.xlu0 %1269
      %1271 = vmax.xlane.f32.xlu0 %v1248
      %v1272 = vpop.xlane.xlu0 %1271
      %1273 = vmax.xlane.f32.xlu0 %v1249
      %v1274 = vpop.xlane.xlu0 %1273
      %1275 = vmax.xlane.f32.xlu0 %v1250
      %v1276 = vpop.xlane.xlu0 %1275
      %1277 = vmax.xlane.f32.xlu0 %v1251
      %v1278 = vpop.xlane.xlu0 %1277
      %1279 = vmax.xlane.f32.xlu0 %v1252
      %v1280 = vpop.xlane.xlu0 %1279
      %1281 = vmax.xlane.f32.xlu0 %v1253
      %v1282 = vpop.xlane.xlu0 %1281
      %1283 = vmax.xlane.f32.xlu0 %v1254
      %v1284 = vpop.xlane.xlu0 %1283
      %1285 = vmax.xlane.f32.xlu0 %v1255
      %v1286 = vpop.xlane.xlu0 %1285
      %1287 = vmax.xlane.f32.xlu0 %v1256
      %v1288 = vpop.xlane.xlu0 %1287
      %v1289 = vsub.f32 %v1241, %v1258
      %v1290 = vsub.f32 %v1242, %v1260
      %v1291 = vsub.f32 %v1243, %v1262
      %v1292 = vsub.f32 %v1244, %v1264
      %v1293 = vsub.f32 %v1245, %v1266
      %v1294 = vsub.f32 %v1246, %v1268
      %v1295 = vsub.f32 %v1247, %v1270
      %v1296 = vsub.f32 %v1248, %v1272
      %v1297 = vsub.f32 %v1249, %v1274
      %v1298 = vsub.f32 %v1250, %v1276
      %v1299 = vsub.f32 %v1251, %v1278
      %v1300 = vsub.f32 %v1252, %v1280
      %v1301 = vsub.f32 %v1253, %v1282
      %v1302 = vsub.f32 %v1254, %v1284
      %v1303 = vsub.f32 %v1255, %v1286
      %v1304 = vsub.f32 %v1256, %v1288
      %v1305 = vmul.f32 %v1289, 1.442695
      %v1306 = vpow.pop %v1305
      %v1307 = vmul.f32 %v1290, 1.442695
      %v1308 = vpow.pop %v1307
      %v1309 = vmul.f32 %v1291, 1.442695
      %v1310 = vpow.pop %v1309
      %v1311 = vmul.f32 %v1292, 1.442695
      %v1312 = vpow.pop %v1311
      %v1313 = vmul.f32 %v1293, 1.442695
      %v1314 = vpow.pop %v1313
      %v1315 = vmul.f32 %v1294, 1.442695
      %v1316 = vpow.pop %v1315
      %v1317 = vmul.f32 %v1295, 1.442695
      %v1318 = vpow.pop %v1317
      %v1319 = vmul.f32 %v1296, 1.442695
      %v1320 = vpow.pop %v1319
      %v1321 = vmul.f32 %v1297, 1.442695
      %v1322 = vpow.pop %v1321
      %v1323 = vmul.f32 %v1298, 1.442695
      %v1324 = vpow.pop %v1323
      %v1325 = vmul.f32 %v1299, 1.442695
      %v1326 = vpow.pop %v1325
      %v1327 = vmul.f32 %v1300, 1.442695
      %v1328 = vpow.pop %v1327
      %v1329 = vmul.f32 %v1301, 1.442695
      %v1330 = vpow.pop %v1329
      %v1331 = vmul.f32 %v1302, 1.442695
      %v1332 = vpow.pop %v1331
      %v1333 = vmul.f32 %v1303, 1.442695
      %v1334 = vpow.pop %v1333
      %v1335 = vmul.f32 %v1304, 1.442695
      %v1336 = vpow.pop %v1335
      %v1337 = vmul.f32 %v1306, %v1209
      %v1338 = vmul.f32 %v1308, %v1210
      %v1339 = vmul.f32 %v1310, %v1211
      %v1340 = vmul.f32 %v1312, %v1212
      %v1341 = vmul.f32 %v1314, %v1213
      %v1342 = vmul.f32 %v1316, %v1214
      %v1343 = vmul.f32 %v1318, %v1215
      %v1344 = vmul.f32 %v1320, %v1216
      %v1345 = vmul.f32 %v1322, %v1217
      %v1346 = vmul.f32 %v1324, %v1218
      %v1347 = vmul.f32 %v1326, %v1219
      %v1348 = vmul.f32 %v1328, %v1220
      %v1349 = vmul.f32 %v1330, %v1221
      %v1350 = vmul.f32 %v1332, %v1222
      %v1351 = vmul.f32 %v1334, %v1223
      %v1352 = vmul.f32 %v1336, %v1224
      %1353 = vadd.xlane.f32.xlu0 %v1337
      %v1354 = vpop.xlane.xlu0 %1353
      %1355 = vadd.xlane.f32.xlu0 %v1338
      %v1356 = vpop.xlane.xlu0 %1355
      %1357 = vadd.xlane.f32.xlu0 %v1339
      %v1358 = vpop.xlane.xlu0 %1357
      %1359 = vadd.xlane.f32.xlu0 %v1340
      %v1360 = vpop.xlane.xlu0 %1359
      %1361 = vadd.xlane.f32.xlu0 %v1341
      %v1362 = vpop.xlane.xlu0 %1361
      %1363 = vadd.xlane.f32.xlu0 %v1342
      %v1364 = vpop.xlane.xlu0 %1363
      %1365 = vadd.xlane.f32.xlu0 %v1343
      %v1366 = vpop.xlane.xlu0 %1365
      %1367 = vadd.xlane.f32.xlu0 %v1344
      %v1368 = vpop.xlane.xlu0 %1367
      %1369 = vadd.xlane.f32.xlu0 %v1345
      %v1370 = vpop.xlane.xlu0 %1369
      %1371 = vadd.xlane.f32.xlu0 %v1346
      %v1372 = vpop.xlane.xlu0 %1371
      %1373 = vadd.xlane.f32.xlu0 %v1347
      %v1374 = vpop.xlane.xlu0 %1373
      %1375 = vadd.xlane.f32.xlu0 %v1348
      %v1376 = vpop.xlane.xlu0 %1375
      %1377 = vadd.xlane.f32.xlu0 %v1349
      %v1378 = vpop.xlane.xlu0 %1377
      %1379 = vadd.xlane.f32.xlu0 %v1350
      %v1380 = vpop.xlane.xlu0 %1379
      %1381 = vadd.xlane.f32.xlu0 %v1351
      %v1382 = vpop.xlane.xlu0 %1381
      %1383 = vadd.xlane.f32.xlu0 %v1352
      %v1384 = vpop.xlane.xlu0 %1383
      %vm1385 = vcmp.gt.f32.partialorder %v1354, 0.0
      %vm1386 = vcmp.gt.f32.partialorder %v1356, 0.0
      %vm1387 = vcmp.gt.f32.partialorder %v1358, 0.0
      %vm1388 = vcmp.gt.f32.partialorder %v1360, 0.0
      %vm1389 = vcmp.gt.f32.partialorder %v1362, 0.0
      %vm1390 = vcmp.gt.f32.partialorder %v1364, 0.0
      %vm1391 = vcmp.gt.f32.partialorder %v1366, 0.0
      %vm1392 = vcmp.gt.f32.partialorder %v1368, 0.0
      %vm1393 = vcmp.gt.f32.partialorder %v1370, 0.0
      %vm1394 = vcmp.gt.f32.partialorder %v1372, 0.0
      %vm1395 = vcmp.gt.f32.partialorder %v1374, 0.0
      %vm1396 = vcmp.gt.f32.partialorder %v1376, 0.0
      %vm1397 = vcmp.gt.f32.partialorder %v1378, 0.0
      %vm1398 = vcmp.gt.f32.partialorder %v1380, 0.0
      %vm1399 = vcmp.gt.f32.partialorder %v1382, 0.0
      %vm1400 = vcmp.gt.f32.partialorder %v1384, 0.0
      %v1401 = vmax.f32 %v1354, 1e-30
      %v1402 = vmax.f32 %v1356, 1e-30
      %v1403 = vmax.f32 %v1358, 1e-30
      %v1404 = vmax.f32 %v1360, 1e-30
      %v1405 = vmax.f32 %v1362, 1e-30
      %v1406 = vmax.f32 %v1364, 1e-30
      %v1407 = vmax.f32 %v1366, 1e-30
      %v1408 = vmax.f32 %v1368, 1e-30
      %v1409 = vmax.f32 %v1370, 1e-30
      %v1410 = vmax.f32 %v1372, 1e-30
      %v1411 = vmax.f32 %v1374, 1e-30
      %v1412 = vmax.f32 %v1376, 1e-30
      %v1413 = vmax.f32 %v1378, 1e-30
      %v1414 = vmax.f32 %v1380, 1e-30
      %v1415 = vmax.f32 %v1382, 1e-30
      %v1416 = vmax.f32 %v1384, 1e-30
      %v1417 = vrcp.pop %v1401
      %v1418 = vrcp.pop %v1402
      %v1419 = vrcp.pop %v1403
      %v1420 = vrcp.pop %v1404
      %v1421 = vrcp.pop %v1405
      %v1422 = vrcp.pop %v1406
      %v1423 = vrcp.pop %v1407
      %v1424 = vrcp.pop %v1408
      %v1425 = vrcp.pop %v1409
      %v1426 = vrcp.pop %v1410
      %v1427 = vrcp.pop %v1411
      %v1428 = vrcp.pop %v1412
      %v1429 = vrcp.pop %v1413
      %v1430 = vrcp.pop %v1414
      %v1431 = vrcp.pop %v1415
      %v1432 = vrcp.pop %v1416
      %v1433 = vsel %vm1385, %v1417, 0.0
      %v1434 = vsel %vm1386, %v1418, 0.0
      %v1435 = vsel %vm1387, %v1419, 0.0
      %v1436 = vsel %vm1388, %v1420, 0.0
      %v1437 = vsel %vm1389, %v1421, 0.0
      %v1438 = vsel %vm1390, %v1422, 0.0
      %v1439 = vsel %vm1391, %v1423, 0.0
      %v1440 = vsel %vm1392, %v1424, 0.0
      %v1441 = vsel %vm1393, %v1425, 0.0
      %v1442 = vsel %vm1394, %v1426, 0.0
      %v1443 = vsel %vm1395, %v1427, 0.0
      %v1444 = vsel %vm1396, %v1428, 0.0
      %v1445 = vsel %vm1397, %v1429, 0.0
      %v1446 = vsel %vm1398, %v1430, 0.0
      %v1447 = vsel %vm1399, %v1431, 0.0
      %v1448 = vsel %vm1400, %v1432, 0.0
      %v1449 = vmul.f32 %v1337, %v1433
      %v1450 = vmul.f32 %v1338, %v1434
      %v1451 = vmul.f32 %v1339, %v1435
      %v1452 = vmul.f32 %v1340, %v1436
      %v1453 = vmul.f32 %v1341, %v1437
      %v1454 = vmul.f32 %v1342, %v1438
      %v1455 = vmul.f32 %v1343, %v1439
      %v1456 = vmul.f32 %v1344, %v1440
      %v1457 = vmul.f32 %v1345, %v1441
      %v1458 = vmul.f32 %v1346, %v1442
      %v1459 = vmul.f32 %v1347, %v1443
      %v1460 = vmul.f32 %v1348, %v1444
      %v1461 = vmul.f32 %v1349, %v1445
      %v1462 = vmul.f32 %v1350, %v1446
      %v1463 = vmul.f32 %v1351, %v1447
      %v1464 = vmul.f32 %v1352, %v1448
      %s1465 = scalar_lea.vmem %s2, 128
      %v1466 = vld [vmem:[%s1465] sm:$0xff]
      %v1467 = vld [vmem:[%s1465 + $0x8] sm:$0xff]
      %v1468 = vld [vmem:[%s1465 + $0x10] sm:$0xff]
      %v1469 = vld [vmem:[%s1465 + $0x18] sm:$0xff]
      %v1470 = vld [vmem:[%s1465 + $0x20] sm:$0xff]
      %v1471 = vld [vmem:[%s1465 + $0x28] sm:$0xff]
      %v1472 = vld [vmem:[%s1465 + $0x30] sm:$0xff]
      %v1473 = vld [vmem:[%s1465 + $0x38] sm:$0xff]
      %v1474 = vld [vmem:[%s1465 + $0x40] sm:$0xff]
      %v1475 = vld [vmem:[%s1465 + $0x48] sm:$0xff]
      %v1476 = vld [vmem:[%s1465 + $0x50] sm:$0xff]
      %v1477 = vld [vmem:[%s1465 + $0x58] sm:$0xff]
      %v1478 = vld [vmem:[%s1465 + $0x60] sm:$0xff]
      %v1479 = vld [vmem:[%s1465 + $0x68] sm:$0xff]
      %v1480 = vld [vmem:[%s1465 + $0x70] sm:$0xff]
      %v1481 = vld [vmem:[%s1465 + $0x78] sm:$0xff]
      %vm1482 = vcmp.gt.f32.partialorder %v1466, 0.0
      %vm1483 = vcmp.gt.f32.partialorder %v1467, 0.0
      %vm1484 = vcmp.gt.f32.partialorder %v1468, 0.0
      %vm1485 = vcmp.gt.f32.partialorder %v1469, 0.0
      %vm1486 = vcmp.gt.f32.partialorder %v1470, 0.0
      %vm1487 = vcmp.gt.f32.partialorder %v1471, 0.0
      %vm1488 = vcmp.gt.f32.partialorder %v1472, 0.0
      %vm1489 = vcmp.gt.f32.partialorder %v1473, 0.0
      %vm1490 = vcmp.gt.f32.partialorder %v1474, 0.0
      %vm1491 = vcmp.gt.f32.partialorder %v1475, 0.0
      %vm1492 = vcmp.gt.f32.partialorder %v1476, 0.0
      %vm1493 = vcmp.gt.f32.partialorder %v1477, 0.0
      %vm1494 = vcmp.gt.f32.partialorder %v1478, 0.0
      %vm1495 = vcmp.gt.f32.partialorder %v1479, 0.0
      %vm1496 = vcmp.gt.f32.partialorder %v1480, 0.0
      %vm1497 = vcmp.gt.f32.partialorder %v1481, 0.0
      %v1498 = vsel %vm1482, %v1131, -1e+30
      %v1499 = vsel %vm1483, %v1136, -1e+30
      %v1500 = vsel %vm1484, %v1141, -1e+30
      %v1501 = vsel %vm1485, %v1146, -1e+30
      %v1502 = vsel %vm1486, %v1151, -1e+30
      %v1503 = vsel %vm1487, %v1156, -1e+30
      %v1504 = vsel %vm1488, %v1161, -1e+30
      %v1505 = vsel %vm1489, %v1166, -1e+30
      %v1506 = vsel %vm1490, %v1171, -1e+30
      %v1507 = vsel %vm1491, %v1176, -1e+30
      %v1508 = vsel %vm1492, %v1181, -1e+30
      %v1509 = vsel %vm1493, %v1186, -1e+30
      %v1510 = vsel %vm1494, %v1191, -1e+30
      %v1511 = vsel %vm1495, %v1196, -1e+30
      %v1512 = vsel %vm1496, %v1201, -1e+30
      %v1513 = vsel %vm1497, %v1206, -1e+30
      %1514 = vmax.xlane.f32.xlu0 %v1498
      %v1515 = vpop.xlane.xlu0 %1514
      %1516 = vmax.xlane.f32.xlu0 %v1499
      %v1517 = vpop.xlane.xlu0 %1516
      %1518 = vmax.xlane.f32.xlu0 %v1500
      %v1519 = vpop.xlane.xlu0 %1518
      %1520 = vmax.xlane.f32.xlu0 %v1501
      %v1521 = vpop.xlane.xlu0 %1520
      %1522 = vmax.xlane.f32.xlu0 %v1502
      %v1523 = vpop.xlane.xlu0 %1522
      %1524 = vmax.xlane.f32.xlu0 %v1503
      %v1525 = vpop.xlane.xlu0 %1524
      %1526 = vmax.xlane.f32.xlu0 %v1504
      %v1527 = vpop.xlane.xlu0 %1526
      %1528 = vmax.xlane.f32.xlu0 %v1505
      %v1529 = vpop.xlane.xlu0 %1528
      %1530 = vmax.xlane.f32.xlu0 %v1506
      %v1531 = vpop.xlane.xlu0 %1530
      %1532 = vmax.xlane.f32.xlu0 %v1507
      %v1533 = vpop.xlane.xlu0 %1532
      %1534 = vmax.xlane.f32.xlu0 %v1508
      %v1535 = vpop.xlane.xlu0 %1534
      %1536 = vmax.xlane.f32.xlu0 %v1509
      %v1537 = vpop.xlane.xlu0 %1536
      %1538 = vmax.xlane.f32.xlu0 %v1510
      %v1539 = vpop.xlane.xlu0 %1538
      %1540 = vmax.xlane.f32.xlu0 %v1511
      %v1541 = vpop.xlane.xlu0 %1540
      %1542 = vmax.xlane.f32.xlu0 %v1512
      %v1543 = vpop.xlane.xlu0 %1542
      %1544 = vmax.xlane.f32.xlu0 %v1513
      %v1545 = vpop.xlane.xlu0 %1544
      %v1546 = vsub.f32 %v1498, %v1515
      %v1547 = vsub.f32 %v1499, %v1517
      %v1548 = vsub.f32 %v1500, %v1519
      %v1549 = vsub.f32 %v1501, %v1521
      %v1550 = vsub.f32 %v1502, %v1523
      %v1551 = vsub.f32 %v1503, %v1525
      %v1552 = vsub.f32 %v1504, %v1527
      %v1553 = vsub.f32 %v1505, %v1529
      %v1554 = vsub.f32 %v1506, %v1531
      %v1555 = vsub.f32 %v1507, %v1533
      %v1556 = vsub.f32 %v1508, %v1535
      %v1557 = vsub.f32 %v1509, %v1537
      %v1558 = vsub.f32 %v1510, %v1539
      %v1559 = vsub.f32 %v1511, %v1541
      %v1560 = vsub.f32 %v1512, %v1543
      %v1561 = vsub.f32 %v1513, %v1545
      %v1562 = vmul.f32 %v1546, 1.442695
      %v1563 = vpow.pop %v1562
      %v1564 = vmul.f32 %v1547, 1.442695
      %v1565 = vpow.pop %v1564
      %v1566 = vmul.f32 %v1548, 1.442695
      %v1567 = vpow.pop %v1566
      %v1568 = vmul.f32 %v1549, 1.442695
      %v1569 = vpow.pop %v1568
      %v1570 = vmul.f32 %v1550, 1.442695
      %v1571 = vpow.pop %v1570
      %v1572 = vmul.f32 %v1551, 1.442695
      %v1573 = vpow.pop %v1572
      %v1574 = vmul.f32 %v1552, 1.442695
      %v1575 = vpow.pop %v1574
      %v1576 = vmul.f32 %v1553, 1.442695
      %v1577 = vpow.pop %v1576
      %v1578 = vmul.f32 %v1554, 1.442695
      %v1579 = vpow.pop %v1578
      %v1580 = vmul.f32 %v1555, 1.442695
      %v1581 = vpow.pop %v1580
      %v1582 = vmul.f32 %v1556, 1.442695
      %v1583 = vpow.pop %v1582
      %v1584 = vmul.f32 %v1557, 1.442695
      %v1585 = vpow.pop %v1584
      %v1586 = vmul.f32 %v1558, 1.442695
      %v1587 = vpow.pop %v1586
      %v1588 = vmul.f32 %v1559, 1.442695
      %v1589 = vpow.pop %v1588
      %v1590 = vmul.f32 %v1560, 1.442695
      %v1591 = vpow.pop %v1590
      %v1592 = vmul.f32 %v1561, 1.442695
      %v1593 = vpow.pop %v1592
      %v1594 = vmul.f32 %v1563, %v1466
      %v1595 = vmul.f32 %v1565, %v1467
      %v1596 = vmul.f32 %v1567, %v1468
      %v1597 = vmul.f32 %v1569, %v1469
      %v1598 = vmul.f32 %v1571, %v1470
      %v1599 = vmul.f32 %v1573, %v1471
      %v1600 = vmul.f32 %v1575, %v1472
      %v1601 = vmul.f32 %v1577, %v1473
      %v1602 = vmul.f32 %v1579, %v1474
      %v1603 = vmul.f32 %v1581, %v1475
      %v1604 = vmul.f32 %v1583, %v1476
      %v1605 = vmul.f32 %v1585, %v1477
      %v1606 = vmul.f32 %v1587, %v1478
      %v1607 = vmul.f32 %v1589, %v1479
      %v1608 = vmul.f32 %v1591, %v1480
      %v1609 = vmul.f32 %v1593, %v1481
      %1610 = vadd.xlane.f32.xlu0 %v1594
      %v1611 = vpop.xlane.xlu0 %1610
      %1612 = vadd.xlane.f32.xlu0 %v1595
      %v1613 = vpop.xlane.xlu0 %1612
      %1614 = vadd.xlane.f32.xlu0 %v1596
      %v1615 = vpop.xlane.xlu0 %1614
      %1616 = vadd.xlane.f32.xlu0 %v1597
      %v1617 = vpop.xlane.xlu0 %1616
      %1618 = vadd.xlane.f32.xlu0 %v1598
      %v1619 = vpop.xlane.xlu0 %1618
      %1620 = vadd.xlane.f32.xlu0 %v1599
      %v1621 = vpop.xlane.xlu0 %1620
      %1622 = vadd.xlane.f32.xlu0 %v1600
      %v1623 = vpop.xlane.xlu0 %1622
      %1624 = vadd.xlane.f32.xlu0 %v1601
      %v1625 = vpop.xlane.xlu0 %1624
      %1626 = vadd.xlane.f32.xlu0 %v1602
      %v1627 = vpop.xlane.xlu0 %1626
      %1628 = vadd.xlane.f32.xlu0 %v1603
      %v1629 = vpop.xlane.xlu0 %1628
      %1630 = vadd.xlane.f32.xlu0 %v1604
      %v1631 = vpop.xlane.xlu0 %1630
      %1632 = vadd.xlane.f32.xlu0 %v1605
      %v1633 = vpop.xlane.xlu0 %1632
      %1634 = vadd.xlane.f32.xlu0 %v1606
      %v1635 = vpop.xlane.xlu0 %1634
      %1636 = vadd.xlane.f32.xlu0 %v1607
      %v1637 = vpop.xlane.xlu0 %1636
      %1638 = vadd.xlane.f32.xlu0 %v1608
      %v1639 = vpop.xlane.xlu0 %1638
      %1640 = vadd.xlane.f32.xlu0 %v1609
      %v1641 = vpop.xlane.xlu0 %1640
      %vm1642 = vcmp.gt.f32.partialorder %v1611, 0.0
      %vm1643 = vcmp.gt.f32.partialorder %v1613, 0.0
      %vm1644 = vcmp.gt.f32.partialorder %v1615, 0.0
      %vm1645 = vcmp.gt.f32.partialorder %v1617, 0.0
      %vm1646 = vcmp.gt.f32.partialorder %v1619, 0.0
      %vm1647 = vcmp.gt.f32.partialorder %v1621, 0.0
      %vm1648 = vcmp.gt.f32.partialorder %v1623, 0.0
      %vm1649 = vcmp.gt.f32.partialorder %v1625, 0.0
      %vm1650 = vcmp.gt.f32.partialorder %v1627, 0.0
      %vm1651 = vcmp.gt.f32.partialorder %v1629, 0.0
      %vm1652 = vcmp.gt.f32.partialorder %v1631, 0.0
      %vm1653 = vcmp.gt.f32.partialorder %v1633, 0.0
      %vm1654 = vcmp.gt.f32.partialorder %v1635, 0.0
      %vm1655 = vcmp.gt.f32.partialorder %v1637, 0.0
      %vm1656 = vcmp.gt.f32.partialorder %v1639, 0.0
      %vm1657 = vcmp.gt.f32.partialorder %v1641, 0.0
      %v1658 = vmax.f32 %v1611, 1e-30
      %v1659 = vmax.f32 %v1613, 1e-30
      %v1660 = vmax.f32 %v1615, 1e-30
      %v1661 = vmax.f32 %v1617, 1e-30
      %v1662 = vmax.f32 %v1619, 1e-30
      %v1663 = vmax.f32 %v1621, 1e-30
      %v1664 = vmax.f32 %v1623, 1e-30
      %v1665 = vmax.f32 %v1625, 1e-30
      %v1666 = vmax.f32 %v1627, 1e-30
      %v1667 = vmax.f32 %v1629, 1e-30
      %v1668 = vmax.f32 %v1631, 1e-30
      %v1669 = vmax.f32 %v1633, 1e-30
      %v1670 = vmax.f32 %v1635, 1e-30
      %v1671 = vmax.f32 %v1637, 1e-30
      %v1672 = vmax.f32 %v1639, 1e-30
      %v1673 = vmax.f32 %v1641, 1e-30
      %v1674 = vrcp.pop %v1658
      %v1675 = vrcp.pop %v1659
      %v1676 = vrcp.pop %v1660
      %v1677 = vrcp.pop %v1661
      %v1678 = vrcp.pop %v1662
      %v1679 = vrcp.pop %v1663
      %v1680 = vrcp.pop %v1664
      %v1681 = vrcp.pop %v1665
      %v1682 = vrcp.pop %v1666
      %v1683 = vrcp.pop %v1667
      %v1684 = vrcp.pop %v1668
      %v1685 = vrcp.pop %v1669
      %v1686 = vrcp.pop %v1670
      %v1687 = vrcp.pop %v1671
      %v1688 = vrcp.pop %v1672
      %v1689 = vrcp.pop %v1673
      %v1690 = vsel %vm1642, %v1674, 0.0
      %v1691 = vsel %vm1643, %v1675, 0.0
      %v1692 = vsel %vm1644, %v1676, 0.0
      %v1693 = vsel %vm1645, %v1677, 0.0
      %v1694 = vsel %vm1646, %v1678, 0.0
      %v1695 = vsel %vm1647, %v1679, 0.0
      %v1696 = vsel %vm1648, %v1680, 0.0
      %v1697 = vsel %vm1649, %v1681, 0.0
      %v1698 = vsel %vm1650, %v1682, 0.0
      %v1699 = vsel %vm1651, %v1683, 0.0
      %v1700 = vsel %vm1652, %v1684, 0.0
      %v1701 = vsel %vm1653, %v1685, 0.0
      %v1702 = vsel %vm1654, %v1686, 0.0
      %v1703 = vsel %vm1655, %v1687, 0.0
      %v1704 = vsel %vm1656, %v1688, 0.0
      %v1705 = vsel %vm1657, %v1689, 0.0
      %v1706 = vmul.f32 %v1594, %v1690
      %v1707 = vmul.f32 %v1595, %v1691
      %v1708 = vmul.f32 %v1596, %v1692
      %v1709 = vmul.f32 %v1597, %v1693
      %v1710 = vmul.f32 %v1598, %v1694
      %v1711 = vmul.f32 %v1599, %v1695
      %v1712 = vmul.f32 %v1600, %v1696
      %v1713 = vmul.f32 %v1601, %v1697
      %v1714 = vmul.f32 %v1602, %v1698
      %v1715 = vmul.f32 %v1603, %v1699
      %v1716 = vmul.f32 %v1604, %v1700
      %v1717 = vmul.f32 %v1605, %v1701
      %v1718 = vmul.f32 %v1606, %v1702
      %v1719 = vmul.f32 %v1607, %v1703
      %v1720 = vmul.f32 %v1608, %v1704
      %v1721 = vmul.f32 %v1609, %v1705
      %1722 = vmatprep.subr.mxu0 0.0
      %1723 = vmatpush1.msra.mxu0 %v889
      %1724 = vmatprep.subr.mxu0 0.0
      %1725 = vmatpush1.msra.mxu0 %v892
      %1726 = vmatprep.subr.mxu0 0.0
      %1727 = vmatpush1.msra.mxu0 %v897
      %1728 = vmatprep.subr.mxu0 0.0
      %1729 = vmatpush1.msra.mxu0 %v900
      %1730 = vmatprep.subr.mxu0 0.0
      %1731 = vmatpush1.msra.mxu0 %v905
      %1732 = vmatprep.subr.mxu0 0.0
      %1733 = vmatpush1.msra.mxu0 %v908
      %1734 = vmatprep.subr.mxu0 0.0
      %1735 = vmatpush1.msra.mxu0 %v913
      %1736 = vmatprep.subr.mxu0 0.0
      %1737 = vmatpush1.msra.mxu0 %v916
      %1738 = vmatprep.subr.mxu0 0.0
      %1739 = vmatpush1.msra.mxu0 %v921
      %1740 = vmatprep.subr.mxu0 0.0
      %1741 = vmatpush1.msra.mxu0 %v924
      %1742 = vmatprep.subr.mxu0 0.0
      %1743 = vmatpush1.msra.mxu0 %v929
      %1744 = vmatprep.subr.mxu0 0.0
      %1745 = vmatpush1.msra.mxu0 %v932
      %1746 = vmatprep.subr.mxu0 0.0
      %1747 = vmatpush1.msra.mxu0 %v937
      %1748 = vmatprep.subr.mxu0 0.0
      %1749 = vmatpush1.msra.mxu0 %v940
      %1750 = vmatprep.subr.mxu0 0.0
      %1751 = vmatpush1.msra.mxu0 %v945
      %1752 = vmatprep.subr.mxu0 0.0
      %1753 = vmatpush1.msra.mxu0 %v948
      %1754 = vmatprep.subr.mxu0 0.0
      %1755 = vmatpush1.msra.mxu0 0.0
      %1756 = vmatprep.subr.mxu0 0.0
      %1757 = vmatpush1.msra.mxu0 0.0
      %1758 = vmatprep.subr.mxu0 0.0
      %1759 = vmatpush1.msra.mxu0 0.0
      %1760 = vmatprep.subr.mxu0 0.0
      %1761 = vmatpush1.msra.mxu0 0.0
      %1762 = vmatprep.subr.mxu0 0.0
      %1763 = vmatpush1.msra.mxu0 0.0
      %1764 = vmatprep.subr.mxu0 0.0
      %1765 = vmatpush1.msra.mxu0 0.0
      %1766 = vmatprep.subr.mxu0 0.0
      %1767 = vmatpush1.msra.mxu0 0.0
      %1768 = vmatprep.subr.mxu0 0.0
      %1769 = vmatpush1.msra.mxu0 0.0
      %1770 = vmatprep.subr.mxu0 0.0
      %1771 = vmatpush1.msra.mxu0 0.0
      %1772 = vmatprep.subr.mxu0 0.0
      %1773 = vmatpush1.msra.mxu0 0.0
      %1774 = vmatprep.subr.mxu0 0.0
      %1775 = vmatpush1.msra.mxu0 0.0
      %1776 = vmatprep.subr.mxu0 0.0
      %1777 = vmatpush1.msra.mxu0 0.0
      %1778 = vmatprep.subr.mxu0 0.0
      %1779 = vmatpush1.msra.mxu0 0.0
      %1780 = vmatprep.subr.mxu0 0.0
      %1781 = vmatpush1.msra.mxu0 0.0
      %1782 = vmatprep.subr.mxu0 0.0
      %1783 = vmatpush1.msra.mxu0 0.0
      %1784 = vmatprep.subr.mxu0 0.0
      %1785 = vmatpush1.msra.mxu0 0.0
      %1786 = vmatprep.mubr.f32.mxu0 0.0
      %1787 = vmatmul.mubr.f32.gmra.mrb[0].mxu0 %v1706
      %v1788 = vpop.f32.mrb[0].mxu0
      %v1789 = vadd.f32 0.0, %v1788
      %v1790 = vpop.f32.mrb[0].mxu0
      %1791 = vmatprep.mubr.f32.mxu0 0.0
      %1792 = vmatmul.mubr.f32.gmra.mrb[0].mxu0 %v1707
      %v1793 = vpop.f32.mrb[0].mxu0
      %v1794 = vadd.f32 0.0, %v1793
      %v1795 = vpop.f32.mrb[0].mxu0
      %1796 = vmatprep.mubr.f32.mxu0 0.0
      %1797 = vmatmul.mubr.f32.gmra.mrb[0].mxu0 %v1708
      %v1798 = vpop.f32.mrb[0].mxu0
      %v1799 = vadd.f32 0.0, %v1798
      %v1800 = vpop.f32.mrb[0].mxu0
      %1801 = vmatprep.mubr.f32.mxu0 0.0
      %1802 = vmatmul.mubr.f32.gmra.mrb[0].mxu0 %v1709
      %v1803 = vpop.f32.mrb[0].mxu0
      %v1804 = vadd.f32 0.0, %v1803
      %v1805 = vpop.f32.mrb[0].mxu0
      %1806 = vmatprep.mubr.f32.mxu0 0.0
      %1807 = vmatmul.mubr.f32.gmra.mrb[0].mxu0 %v1710
      %v1808 = vpop.f32.mrb[0].mxu0
      %v1809 = vadd.f32 0.0, %v1808
      %v1810 = vpop.f32.mrb[0].mxu0
      %1811 = vmatprep.mubr.f32.mxu0 0.0
      %1812 = vmatmul.mubr.f32.gmra.mrb[0].mxu0 %v1711
      %v1813 = vpop.f32.mrb[0].mxu0
      %v1814 = vadd.f32 0.0, %v1813
      %v1815 = vpop.f32.mrb[0].mxu0
      %1816 = vmatprep.mubr.f32.mxu0 0.0
      %1817 = vmatmul.mubr.f32.gmra.mrb[0].mxu0 %v1712
      %v1818 = vpop.f32.mrb[0].mxu0
      %v1819 = vadd.f32 0.0, %v1818
      %v1820 = vpop.f32.mrb[0].mxu0
      %1821 = vmatprep.mubr.f32.mxu0 0.0
      %1822 = vmatmul.mubr.f32.gmra.mrb[0].mxu0 %v1713
      %v1823 = vpop.f32.mrb[0].mxu0
      %v1824 = vadd.f32 0.0, %v1823
      %v1825 = vpop.f32.mrb[0].mxu0
      %1826 = vmatprep.mubr.f32.mxu0 0.0
      %1827 = vmatmul.mubr.f32.gmra.mrb[0].mxu0 %v1714
      %v1828 = vpop.f32.mrb[0].mxu0
      %v1829 = vadd.f32 0.0, %v1828
      %v1830 = vpop.f32.mrb[0].mxu0
      %1831 = vmatprep.mubr.f32.mxu0 0.0
      %1832 = vmatmul.mubr.f32.gmra.mrb[0].mxu0 %v1715
      %v1833 = vpop.f32.mrb[0].mxu0
      %v1834 = vadd.f32 0.0, %v1833
      %v1835 = vpop.f32.mrb[0].mxu0
      %1836 = vmatprep.mubr.f32.mxu0 0.0
      %1837 = vmatmul.mubr.f32.gmra.mrb[0].mxu0 %v1716
      %v1838 = vpop.f32.mrb[0].mxu0
      %v1839 = vadd.f32 0.0, %v1838
      %v1840 = vpop.f32.mrb[0].mxu0
      %1841 = vmatprep.mubr.f32.mxu0 0.0
      %1842 = vmatmul.mubr.f32.gmra.mrb[0].mxu0 %v1717
      %v1843 = vpop.f32.mrb[0].mxu0
      %v1844 = vadd.f32 0.0, %v1843
      %v1845 = vpop.f32.mrb[0].mxu0
      %1846 = vmatprep.mubr.f32.mxu0 0.0
      %1847 = vmatmul.mubr.f32.gmra.mrb[0].mxu0 %v1718
      %v1848 = vpop.f32.mrb[0].mxu0
      %v1849 = vadd.f32 0.0, %v1848
      %v1850 = vpop.f32.mrb[0].mxu0
      %1851 = vmatprep.mubr.f32.mxu0 0.0
      %1852 = vmatmul.mubr.f32.gmra.mrb[0].mxu0 %v1719
      %v1853 = vpop.f32.mrb[0].mxu0
      %v1854 = vadd.f32 0.0, %v1853
      %v1855 = vpop.f32.mrb[0].mxu0
      %1856 = vmatprep.mubr.f32.mxu0 0.0
      %1857 = vmatmul.mubr.f32.gmra.mrb[0].mxu0 %v1720
      %v1858 = vpop.f32.mrb[0].mxu0
      %v1859 = vadd.f32 0.0, %v1858
      %v1860 = vpop.f32.mrb[0].mxu0
      %1861 = vmatprep.mubr.f32.mxu0 0.0
      %1862 = vmatmul.mubr.f32.gmra.mrb[0].mxu0 %v1721
      %v1863 = vpop.f32.mrb[0].mxu0
      %v1864 = vadd.f32 0.0, %v1863
      %v1865 = vpop.f32.mrb[0].mxu0
      %1866 = vdwg.mxu0
      %1867 = vmatprep.subr.mxu0 0.0
      %1868 = vmatpush1.msra.mxu0 %v889
      %1869 = vmatprep.subr.mxu0 0.0
      %1870 = vmatpush1.msra.mxu0 %v892
      %1871 = vmatprep.subr.mxu0 0.0
      %1872 = vmatpush1.msra.mxu0 %v897
      %1873 = vmatprep.subr.mxu0 0.0
      %1874 = vmatpush1.msra.mxu0 %v900
      %1875 = vmatprep.subr.mxu0 0.0
      %1876 = vmatpush1.msra.mxu0 %v905
      %1877 = vmatprep.subr.mxu0 0.0
      %1878 = vmatpush1.msra.mxu0 %v908
      %1879 = vmatprep.subr.mxu0 0.0
      %1880 = vmatpush1.msra.mxu0 %v913
      %1881 = vmatprep.subr.mxu0 0.0
      %1882 = vmatpush1.msra.mxu0 %v916
      %1883 = vmatprep.subr.mxu0 0.0
      %1884 = vmatpush1.msra.mxu0 %v921
      %1885 = vmatprep.subr.mxu0 0.0
      %1886 = vmatpush1.msra.mxu0 %v924
      %1887 = vmatprep.subr.mxu0 0.0
      %1888 = vmatpush1.msra.mxu0 %v929
      %1889 = vmatprep.subr.mxu0 0.0
      %1890 = vmatpush1.msra.mxu0 %v932
      %1891 = vmatprep.subr.mxu0 0.0
      %1892 = vmatpush1.msra.mxu0 %v937
      %1893 = vmatprep.subr.mxu0 0.0
      %1894 = vmatpush1.msra.mxu0 %v940
      %1895 = vmatprep.subr.mxu0 0.0
      %1896 = vmatpush1.msra.mxu0 %v945
      %1897 = vmatprep.subr.mxu0 0.0
      %1898 = vmatpush1.msra.mxu0 %v948
      %1899 = vmatprep.subr.mxu0 0.0
      %1900 = vmatpush1.msra.mxu0 0.0
      %1901 = vmatprep.subr.mxu0 0.0
      %1902 = vmatpush1.msra.mxu0 0.0
      %1903 = vmatprep.subr.mxu0 0.0
      %1904 = vmatpush1.msra.mxu0 0.0
      %1905 = vmatprep.subr.mxu0 0.0
      %1906 = vmatpush1.msra.mxu0 0.0
      %1907 = vmatprep.subr.mxu0 0.0
      %1908 = vmatpush1.msra.mxu0 0.0
      %1909 = vmatprep.subr.mxu0 0.0
      %1910 = vmatpush1.msra.mxu0 0.0
      %1911 = vmatprep.subr.mxu0 0.0
      %1912 = vmatpush1.msra.mxu0 0.0
      %1913 = vmatprep.subr.mxu0 0.0
      %1914 = vmatpush1.msra.mxu0 0.0
      %1915 = vmatprep.subr.mxu0 0.0
      %1916 = vmatpush1.msra.mxu0 0.0
      %1917 = vmatprep.subr.mxu0 0.0
      %1918 = vmatpush1.msra.mxu0 0.0
      %1919 = vmatprep.subr.mxu0 0.0
      %1920 = vmatpush1.msra.mxu0 0.0
      %1921 = vmatprep.subr.mxu0 0.0
      %1922 = vmatpush1.msra.mxu0 0.0
      %1923 = vmatprep.subr.mxu0 0.0
      %1924 = vmatpush1.msra.mxu0 0.0
      %1925 = vmatprep.subr.mxu0 0.0
      %1926 = vmatpush1.msra.mxu0 0.0
      %1927 = vmatprep.subr.mxu0 0.0
      %1928 = vmatpush1.msra.mxu0 0.0
      %1929 = vmatprep.subr.mxu0 0.0
      %1930 = vmatpush1.msra.mxu0 0.0
      %1931 = vmatprep.mubr.f32.mxu0 0.0
      %1932 = vmatmul.mubr.f32.gmra.mrb[0].mxu0 %v1449
      %v1933 = vpop.f32.mrb[0].mxu0
      %v1934 = vadd.f32 %v1789, %v1933
      %v1935 = vpop.f32.mrb[0].mxu0
      %1936 = vmatprep.mubr.f32.mxu0 0.0
      %1937 = vmatmul.mubr.f32.gmra.mrb[0].mxu0 %v1450
      %v1938 = vpop.f32.mrb[0].mxu0
      %v1939 = vadd.f32 %v1794, %v1938
      %v1940 = vpop.f32.mrb[0].mxu0
      %1941 = vmatprep.mubr.f32.mxu0 0.0
      %1942 = vmatmul.mubr.f32.gmra.mrb[0].mxu0 %v1451
      %v1943 = vpop.f32.mrb[0].mxu0
      %v1944 = vadd.f32 %v1799, %v1943
      %v1945 = vpop.f32.mrb[0].mxu0
      %1946 = vmatprep.mubr.f32.mxu0 0.0
      %1947 = vmatmul.mubr.f32.gmra.mrb[0].mxu0 %v1452
      %v1948 = vpop.f32.mrb[0].mxu0
      %v1949 = vadd.f32 %v1804, %v1948
      %v1950 = vpop.f32.mrb[0].mxu0
      %1951 = vmatprep.mubr.f32.mxu0 0.0
      %1952 = vmatmul.mubr.f32.gmra.mrb[0].mxu0 %v1453
      %v1953 = vpop.f32.mrb[0].mxu0
      %v1954 = vadd.f32 %v1809, %v1953
      %v1955 = vpop.f32.mrb[0].mxu0
      %1956 = vmatprep.mubr.f32.mxu0 0.0
      %1957 = vmatmul.mubr.f32.gmra.mrb[0].mxu0 %v1454
      %v1958 = vpop.f32.mrb[0].mxu0
      %v1959 = vadd.f32 %v1814, %v1958
      %v1960 = vpop.f32.mrb[0].mxu0
      %1961 = vmatprep.mubr.f32.mxu0 0.0
      %1962 = vmatmul.mubr.f32.gmra.mrb[0].mxu0 %v1455
      %v1963 = vpop.f32.mrb[0].mxu0
      %v1964 = vadd.f32 %v1819, %v1963
      %v1965 = vpop.f32.mrb[0].mxu0
      %1966 = vmatprep.mubr.f32.mxu0 0.0
      %1967 = vmatmul.mubr.f32.gmra.mrb[0].mxu0 %v1456
      %v1968 = vpop.f32.mrb[0].mxu0
      %v1969 = vadd.f32 %v1824, %v1968
      %v1970 = vpop.f32.mrb[0].mxu0
      %1971 = vmatprep.mubr.f32.mxu0 0.0
      %1972 = vmatmul.mubr.f32.gmra.mrb[0].mxu0 %v1457
      %v1973 = vpop.f32.mrb[0].mxu0
      %v1974 = vadd.f32 %v1829, %v1973
      %v1975 = vpop.f32.mrb[0].mxu0
      %1976 = vmatprep.mubr.f32.mxu0 0.0
      %1977 = vmatmul.mubr.f32.gmra.mrb[0].mxu0 %v1458
      %v1978 = vpop.f32.mrb[0].mxu0
      %v1979 = vadd.f32 %v1834, %v1978
      %v1980 = vpop.f32.mrb[0].mxu0
      %1981 = vmatprep.mubr.f32.mxu0 0.0
      %1982 = vmatmul.mubr.f32.gmra.mrb[0].mxu0 %v1459
      %v1983 = vpop.f32.mrb[0].mxu0
      %v1984 = vadd.f32 %v1839, %v1983
      %v1985 = vpop.f32.mrb[0].mxu0
      %1986 = vmatprep.mubr.f32.mxu0 0.0
      %1987 = vmatmul.mubr.f32.gmra.mrb[0].mxu0 %v1460
      %v1988 = vpop.f32.mrb[0].mxu0
      %v1989 = vadd.f32 %v1844, %v1988
      %v1990 = vpop.f32.mrb[0].mxu0
      %1991 = vmatprep.mubr.f32.mxu0 0.0
      %1992 = vmatmul.mubr.f32.gmra.mrb[0].mxu0 %v1461
      %v1993 = vpop.f32.mrb[0].mxu0
      %v1994 = vadd.f32 %v1849, %v1993
      %v1995 = vpop.f32.mrb[0].mxu0
      %1996 = vmatprep.mubr.f32.mxu0 0.0
      %1997 = vmatmul.mubr.f32.gmra.mrb[0].mxu0 %v1462
      %v1998 = vpop.f32.mrb[0].mxu0
      %v1999 = vadd.f32 %v1854, %v1998
      %v2000 = vpop.f32.mrb[0].mxu0
      %2001 = vmatprep.mubr.f32.mxu0 0.0
      %2002 = vmatmul.mubr.f32.gmra.mrb[0].mxu0 %v1463
      %v2003 = vpop.f32.mrb[0].mxu0
      %v2004 = vadd.f32 %v1859, %v2003
      %v2005 = vpop.f32.mrb[0].mxu0
      %2006 = vmatprep.mubr.f32.mxu0 0.0
      %2007 = vmatmul.mubr.f32.gmra.mrb[0].mxu0 %v1464
      %v2008 = vpop.f32.mrb[0].mxu0
      %v2009 = vadd.f32 %v1864, %v2008
      %v2010 = vpop.f32.mrb[0].mxu0
      %2011 = vdwg.mxu0
      %s2012 = scalar_lea.vmem %s2, 256
      %v2013 = vld [vmem:[%s2012] sm:$0xff]
      %v2014 = vld [vmem:[%s2012 + $0x8] sm:$0xff]
      %v2015 = vld [vmem:[%s2012 + $0x10] sm:$0xff]
      %v2016 = vld [vmem:[%s2012 + $0x18] sm:$0xff]
      %v2017 = vld [vmem:[%s2012 + $0x20] sm:$0xff]
      %v2018 = vld [vmem:[%s2012 + $0x28] sm:$0xff]
      %v2019 = vld [vmem:[%s2012 + $0x30] sm:$0xff]
      %v2020 = vld [vmem:[%s2012 + $0x38] sm:$0xff]
      %v2021 = vld [vmem:[%s2012 + $0x40] sm:$0xff]
      %v2022 = vld [vmem:[%s2012 + $0x48] sm:$0xff]
      %v2023 = vld [vmem:[%s2012 + $0x50] sm:$0xff]
      %v2024 = vld [vmem:[%s2012 + $0x58] sm:$0xff]
      %v2025 = vld [vmem:[%s2012 + $0x60] sm:$0xff]
      %v2026 = vld [vmem:[%s2012 + $0x68] sm:$0xff]
      %v2027 = vld [vmem:[%s2012 + $0x70] sm:$0xff]
      %v2028 = vld [vmem:[%s2012 + $0x78] sm:$0xff]
      %vm2029 = vcmp.gt.f32.partialorder %v2013, 0.0
      %vm2030 = vcmp.gt.f32.partialorder %v2014, 0.0
      %vm2031 = vcmp.gt.f32.partialorder %v2015, 0.0
      %vm2032 = vcmp.gt.f32.partialorder %v2016, 0.0
      %vm2033 = vcmp.gt.f32.partialorder %v2017, 0.0
      %vm2034 = vcmp.gt.f32.partialorder %v2018, 0.0
      %vm2035 = vcmp.gt.f32.partialorder %v2019, 0.0
      %vm2036 = vcmp.gt.f32.partialorder %v2020, 0.0
      %vm2037 = vcmp.gt.f32.partialorder %v2021, 0.0
      %vm2038 = vcmp.gt.f32.partialorder %v2022, 0.0
      %vm2039 = vcmp.gt.f32.partialorder %v2023, 0.0
      %vm2040 = vcmp.gt.f32.partialorder %v2024, 0.0
      %vm2041 = vcmp.gt.f32.partialorder %v2025, 0.0
      %vm2042 = vcmp.gt.f32.partialorder %v2026, 0.0
      %vm2043 = vcmp.gt.f32.partialorder %v2027, 0.0
      %vm2044 = vcmp.gt.f32.partialorder %v2028, 0.0
      %v2045 = vsel %vm2029, %v1131, -1e+30
      %v2046 = vsel %vm2030, %v1136, -1e+30
      %v2047 = vsel %vm2031, %v1141, -1e+30
      %v2048 = vsel %vm2032, %v1146, -1e+30
      %v2049 = vsel %vm2033, %v1151, -1e+30
      %v2050 = vsel %vm2034, %v1156, -1e+30
      %v2051 = vsel %vm2035, %v1161, -1e+30
      %v2052 = vsel %vm2036, %v1166, -1e+30
      %v2053 = vsel %vm2037, %v1171, -1e+30
      %v2054 = vsel %vm2038, %v1176, -1e+30
      %v2055 = vsel %vm2039, %v1181, -1e+30
      %v2056 = vsel %vm2040, %v1186, -1e+30
      %v2057 = vsel %vm2041, %v1191, -1e+30
      %v2058 = vsel %vm2042, %v1196, -1e+30
      %v2059 = vsel %vm2043, %v1201, -1e+30
      %v2060 = vsel %vm2044, %v1206, -1e+30
      %2061 = vmax.xlane.f32.xlu0 %v2045
      %v2062 = vpop.xlane.xlu0 %2061
      %2063 = vmax.xlane.f32.xlu0 %v2046
      %v2064 = vpop.xlane.xlu0 %2063
      %2065 = vmax.xlane.f32.xlu0 %v2047
      %v2066 = vpop.xlane.xlu0 %2065
      %2067 = vmax.xlane.f32.xlu0 %v2048
      %v2068 = vpop.xlane.xlu0 %2067
      %2069 = vmax.xlane.f32.xlu0 %v2049
      %v2070 = vpop.xlane.xlu0 %2069
      %2071 = vmax.xlane.f32.xlu0 %v2050
      %v2072 = vpop.xlane.xlu0 %2071
      %2073 = vmax.xlane.f32.xlu0 %v2051
      %v2074 = vpop.xlane.xlu0 %2073
      %2075 = vmax.xlane.f32.xlu0 %v2052
      %v2076 = vpop.xlane.xlu0 %2075
      %2077 = vmax.xlane.f32.xlu0 %v2053
      %v2078 = vpop.xlane.xlu0 %2077
      %2079 = vmax.xlane.f32.xlu0 %v2054
      %v2080 = vpop.xlane.xlu0 %2079
      %2081 = vmax.xlane.f32.xlu0 %v2055
      %v2082 = vpop.xlane.xlu0 %2081
      %2083 = vmax.xlane.f32.xlu0 %v2056
      %v2084 = vpop.xlane.xlu0 %2083
      %2085 = vmax.xlane.f32.xlu0 %v2057
      %v2086 = vpop.xlane.xlu0 %2085
      %2087 = vmax.xlane.f32.xlu0 %v2058
      %v2088 = vpop.xlane.xlu0 %2087
      %2089 = vmax.xlane.f32.xlu0 %v2059
      %v2090 = vpop.xlane.xlu0 %2089
      %2091 = vmax.xlane.f32.xlu0 %v2060
      %v2092 = vpop.xlane.xlu0 %2091
      %v2093 = vsub.f32 %v2045, %v2062
      %v2094 = vsub.f32 %v2046, %v2064
      %v2095 = vsub.f32 %v2047, %v2066
      %v2096 = vsub.f32 %v2048, %v2068
      %v2097 = vsub.f32 %v2049, %v2070
      %v2098 = vsub.f32 %v2050, %v2072
      %v2099 = vsub.f32 %v2051, %v2074
      %v2100 = vsub.f32 %v2052, %v2076
      %v2101 = vsub.f32 %v2053, %v2078
      %v2102 = vsub.f32 %v2054, %v2080
      %v2103 = vsub.f32 %v2055, %v2082
      %v2104 = vsub.f32 %v2056, %v2084
      %v2105 = vsub.f32 %v2057, %v2086
      %v2106 = vsub.f32 %v2058, %v2088
      %v2107 = vsub.f32 %v2059, %v2090
      %v2108 = vsub.f32 %v2060, %v2092
      %v2109 = vmul.f32 %v2093, 1.442695
      %v2110 = vpow.pop %v2109
      %v2111 = vmul.f32 %v2094, 1.442695
      %v2112 = vpow.pop %v2111
      %v2113 = vmul.f32 %v2095, 1.442695
      %v2114 = vpow.pop %v2113
      %v2115 = vmul.f32 %v2096, 1.442695
      %v2116 = vpow.pop %v2115
      %v2117 = vmul.f32 %v2097, 1.442695
      %v2118 = vpow.pop %v2117
      %v2119 = vmul.f32 %v2098, 1.442695
      %v2120 = vpow.pop %v2119
      %v2121 = vmul.f32 %v2099, 1.442695
      %v2122 = vpow.pop %v2121
      %v2123 = vmul.f32 %v2100, 1.442695
      %v2124 = vpow.pop %v2123
      %v2125 = vmul.f32 %v2101, 1.442695
      %v2126 = vpow.pop %v2125
      %v2127 = vmul.f32 %v2102, 1.442695
      %v2128 = vpow.pop %v2127
      %v2129 = vmul.f32 %v2103, 1.442695
      %v2130 = vpow.pop %v2129
      %v2131 = vmul.f32 %v2104, 1.442695
      %v2132 = vpow.pop %v2131
      %v2133 = vmul.f32 %v2105, 1.442695
      %v2134 = vpow.pop %v2133
      %v2135 = vmul.f32 %v2106, 1.442695
      %v2136 = vpow.pop %v2135
      %v2137 = vmul.f32 %v2107, 1.442695
      %v2138 = vpow.pop %v2137
      %v2139 = vmul.f32 %v2108, 1.442695
      %v2140 = vpow.pop %v2139
      %v2141 = vmul.f32 %v2110, %v2013
      %v2142 = vmul.f32 %v2112, %v2014
      %v2143 = vmul.f32 %v2114, %v2015
      %v2144 = vmul.f32 %v2116, %v2016
      %v2145 = vmul.f32 %v2118, %v2017
      %v2146 = vmul.f32 %v2120, %v2018
      %v2147 = vmul.f32 %v2122, %v2019
      %v2148 = vmul.f32 %v2124, %v2020
      %v2149 = vmul.f32 %v2126, %v2021
      %v2150 = vmul.f32 %v2128, %v2022
      %v2151 = vmul.f32 %v2130, %v2023
      %v2152 = vmul.f32 %v2132, %v2024
      %v2153 = vmul.f32 %v2134, %v2025
      %v2154 = vmul.f32 %v2136, %v2026
      %v2155 = vmul.f32 %v2138, %v2027
      %v2156 = vmul.f32 %v2140, %v2028
      %2157 = vadd.xlane.f32.xlu0 %v2141
      %v2158 = vpop.xlane.xlu0 %2157
      %2159 = vadd.xlane.f32.xlu0 %v2142
      %v2160 = vpop.xlane.xlu0 %2159
      %2161 = vadd.xlane.f32.xlu0 %v2143
      %v2162 = vpop.xlane.xlu0 %2161
      %2163 = vadd.xlane.f32.xlu0 %v2144
      %v2164 = vpop.xlane.xlu0 %2163
      %2165 = vadd.xlane.f32.xlu0 %v2145
      %v2166 = vpop.xlane.xlu0 %2165
      %2167 = vadd.xlane.f32.xlu0 %v2146
      %v2168 = vpop.xlane.xlu0 %2167
      %2169 = vadd.xlane.f32.xlu0 %v2147
      %v2170 = vpop.xlane.xlu0 %2169
      %2171 = vadd.xlane.f32.xlu0 %v2148
      %v2172 = vpop.xlane.xlu0 %2171
      %2173 = vadd.xlane.f32.xlu0 %v2149
      %v2174 = vpop.xlane.xlu0 %2173
      %2175 = vadd.xlane.f32.xlu0 %v2150
      %v2176 = vpop.xlane.xlu0 %2175
      %2177 = vadd.xlane.f32.xlu0 %v2151
      %v2178 = vpop.xlane.xlu0 %2177
      %2179 = vadd.xlane.f32.xlu0 %v2152
      %v2180 = vpop.xlane.xlu0 %2179
      %2181 = vadd.xlane.f32.xlu0 %v2153
      %v2182 = vpop.xlane.xlu0 %2181
      %2183 = vadd.xlane.f32.xlu0 %v2154
      %v2184 = vpop.xlane.xlu0 %2183
      %2185 = vadd.xlane.f32.xlu0 %v2155
      %v2186 = vpop.xlane.xlu0 %2185
      %2187 = vadd.xlane.f32.xlu0 %v2156
      %v2188 = vpop.xlane.xlu0 %2187
      %vm2189 = vcmp.gt.f32.partialorder %v2158, 0.0
      %vm2190 = vcmp.gt.f32.partialorder %v2160, 0.0
      %vm2191 = vcmp.gt.f32.partialorder %v2162, 0.0
      %vm2192 = vcmp.gt.f32.partialorder %v2164, 0.0
      %vm2193 = vcmp.gt.f32.partialorder %v2166, 0.0
      %vm2194 = vcmp.gt.f32.partialorder %v2168, 0.0
      %vm2195 = vcmp.gt.f32.partialorder %v2170, 0.0
      %vm2196 = vcmp.gt.f32.partialorder %v2172, 0.0
      %vm2197 = vcmp.gt.f32.partialorder %v2174, 0.0
      %vm2198 = vcmp.gt.f32.partialorder %v2176, 0.0
      %vm2199 = vcmp.gt.f32.partialorder %v2178, 0.0
      %vm2200 = vcmp.gt.f32.partialorder %v2180, 0.0
      %vm2201 = vcmp.gt.f32.partialorder %v2182, 0.0
      %vm2202 = vcmp.gt.f32.partialorder %v2184, 0.0
      %vm2203 = vcmp.gt.f32.partialorder %v2186, 0.0
      %vm2204 = vcmp.gt.f32.partialorder %v2188, 0.0
      %v2205 = vmax.f32 %v2158, 1e-30
      %v2206 = vmax.f32 %v2160, 1e-30
      %v2207 = vmax.f32 %v2162, 1e-30
      %v2208 = vmax.f32 %v2164, 1e-30
      %v2209 = vmax.f32 %v2166, 1e-30
      %v2210 = vmax.f32 %v2168, 1e-30
      %v2211 = vmax.f32 %v2170, 1e-30
      %v2212 = vmax.f32 %v2172, 1e-30
      %v2213 = vmax.f32 %v2174, 1e-30
      %v2214 = vmax.f32 %v2176, 1e-30
      %v2215 = vmax.f32 %v2178, 1e-30
      %v2216 = vmax.f32 %v2180, 1e-30
      %v2217 = vmax.f32 %v2182, 1e-30
      %v2218 = vmax.f32 %v2184, 1e-30
      %v2219 = vmax.f32 %v2186, 1e-30
      %v2220 = vmax.f32 %v2188, 1e-30
      %v2221 = vrcp.pop %v2205
      %v2222 = vrcp.pop %v2206
      %v2223 = vrcp.pop %v2207
      %v2224 = vrcp.pop %v2208
      %v2225 = vrcp.pop %v2209
      %v2226 = vrcp.pop %v2210
      %v2227 = vrcp.pop %v2211
      %v2228 = vrcp.pop %v2212
      %v2229 = vrcp.pop %v2213
      %v2230 = vrcp.pop %v2214
      %v2231 = vrcp.pop %v2215
      %v2232 = vrcp.pop %v2216
      %v2233 = vrcp.pop %v2217
      %v2234 = vrcp.pop %v2218
      %v2235 = vrcp.pop %v2219
      %v2236 = vrcp.pop %v2220
      %v2237 = vsel %vm2189, %v2221, 0.0
      %v2238 = vsel %vm2190, %v2222, 0.0
      %v2239 = vsel %vm2191, %v2223, 0.0
      %v2240 = vsel %vm2192, %v2224, 0.0
      %v2241 = vsel %vm2193, %v2225, 0.0
      %v2242 = vsel %vm2194, %v2226, 0.0
      %v2243 = vsel %vm2195, %v2227, 0.0
      %v2244 = vsel %vm2196, %v2228, 0.0
      %v2245 = vsel %vm2197, %v2229, 0.0
      %v2246 = vsel %vm2198, %v2230, 0.0
      %v2247 = vsel %vm2199, %v2231, 0.0
      %v2248 = vsel %vm2200, %v2232, 0.0
      %v2249 = vsel %vm2201, %v2233, 0.0
      %v2250 = vsel %vm2202, %v2234, 0.0
      %v2251 = vsel %vm2203, %v2235, 0.0
      %v2252 = vsel %vm2204, %v2236, 0.0
      %v2253 = vmul.f32 %v2141, %v2237
      %v2254 = vmul.f32 %v2142, %v2238
      %v2255 = vmul.f32 %v2143, %v2239
      %v2256 = vmul.f32 %v2144, %v2240
      %v2257 = vmul.f32 %v2145, %v2241
      %v2258 = vmul.f32 %v2146, %v2242
      %v2259 = vmul.f32 %v2147, %v2243
      %v2260 = vmul.f32 %v2148, %v2244
      %v2261 = vmul.f32 %v2149, %v2245
      %v2262 = vmul.f32 %v2150, %v2246
      %v2263 = vmul.f32 %v2151, %v2247
      %v2264 = vmul.f32 %v2152, %v2248
      %v2265 = vmul.f32 %v2153, %v2249
      %v2266 = vmul.f32 %v2154, %v2250
      %v2267 = vmul.f32 %v2155, %v2251
      %v2268 = vmul.f32 %v2156, %v2252
      %2269 = vmatprep.subr.mxu0 0.0
      %2270 = vmatpush1.msra.mxu0 %v889
      %2271 = vmatprep.subr.mxu0 0.0
      %2272 = vmatpush1.msra.mxu0 %v892
      %2273 = vmatprep.subr.mxu0 0.0
      %2274 = vmatpush1.msra.mxu0 %v897
      %2275 = vmatprep.subr.mxu0 0.0
      %2276 = vmatpush1.msra.mxu0 %v900
      %2277 = vmatprep.subr.mxu0 0.0
      %2278 = vmatpush1.msra.mxu0 %v905
      %2279 = vmatprep.subr.mxu0 0.0
      %2280 = vmatpush1.msra.mxu0 %v908
      %2281 = vmatprep.subr.mxu0 0.0
      %2282 = vmatpush1.msra.mxu0 %v913
      %2283 = vmatprep.subr.mxu0 0.0
      %2284 = vmatpush1.msra.mxu0 %v916
      %2285 = vmatprep.subr.mxu0 0.0
      %2286 = vmatpush1.msra.mxu0 %v921
      %2287 = vmatprep.subr.mxu0 0.0
      %2288 = vmatpush1.msra.mxu0 %v924
      %2289 = vmatprep.subr.mxu0 0.0
      %2290 = vmatpush1.msra.mxu0 %v929
      %2291 = vmatprep.subr.mxu0 0.0
      %2292 = vmatpush1.msra.mxu0 %v932
      %2293 = vmatprep.subr.mxu0 0.0
      %2294 = vmatpush1.msra.mxu0 %v937
      %2295 = vmatprep.subr.mxu0 0.0
      %2296 = vmatpush1.msra.mxu0 %v940
      %2297 = vmatprep.subr.mxu0 0.0
      %2298 = vmatpush1.msra.mxu0 %v945
      %2299 = vmatprep.subr.mxu0 0.0
      %2300 = vmatpush1.msra.mxu0 %v948
      %2301 = vmatprep.subr.mxu0 0.0
      %2302 = vmatpush1.msra.mxu0 0.0
      %2303 = vmatprep.subr.mxu0 0.0
      %2304 = vmatpush1.msra.mxu0 0.0
      %2305 = vmatprep.subr.mxu0 0.0
      %2306 = vmatpush1.msra.mxu0 0.0
      %2307 = vmatprep.subr.mxu0 0.0
      %2308 = vmatpush1.msra.mxu0 0.0
      %2309 = vmatprep.subr.mxu0 0.0
      %2310 = vmatpush1.msra.mxu0 0.0
      %2311 = vmatprep.subr.mxu0 0.0
      %2312 = vmatpush1.msra.mxu0 0.0
      %2313 = vmatprep.subr.mxu0 0.0
      %2314 = vmatpush1.msra.mxu0 0.0
      %2315 = vmatprep.subr.mxu0 0.0
      %2316 = vmatpush1.msra.mxu0 0.0
      %2317 = vmatprep.subr.mxu0 0.0
      %2318 = vmatpush1.msra.mxu0 0.0
      %2319 = vmatprep.subr.mxu0 0.0
      %2320 = vmatpush1.msra.mxu0 0.0
      %2321 = vmatprep.subr.mxu0 0.0
      %2322 = vmatpush1.msra.mxu0 0.0
      %2323 = vmatprep.subr.mxu0 0.0
      %2324 = vmatpush1.msra.mxu0 0.0
      %2325 = vmatprep.subr.mxu0 0.0
      %2326 = vmatpush1.msra.mxu0 0.0
      %2327 = vmatprep.subr.mxu0 0.0
      %2328 = vmatpush1.msra.mxu0 0.0
      %2329 = vmatprep.subr.mxu0 0.0
      %2330 = vmatpush1.msra.mxu0 0.0
      %2331 = vmatprep.subr.mxu0 0.0
      %2332 = vmatpush1.msra.mxu0 0.0
      %2333 = vmatprep.mubr.f32.mxu0 0.0
      %2334 = vmatmul.mubr.f32.gmra.mrb[0].mxu0 %v2253
      %v2335 = vpop.f32.mrb[0].mxu0
      %v2336 = vadd.f32 0.0, %v2335
      %v2337 = vpop.f32.mrb[0].mxu0
      %2338 = vmatprep.mubr.f32.mxu0 0.0
      %2339 = vmatmul.mubr.f32.gmra.mrb[0].mxu0 %v2254
      %v2340 = vpop.f32.mrb[0].mxu0
      %v2341 = vadd.f32 0.0, %v2340
      %v2342 = vpop.f32.mrb[0].mxu0
      %2343 = vmatprep.mubr.f32.mxu0 0.0
      %2344 = vmatmul.mubr.f32.gmra.mrb[0].mxu0 %v2255
      %v2345 = vpop.f32.mrb[0].mxu0
      %v2346 = vadd.f32 0.0, %v2345
      %v2347 = vpop.f32.mrb[0].mxu0
      %2348 = vmatprep.mubr.f32.mxu0 0.0
      %2349 = vmatmul.mubr.f32.gmra.mrb[0].mxu0 %v2256
      %v2350 = vpop.f32.mrb[0].mxu0
      %v2351 = vadd.f32 0.0, %v2350
      %v2352 = vpop.f32.mrb[0].mxu0
      %2353 = vmatprep.mubr.f32.mxu0 0.0
      %2354 = vmatmul.mubr.f32.gmra.mrb[0].mxu0 %v2257
      %v2355 = vpop.f32.mrb[0].mxu0
      %v2356 = vadd.f32 0.0, %v2355
      %v2357 = vpop.f32.mrb[0].mxu0
      %2358 = vmatprep.mubr.f32.mxu0 0.0
      %2359 = vmatmul.mubr.f32.gmra.mrb[0].mxu0 %v2258
      %v2360 = vpop.f32.mrb[0].mxu0
      %v2361 = vadd.f32 0.0, %v2360
      %v2362 = vpop.f32.mrb[0].mxu0
      %2363 = vmatprep.mubr.f32.mxu0 0.0
      %2364 = vmatmul.mubr.f32.gmra.mrb[0].mxu0 %v2259
      %v2365 = vpop.f32.mrb[0].mxu0
      %v2366 = vadd.f32 0.0, %v2365
      %v2367 = vpop.f32.mrb[0].mxu0
      %2368 = vmatprep.mubr.f32.mxu0 0.0
      %2369 = vmatmul.mubr.f32.gmra.mrb[0].mxu0 %v2260
      %v2370 = vpop.f32.mrb[0].mxu0
      %v2371 = vadd.f32 0.0, %v2370
      %v2372 = vpop.f32.mrb[0].mxu0
      %2373 = vmatprep.mubr.f32.mxu0 0.0
      %2374 = vmatmul.mubr.f32.gmra.mrb[0].mxu0 %v2261
      %v2375 = vpop.f32.mrb[0].mxu0
      %v2376 = vadd.f32 0.0, %v2375
      %v2377 = vpop.f32.mrb[0].mxu0
      %2378 = vmatprep.mubr.f32.mxu0 0.0
      %2379 = vmatmul.mubr.f32.gmra.mrb[0].mxu0 %v2262
      %v2380 = vpop.f32.mrb[0].mxu0
      %v2381 = vadd.f32 0.0, %v2380
      %v2382 = vpop.f32.mrb[0].mxu0
      %2383 = vmatprep.mubr.f32.mxu0 0.0
      %2384 = vmatmul.mubr.f32.gmra.mrb[0].mxu0 %v2263
      %v2385 = vpop.f32.mrb[0].mxu0
      %v2386 = vadd.f32 0.0, %v2385
      %v2387 = vpop.f32.mrb[0].mxu0
      %2388 = vmatprep.mubr.f32.mxu0 0.0
      %2389 = vmatmul.mubr.f32.gmra.mrb[0].mxu0 %v2264
      %v2390 = vpop.f32.mrb[0].mxu0
      %v2391 = vadd.f32 0.0, %v2390
      %v2392 = vpop.f32.mrb[0].mxu0
      %2393 = vmatprep.mubr.f32.mxu0 0.0
      %2394 = vmatmul.mubr.f32.gmra.mrb[0].mxu0 %v2265
      %v2395 = vpop.f32.mrb[0].mxu0
      %v2396 = vadd.f32 0.0, %v2395
      %v2397 = vpop.f32.mrb[0].mxu0
      %2398 = vmatprep.mubr.f32.mxu0 0.0
      %2399 = vmatmul.mubr.f32.gmra.mrb[0].mxu0 %v2266
      %v2400 = vpop.f32.mrb[0].mxu0
      %v2401 = vadd.f32 0.0, %v2400
      %v2402 = vpop.f32.mrb[0].mxu0
      %2403 = vmatprep.mubr.f32.mxu0 0.0
      %2404 = vmatmul.mubr.f32.gmra.mrb[0].mxu0 %v2267
      %v2405 = vpop.f32.mrb[0].mxu0
      %v2406 = vadd.f32 0.0, %v2405
      %v2407 = vpop.f32.mrb[0].mxu0
      %2408 = vmatprep.mubr.f32.mxu0 0.0
      %2409 = vmatmul.mubr.f32.gmra.mrb[0].mxu0 %v2268
      %v2410 = vpop.f32.mrb[0].mxu0
      %v2411 = vadd.f32 0.0, %v2410
      %v2412 = vpop.f32.mrb[0].mxu0
      %2413 = vdwg.mxu0
      %v2414 = vadd.f32 %v1934, %v2336
      %v2415 = vadd.f32 %v1939, %v2341
      %v2416 = vadd.f32 %v1944, %v2346
      %v2417 = vadd.f32 %v1949, %v2351
      %v2418 = vadd.f32 %v1954, %v2356
      %v2419 = vadd.f32 %v1959, %v2361
      %v2420 = vadd.f32 %v1964, %v2366
      %v2421 = vadd.f32 %v1969, %v2371
      %v2422 = vadd.f32 %v1974, %v2376
      %v2423 = vadd.f32 %v1979, %v2381
      %v2424 = vadd.f32 %v1984, %v2386
      %v2425 = vadd.f32 %v1989, %v2391
      %v2426 = vadd.f32 %v1994, %v2396
      %v2427 = vadd.f32 %v1999, %v2401
      %v2428 = vadd.f32 %v2004, %v2406
      %v2429 = vadd.f32 %v2009, %v2411
      %s2430 = scalar_lea.vmem %s2, 384
      %v2431 = vld [vmem:[%s2430] sm:$0xff]
      %v2432 = vld [vmem:[%s2430 + $0x8] sm:$0xff]
      %v2433 = vld [vmem:[%s2430 + $0x10] sm:$0xff]
      %v2434 = vld [vmem:[%s2430 + $0x18] sm:$0xff]
      %v2435 = vld [vmem:[%s2430 + $0x20] sm:$0xff]
      %v2436 = vld [vmem:[%s2430 + $0x28] sm:$0xff]
      %v2437 = vld [vmem:[%s2430 + $0x30] sm:$0xff]
      %v2438 = vld [vmem:[%s2430 + $0x38] sm:$0xff]
      %v2439 = vld [vmem:[%s2430 + $0x40] sm:$0xff]
      %v2440 = vld [vmem:[%s2430 + $0x48] sm:$0xff]
      %v2441 = vld [vmem:[%s2430 + $0x50] sm:$0xff]
      %v2442 = vld [vmem:[%s2430 + $0x58] sm:$0xff]
      %v2443 = vld [vmem:[%s2430 + $0x60] sm:$0xff]
      %v2444 = vld [vmem:[%s2430 + $0x68] sm:$0xff]
      %v2445 = vld [vmem:[%s2430 + $0x70] sm:$0xff]
      %v2446 = vld [vmem:[%s2430 + $0x78] sm:$0xff]
      %vm2447 = vcmp.gt.f32.partialorder %v2431, 0.0
      %vm2448 = vcmp.gt.f32.partialorder %v2432, 0.0
      %vm2449 = vcmp.gt.f32.partialorder %v2433, 0.0
      %vm2450 = vcmp.gt.f32.partialorder %v2434, 0.0
      %vm2451 = vcmp.gt.f32.partialorder %v2435, 0.0
      %vm2452 = vcmp.gt.f32.partialorder %v2436, 0.0
      %vm2453 = vcmp.gt.f32.partialorder %v2437, 0.0
      %vm2454 = vcmp.gt.f32.partialorder %v2438, 0.0
      %vm2455 = vcmp.gt.f32.partialorder %v2439, 0.0
      %vm2456 = vcmp.gt.f32.partialorder %v2440, 0.0
      %vm2457 = vcmp.gt.f32.partialorder %v2441, 0.0
      %vm2458 = vcmp.gt.f32.partialorder %v2442, 0.0
      %vm2459 = vcmp.gt.f32.partialorder %v2443, 0.0
      %vm2460 = vcmp.gt.f32.partialorder %v2444, 0.0
      %vm2461 = vcmp.gt.f32.partialorder %v2445, 0.0
      %vm2462 = vcmp.gt.f32.partialorder %v2446, 0.0
      %v2463 = vsel %vm2447, %v1131, -1e+30
      %v2464 = vsel %vm2448, %v1136, -1e+30
      %v2465 = vsel %vm2449, %v1141, -1e+30
      %v2466 = vsel %vm2450, %v1146, -1e+30
      %v2467 = vsel %vm2451, %v1151, -1e+30
      %v2468 = vsel %vm2452, %v1156, -1e+30
      %v2469 = vsel %vm2453, %v1161, -1e+30
      %v2470 = vsel %vm2454, %v1166, -1e+30
      %v2471 = vsel %vm2455, %v1171, -1e+30
      %v2472 = vsel %vm2456, %v1176, -1e+30
      %v2473 = vsel %vm2457, %v1181, -1e+30
      %v2474 = vsel %vm2458, %v1186, -1e+30
      %v2475 = vsel %vm2459, %v1191, -1e+30
      %v2476 = vsel %vm2460, %v1196, -1e+30
      %v2477 = vsel %vm2461, %v1201, -1e+30
      %v2478 = vsel %vm2462, %v1206, -1e+30
      %2479 = vmax.xlane.f32.xlu0 %v2463
      %v2480 = vpop.xlane.xlu0 %2479
      %2481 = vmax.xlane.f32.xlu0 %v2464
      %v2482 = vpop.xlane.xlu0 %2481
      %2483 = vmax.xlane.f32.xlu0 %v2465
      %v2484 = vpop.xlane.xlu0 %2483
      %2485 = vmax.xlane.f32.xlu0 %v2466
      %v2486 = vpop.xlane.xlu0 %2485
      %2487 = vmax.xlane.f32.xlu0 %v2467
      %v2488 = vpop.xlane.xlu0 %2487
      %2489 = vmax.xlane.f32.xlu0 %v2468
      %v2490 = vpop.xlane.xlu0 %2489
      %2491 = vmax.xlane.f32.xlu0 %v2469
      %v2492 = vpop.xlane.xlu0 %2491
      %2493 = vmax.xlane.f32.xlu0 %v2470
      %v2494 = vpop.xlane.xlu0 %2493
      %2495 = vmax.xlane.f32.xlu0 %v2471
      %v2496 = vpop.xlane.xlu0 %2495
      %2497 = vmax.xlane.f32.xlu0 %v2472
      %v2498 = vpop.xlane.xlu0 %2497
      %2499 = vmax.xlane.f32.xlu0 %v2473
      %v2500 = vpop.xlane.xlu0 %2499
      %2501 = vmax.xlane.f32.xlu0 %v2474
      %v2502 = vpop.xlane.xlu0 %2501
      %2503 = vmax.xlane.f32.xlu0 %v2475
      %v2504 = vpop.xlane.xlu0 %2503
      %2505 = vmax.xlane.f32.xlu0 %v2476
      %v2506 = vpop.xlane.xlu0 %2505
      %2507 = vmax.xlane.f32.xlu0 %v2477
      %v2508 = vpop.xlane.xlu0 %2507
      %2509 = vmax.xlane.f32.xlu0 %v2478
      %v2510 = vpop.xlane.xlu0 %2509
      %v2511 = vsub.f32 %v2463, %v2480
      %v2512 = vsub.f32 %v2464, %v2482
      %v2513 = vsub.f32 %v2465, %v2484
      %v2514 = vsub.f32 %v2466, %v2486
      %v2515 = vsub.f32 %v2467, %v2488
      %v2516 = vsub.f32 %v2468, %v2490
      %v2517 = vsub.f32 %v2469, %v2492
      %v2518 = vsub.f32 %v2470, %v2494
      %v2519 = vsub.f32 %v2471, %v2496
      %v2520 = vsub.f32 %v2472, %v2498
      %v2521 = vsub.f32 %v2473, %v2500
      %v2522 = vsub.f32 %v2474, %v2502
      %v2523 = vsub.f32 %v2475, %v2504
      %v2524 = vsub.f32 %v2476, %v2506
      %v2525 = vsub.f32 %v2477, %v2508
      %v2526 = vsub.f32 %v2478, %v2510
      %v2527 = vmul.f32 %v2511, 1.442695
      %v2528 = vpow.pop %v2527
      %v2529 = vmul.f32 %v2512, 1.442695
      %v2530 = vpow.pop %v2529
      %v2531 = vmul.f32 %v2513, 1.442695
      %v2532 = vpow.pop %v2531
      %v2533 = vmul.f32 %v2514, 1.442695
      %v2534 = vpow.pop %v2533
      %v2535 = vmul.f32 %v2515, 1.442695
      %v2536 = vpow.pop %v2535
      %v2537 = vmul.f32 %v2516, 1.442695
      %v2538 = vpow.pop %v2537
      %v2539 = vmul.f32 %v2517, 1.442695
      %v2540 = vpow.pop %v2539
      %v2541 = vmul.f32 %v2518, 1.442695
      %v2542 = vpow.pop %v2541
      %v2543 = vmul.f32 %v2519, 1.442695
      %v2544 = vpow.pop %v2543
      %v2545 = vmul.f32 %v2520, 1.442695
      %v2546 = vpow.pop %v2545
      %v2547 = vmul.f32 %v2521, 1.442695
      %v2548 = vpow.pop %v2547
      %v2549 = vmul.f32 %v2522, 1.442695
      %v2550 = vpow.pop %v2549
      %v2551 = vmul.f32 %v2523, 1.442695
      %v2552 = vpow.pop %v2551
      %v2553 = vmul.f32 %v2524, 1.442695
      %v2554 = vpow.pop %v2553
      %v2555 = vmul.f32 %v2525, 1.442695
      %v2556 = vpow.pop %v2555
      %v2557 = vmul.f32 %v2526, 1.442695
      %v2558 = vpow.pop %v2557
      %v2559 = vmul.f32 %v2528, %v2431
      %v2560 = vmul.f32 %v2530, %v2432
      %v2561 = vmul.f32 %v2532, %v2433
      %v2562 = vmul.f32 %v2534, %v2434
      %v2563 = vmul.f32 %v2536, %v2435
      %v2564 = vmul.f32 %v2538, %v2436
      %v2565 = vmul.f32 %v2540, %v2437
      %v2566 = vmul.f32 %v2542, %v2438
      %v2567 = vmul.f32 %v2544, %v2439
      %v2568 = vmul.f32 %v2546, %v2440
      %v2569 = vmul.f32 %v2548, %v2441
      %v2570 = vmul.f32 %v2550, %v2442
      %v2571 = vmul.f32 %v2552, %v2443
      %v2572 = vmul.f32 %v2554, %v2444
      %v2573 = vmul.f32 %v2556, %v2445
      %v2574 = vmul.f32 %v2558, %v2446
      %2575 = vadd.xlane.f32.xlu0 %v2559
      %v2576 = vpop.xlane.xlu0 %2575
      %2577 = vadd.xlane.f32.xlu0 %v2560
      %v2578 = vpop.xlane.xlu0 %2577
      %2579 = vadd.xlane.f32.xlu0 %v2561
      %v2580 = vpop.xlane.xlu0 %2579
      %2581 = vadd.xlane.f32.xlu0 %v2562
      %v2582 = vpop.xlane.xlu0 %2581
      %2583 = vadd.xlane.f32.xlu0 %v2563
      %v2584 = vpop.xlane.xlu0 %2583
      %2585 = vadd.xlane.f32.xlu0 %v2564
      %v2586 = vpop.xlane.xlu0 %2585
      %2587 = vadd.xlane.f32.xlu0 %v2565
      %v2588 = vpop.xlane.xlu0 %2587
      %2589 = vadd.xlane.f32.xlu0 %v2566
      %v2590 = vpop.xlane.xlu0 %2589
      %2591 = vadd.xlane.f32.xlu0 %v2567
      %v2592 = vpop.xlane.xlu0 %2591
      %2593 = vadd.xlane.f32.xlu0 %v2568
      %v2594 = vpop.xlane.xlu0 %2593
      %2595 = vadd.xlane.f32.xlu0 %v2569
      %v2596 = vpop.xlane.xlu0 %2595
      %2597 = vadd.xlane.f32.xlu0 %v2570
      %v2598 = vpop.xlane.xlu0 %2597
      %2599 = vadd.xlane.f32.xlu0 %v2571
      %v2600 = vpop.xlane.xlu0 %2599
      %2601 = vadd.xlane.f32.xlu0 %v2572
      %v2602 = vpop.xlane.xlu0 %2601
      %2603 = vadd.xlane.f32.xlu0 %v2573
      %v2604 = vpop.xlane.xlu0 %2603
      %2605 = vadd.xlane.f32.xlu0 %v2574
      %v2606 = vpop.xlane.xlu0 %2605
      %vm2607 = vcmp.gt.f32.partialorder %v2576, 0.0
      %vm2608 = vcmp.gt.f32.partialorder %v2578, 0.0
      %vm2609 = vcmp.gt.f32.partialorder %v2580, 0.0
      %vm2610 = vcmp.gt.f32.partialorder %v2582, 0.0
      %vm2611 = vcmp.gt.f32.partialorder %v2584, 0.0
      %vm2612 = vcmp.gt.f32.partialorder %v2586, 0.0
      %vm2613 = vcmp.gt.f32.partialorder %v2588, 0.0
      %vm2614 = vcmp.gt.f32.partialorder %v2590, 0.0
      %vm2615 = vcmp.gt.f32.partialorder %v2592, 0.0
      %vm2616 = vcmp.gt.f32.partialorder %v2594, 0.0
      %vm2617 = vcmp.gt.f32.partialorder %v2596, 0.0
      %vm2618 = vcmp.gt.f32.partialorder %v2598, 0.0
      %vm2619 = vcmp.gt.f32.partialorder %v2600, 0.0
      %vm2620 = vcmp.gt.f32.partialorder %v2602, 0.0
      %vm2621 = vcmp.gt.f32.partialorder %v2604, 0.0
      %vm2622 = vcmp.gt.f32.partialorder %v2606, 0.0
      %v2623 = vmax.f32 %v2576, 1e-30
      %v2624 = vmax.f32 %v2578, 1e-30
      %v2625 = vmax.f32 %v2580, 1e-30
      %v2626 = vmax.f32 %v2582, 1e-30
      %v2627 = vmax.f32 %v2584, 1e-30
      %v2628 = vmax.f32 %v2586, 1e-30
      %v2629 = vmax.f32 %v2588, 1e-30
      %v2630 = vmax.f32 %v2590, 1e-30
      %v2631 = vmax.f32 %v2592, 1e-30
      %v2632 = vmax.f32 %v2594, 1e-30
      %v2633 = vmax.f32 %v2596, 1e-30
      %v2634 = vmax.f32 %v2598, 1e-30
      %v2635 = vmax.f32 %v2600, 1e-30
      %v2636 = vmax.f32 %v2602, 1e-30
      %v2637 = vmax.f32 %v2604, 1e-30
      %v2638 = vmax.f32 %v2606, 1e-30
      %v2639 = vrcp.pop %v2623
      %v2640 = vrcp.pop %v2624
      %v2641 = vrcp.pop %v2625
      %v2642 = vrcp.pop %v2626
      %v2643 = vrcp.pop %v2627
      %v2644 = vrcp.pop %v2628
      %v2645 = vrcp.pop %v2629
      %v2646 = vrcp.pop %v2630
      %v2647 = vrcp.pop %v2631
      %v2648 = vrcp.pop %v2632
      %v2649 = vrcp.pop %v2633
      %v2650 = vrcp.pop %v2634
      %v2651 = vrcp.pop %v2635
      %v2652 = vrcp.pop %v2636
      %v2653 = vrcp.pop %v2637
      %v2654 = vrcp.pop %v2638
      %v2655 = vsel %vm2607, %v2639, 0.0
      %v2656 = vsel %vm2608, %v2640, 0.0
      %v2657 = vsel %vm2609, %v2641, 0.0
      %v2658 = vsel %vm2610, %v2642, 0.0
      %v2659 = vsel %vm2611, %v2643, 0.0
      %v2660 = vsel %vm2612, %v2644, 0.0
      %v2661 = vsel %vm2613, %v2645, 0.0
      %v2662 = vsel %vm2614, %v2646, 0.0
      %v2663 = vsel %vm2615, %v2647, 0.0
      %v2664 = vsel %vm2616, %v2648, 0.0
      %v2665 = vsel %vm2617, %v2649, 0.0
      %v2666 = vsel %vm2618, %v2650, 0.0
      %v2667 = vsel %vm2619, %v2651, 0.0
      %v2668 = vsel %vm2620, %v2652, 0.0
      %v2669 = vsel %vm2621, %v2653, 0.0
      %v2670 = vsel %vm2622, %v2654, 0.0
      %v2671 = vmul.f32 %v2559, %v2655
      %v2672 = vmul.f32 %v2560, %v2656
      %v2673 = vmul.f32 %v2561, %v2657
      %v2674 = vmul.f32 %v2562, %v2658
      %v2675 = vmul.f32 %v2563, %v2659
      %v2676 = vmul.f32 %v2564, %v2660
      %v2677 = vmul.f32 %v2565, %v2661
      %v2678 = vmul.f32 %v2566, %v2662
      %v2679 = vmul.f32 %v2567, %v2663
      %v2680 = vmul.f32 %v2568, %v2664
      %v2681 = vmul.f32 %v2569, %v2665
      %v2682 = vmul.f32 %v2570, %v2666
      %v2683 = vmul.f32 %v2571, %v2667
      %v2684 = vmul.f32 %v2572, %v2668
      %v2685 = vmul.f32 %v2573, %v2669
      %v2686 = vmul.f32 %v2574, %v2670
      %2687 = vmatprep.subr.mxu0 0.0
      %2688 = vmatpush1.msra.mxu0 %v889
      %2689 = vmatprep.subr.mxu0 0.0
      %2690 = vmatpush1.msra.mxu0 %v892
      %2691 = vmatprep.subr.mxu0 0.0
      %2692 = vmatpush1.msra.mxu0 %v897
      %2693 = vmatprep.subr.mxu0 0.0
      %2694 = vmatpush1.msra.mxu0 %v900
      %2695 = vmatprep.subr.mxu0 0.0
      %2696 = vmatpush1.msra.mxu0 %v905
      %2697 = vmatprep.subr.mxu0 0.0
      %2698 = vmatpush1.msra.mxu0 %v908
      %2699 = vmatprep.subr.mxu0 0.0
      %2700 = vmatpush1.msra.mxu0 %v913
      %2701 = vmatprep.subr.mxu0 0.0
      %2702 = vmatpush1.msra.mxu0 %v916
      %2703 = vmatprep.subr.mxu0 0.0
      %2704 = vmatpush1.msra.mxu0 %v921
      %2705 = vmatprep.subr.mxu0 0.0
      %2706 = vmatpush1.msra.mxu0 %v924
      %2707 = vmatprep.subr.mxu0 0.0
      %2708 = vmatpush1.msra.mxu0 %v929
      %2709 = vmatprep.subr.mxu0 0.0
      %2710 = vmatpush1.msra.mxu0 %v932
      %2711 = vmatprep.subr.mxu0 0.0
      %2712 = vmatpush1.msra.mxu0 %v937
      %2713 = vmatprep.subr.mxu0 0.0
      %2714 = vmatpush1.msra.mxu0 %v940
      %2715 = vmatprep.subr.mxu0 0.0
      %2716 = vmatpush1.msra.mxu0 %v945
      %2717 = vmatprep.subr.mxu0 0.0
      %2718 = vmatpush1.msra.mxu0 %v948
      %2719 = vmatprep.subr.mxu0 0.0
      %2720 = vmatpush1.msra.mxu0 0.0
      %2721 = vmatprep.subr.mxu0 0.0
      %2722 = vmatpush1.msra.mxu0 0.0
      %2723 = vmatprep.subr.mxu0 0.0
      %2724 = vmatpush1.msra.mxu0 0.0
      %2725 = vmatprep.subr.mxu0 0.0
      %2726 = vmatpush1.msra.mxu0 0.0
      %2727 = vmatprep.subr.mxu0 0.0
      %2728 = vmatpush1.msra.mxu0 0.0
      %2729 = vmatprep.subr.mxu0 0.0
      %2730 = vmatpush1.msra.mxu0 0.0
      %2731 = vmatprep.subr.mxu0 0.0
      %2732 = vmatpush1.msra.mxu0 0.0
      %2733 = vmatprep.subr.mxu0 0.0
      %2734 = vmatpush1.msra.mxu0 0.0
      %2735 = vmatprep.subr.mxu0 0.0
      %2736 = vmatpush1.msra.mxu0 0.0
      %2737 = vmatprep.subr.mxu0 0.0
      %2738 = vmatpush1.msra.mxu0 0.0
      %2739 = vmatprep.subr.mxu0 0.0
      %2740 = vmatpush1.msra.mxu0 0.0
      %2741 = vmatprep.subr.mxu0 0.0
      %2742 = vmatpush1.msra.mxu0 0.0
      %2743 = vmatprep.subr.mxu0 0.0
      %2744 = vmatpush1.msra.mxu0 0.0
      %2745 = vmatprep.subr.mxu0 0.0
      %2746 = vmatpush1.msra.mxu0 0.0
      %2747 = vmatprep.subr.mxu0 0.0
      %2748 = vmatpush1.msra.mxu0 0.0
      %2749 = vmatprep.subr.mxu0 0.0
      %2750 = vmatpush1.msra.mxu0 0.0
      %2751 = vmatprep.mubr.f32.mxu0 0.0
      %2752 = vmatmul.mubr.f32.gmra.mrb[0].mxu0 %v2671
      %v2753 = vpop.f32.mrb[0].mxu0
      %v2754 = vadd.f32 0.0, %v2753
      %v2755 = vpop.f32.mrb[0].mxu0
      %2756 = vmatprep.mubr.f32.mxu0 0.0
      %2757 = vmatmul.mubr.f32.gmra.mrb[0].mxu0 %v2672
      %v2758 = vpop.f32.mrb[0].mxu0
      %v2759 = vadd.f32 0.0, %v2758
      %v2760 = vpop.f32.mrb[0].mxu0
      %2761 = vmatprep.mubr.f32.mxu0 0.0
      %2762 = vmatmul.mubr.f32.gmra.mrb[0].mxu0 %v2673
      %v2763 = vpop.f32.mrb[0].mxu0
      %v2764 = vadd.f32 0.0, %v2763
      %v2765 = vpop.f32.mrb[0].mxu0
      %2766 = vmatprep.mubr.f32.mxu0 0.0
      %2767 = vmatmul.mubr.f32.gmra.mrb[0].mxu0 %v2674
      %v2768 = vpop.f32.mrb[0].mxu0
      %v2769 = vadd.f32 0.0, %v2768
      %v2770 = vpop.f32.mrb[0].mxu0
      %2771 = vmatprep.mubr.f32.mxu0 0.0
      %2772 = vmatmul.mubr.f32.gmra.mrb[0].mxu0 %v2675
      %v2773 = vpop.f32.mrb[0].mxu0
      %v2774 = vadd.f32 0.0, %v2773
      %v2775 = vpop.f32.mrb[0].mxu0
      %2776 = vmatprep.mubr.f32.mxu0 0.0
      %2777 = vmatmul.mubr.f32.gmra.mrb[0].mxu0 %v2676
      %v2778 = vpop.f32.mrb[0].mxu0
      %v2779 = vadd.f32 0.0, %v2778
      %v2780 = vpop.f32.mrb[0].mxu0
      %2781 = vmatprep.mubr.f32.mxu0 0.0
      %2782 = vmatmul.mubr.f32.gmra.mrb[0].mxu0 %v2677
      %v2783 = vpop.f32.mrb[0].mxu0
      %v2784 = vadd.f32 0.0, %v2783
      %v2785 = vpop.f32.mrb[0].mxu0
      %2786 = vmatprep.mubr.f32.mxu0 0.0
      %2787 = vmatmul.mubr.f32.gmra.mrb[0].mxu0 %v2678
      %v2788 = vpop.f32.mrb[0].mxu0
      %v2789 = vadd.f32 0.0, %v2788
      %v2790 = vpop.f32.mrb[0].mxu0
      %2791 = vmatprep.mubr.f32.mxu0 0.0
      %2792 = vmatmul.mubr.f32.gmra.mrb[0].mxu0 %v2679
      %v2793 = vpop.f32.mrb[0].mxu0
      %v2794 = vadd.f32 0.0, %v2793
      %v2795 = vpop.f32.mrb[0].mxu0
      %2796 = vmatprep.mubr.f32.mxu0 0.0
      %2797 = vmatmul.mubr.f32.gmra.mrb[0].mxu0 %v2680
      %v2798 = vpop.f32.mrb[0].mxu0
      %v2799 = vadd.f32 0.0, %v2798
      %v2800 = vpop.f32.mrb[0].mxu0
      %2801 = vmatprep.mubr.f32.mxu0 0.0
      %2802 = vmatmul.mubr.f32.gmra.mrb[0].mxu0 %v2681
      %v2803 = vpop.f32.mrb[0].mxu0
      %v2804 = vadd.f32 0.0, %v2803
      %v2805 = vpop.f32.mrb[0].mxu0
      %2806 = vmatprep.mubr.f32.mxu0 0.0
      %2807 = vmatmul.mubr.f32.gmra.mrb[0].mxu0 %v2682
      %v2808 = vpop.f32.mrb[0].mxu0
      %v2809 = vadd.f32 0.0, %v2808
      %v2810 = vpop.f32.mrb[0].mxu0
      %2811 = vmatprep.mubr.f32.mxu0 0.0
      %2812 = vmatmul.mubr.f32.gmra.mrb[0].mxu0 %v2683
      %v2813 = vpop.f32.mrb[0].mxu0
      %v2814 = vadd.f32 0.0, %v2813
      %v2815 = vpop.f32.mrb[0].mxu0
      %2816 = vmatprep.mubr.f32.mxu0 0.0
      %2817 = vmatmul.mubr.f32.gmra.mrb[0].mxu0 %v2684
      %v2818 = vpop.f32.mrb[0].mxu0
      %v2819 = vadd.f32 0.0, %v2818
      %v2820 = vpop.f32.mrb[0].mxu0
      %2821 = vmatprep.mubr.f32.mxu0 0.0
      %2822 = vmatmul.mubr.f32.gmra.mrb[0].mxu0 %v2685
      %v2823 = vpop.f32.mrb[0].mxu0
      %v2824 = vadd.f32 0.0, %v2823
      %v2825 = vpop.f32.mrb[0].mxu0
      %2826 = vmatprep.mubr.f32.mxu0 0.0
      %2827 = vmatmul.mubr.f32.gmra.mrb[0].mxu0 %v2686
      %v2828 = vpop.f32.mrb[0].mxu0
      %v2829 = vadd.f32 0.0, %v2828
      %v2830 = vpop.f32.mrb[0].mxu0
      %2831 = vdwg.mxu0
      %v2832 = vadd.f32 %v2414, %v2754
      %v2833 = vadd.f32 %v2415, %v2759
      %v2834 = vadd.f32 %v2416, %v2764
      %v2835 = vadd.f32 %v2417, %v2769
      %v2836 = vadd.f32 %v2418, %v2774
      %v2837 = vadd.f32 %v2419, %v2779
      %v2838 = vadd.f32 %v2420, %v2784
      %v2839 = vadd.f32 %v2421, %v2789
      %v2840 = vadd.f32 %v2422, %v2794
      %v2841 = vadd.f32 %v2423, %v2799
      %v2842 = vadd.f32 %v2424, %v2804
      %v2843 = vadd.f32 %v2425, %v2809
      %v2844 = vadd.f32 %v2426, %v2814
      %v2845 = vadd.f32 %v2427, %v2819
      %v2846 = vadd.f32 %v2428, %v2824
      %v2847 = vadd.f32 %v2429, %v2829
      %s2848 = scalar_lea.vmem %s2, 512
      %v2849 = vld [vmem:[%s2848] sm:$0xff]
      %v2850 = vld [vmem:[%s2848 + $0x8] sm:$0xff]
      %v2851 = vld [vmem:[%s2848 + $0x10] sm:$0xff]
      %v2852 = vld [vmem:[%s2848 + $0x18] sm:$0xff]
      %v2853 = vld [vmem:[%s2848 + $0x20] sm:$0xff]
      %v2854 = vld [vmem:[%s2848 + $0x28] sm:$0xff]
      %v2855 = vld [vmem:[%s2848 + $0x30] sm:$0xff]
      %v2856 = vld [vmem:[%s2848 + $0x38] sm:$0xff]
      %v2857 = vld [vmem:[%s2848 + $0x40] sm:$0xff]
      %v2858 = vld [vmem:[%s2848 + $0x48] sm:$0xff]
      %v2859 = vld [vmem:[%s2848 + $0x50] sm:$0xff]
      %v2860 = vld [vmem:[%s2848 + $0x58] sm:$0xff]
      %v2861 = vld [vmem:[%s2848 + $0x60] sm:$0xff]
      %v2862 = vld [vmem:[%s2848 + $0x68] sm:$0xff]
      %v2863 = vld [vmem:[%s2848 + $0x70] sm:$0xff]
      %v2864 = vld [vmem:[%s2848 + $0x78] sm:$0xff]
      %vm2865 = vcmp.gt.f32.partialorder %v2849, 0.0
      %vm2866 = vcmp.gt.f32.partialorder %v2850, 0.0
      %vm2867 = vcmp.gt.f32.partialorder %v2851, 0.0
      %vm2868 = vcmp.gt.f32.partialorder %v2852, 0.0
      %vm2869 = vcmp.gt.f32.partialorder %v2853, 0.0
      %vm2870 = vcmp.gt.f32.partialorder %v2854, 0.0
      %vm2871 = vcmp.gt.f32.partialorder %v2855, 0.0
      %vm2872 = vcmp.gt.f32.partialorder %v2856, 0.0
      %vm2873 = vcmp.gt.f32.partialorder %v2857, 0.0
      %vm2874 = vcmp.gt.f32.partialorder %v2858, 0.0
      %vm2875 = vcmp.gt.f32.partialorder %v2859, 0.0
      %vm2876 = vcmp.gt.f32.partialorder %v2860, 0.0
      %vm2877 = vcmp.gt.f32.partialorder %v2861, 0.0
      %vm2878 = vcmp.gt.f32.partialorder %v2862, 0.0
      %vm2879 = vcmp.gt.f32.partialorder %v2863, 0.0
      %vm2880 = vcmp.gt.f32.partialorder %v2864, 0.0
      %v2881 = vsel %vm2865, %v1131, -1e+30
      %v2882 = vsel %vm2866, %v1136, -1e+30
      %v2883 = vsel %vm2867, %v1141, -1e+30
      %v2884 = vsel %vm2868, %v1146, -1e+30
      %v2885 = vsel %vm2869, %v1151, -1e+30
      %v2886 = vsel %vm2870, %v1156, -1e+30
      %v2887 = vsel %vm2871, %v1161, -1e+30
      %v2888 = vsel %vm2872, %v1166, -1e+30
      %v2889 = vsel %vm2873, %v1171, -1e+30
      %v2890 = vsel %vm2874, %v1176, -1e+30
      %v2891 = vsel %vm2875, %v1181, -1e+30
      %v2892 = vsel %vm2876, %v1186, -1e+30
      %v2893 = vsel %vm2877, %v1191, -1e+30
      %v2894 = vsel %vm2878, %v1196, -1e+30
      %v2895 = vsel %vm2879, %v1201, -1e+30
      %v2896 = vsel %vm2880, %v1206, -1e+30
      %2897 = vmax.xlane.f32.xlu0 %v2881
      %v2898 = vpop.xlane.xlu0 %2897
      %2899 = vmax.xlane.f32.xlu0 %v2882
      %v2900 = vpop.xlane.xlu0 %2899
      %2901 = vmax.xlane.f32.xlu0 %v2883
      %v2902 = vpop.xlane.xlu0 %2901
      %2903 = vmax.xlane.f32.xlu0 %v2884
      %v2904 = vpop.xlane.xlu0 %2903
      %2905 = vmax.xlane.f32.xlu0 %v2885
      %v2906 = vpop.xlane.xlu0 %2905
      %2907 = vmax.xlane.f32.xlu0 %v2886
      %v2908 = vpop.xlane.xlu0 %2907
      %2909 = vmax.xlane.f32.xlu0 %v2887
      %v2910 = vpop.xlane.xlu0 %2909
      %2911 = vmax.xlane.f32.xlu0 %v2888
      %v2912 = vpop.xlane.xlu0 %2911
      %2913 = vmax.xlane.f32.xlu0 %v2889
      %v2914 = vpop.xlane.xlu0 %2913
      %2915 = vmax.xlane.f32.xlu0 %v2890
      %v2916 = vpop.xlane.xlu0 %2915
      %2917 = vmax.xlane.f32.xlu0 %v2891
      %v2918 = vpop.xlane.xlu0 %2917
      %2919 = vmax.xlane.f32.xlu0 %v2892
      %v2920 = vpop.xlane.xlu0 %2919
      %2921 = vmax.xlane.f32.xlu0 %v2893
      %v2922 = vpop.xlane.xlu0 %2921
      %2923 = vmax.xlane.f32.xlu0 %v2894
      %v2924 = vpop.xlane.xlu0 %2923
      %2925 = vmax.xlane.f32.xlu0 %v2895
      %v2926 = vpop.xlane.xlu0 %2925
      %2927 = vmax.xlane.f32.xlu0 %v2896
      %v2928 = vpop.xlane.xlu0 %2927
      %v2929 = vsub.f32 %v2881, %v2898
      %v2930 = vsub.f32 %v2882, %v2900
      %v2931 = vsub.f32 %v2883, %v2902
      %v2932 = vsub.f32 %v2884, %v2904
      %v2933 = vsub.f32 %v2885, %v2906
      %v2934 = vsub.f32 %v2886, %v2908
      %v2935 = vsub.f32 %v2887, %v2910
      %v2936 = vsub.f32 %v2888, %v2912
      %v2937 = vsub.f32 %v2889, %v2914
      %v2938 = vsub.f32 %v2890, %v2916
      %v2939 = vsub.f32 %v2891, %v2918
      %v2940 = vsub.f32 %v2892, %v2920
      %v2941 = vsub.f32 %v2893, %v2922
      %v2942 = vsub.f32 %v2894, %v2924
      %v2943 = vsub.f32 %v2895, %v2926
      %v2944 = vsub.f32 %v2896, %v2928
      %v2945 = vmul.f32 %v2929, 1.442695
      %v2946 = vpow.pop %v2945
      %v2947 = vmul.f32 %v2930, 1.442695
      %v2948 = vpow.pop %v2947
      %v2949 = vmul.f32 %v2931, 1.442695
      %v2950 = vpow.pop %v2949
      %v2951 = vmul.f32 %v2932, 1.442695
      %v2952 = vpow.pop %v2951
      %v2953 = vmul.f32 %v2933, 1.442695
      %v2954 = vpow.pop %v2953
      %v2955 = vmul.f32 %v2934, 1.442695
      %v2956 = vpow.pop %v2955
      %v2957 = vmul.f32 %v2935, 1.442695
      %v2958 = vpow.pop %v2957
      %v2959 = vmul.f32 %v2936, 1.442695
      %v2960 = vpow.pop %v2959
      %v2961 = vmul.f32 %v2937, 1.442695
      %v2962 = vpow.pop %v2961
      %v2963 = vmul.f32 %v2938, 1.442695
      %v2964 = vpow.pop %v2963
      %v2965 = vmul.f32 %v2939, 1.442695
      %v2966 = vpow.pop %v2965
      %v2967 = vmul.f32 %v2940, 1.442695
      %v2968 = vpow.pop %v2967
      %v2969 = vmul.f32 %v2941, 1.442695
      %v2970 = vpow.pop %v2969
      %v2971 = vmul.f32 %v2942, 1.442695
      %v2972 = vpow.pop %v2971
      %v2973 = vmul.f32 %v2943, 1.442695
      %v2974 = vpow.pop %v2973
      %v2975 = vmul.f32 %v2944, 1.442695
      %v2976 = vpow.pop %v2975
      %v2977 = vmul.f32 %v2946, %v2849
      %v2978 = vmul.f32 %v2948, %v2850
      %v2979 = vmul.f32 %v2950, %v2851
      %v2980 = vmul.f32 %v2952, %v2852
      %v2981 = vmul.f32 %v2954, %v2853
      %v2982 = vmul.f32 %v2956, %v2854
      %v2983 = vmul.f32 %v2958, %v2855
      %v2984 = vmul.f32 %v2960, %v2856
      %v2985 = vmul.f32 %v2962, %v2857
      %v2986 = vmul.f32 %v2964, %v2858
      %v2987 = vmul.f32 %v2966, %v2859
      %v2988 = vmul.f32 %v2968, %v2860
      %v2989 = vmul.f32 %v2970, %v2861
      %v2990 = vmul.f32 %v2972, %v2862
      %v2991 = vmul.f32 %v2974, %v2863
      %v2992 = vmul.f32 %v2976, %v2864
      %2993 = vadd.xlane.f32.xlu0 %v2977
      %v2994 = vpop.xlane.xlu0 %2993
      %2995 = vadd.xlane.f32.xlu0 %v2978
      %v2996 = vpop.xlane.xlu0 %2995
      %2997 = vadd.xlane.f32.xlu0 %v2979
      %v2998 = vpop.xlane.xlu0 %2997
      %2999 = vadd.xlane.f32.xlu0 %v2980
      %v3000 = vpop.xlane.xlu0 %2999
      %3001 = vadd.xlane.f32.xlu0 %v2981
      %v3002 = vpop.xlane.xlu0 %3001
      %3003 = vadd.xlane.f32.xlu0 %v2982
      %v3004 = vpop.xlane.xlu0 %3003
      %3005 = vadd.xlane.f32.xlu0 %v2983
      %v3006 = vpop.xlane.xlu0 %3005
      %3007 = vadd.xlane.f32.xlu0 %v2984
      %v3008 = vpop.xlane.xlu0 %3007
      %3009 = vadd.xlane.f32.xlu0 %v2985
      %v3010 = vpop.xlane.xlu0 %3009
      %3011 = vadd.xlane.f32.xlu0 %v2986
      %v3012 = vpop.xlane.xlu0 %3011
      %3013 = vadd.xlane.f32.xlu0 %v2987
      %v3014 = vpop.xlane.xlu0 %3013
      %3015 = vadd.xlane.f32.xlu0 %v2988
      %v3016 = vpop.xlane.xlu0 %3015
      %3017 = vadd.xlane.f32.xlu0 %v2989
      %v3018 = vpop.xlane.xlu0 %3017
      %3019 = vadd.xlane.f32.xlu0 %v2990
      %v3020 = vpop.xlane.xlu0 %3019
      %3021 = vadd.xlane.f32.xlu0 %v2991
      %v3022 = vpop.xlane.xlu0 %3021
      %3023 = vadd.xlane.f32.xlu0 %v2992
      %v3024 = vpop.xlane.xlu0 %3023
      %vm3025 = vcmp.gt.f32.partialorder %v2994, 0.0
      %vm3026 = vcmp.gt.f32.partialorder %v2996, 0.0
      %vm3027 = vcmp.gt.f32.partialorder %v2998, 0.0
      %vm3028 = vcmp.gt.f32.partialorder %v3000, 0.0
      %vm3029 = vcmp.gt.f32.partialorder %v3002, 0.0
      %vm3030 = vcmp.gt.f32.partialorder %v3004, 0.0
      %vm3031 = vcmp.gt.f32.partialorder %v3006, 0.0
      %vm3032 = vcmp.gt.f32.partialorder %v3008, 0.0
      %vm3033 = vcmp.gt.f32.partialorder %v3010, 0.0
      %vm3034 = vcmp.gt.f32.partialorder %v3012, 0.0
      %vm3035 = vcmp.gt.f32.partialorder %v3014, 0.0
      %vm3036 = vcmp.gt.f32.partialorder %v3016, 0.0
      %vm3037 = vcmp.gt.f32.partialorder %v3018, 0.0
      %vm3038 = vcmp.gt.f32.partialorder %v3020, 0.0
      %vm3039 = vcmp.gt.f32.partialorder %v3022, 0.0
      %vm3040 = vcmp.gt.f32.partialorder %v3024, 0.0
      %v3041 = vmax.f32 %v2994, 1e-30
      %v3042 = vmax.f32 %v2996, 1e-30
      %v3043 = vmax.f32 %v2998, 1e-30
      %v3044 = vmax.f32 %v3000, 1e-30
      %v3045 = vmax.f32 %v3002, 1e-30
      %v3046 = vmax.f32 %v3004, 1e-30
      %v3047 = vmax.f32 %v3006, 1e-30
      %v3048 = vmax.f32 %v3008, 1e-30
      %v3049 = vmax.f32 %v3010, 1e-30
      %v3050 = vmax.f32 %v3012, 1e-30
      %v3051 = vmax.f32 %v3014, 1e-30
      %v3052 = vmax.f32 %v3016, 1e-30
      %v3053 = vmax.f32 %v3018, 1e-30
      %v3054 = vmax.f32 %v3020, 1e-30
      %v3055 = vmax.f32 %v3022, 1e-30
      %v3056 = vmax.f32 %v3024, 1e-30
      %v3057 = vrcp.pop %v3041
      %v3058 = vrcp.pop %v3042
      %v3059 = vrcp.pop %v3043
      %v3060 = vrcp.pop %v3044
      %v3061 = vrcp.pop %v3045
      %v3062 = vrcp.pop %v3046
      %v3063 = vrcp.pop %v3047
      %v3064 = vrcp.pop %v3048
      %v3065 = vrcp.pop %v3049
      %v3066 = vrcp.pop %v3050
      %v3067 = vrcp.pop %v3051
      %v3068 = vrcp.pop %v3052
      %v3069 = vrcp.pop %v3053
      %v3070 = vrcp.pop %v3054
      %v3071 = vrcp.pop %v3055
      %v3072 = vrcp.pop %v3056
      %v3073 = vsel %vm3025, %v3057, 0.0
      %v3074 = vsel %vm3026, %v3058, 0.0
      %v3075 = vsel %vm3027, %v3059, 0.0
      %v3076 = vsel %vm3028, %v3060, 0.0
      %v3077 = vsel %vm3029, %v3061, 0.0
      %v3078 = vsel %vm3030, %v3062, 0.0
      %v3079 = vsel %vm3031, %v3063, 0.0
      %v3080 = vsel %vm3032, %v3064, 0.0
      %v3081 = vsel %vm3033, %v3065, 0.0
      %v3082 = vsel %vm3034, %v3066, 0.0
      %v3083 = vsel %vm3035, %v3067, 0.0
      %v3084 = vsel %vm3036, %v3068, 0.0
      %v3085 = vsel %vm3037, %v3069, 0.0
      %v3086 = vsel %vm3038, %v3070, 0.0
      %v3087 = vsel %vm3039, %v3071, 0.0
      %v3088 = vsel %vm3040, %v3072, 0.0
      %v3089 = vmul.f32 %v2977, %v3073
      %v3090 = vmul.f32 %v2978, %v3074
      %v3091 = vmul.f32 %v2979, %v3075
      %v3092 = vmul.f32 %v2980, %v3076
      %v3093 = vmul.f32 %v2981, %v3077
      %v3094 = vmul.f32 %v2982, %v3078
      %v3095 = vmul.f32 %v2983, %v3079
      %v3096 = vmul.f32 %v2984, %v3080
      %v3097 = vmul.f32 %v2985, %v3081
      %v3098 = vmul.f32 %v2986, %v3082
      %v3099 = vmul.f32 %v2987, %v3083
      %v3100 = vmul.f32 %v2988, %v3084
      %v3101 = vmul.f32 %v2989, %v3085
      %v3102 = vmul.f32 %v2990, %v3086
      %v3103 = vmul.f32 %v2991, %v3087
      %v3104 = vmul.f32 %v2992, %v3088
      %3105 = vmatprep.subr.mxu0 0.0
      %3106 = vmatpush1.msra.mxu0 %v889
      %3107 = vmatprep.subr.mxu0 0.0
      %3108 = vmatpush1.msra.mxu0 %v892
      %3109 = vmatprep.subr.mxu0 0.0
      %3110 = vmatpush1.msra.mxu0 %v897
      %3111 = vmatprep.subr.mxu0 0.0
      %3112 = vmatpush1.msra.mxu0 %v900
      %3113 = vmatprep.subr.mxu0 0.0
      %3114 = vmatpush1.msra.mxu0 %v905
      %3115 = vmatprep.subr.mxu0 0.0
      %3116 = vmatpush1.msra.mxu0 %v908
      %3117 = vmatprep.subr.mxu0 0.0
      %3118 = vmatpush1.msra.mxu0 %v913
      %3119 = vmatprep.subr.mxu0 0.0
      %3120 = vmatpush1.msra.mxu0 %v916
      %3121 = vmatprep.subr.mxu0 0.0
      %3122 = vmatpush1.msra.mxu0 %v921
      %3123 = vmatprep.subr.mxu0 0.0
      %3124 = vmatpush1.msra.mxu0 %v924
      %3125 = vmatprep.subr.mxu0 0.0
      %3126 = vmatpush1.msra.mxu0 %v929
      %3127 = vmatprep.subr.mxu0 0.0
      %3128 = vmatpush1.msra.mxu0 %v932
      %3129 = vmatprep.subr.mxu0 0.0
      %3130 = vmatpush1.msra.mxu0 %v937
      %3131 = vmatprep.subr.mxu0 0.0
      %3132 = vmatpush1.msra.mxu0 %v940
      %3133 = vmatprep.subr.mxu0 0.0
      %3134 = vmatpush1.msra.mxu0 %v945
      %3135 = vmatprep.subr.mxu0 0.0
      %3136 = vmatpush1.msra.mxu0 %v948
      %3137 = vmatprep.subr.mxu0 0.0
      %3138 = vmatpush1.msra.mxu0 0.0
      %3139 = vmatprep.subr.mxu0 0.0
      %3140 = vmatpush1.msra.mxu0 0.0
      %3141 = vmatprep.subr.mxu0 0.0
      %3142 = vmatpush1.msra.mxu0 0.0
      %3143 = vmatprep.subr.mxu0 0.0
      %3144 = vmatpush1.msra.mxu0 0.0
      %3145 = vmatprep.subr.mxu0 0.0
      %3146 = vmatpush1.msra.mxu0 0.0
      %3147 = vmatprep.subr.mxu0 0.0
      %3148 = vmatpush1.msra.mxu0 0.0
      %3149 = vmatprep.subr.mxu0 0.0
      %3150 = vmatpush1.msra.mxu0 0.0
      %3151 = vmatprep.subr.mxu0 0.0
      %3152 = vmatpush1.msra.mxu0 0.0
      %3153 = vmatprep.subr.mxu0 0.0
      %3154 = vmatpush1.msra.mxu0 0.0
      %3155 = vmatprep.subr.mxu0 0.0
      %3156 = vmatpush1.msra.mxu0 0.0
      %3157 = vmatprep.subr.mxu0 0.0
      %3158 = vmatpush1.msra.mxu0 0.0
      %3159 = vmatprep.subr.mxu0 0.0
      %3160 = vmatpush1.msra.mxu0 0.0
      %3161 = vmatprep.subr.mxu0 0.0
      %3162 = vmatpush1.msra.mxu0 0.0
      %3163 = vmatprep.subr.mxu0 0.0
      %3164 = vmatpush1.msra.mxu0 0.0
      %3165 = vmatprep.subr.mxu0 0.0
      %3166 = vmatpush1.msra.mxu0 0.0
      %3167 = vmatprep.subr.mxu0 0.0
      %3168 = vmatpush1.msra.mxu0 0.0
      %3169 = vmatprep.mubr.f32.mxu0 0.0
      %3170 = vmatmul.mubr.f32.gmra.mrb[0].mxu0 %v3089
      %v3171 = vpop.f32.mrb[0].mxu0
      %v3172 = vadd.f32 0.0, %v3171
      %v3173 = vpop.f32.mrb[0].mxu0
      %3174 = vmatprep.mubr.f32.mxu0 0.0
      %3175 = vmatmul.mubr.f32.gmra.mrb[0].mxu0 %v3090
      %v3176 = vpop.f32.mrb[0].mxu0
      %v3177 = vadd.f32 0.0, %v3176
      %v3178 = vpop.f32.mrb[0].mxu0
      %3179 = vmatprep.mubr.f32.mxu0 0.0
      %3180 = vmatmul.mubr.f32.gmra.mrb[0].mxu0 %v3091
      %v3181 = vpop.f32.mrb[0].mxu0
      %v3182 = vadd.f32 0.0, %v3181
      %v3183 = vpop.f32.mrb[0].mxu0
      %3184 = vmatprep.mubr.f32.mxu0 0.0
      %3185 = vmatmul.mubr.f32.gmra.mrb[0].mxu0 %v3092
      %v3186 = vpop.f32.mrb[0].mxu0
      %v3187 = vadd.f32 0.0, %v3186
      %v3188 = vpop.f32.mrb[0].mxu0
      %3189 = vmatprep.mubr.f32.mxu0 0.0
      %3190 = vmatmul.mubr.f32.gmra.mrb[0].mxu0 %v3093
      %v3191 = vpop.f32.mrb[0].mxu0
      %v3192 = vadd.f32 0.0, %v3191
      %v3193 = vpop.f32.mrb[0].mxu0
      %3194 = vmatprep.mubr.f32.mxu0 0.0
      %3195 = vmatmul.mubr.f32.gmra.mrb[0].mxu0 %v3094
      %v3196 = vpop.f32.mrb[0].mxu0
      %v3197 = vadd.f32 0.0, %v3196
      %v3198 = vpop.f32.mrb[0].mxu0
      %3199 = vmatprep.mubr.f32.mxu0 0.0
      %3200 = vmatmul.mubr.f32.gmra.mrb[0].mxu0 %v3095
      %v3201 = vpop.f32.mrb[0].mxu0
      %v3202 = vadd.f32 0.0, %v3201
      %v3203 = vpop.f32.mrb[0].mxu0
      %3204 = vmatprep.mubr.f32.mxu0 0.0
      %3205 = vmatmul.mubr.f32.gmra.mrb[0].mxu0 %v3096
      %v3206 = vpop.f32.mrb[0].mxu0
      %v3207 = vadd.f32 0.0, %v3206
      %v3208 = vpop.f32.mrb[0].mxu0
      %3209 = vmatprep.mubr.f32.mxu0 0.0
      %3210 = vmatmul.mubr.f32.gmra.mrb[0].mxu0 %v3097
      %v3211 = vpop.f32.mrb[0].mxu0
      %v3212 = vadd.f32 0.0, %v3211
      %v3213 = vpop.f32.mrb[0].mxu0
      %3214 = vmatprep.mubr.f32.mxu0 0.0
      %3215 = vmatmul.mubr.f32.gmra.mrb[0].mxu0 %v3098
      %v3216 = vpop.f32.mrb[0].mxu0
      %v3217 = vadd.f32 0.0, %v3216
      %v3218 = vpop.f32.mrb[0].mxu0
      %3219 = vmatprep.mubr.f32.mxu0 0.0
      %3220 = vmatmul.mubr.f32.gmra.mrb[0].mxu0 %v3099
      %v3221 = vpop.f32.mrb[0].mxu0
      %v3222 = vadd.f32 0.0, %v3221
      %v3223 = vpop.f32.mrb[0].mxu0
      %3224 = vmatprep.mubr.f32.mxu0 0.0
      %3225 = vmatmul.mubr.f32.gmra.mrb[0].mxu0 %v3100
      %v3226 = vpop.f32.mrb[0].mxu0
      %v3227 = vadd.f32 0.0, %v3226
      %v3228 = vpop.f32.mrb[0].mxu0
      %3229 = vmatprep.mubr.f32.mxu0 0.0
      %3230 = vmatmul.mubr.f32.gmra.mrb[0].mxu0 %v3101
      %v3231 = vpop.f32.mrb[0].mxu0
      %v3232 = vadd.f32 0.0, %v3231
      %v3233 = vpop.f32.mrb[0].mxu0
      %3234 = vmatprep.mubr.f32.mxu0 0.0
      %3235 = vmatmul.mubr.f32.gmra.mrb[0].mxu0 %v3102
      %v3236 = vpop.f32.mrb[0].mxu0
      %v3237 = vadd.f32 0.0, %v3236
      %v3238 = vpop.f32.mrb[0].mxu0
      %3239 = vmatprep.mubr.f32.mxu0 0.0
      %3240 = vmatmul.mubr.f32.gmra.mrb[0].mxu0 %v3103
      %v3241 = vpop.f32.mrb[0].mxu0
      %v3242 = vadd.f32 0.0, %v3241
      %v3243 = vpop.f32.mrb[0].mxu0
      %3244 = vmatprep.mubr.f32.mxu0 0.0
      %3245 = vmatmul.mubr.f32.gmra.mrb[0].mxu0 %v3104
      %v3246 = vpop.f32.mrb[0].mxu0
      %v3247 = vadd.f32 0.0, %v3246
      %v3248 = vpop.f32.mrb[0].mxu0
      %3249 = vdwg.mxu0
      %v3250 = vadd.f32 %v2832, %v3172
      %v3251 = vadd.f32 %v2833, %v3177
      %v3252 = vadd.f32 %v2834, %v3182
      %v3253 = vadd.f32 %v2835, %v3187
      %v3254 = vadd.f32 %v2836, %v3192
      %v3255 = vadd.f32 %v2837, %v3197
      %v3256 = vadd.f32 %v2838, %v3202
      %v3257 = vadd.f32 %v2839, %v3207
      %v3258 = vadd.f32 %v2840, %v3212
      %v3259 = vadd.f32 %v2841, %v3217
      %v3260 = vadd.f32 %v2842, %v3222
      %v3261 = vadd.f32 %v2843, %v3227
      %v3262 = vadd.f32 %v2844, %v3232
      %v3263 = vadd.f32 %v2845, %v3237
      %v3264 = vadd.f32 %v2846, %v3242
      %v3265 = vadd.f32 %v2847, %v3247
      %3266 = vrot.lane.b32.xlu0 %v951, 112
      %v3267 = vpop.permute.xlu0 %3266
      %3268 = vrot.lane.b32.xlu0 %v952, 112
      %v3269 = vpop.permute.xlu0 %3268
      %3270 = vrot.lane.b32.xlu0 %v953, 112
      %v3271 = vpop.permute.xlu0 %3270
      %3272 = vrot.lane.b32.xlu0 %v954, 112
      %v3273 = vpop.permute.xlu0 %3272
      %3274 = vrot.lane.b32.xlu0 %v955, 112
      %v3275 = vpop.permute.xlu0 %3274
      %3276 = vrot.lane.b32.xlu0 %v956, 112
      %v3277 = vpop.permute.xlu0 %3276
      %3278 = vrot.lane.b32.xlu0 %v957, 112
      %v3279 = vpop.permute.xlu0 %3278
      %3280 = vrot.lane.b32.xlu0 %v958, 112
      %v3281 = vpop.permute.xlu0 %3280
      %3282 = vrot.lane.b32.xlu0 %v959, 112
      %v3283 = vpop.permute.xlu0 %3282
      %3284 = vrot.lane.b32.xlu0 %v960, 112
      %v3285 = vpop.permute.xlu0 %3284
      %3286 = vrot.lane.b32.xlu0 %v961, 112
      %v3287 = vpop.permute.xlu0 %3286
      %3288 = vrot.lane.b32.xlu0 %v962, 112
      %v3289 = vpop.permute.xlu0 %3288
      %3290 = vrot.lane.b32.xlu0 %v963, 112
      %v3291 = vpop.permute.xlu0 %3290
      %3292 = vrot.lane.b32.xlu0 %v964, 112
      %v3293 = vpop.permute.xlu0 %3292
      %3294 = vrot.lane.b32.xlu0 %v965, 112
      %v3295 = vpop.permute.xlu0 %3294
      %3296 = vrot.lane.b32.xlu0 %v966, 112
      %v3297 = vpop.permute.xlu0 %3296
      %3298 = vrot.lane.b32.xlu0 %v753, 112
      %v3299 = vpop.permute.xlu0 %3298
      %3300 = vrot.lane.b32.xlu0 %v756, 112
      %v3301 = vpop.permute.xlu0 %3300
      %3302 = vrot.lane.b32.xlu0 %v761, 112
      %v3303 = vpop.permute.xlu0 %3302
      %3304 = vrot.lane.b32.xlu0 %v764, 112
      %v3305 = vpop.permute.xlu0 %3304
      %3306 = vrot.lane.b32.xlu0 %v769, 112
      %v3307 = vpop.permute.xlu0 %3306
      %3308 = vrot.lane.b32.xlu0 %v772, 112
      %v3309 = vpop.permute.xlu0 %3308
      %3310 = vrot.lane.b32.xlu0 %v777, 112
      %v3311 = vpop.permute.xlu0 %3310
      %3312 = vrot.lane.b32.xlu0 %v780, 112
      %v3313 = vpop.permute.xlu0 %3312
      %3314 = vrot.lane.b32.xlu0 %v785, 112
      %v3315 = vpop.permute.xlu0 %3314
      %3316 = vrot.lane.b32.xlu0 %v788, 112
      %v3317 = vpop.permute.xlu0 %3316
      %3318 = vrot.lane.b32.xlu0 %v793, 112
      %v3319 = vpop.permute.xlu0 %3318
      %3320 = vrot.lane.b32.xlu0 %v796, 112
      %v3321 = vpop.permute.xlu0 %3320
      %3322 = vrot.lane.b32.xlu0 %v801, 112
      %v3323 = vpop.permute.xlu0 %3322
      %3324 = vrot.lane.b32.xlu0 %v804, 112
      %v3325 = vpop.permute.xlu0 %3324
      %3326 = vrot.lane.b32.xlu0 %v809, 112
      %v3327 = vpop.permute.xlu0 %3326
      %3328 = vrot.lane.b32.xlu0 %v812, 112
      %v3329 = vpop.permute.xlu0 %3328
      %v3330 = vsel %vm967, %v3267, 0
      %v3332 = vsel %vm967, %v3269, 0
      %v3334 = vsel %vm967, %v3271, 0
      %v3336 = vsel %vm967, %v3273, 0
      %v3338 = vsel %vm967, %v3275, 0
      %v3340 = vsel %vm967, %v3277, 0
      %v3342 = vsel %vm967, %v3279, 0
      %v3344 = vsel %vm967, %v3281, 0
      %v3346 = vsel %vm967, %v3283, 0
      %v3348 = vsel %vm967, %v3285, 0
      %v3350 = vsel %vm967, %v3287, 0
      %v3352 = vsel %vm967, %v3289, 0
      %v3354 = vsel %vm967, %v3291, 0
      %v3356 = vsel %vm967, %v3293, 0
      %v3358 = vsel %vm967, %v3295, 0
      %v3360 = vsel %vm967, %v3297, 0
      %v3362 = vsel %vm967, %v3299, 0
      %v3364 = vsel %vm967, %v3301, 0
      %v3366 = vsel %vm967, %v3303, 0
      %v3368 = vsel %vm967, %v3305, 0
      %v3370 = vsel %vm967, %v3307, 0
      %v3372 = vsel %vm967, %v3309, 0
      %v3374 = vsel %vm967, %v3311, 0
      %v3376 = vsel %vm967, %v3313, 0
      %v3378 = vsel %vm967, %v3315, 0
      %v3380 = vsel %vm967, %v3317, 0
      %v3382 = vsel %vm967, %v3319, 0
      %v3384 = vsel %vm967, %v3321, 0
      %v3386 = vsel %vm967, %v3323, 0
      %v3388 = vsel %vm967, %v3325, 0
      %v3390 = vsel %vm967, %v3327, 0
      %v3392 = vsel %vm967, %v3329, 0
      %3394 = vmatprep.subr.mxu0 0.0
      %3395 = vmatpush1.xpose.msra.mxu0 %v3362
      %3396 = vmatprep.subr.mxu0 0.0
      %3397 = vmatpush1.xpose.msra.mxu0 %v3364
      %3398 = vmatprep.subr.mxu0 0.0
      %3399 = vmatpush1.xpose.msra.mxu0 %v3366
      %3400 = vmatprep.subr.mxu0 0.0
      %3401 = vmatpush1.xpose.msra.mxu0 %v3368
      %3402 = vmatprep.subr.mxu0 0.0
      %3403 = vmatpush1.xpose.msra.mxu0 %v3370
      %3404 = vmatprep.subr.mxu0 0.0
      %3405 = vmatpush1.xpose.msra.mxu0 %v3372
      %3406 = vmatprep.subr.mxu0 0.0
      %3407 = vmatpush1.xpose.msra.mxu0 %v3374
      %3408 = vmatprep.subr.mxu0 0.0
      %3409 = vmatpush1.xpose.msra.mxu0 %v3376
      %3410 = vmatprep.subr.mxu0 0.0
      %3411 = vmatpush1.xpose.msra.mxu0 %v3378
      %3412 = vmatprep.subr.mxu0 0.0
      %3413 = vmatpush1.xpose.msra.mxu0 %v3380
      %3414 = vmatprep.subr.mxu0 0.0
      %3415 = vmatpush1.xpose.msra.mxu0 %v3382
      %3416 = vmatprep.subr.mxu0 0.0
      %3417 = vmatpush1.xpose.msra.mxu0 %v3384
      %3418 = vmatprep.subr.mxu0 0.0
      %3419 = vmatpush1.xpose.msra.mxu0 %v3386
      %3420 = vmatprep.subr.mxu0 0.0
      %3421 = vmatpush1.xpose.msra.mxu0 %v3388
      %3422 = vmatprep.subr.mxu0 0.0
      %3423 = vmatpush1.xpose.msra.mxu0 %v3390
      %3424 = vmatprep.subr.mxu0 0.0
      %3425 = vmatpush1.xpose.msra.mxu0 %v3392
      %3426 = vmatprep.subr.mxu0 0.0
      %3427 = vmatpush1.xpose.msra.mxu0 0.0
      %3428 = vmatprep.subr.mxu0 0.0
      %3429 = vmatpush1.xpose.msra.mxu0 0.0
      %3430 = vmatprep.subr.mxu0 0.0
      %3431 = vmatpush1.xpose.msra.mxu0 0.0
      %3432 = vmatprep.subr.mxu0 0.0
      %3433 = vmatpush1.xpose.msra.mxu0 0.0
      %3434 = vmatprep.subr.mxu0 0.0
      %3435 = vmatpush1.xpose.msra.mxu0 0.0
      %3436 = vmatprep.subr.mxu0 0.0
      %3437 = vmatpush1.xpose.msra.mxu0 0.0
      %3438 = vmatprep.subr.mxu0 0.0
      %3439 = vmatpush1.xpose.msra.mxu0 0.0
      %3440 = vmatprep.subr.mxu0 0.0
      %3441 = vmatpush1.xpose.msra.mxu0 0.0
      %3442 = vmatprep.subr.mxu0 0.0
      %3443 = vmatpush1.xpose.msra.mxu0 0.0
      %3444 = vmatprep.subr.mxu0 0.0
      %3445 = vmatpush1.xpose.msra.mxu0 0.0
      %3446 = vmatprep.subr.mxu0 0.0
      %3447 = vmatpush1.xpose.msra.mxu0 0.0
      %3448 = vmatprep.subr.mxu0 0.0
      %3449 = vmatpush1.xpose.msra.mxu0 0.0
      %3450 = vmatprep.subr.mxu0 0.0
      %3451 = vmatpush1.xpose.msra.mxu0 0.0
      %3452 = vmatprep.subr.mxu0 0.0
      %3453 = vmatpush1.xpose.msra.mxu0 0.0
      %3454 = vmatprep.subr.mxu0 0.0
      %3455 = vmatpush1.xpose.msra.mxu0 0.0
      %3456 = vmatprep.subr.mxu0 0.0
      %3457 = vmatpush1.xpose.msra.mxu0 0.0
      %3458 = vmatprep.mubr.f32.mxu0 0.0
      %3459 = vmatmul.mubr.f32.gmra.mrb[0].mxu0 %v3330
      %v3460 = vpop.f32.mrb[0].mxu0
      %v3461 = vadd.f32 0.0, %v3460
      %v3462 = vpop.f32.mrb[0].mxu0
      %3463 = vmatprep.mubr.f32.mxu0 0.0
      %3464 = vmatmul.mubr.f32.gmra.mrb[0].mxu0 %v3332
      %v3465 = vpop.f32.mrb[0].mxu0
      %v3466 = vadd.f32 0.0, %v3465
      %v3467 = vpop.f32.mrb[0].mxu0
      %3468 = vmatprep.mubr.f32.mxu0 0.0
      %3469 = vmatmul.mubr.f32.gmra.mrb[0].mxu0 %v3334
      %v3470 = vpop.f32.mrb[0].mxu0
      %v3471 = vadd.f32 0.0, %v3470
      %v3472 = vpop.f32.mrb[0].mxu0
      %3473 = vmatprep.mubr.f32.mxu0 0.0
      %3474 = vmatmul.mubr.f32.gmra.mrb[0].mxu0 %v3336
      %v3475 = vpop.f32.mrb[0].mxu0
      %v3476 = vadd.f32 0.0, %v3475
      %v3477 = vpop.f32.mrb[0].mxu0
      %3478 = vmatprep.mubr.f32.mxu0 0.0
      %3479 = vmatmul.mubr.f32.gmra.mrb[0].mxu0 %v3338
      %v3480 = vpop.f32.mrb[0].mxu0
      %v3481 = vadd.f32 0.0, %v3480
      %v3482 = vpop.f32.mrb[0].mxu0
      %3483 = vmatprep.mubr.f32.mxu0 0.0
      %3484 = vmatmul.mubr.f32.gmra.mrb[0].mxu0 %v3340
      %v3485 = vpop.f32.mrb[0].mxu0
      %v3486 = vadd.f32 0.0, %v3485
      %v3487 = vpop.f32.mrb[0].mxu0
      %3488 = vmatprep.mubr.f32.mxu0 0.0
      %3489 = vmatmul.mubr.f32.gmra.mrb[0].mxu0 %v3342
      %v3490 = vpop.f32.mrb[0].mxu0
      %v3491 = vadd.f32 0.0, %v3490
      %v3492 = vpop.f32.mrb[0].mxu0
      %3493 = vmatprep.mubr.f32.mxu0 0.0
      %3494 = vmatmul.mubr.f32.gmra.mrb[0].mxu0 %v3344
      %v3495 = vpop.f32.mrb[0].mxu0
      %v3496 = vadd.f32 0.0, %v3495
      %v3497 = vpop.f32.mrb[0].mxu0
      %3498 = vmatprep.mubr.f32.mxu0 0.0
      %3499 = vmatmul.mubr.f32.gmra.mrb[0].mxu0 %v3346
      %v3500 = vpop.f32.mrb[0].mxu0
      %v3501 = vadd.f32 0.0, %v3500
      %v3502 = vpop.f32.mrb[0].mxu0
      %3503 = vmatprep.mubr.f32.mxu0 0.0
      %3504 = vmatmul.mubr.f32.gmra.mrb[0].mxu0 %v3348
      %v3505 = vpop.f32.mrb[0].mxu0
      %v3506 = vadd.f32 0.0, %v3505
      %v3507 = vpop.f32.mrb[0].mxu0
      %3508 = vmatprep.mubr.f32.mxu0 0.0
      %3509 = vmatmul.mubr.f32.gmra.mrb[0].mxu0 %v3350
      %v3510 = vpop.f32.mrb[0].mxu0
      %v3511 = vadd.f32 0.0, %v3510
      %v3512 = vpop.f32.mrb[0].mxu0
      %3513 = vmatprep.mubr.f32.mxu0 0.0
      %3514 = vmatmul.mubr.f32.gmra.mrb[0].mxu0 %v3352
      %v3515 = vpop.f32.mrb[0].mxu0
      %v3516 = vadd.f32 0.0, %v3515
      %v3517 = vpop.f32.mrb[0].mxu0
      %3518 = vmatprep.mubr.f32.mxu0 0.0
      %3519 = vmatmul.mubr.f32.gmra.mrb[0].mxu0 %v3354
      %v3520 = vpop.f32.mrb[0].mxu0
      %v3521 = vadd.f32 0.0, %v3520
      %v3522 = vpop.f32.mrb[0].mxu0
      %3523 = vmatprep.mubr.f32.mxu0 0.0
      %3524 = vmatmul.mubr.f32.gmra.mrb[0].mxu0 %v3356
      %v3525 = vpop.f32.mrb[0].mxu0
      %v3526 = vadd.f32 0.0, %v3525
      %v3527 = vpop.f32.mrb[0].mxu0
      %3528 = vmatprep.mubr.f32.mxu0 0.0
      %3529 = vmatmul.mubr.f32.gmra.mrb[0].mxu0 %v3358
      %v3530 = vpop.f32.mrb[0].mxu0
      %v3531 = vadd.f32 0.0, %v3530
      %v3532 = vpop.f32.mrb[0].mxu0
      %3533 = vmatprep.mubr.f32.mxu0 0.0
      %3534 = vmatmul.mubr.f32.gmra.mrb[0].mxu0 %v3360
      %v3535 = vpop.f32.mrb[0].mxu0
      %v3536 = vadd.f32 0.0, %v3535
      %v3537 = vpop.f32.mrb[0].mxu0
      %3538 = vdwg.mxu0
      %v3539 = vsel %vm1225, %v3461, -1e+30
      %v3540 = vsel %vm1226, %v3466, -1e+30
      %v3541 = vsel %vm1227, %v3471, -1e+30
      %v3542 = vsel %vm1228, %v3476, -1e+30
      %v3543 = vsel %vm1229, %v3481, -1e+30
      %v3544 = vsel %vm1230, %v3486, -1e+30
      %v3545 = vsel %vm1231, %v3491, -1e+30
      %v3546 = vsel %vm1232, %v3496, -1e+30
      %v3547 = vsel %vm1233, %v3501, -1e+30
      %v3548 = vsel %vm1234, %v3506, -1e+30
      %v3549 = vsel %vm1235, %v3511, -1e+30
      %v3550 = vsel %vm1236, %v3516, -1e+30
      %v3551 = vsel %vm1237, %v3521, -1e+30
      %v3552 = vsel %vm1238, %v3526, -1e+30
      %v3553 = vsel %vm1239, %v3531, -1e+30
      %v3554 = vsel %vm1240, %v3536, -1e+30
      %3555 = vmax.xlane.f32.xlu0 %v3539
      %v3556 = vpop.xlane.xlu0 %3555
      %3557 = vmax.xlane.f32.xlu0 %v3540
      %v3558 = vpop.xlane.xlu0 %3557
      %3559 = vmax.xlane.f32.xlu0 %v3541
      %v3560 = vpop.xlane.xlu0 %3559
      %3561 = vmax.xlane.f32.xlu0 %v3542
      %v3562 = vpop.xlane.xlu0 %3561
      %3563 = vmax.xlane.f32.xlu0 %v3543
      %v3564 = vpop.xlane.xlu0 %3563
      %3565 = vmax.xlane.f32.xlu0 %v3544
      %v3566 = vpop.xlane.xlu0 %3565
      %3567 = vmax.xlane.f32.xlu0 %v3545
      %v3568 = vpop.xlane.xlu0 %3567
      %3569 = vmax.xlane.f32.xlu0 %v3546
      %v3570 = vpop.xlane.xlu0 %3569
      %3571 = vmax.xlane.f32.xlu0 %v3547
      %v3572 = vpop.xlane.xlu0 %3571
      %3573 = vmax.xlane.f32.xlu0 %v3548
      %v3574 = vpop.xlane.xlu0 %3573
      %3575 = vmax.xlane.f32.xlu0 %v3549
      %v3576 = vpop.xlane.xlu0 %3575
      %3577 = vmax.xlane.f32.xlu0 %v3550
      %v3578 = vpop.xlane.xlu0 %3577
      %3579 = vmax.xlane.f32.xlu0 %v3551
      %v3580 = vpop.xlane.xlu0 %3579
      %3581 = vmax.xlane.f32.xlu0 %v3552
      %v3582 = vpop.xlane.xlu0 %3581
      %3583 = vmax.xlane.f32.xlu0 %v3553
      %v3584 = vpop.xlane.xlu0 %3583
      %3585 = vmax.xlane.f32.xlu0 %v3554
      %v3586 = vpop.xlane.xlu0 %3585
      %v3587 = vsub.f32 %v3539, %v3556
      %v3588 = vsub.f32 %v3540, %v3558
      %v3589 = vsub.f32 %v3541, %v3560
      %v3590 = vsub.f32 %v3542, %v3562
      %v3591 = vsub.f32 %v3543, %v3564
      %v3592 = vsub.f32 %v3544, %v3566
      %v3593 = vsub.f32 %v3545, %v3568
      %v3594 = vsub.f32 %v3546, %v3570
      %v3595 = vsub.f32 %v3547, %v3572
      %v3596 = vsub.f32 %v3548, %v3574
      %v3597 = vsub.f32 %v3549, %v3576
      %v3598 = vsub.f32 %v3550, %v3578
      %v3599 = vsub.f32 %v3551, %v3580
      %v3600 = vsub.f32 %v3552, %v3582
      %v3601 = vsub.f32 %v3553, %v3584
      %v3602 = vsub.f32 %v3554, %v3586
      %v3603 = vmul.f32 %v3587, 1.442695
      %v3604 = vpow.pop %v3603
      %v3605 = vmul.f32 %v3588, 1.442695
      %v3606 = vpow.pop %v3605
      %v3607 = vmul.f32 %v3589, 1.442695
      %v3608 = vpow.pop %v3607
      %v3609 = vmul.f32 %v3590, 1.442695
      %v3610 = vpow.pop %v3609
      %v3611 = vmul.f32 %v3591, 1.442695
      %v3612 = vpow.pop %v3611
      %v3613 = vmul.f32 %v3592, 1.442695
      %v3614 = vpow.pop %v3613
      %v3615 = vmul.f32 %v3593, 1.442695
      %v3616 = vpow.pop %v3615
      %v3617 = vmul.f32 %v3594, 1.442695
      %v3618 = vpow.pop %v3617
      %v3619 = vmul.f32 %v3595, 1.442695
      %v3620 = vpow.pop %v3619
      %v3621 = vmul.f32 %v3596, 1.442695
      %v3622 = vpow.pop %v3621
      %v3623 = vmul.f32 %v3597, 1.442695
      %v3624 = vpow.pop %v3623
      %v3625 = vmul.f32 %v3598, 1.442695
      %v3626 = vpow.pop %v3625
      %v3627 = vmul.f32 %v3599, 1.442695
      %v3628 = vpow.pop %v3627
      %v3629 = vmul.f32 %v3600, 1.442695
      %v3630 = vpow.pop %v3629
      %v3631 = vmul.f32 %v3601, 1.442695
      %v3632 = vpow.pop %v3631
      %v3633 = vmul.f32 %v3602, 1.442695
      %v3634 = vpow.pop %v3633
      %v3635 = vmul.f32 %v3604, %v1209
      %v3636 = vmul.f32 %v3606, %v1210
      %v3637 = vmul.f32 %v3608, %v1211
      %v3638 = vmul.f32 %v3610, %v1212
      %v3639 = vmul.f32 %v3612, %v1213
      %v3640 = vmul.f32 %v3614, %v1214
      %v3641 = vmul.f32 %v3616, %v1215
      %v3642 = vmul.f32 %v3618, %v1216
      %v3643 = vmul.f32 %v3620, %v1217
      %v3644 = vmul.f32 %v3622, %v1218
      %v3645 = vmul.f32 %v3624, %v1219
      %v3646 = vmul.f32 %v3626, %v1220
      %v3647 = vmul.f32 %v3628, %v1221
      %v3648 = vmul.f32 %v3630, %v1222
      %v3649 = vmul.f32 %v3632, %v1223
      %v3650 = vmul.f32 %v3634, %v1224
      %3651 = vadd.xlane.f32.xlu0 %v3635
      %v3652 = vpop.xlane.xlu0 %3651
      %3653 = vadd.xlane.f32.xlu0 %v3636
      %v3654 = vpop.xlane.xlu0 %3653
      %3655 = vadd.xlane.f32.xlu0 %v3637
      %v3656 = vpop.xlane.xlu0 %3655
      %3657 = vadd.xlane.f32.xlu0 %v3638
      %v3658 = vpop.xlane.xlu0 %3657
      %3659 = vadd.xlane.f32.xlu0 %v3639
      %v3660 = vpop.xlane.xlu0 %3659
      %3661 = vadd.xlane.f32.xlu0 %v3640
      %v3662 = vpop.xlane.xlu0 %3661
      %3663 = vadd.xlane.f32.xlu0 %v3641
      %v3664 = vpop.xlane.xlu0 %3663
      %3665 = vadd.xlane.f32.xlu0 %v3642
      %v3666 = vpop.xlane.xlu0 %3665
      %3667 = vadd.xlane.f32.xlu0 %v3643
      %v3668 = vpop.xlane.xlu0 %3667
      %3669 = vadd.xlane.f32.xlu0 %v3644
      %v3670 = vpop.xlane.xlu0 %3669
      %3671 = vadd.xlane.f32.xlu0 %v3645
      %v3672 = vpop.xlane.xlu0 %3671
      %3673 = vadd.xlane.f32.xlu0 %v3646
      %v3674 = vpop.xlane.xlu0 %3673
      %3675 = vadd.xlane.f32.xlu0 %v3647
      %v3676 = vpop.xlane.xlu0 %3675
      %3677 = vadd.xlane.f32.xlu0 %v3648
      %v3678 = vpop.xlane.xlu0 %3677
      %3679 = vadd.xlane.f32.xlu0 %v3649
      %v3680 = vpop.xlane.xlu0 %3679
      %3681 = vadd.xlane.f32.xlu0 %v3650
      %v3682 = vpop.xlane.xlu0 %3681
      %vm3683 = vcmp.gt.f32.partialorder %v3652, 0.0
      %vm3684 = vcmp.gt.f32.partialorder %v3654, 0.0
      %vm3685 = vcmp.gt.f32.partialorder %v3656, 0.0
      %vm3686 = vcmp.gt.f32.partialorder %v3658, 0.0
      %vm3687 = vcmp.gt.f32.partialorder %v3660, 0.0
      %vm3688 = vcmp.gt.f32.partialorder %v3662, 0.0
      %vm3689 = vcmp.gt.f32.partialorder %v3664, 0.0
      %vm3690 = vcmp.gt.f32.partialorder %v3666, 0.0
      %vm3691 = vcmp.gt.f32.partialorder %v3668, 0.0
      %vm3692 = vcmp.gt.f32.partialorder %v3670, 0.0
      %vm3693 = vcmp.gt.f32.partialorder %v3672, 0.0
      %vm3694 = vcmp.gt.f32.partialorder %v3674, 0.0
      %vm3695 = vcmp.gt.f32.partialorder %v3676, 0.0
      %vm3696 = vcmp.gt.f32.partialorder %v3678, 0.0
      %vm3697 = vcmp.gt.f32.partialorder %v3680, 0.0
      %vm3698 = vcmp.gt.f32.partialorder %v3682, 0.0
      %v3699 = vmax.f32 %v3652, 1e-30
      %v3700 = vmax.f32 %v3654, 1e-30
      %v3701 = vmax.f32 %v3656, 1e-30
      %v3702 = vmax.f32 %v3658, 1e-30
      %v3703 = vmax.f32 %v3660, 1e-30
      %v3704 = vmax.f32 %v3662, 1e-30
      %v3705 = vmax.f32 %v3664, 1e-30
      %v3706 = vmax.f32 %v3666, 1e-30
      %v3707 = vmax.f32 %v3668, 1e-30
      %v3708 = vmax.f32 %v3670, 1e-30
      %v3709 = vmax.f32 %v3672, 1e-30
      %v3710 = vmax.f32 %v3674, 1e-30
      %v3711 = vmax.f32 %v3676, 1e-30
      %v3712 = vmax.f32 %v3678, 1e-30
      %v3713 = vmax.f32 %v3680, 1e-30
      %v3714 = vmax.f32 %v3682, 1e-30
      %v3715 = vrcp.pop %v3699
      %v3716 = vrcp.pop %v3700
      %v3717 = vrcp.pop %v3701
      %v3718 = vrcp.pop %v3702
      %v3719 = vrcp.pop %v3703
      %v3720 = vrcp.pop %v3704
      %v3721 = vrcp.pop %v3705
      %v3722 = vrcp.pop %v3706
      %v3723 = vrcp.pop %v3707
      %v3724 = vrcp.pop %v3708
      %v3725 = vrcp.pop %v3709
      %v3726 = vrcp.pop %v3710
      %v3727 = vrcp.pop %v3711
      %v3728 = vrcp.pop %v3712
      %v3729 = vrcp.pop %v3713
      %v3730 = vrcp.pop %v3714
      %v3731 = vsel %vm3683, %v3715, 0.0
      %v3732 = vsel %vm3684, %v3716, 0.0
      %v3733 = vsel %vm3685, %v3717, 0.0
      %v3734 = vsel %vm3686, %v3718, 0.0
      %v3735 = vsel %vm3687, %v3719, 0.0
      %v3736 = vsel %vm3688, %v3720, 0.0
      %v3737 = vsel %vm3689, %v3721, 0.0
      %v3738 = vsel %vm3690, %v3722, 0.0
      %v3739 = vsel %vm3691, %v3723, 0.0
      %v3740 = vsel %vm3692, %v3724, 0.0
      %v3741 = vsel %vm3693, %v3725, 0.0
      %v3742 = vsel %vm3694, %v3726, 0.0
      %v3743 = vsel %vm3695, %v3727, 0.0
      %v3744 = vsel %vm3696, %v3728, 0.0
      %v3745 = vsel %vm3697, %v3729, 0.0
      %v3746 = vsel %vm3698, %v3730, 0.0
      %v3747 = vmul.f32 %v3635, %v3731
      %v3748 = vmul.f32 %v3636, %v3732
      %v3749 = vmul.f32 %v3637, %v3733
      %v3750 = vmul.f32 %v3638, %v3734
      %v3751 = vmul.f32 %v3639, %v3735
      %v3752 = vmul.f32 %v3640, %v3736
      %v3753 = vmul.f32 %v3641, %v3737
      %v3754 = vmul.f32 %v3642, %v3738
      %v3755 = vmul.f32 %v3643, %v3739
      %v3756 = vmul.f32 %v3644, %v3740
      %v3757 = vmul.f32 %v3645, %v3741
      %v3758 = vmul.f32 %v3646, %v3742
      %v3759 = vmul.f32 %v3647, %v3743
      %v3760 = vmul.f32 %v3648, %v3744
      %v3761 = vmul.f32 %v3649, %v3745
      %v3762 = vmul.f32 %v3650, %v3746
      %v3763 = vsel %vm1482, %v3461, -1e+30
      %v3764 = vsel %vm1483, %v3466, -1e+30
      %v3765 = vsel %vm1484, %v3471, -1e+30
      %v3766 = vsel %vm1485, %v3476, -1e+30
      %v3767 = vsel %vm1486, %v3481, -1e+30
      %v3768 = vsel %vm1487, %v3486, -1e+30
      %v3769 = vsel %vm1488, %v3491, -1e+30
      %v3770 = vsel %vm1489, %v3496, -1e+30
      %v3771 = vsel %vm1490, %v3501, -1e+30
      %v3772 = vsel %vm1491, %v3506, -1e+30
      %v3773 = vsel %vm1492, %v3511, -1e+30
      %v3774 = vsel %vm1493, %v3516, -1e+30
      %v3775 = vsel %vm1494, %v3521, -1e+30
      %v3776 = vsel %vm1495, %v3526, -1e+30
      %v3777 = vsel %vm1496, %v3531, -1e+30
      %v3778 = vsel %vm1497, %v3536, -1e+30
      %3779 = vmax.xlane.f32.xlu0 %v3763
      %v3780 = vpop.xlane.xlu0 %3779
      %3781 = vmax.xlane.f32.xlu0 %v3764
      %v3782 = vpop.xlane.xlu0 %3781
      %3783 = vmax.xlane.f32.xlu0 %v3765
      %v3784 = vpop.xlane.xlu0 %3783
      %3785 = vmax.xlane.f32.xlu0 %v3766
      %v3786 = vpop.xlane.xlu0 %3785
      %3787 = vmax.xlane.f32.xlu0 %v3767
      %v3788 = vpop.xlane.xlu0 %3787
      %3789 = vmax.xlane.f32.xlu0 %v3768
      %v3790 = vpop.xlane.xlu0 %3789
      %3791 = vmax.xlane.f32.xlu0 %v3769
      %v3792 = vpop.xlane.xlu0 %3791
      %3793 = vmax.xlane.f32.xlu0 %v3770
      %v3794 = vpop.xlane.xlu0 %3793
      %3795 = vmax.xlane.f32.xlu0 %v3771
      %v3796 = vpop.xlane.xlu0 %3795
      %3797 = vmax.xlane.f32.xlu0 %v3772
      %v3798 = vpop.xlane.xlu0 %3797
      %3799 = vmax.xlane.f32.xlu0 %v3773
      %v3800 = vpop.xlane.xlu0 %3799
      %3801 = vmax.xlane.f32.xlu0 %v3774
      %v3802 = vpop.xlane.xlu0 %3801
      %3803 = vmax.xlane.f32.xlu0 %v3775
      %v3804 = vpop.xlane.xlu0 %3803
      %3805 = vmax.xlane.f32.xlu0 %v3776
      %v3806 = vpop.xlane.xlu0 %3805
      %3807 = vmax.xlane.f32.xlu0 %v3777
      %v3808 = vpop.xlane.xlu0 %3807
      %3809 = vmax.xlane.f32.xlu0 %v3778
      %v3810 = vpop.xlane.xlu0 %3809
      %v3811 = vsub.f32 %v3763, %v3780
      %v3812 = vsub.f32 %v3764, %v3782
      %v3813 = vsub.f32 %v3765, %v3784
      %v3814 = vsub.f32 %v3766, %v3786
      %v3815 = vsub.f32 %v3767, %v3788
      %v3816 = vsub.f32 %v3768, %v3790
      %v3817 = vsub.f32 %v3769, %v3792
      %v3818 = vsub.f32 %v3770, %v3794
      %v3819 = vsub.f32 %v3771, %v3796
      %v3820 = vsub.f32 %v3772, %v3798
      %v3821 = vsub.f32 %v3773, %v3800
      %v3822 = vsub.f32 %v3774, %v3802
      %v3823 = vsub.f32 %v3775, %v3804
      %v3824 = vsub.f32 %v3776, %v3806
      %v3825 = vsub.f32 %v3777, %v3808
      %v3826 = vsub.f32 %v3778, %v3810
      %v3827 = vmul.f32 %v3811, 1.442695
      %v3828 = vpow.pop %v3827
      %v3829 = vmul.f32 %v3812, 1.442695
      %v3830 = vpow.pop %v3829
      %v3831 = vmul.f32 %v3813, 1.442695
      %v3832 = vpow.pop %v3831
      %v3833 = vmul.f32 %v3814, 1.442695
      %v3834 = vpow.pop %v3833
      %v3835 = vmul.f32 %v3815, 1.442695
      %v3836 = vpow.pop %v3835
      %v3837 = vmul.f32 %v3816, 1.442695
      %v3838 = vpow.pop %v3837
      %v3839 = vmul.f32 %v3817, 1.442695
      %v3840 = vpow.pop %v3839
      %v3841 = vmul.f32 %v3818, 1.442695
      %v3842 = vpow.pop %v3841
      %v3843 = vmul.f32 %v3819, 1.442695
      %v3844 = vpow.pop %v3843
      %v3845 = vmul.f32 %v3820, 1.442695
      %v3846 = vpow.pop %v3845
      %v3847 = vmul.f32 %v3821, 1.442695
      %v3848 = vpow.pop %v3847
      %v3849 = vmul.f32 %v3822, 1.442695
      %v3850 = vpow.pop %v3849
      %v3851 = vmul.f32 %v3823, 1.442695
      %v3852 = vpow.pop %v3851
      %v3853 = vmul.f32 %v3824, 1.442695
      %v3854 = vpow.pop %v3853
      %v3855 = vmul.f32 %v3825, 1.442695
      %v3856 = vpow.pop %v3855
      %v3857 = vmul.f32 %v3826, 1.442695
      %v3858 = vpow.pop %v3857
      %v3859 = vmul.f32 %v3828, %v1466
      %v3860 = vmul.f32 %v3830, %v1467
      %v3861 = vmul.f32 %v3832, %v1468
      %v3862 = vmul.f32 %v3834, %v1469
      %v3863 = vmul.f32 %v3836, %v1470
      %v3864 = vmul.f32 %v3838, %v1471
      %v3865 = vmul.f32 %v3840, %v1472
      %v3866 = vmul.f32 %v3842, %v1473
      %v3867 = vmul.f32 %v3844, %v1474
      %v3868 = vmul.f32 %v3846, %v1475
      %v3869 = vmul.f32 %v3848, %v1476
      %v3870 = vmul.f32 %v3850, %v1477
      %v3871 = vmul.f32 %v3852, %v1478
      %v3872 = vmul.f32 %v3854, %v1479
      %v3873 = vmul.f32 %v3856, %v1480
      %v3874 = vmul.f32 %v3858, %v1481
      %3875 = vadd.xlane.f32.xlu0 %v3859
      %v3876 = vpop.xlane.xlu0 %3875
      %3877 = vadd.xlane.f32.xlu0 %v3860
      %v3878 = vpop.xlane.xlu0 %3877
      %3879 = vadd.xlane.f32.xlu0 %v3861
      %v3880 = vpop.xlane.xlu0 %3879
      %3881 = vadd.xlane.f32.xlu0 %v3862
      %v3882 = vpop.xlane.xlu0 %3881
      %3883 = vadd.xlane.f32.xlu0 %v3863
      %v3884 = vpop.xlane.xlu0 %3883
      %3885 = vadd.xlane.f32.xlu0 %v3864
      %v3886 = vpop.xlane.xlu0 %3885
      %3887 = vadd.xlane.f32.xlu0 %v3865
      %v3888 = vpop.xlane.xlu0 %3887
      %3889 = vadd.xlane.f32.xlu0 %v3866
      %v3890 = vpop.xlane.xlu0 %3889
      %3891 = vadd.xlane.f32.xlu0 %v3867
      %v3892 = vpop.xlane.xlu0 %3891
      %3893 = vadd.xlane.f32.xlu0 %v3868
      %v3894 = vpop.xlane.xlu0 %3893
      %3895 = vadd.xlane.f32.xlu0 %v3869
      %v3896 = vpop.xlane.xlu0 %3895
      %3897 = vadd.xlane.f32.xlu0 %v3870
      %v3898 = vpop.xlane.xlu0 %3897
      %3899 = vadd.xlane.f32.xlu0 %v3871
      %v3900 = vpop.xlane.xlu0 %3899
      %3901 = vadd.xlane.f32.xlu0 %v3872
      %v3902 = vpop.xlane.xlu0 %3901
      %3903 = vadd.xlane.f32.xlu0 %v3873
      %v3904 = vpop.xlane.xlu0 %3903
      %3905 = vadd.xlane.f32.xlu0 %v3874
      %v3906 = vpop.xlane.xlu0 %3905
      %vm3907 = vcmp.gt.f32.partialorder %v3876, 0.0
      %vm3908 = vcmp.gt.f32.partialorder %v3878, 0.0
      %vm3909 = vcmp.gt.f32.partialorder %v3880, 0.0
      %vm3910 = vcmp.gt.f32.partialorder %v3882, 0.0
      %vm3911 = vcmp.gt.f32.partialorder %v3884, 0.0
      %vm3912 = vcmp.gt.f32.partialorder %v3886, 0.0
      %vm3913 = vcmp.gt.f32.partialorder %v3888, 0.0
      %vm3914 = vcmp.gt.f32.partialorder %v3890, 0.0
      %vm3915 = vcmp.gt.f32.partialorder %v3892, 0.0
      %vm3916 = vcmp.gt.f32.partialorder %v3894, 0.0
      %vm3917 = vcmp.gt.f32.partialorder %v3896, 0.0
      %vm3918 = vcmp.gt.f32.partialorder %v3898, 0.0
      %vm3919 = vcmp.gt.f32.partialorder %v3900, 0.0
      %vm3920 = vcmp.gt.f32.partialorder %v3902, 0.0
      %vm3921 = vcmp.gt.f32.partialorder %v3904, 0.0
      %vm3922 = vcmp.gt.f32.partialorder %v3906, 0.0
      %v3923 = vmax.f32 %v3876, 1e-30
      %v3924 = vmax.f32 %v3878, 1e-30
      %v3925 = vmax.f32 %v3880, 1e-30
      %v3926 = vmax.f32 %v3882, 1e-30
      %v3927 = vmax.f32 %v3884, 1e-30
      %v3928 = vmax.f32 %v3886, 1e-30
      %v3929 = vmax.f32 %v3888, 1e-30
      %v3930 = vmax.f32 %v3890, 1e-30
      %v3931 = vmax.f32 %v3892, 1e-30
      %v3932 = vmax.f32 %v3894, 1e-30
      %v3933 = vmax.f32 %v3896, 1e-30
      %v3934 = vmax.f32 %v3898, 1e-30
      %v3935 = vmax.f32 %v3900, 1e-30
      %v3936 = vmax.f32 %v3902, 1e-30
      %v3937 = vmax.f32 %v3904, 1e-30
      %v3938 = vmax.f32 %v3906, 1e-30
      %v3939 = vrcp.pop %v3923
      %v3940 = vrcp.pop %v3924
      %v3941 = vrcp.pop %v3925
      %v3942 = vrcp.pop %v3926
      %v3943 = vrcp.pop %v3927
      %v3944 = vrcp.pop %v3928
      %v3945 = vrcp.pop %v3929
      %v3946 = vrcp.pop %v3930
      %v3947 = vrcp.pop %v3931
      %v3948 = vrcp.pop %v3932
      %v3949 = vrcp.pop %v3933
      %v3950 = vrcp.pop %v3934
      %v3951 = vrcp.pop %v3935
      %v3952 = vrcp.pop %v3936
      %v3953 = vrcp.pop %v3937
      %v3954 = vrcp.pop %v3938
      %v3955 = vsel %vm3907, %v3939, 0.0
      %v3956 = vsel %vm3908, %v3940, 0.0
      %v3957 = vsel %vm3909, %v3941, 0.0
      %v3958 = vsel %vm3910, %v3942, 0.0
      %v3959 = vsel %vm3911, %v3943, 0.0
      %v3960 = vsel %vm3912, %v3944, 0.0
      %v3961 = vsel %vm3913, %v3945, 0.0
      %v3962 = vsel %vm3914, %v3946, 0.0
      %v3963 = vsel %vm3915, %v3947, 0.0
      %v3964 = vsel %vm3916, %v3948, 0.0
      %v3965 = vsel %vm3917, %v3949, 0.0
      %v3966 = vsel %vm3918, %v3950, 0.0
      %v3967 = vsel %vm3919, %v3951, 0.0
      %v3968 = vsel %vm3920, %v3952, 0.0
      %v3969 = vsel %vm3921, %v3953, 0.0
      %v3970 = vsel %vm3922, %v3954, 0.0
      %v3971 = vmul.f32 %v3859, %v3955
      %v3972 = vmul.f32 %v3860, %v3956
      %v3973 = vmul.f32 %v3861, %v3957
      %v3974 = vmul.f32 %v3862, %v3958
      %v3975 = vmul.f32 %v3863, %v3959
      %v3976 = vmul.f32 %v3864, %v3960
      %v3977 = vmul.f32 %v3865, %v3961
      %v3978 = vmul.f32 %v3866, %v3962
      %v3979 = vmul.f32 %v3867, %v3963
      %v3980 = vmul.f32 %v3868, %v3964
      %v3981 = vmul.f32 %v3869, %v3965
      %v3982 = vmul.f32 %v3870, %v3966
      %v3983 = vmul.f32 %v3871, %v3967
      %v3984 = vmul.f32 %v3872, %v3968
      %v3985 = vmul.f32 %v3873, %v3969
      %v3986 = vmul.f32 %v3874, %v3970
      %4003 = vrot.lane.b32.xlu0 %v889, 112
      %v4004 = vpop.permute.xlu0 %4003
      %4005 = vrot.lane.b32.xlu0 %v892, 112
      %v4006 = vpop.permute.xlu0 %4005
      %4007 = vrot.lane.b32.xlu0 %v897, 112
      %v4008 = vpop.permute.xlu0 %4007
      %4009 = vrot.lane.b32.xlu0 %v900, 112
      %v4010 = vpop.permute.xlu0 %4009
      %4011 = vrot.lane.b32.xlu0 %v905, 112
      %v4012 = vpop.permute.xlu0 %4011
      %4013 = vrot.lane.b32.xlu0 %v908, 112
      %v4014 = vpop.permute.xlu0 %4013
      %4015 = vrot.lane.b32.xlu0 %v913, 112
      %v4016 = vpop.permute.xlu0 %4015
      %4017 = vrot.lane.b32.xlu0 %v916, 112
      %v4018 = vpop.permute.xlu0 %4017
      %4019 = vrot.lane.b32.xlu0 %v921, 112
      %v4020 = vpop.permute.xlu0 %4019
      %4021 = vrot.lane.b32.xlu0 %v924, 112
      %v4022 = vpop.permute.xlu0 %4021
      %4023 = vrot.lane.b32.xlu0 %v929, 112
      %v4024 = vpop.permute.xlu0 %4023
      %4025 = vrot.lane.b32.xlu0 %v932, 112
      %v4026 = vpop.permute.xlu0 %4025
      %4027 = vrot.lane.b32.xlu0 %v937, 112
      %v4028 = vpop.permute.xlu0 %4027
      %4029 = vrot.lane.b32.xlu0 %v940, 112
      %v4030 = vpop.permute.xlu0 %4029
      %4031 = vrot.lane.b32.xlu0 %v945, 112
      %v4032 = vpop.permute.xlu0 %4031
      %4033 = vrot.lane.b32.xlu0 %v948, 112
      %v4034 = vpop.permute.xlu0 %4033
      %4051 = vmatprep.subr.mxu0 0.0
      %4052 = vmatpush1.msra.mxu0 %v4004
      %4053 = vmatprep.subr.mxu0 0.0
      %4054 = vmatpush1.msra.mxu0 %v4006
      %4055 = vmatprep.subr.mxu0 0.0
      %4056 = vmatpush1.msra.mxu0 %v4008
      %4057 = vmatprep.subr.mxu0 0.0
      %4058 = vmatpush1.msra.mxu0 %v4010
      %4059 = vmatprep.subr.mxu0 0.0
      %4060 = vmatpush1.msra.mxu0 %v4012
      %4061 = vmatprep.subr.mxu0 0.0
      %4062 = vmatpush1.msra.mxu0 %v4014
      %4063 = vmatprep.subr.mxu0 0.0
      %4064 = vmatpush1.msra.mxu0 %v4016
      %4065 = vmatprep.subr.mxu0 0.0
      %4066 = vmatpush1.msra.mxu0 %v4018
      %4067 = vmatprep.subr.mxu0 0.0
      %4068 = vmatpush1.msra.mxu0 %v4020
      %4069 = vmatprep.subr.mxu0 0.0
      %4070 = vmatpush1.msra.mxu0 %v4022
      %4071 = vmatprep.subr.mxu0 0.0
      %4072 = vmatpush1.msra.mxu0 %v4024
      %4073 = vmatprep.subr.mxu0 0.0
      %4074 = vmatpush1.msra.mxu0 %v4026
      %4075 = vmatprep.subr.mxu0 0.0
      %4076 = vmatpush1.msra.mxu0 %v4028
      %4077 = vmatprep.subr.mxu0 0.0
      %4078 = vmatpush1.msra.mxu0 %v4030
      %4079 = vmatprep.subr.mxu0 0.0
      %4080 = vmatpush1.msra.mxu0 %v4032
      %4081 = vmatprep.subr.mxu0 0.0
      %4082 = vmatpush1.msra.mxu0 %v4034
      %4083 = vmatprep.subr.mxu0 0.0
      %4084 = vmatpush1.msra.mxu0 0.0
      %4085 = vmatprep.subr.mxu0 0.0
      %4086 = vmatpush1.msra.mxu0 0.0
      %4087 = vmatprep.subr.mxu0 0.0
      %4088 = vmatpush1.msra.mxu0 0.0
      %4089 = vmatprep.subr.mxu0 0.0
      %4090 = vmatpush1.msra.mxu0 0.0
      %4091 = vmatprep.subr.mxu0 0.0
      %4092 = vmatpush1.msra.mxu0 0.0
      %4093 = vmatprep.subr.mxu0 0.0
      %4094 = vmatpush1.msra.mxu0 0.0
      %4095 = vmatprep.subr.mxu0 0.0
      %4096 = vmatpush1.msra.mxu0 0.0
      %4097 = vmatprep.subr.mxu0 0.0
      %4098 = vmatpush1.msra.mxu0 0.0
      %4099 = vmatprep.subr.mxu0 0.0
      %4100 = vmatpush1.msra.mxu0 0.0
      %4101 = vmatprep.subr.mxu0 0.0
      %4102 = vmatpush1.msra.mxu0 0.0
      %4103 = vmatprep.subr.mxu0 0.0
      %4104 = vmatpush1.msra.mxu0 0.0
      %4105 = vmatprep.subr.mxu0 0.0
      %4106 = vmatpush1.msra.mxu0 0.0
      %4107 = vmatprep.subr.mxu0 0.0
      %4108 = vmatpush1.msra.mxu0 0.0
      %4109 = vmatprep.subr.mxu0 0.0
      %4110 = vmatpush1.msra.mxu0 0.0
      %4111 = vmatprep.subr.mxu0 0.0
      %4112 = vmatpush1.msra.mxu0 0.0
      %4113 = vmatprep.subr.mxu0 0.0
      %4114 = vmatpush1.msra.mxu0 0.0
      %4115 = vmatprep.mubr.f32.mxu0 0.0
      %4116 = vmatmul.mubr.f32.gmra.mrb[0].mxu0 %v3971
      %v4117 = vpop.f32.mrb[0].mxu0
      %v4118 = vadd.f32 0.0, %v4117
      %v4119 = vpop.f32.mrb[0].mxu0
      %4120 = vmatprep.mubr.f32.mxu0 0.0
      %4121 = vmatmul.mubr.f32.gmra.mrb[0].mxu0 %v3972
      %v4122 = vpop.f32.mrb[0].mxu0
      %v4123 = vadd.f32 0.0, %v4122
      %v4124 = vpop.f32.mrb[0].mxu0
      %4125 = vmatprep.mubr.f32.mxu0 0.0
      %4126 = vmatmul.mubr.f32.gmra.mrb[0].mxu0 %v3973
      %v4127 = vpop.f32.mrb[0].mxu0
      %v4128 = vadd.f32 0.0, %v4127
      %v4129 = vpop.f32.mrb[0].mxu0
      %4130 = vmatprep.mubr.f32.mxu0 0.0
      %4131 = vmatmul.mubr.f32.gmra.mrb[0].mxu0 %v3974
      %v4132 = vpop.f32.mrb[0].mxu0
      %v4133 = vadd.f32 0.0, %v4132
      %v4134 = vpop.f32.mrb[0].mxu0
      %4135 = vmatprep.mubr.f32.mxu0 0.0
      %4136 = vmatmul.mubr.f32.gmra.mrb[0].mxu0 %v3975
      %v4137 = vpop.f32.mrb[0].mxu0
      %v4138 = vadd.f32 0.0, %v4137
      %v4139 = vpop.f32.mrb[0].mxu0
      %4140 = vmatprep.mubr.f32.mxu0 0.0
      %4141 = vmatmul.mubr.f32.gmra.mrb[0].mxu0 %v3976
      %v4142 = vpop.f32.mrb[0].mxu0
      %v4143 = vadd.f32 0.0, %v4142
      %v4144 = vpop.f32.mrb[0].mxu0
      %4145 = vmatprep.mubr.f32.mxu0 0.0
      %4146 = vmatmul.mubr.f32.gmra.mrb[0].mxu0 %v3977
      %v4147 = vpop.f32.mrb[0].mxu0
      %v4148 = vadd.f32 0.0, %v4147
      %v4149 = vpop.f32.mrb[0].mxu0
      %4150 = vmatprep.mubr.f32.mxu0 0.0
      %4151 = vmatmul.mubr.f32.gmra.mrb[0].mxu0 %v3978
      %v4152 = vpop.f32.mrb[0].mxu0
      %v4153 = vadd.f32 0.0, %v4152
      %v4154 = vpop.f32.mrb[0].mxu0
      %4155 = vmatprep.mubr.f32.mxu0 0.0
      %4156 = vmatmul.mubr.f32.gmra.mrb[0].mxu0 %v3979
      %v4157 = vpop.f32.mrb[0].mxu0
      %v4158 = vadd.f32 0.0, %v4157
      %v4159 = vpop.f32.mrb[0].mxu0
      %4160 = vmatprep.mubr.f32.mxu0 0.0
      %4161 = vmatmul.mubr.f32.gmra.mrb[0].mxu0 %v3980
      %v4162 = vpop.f32.mrb[0].mxu0
      %v4163 = vadd.f32 0.0, %v4162
      %v4164 = vpop.f32.mrb[0].mxu0
      %4165 = vmatprep.mubr.f32.mxu0 0.0
      %4166 = vmatmul.mubr.f32.gmra.mrb[0].mxu0 %v3981
      %v4167 = vpop.f32.mrb[0].mxu0
      %v4168 = vadd.f32 0.0, %v4167
      %v4169 = vpop.f32.mrb[0].mxu0
      %4170 = vmatprep.mubr.f32.mxu0 0.0
      %4171 = vmatmul.mubr.f32.gmra.mrb[0].mxu0 %v3982
      %v4172 = vpop.f32.mrb[0].mxu0
      %v4173 = vadd.f32 0.0, %v4172
      %v4174 = vpop.f32.mrb[0].mxu0
      %4175 = vmatprep.mubr.f32.mxu0 0.0
      %4176 = vmatmul.mubr.f32.gmra.mrb[0].mxu0 %v3983
      %v4177 = vpop.f32.mrb[0].mxu0
      %v4178 = vadd.f32 0.0, %v4177
      %v4179 = vpop.f32.mrb[0].mxu0
      %4180 = vmatprep.mubr.f32.mxu0 0.0
      %4181 = vmatmul.mubr.f32.gmra.mrb[0].mxu0 %v3984
      %v4182 = vpop.f32.mrb[0].mxu0
      %v4183 = vadd.f32 0.0, %v4182
      %v4184 = vpop.f32.mrb[0].mxu0
      %4185 = vmatprep.mubr.f32.mxu0 0.0
      %4186 = vmatmul.mubr.f32.gmra.mrb[0].mxu0 %v3985
      %v4187 = vpop.f32.mrb[0].mxu0
      %v4188 = vadd.f32 0.0, %v4187
      %v4189 = vpop.f32.mrb[0].mxu0
      %4190 = vmatprep.mubr.f32.mxu0 0.0
      %4191 = vmatmul.mubr.f32.gmra.mrb[0].mxu0 %v3986
      %v4192 = vpop.f32.mrb[0].mxu0
      %v4193 = vadd.f32 0.0, %v4192
      %v4194 = vpop.f32.mrb[0].mxu0
      %4195 = vdwg.mxu0
      %4196 = vmatprep.subr.mxu0 0.0
      %4197 = vmatpush1.msra.mxu0 %v4004
      %4198 = vmatprep.subr.mxu0 0.0
      %4199 = vmatpush1.msra.mxu0 %v4006
      %4200 = vmatprep.subr.mxu0 0.0
      %4201 = vmatpush1.msra.mxu0 %v4008
      %4202 = vmatprep.subr.mxu0 0.0
      %4203 = vmatpush1.msra.mxu0 %v4010
      %4204 = vmatprep.subr.mxu0 0.0
      %4205 = vmatpush1.msra.mxu0 %v4012
      %4206 = vmatprep.subr.mxu0 0.0
      %4207 = vmatpush1.msra.mxu0 %v4014
      %4208 = vmatprep.subr.mxu0 0.0
      %4209 = vmatpush1.msra.mxu0 %v4016
      %4210 = vmatprep.subr.mxu0 0.0
      %4211 = vmatpush1.msra.mxu0 %v4018
      %4212 = vmatprep.subr.mxu0 0.0
      %4213 = vmatpush1.msra.mxu0 %v4020
      %4214 = vmatprep.subr.mxu0 0.0
      %4215 = vmatpush1.msra.mxu0 %v4022
      %4216 = vmatprep.subr.mxu0 0.0
      %4217 = vmatpush1.msra.mxu0 %v4024
      %4218 = vmatprep.subr.mxu0 0.0
      %4219 = vmatpush1.msra.mxu0 %v4026
      %4220 = vmatprep.subr.mxu0 0.0
      %4221 = vmatpush1.msra.mxu0 %v4028
      %4222 = vmatprep.subr.mxu0 0.0
      %4223 = vmatpush1.msra.mxu0 %v4030
      %4224 = vmatprep.subr.mxu0 0.0
      %4225 = vmatpush1.msra.mxu0 %v4032
      %4226 = vmatprep.subr.mxu0 0.0
      %4227 = vmatpush1.msra.mxu0 %v4034
      %4228 = vmatprep.subr.mxu0 0.0
      %4229 = vmatpush1.msra.mxu0 0.0
      %4230 = vmatprep.subr.mxu0 0.0
      %4231 = vmatpush1.msra.mxu0 0.0
      %4232 = vmatprep.subr.mxu0 0.0
      %4233 = vmatpush1.msra.mxu0 0.0
      %4234 = vmatprep.subr.mxu0 0.0
      %4235 = vmatpush1.msra.mxu0 0.0
      %4236 = vmatprep.subr.mxu0 0.0
      %4237 = vmatpush1.msra.mxu0 0.0
      %4238 = vmatprep.subr.mxu0 0.0
      %4239 = vmatpush1.msra.mxu0 0.0
      %4240 = vmatprep.subr.mxu0 0.0
      %4241 = vmatpush1.msra.mxu0 0.0
      %4242 = vmatprep.subr.mxu0 0.0
      %4243 = vmatpush1.msra.mxu0 0.0
      %4244 = vmatprep.subr.mxu0 0.0
      %4245 = vmatpush1.msra.mxu0 0.0
      %4246 = vmatprep.subr.mxu0 0.0
      %4247 = vmatpush1.msra.mxu0 0.0
      %4248 = vmatprep.subr.mxu0 0.0
      %4249 = vmatpush1.msra.mxu0 0.0
      %4250 = vmatprep.subr.mxu0 0.0
      %4251 = vmatpush1.msra.mxu0 0.0
      %4252 = vmatprep.subr.mxu0 0.0
      %4253 = vmatpush1.msra.mxu0 0.0
      %4254 = vmatprep.subr.mxu0 0.0
      %4255 = vmatpush1.msra.mxu0 0.0
      %4256 = vmatprep.subr.mxu0 0.0
      %4257 = vmatpush1.msra.mxu0 0.0
      %4258 = vmatprep.subr.mxu0 0.0
      %4259 = vmatpush1.msra.mxu0 0.0
      %4260 = vmatprep.mubr.f32.mxu0 0.0
      %4261 = vmatmul.mubr.f32.gmra.mrb[0].mxu0 %v3747
      %v4262 = vpop.f32.mrb[0].mxu0
      %v4263 = vadd.f32 %v4118, %v4262
      %v4264 = vpop.f32.mrb[0].mxu0
      %4265 = vmatprep.mubr.f32.mxu0 0.0
      %4266 = vmatmul.mubr.f32.gmra.mrb[0].mxu0 %v3748
      %v4267 = vpop.f32.mrb[0].mxu0
      %v4268 = vadd.f32 %v4123, %v4267
      %v4269 = vpop.f32.mrb[0].mxu0
      %4270 = vmatprep.mubr.f32.mxu0 0.0
      %4271 = vmatmul.mubr.f32.gmra.mrb[0].mxu0 %v3749
      %v4272 = vpop.f32.mrb[0].mxu0
      %v4273 = vadd.f32 %v4128, %v4272
      %v4274 = vpop.f32.mrb[0].mxu0
      %4275 = vmatprep.mubr.f32.mxu0 0.0
      %4276 = vmatmul.mubr.f32.gmra.mrb[0].mxu0 %v3750
      %v4277 = vpop.f32.mrb[0].mxu0
      %v4278 = vadd.f32 %v4133, %v4277
      %v4279 = vpop.f32.mrb[0].mxu0
      %4280 = vmatprep.mubr.f32.mxu0 0.0
      %4281 = vmatmul.mubr.f32.gmra.mrb[0].mxu0 %v3751
      %v4282 = vpop.f32.mrb[0].mxu0
      %v4283 = vadd.f32 %v4138, %v4282
      %v4284 = vpop.f32.mrb[0].mxu0
      %4285 = vmatprep.mubr.f32.mxu0 0.0
      %4286 = vmatmul.mubr.f32.gmra.mrb[0].mxu0 %v3752
      %v4287 = vpop.f32.mrb[0].mxu0
      %v4288 = vadd.f32 %v4143, %v4287
      %v4289 = vpop.f32.mrb[0].mxu0
      %4290 = vmatprep.mubr.f32.mxu0 0.0
      %4291 = vmatmul.mubr.f32.gmra.mrb[0].mxu0 %v3753
      %v4292 = vpop.f32.mrb[0].mxu0
      %v4293 = vadd.f32 %v4148, %v4292
      %v4294 = vpop.f32.mrb[0].mxu0
      %4295 = vmatprep.mubr.f32.mxu0 0.0
      %4296 = vmatmul.mubr.f32.gmra.mrb[0].mxu0 %v3754
      %v4297 = vpop.f32.mrb[0].mxu0
      %v4298 = vadd.f32 %v4153, %v4297
      %v4299 = vpop.f32.mrb[0].mxu0
      %4300 = vmatprep.mubr.f32.mxu0 0.0
      %4301 = vmatmul.mubr.f32.gmra.mrb[0].mxu0 %v3755
      %v4302 = vpop.f32.mrb[0].mxu0
      %v4303 = vadd.f32 %v4158, %v4302
      %v4304 = vpop.f32.mrb[0].mxu0
      %4305 = vmatprep.mubr.f32.mxu0 0.0
      %4306 = vmatmul.mubr.f32.gmra.mrb[0].mxu0 %v3756
      %v4307 = vpop.f32.mrb[0].mxu0
      %v4308 = vadd.f32 %v4163, %v4307
      %v4309 = vpop.f32.mrb[0].mxu0
      %4310 = vmatprep.mubr.f32.mxu0 0.0
      %4311 = vmatmul.mubr.f32.gmra.mrb[0].mxu0 %v3757
      %v4312 = vpop.f32.mrb[0].mxu0
      %v4313 = vadd.f32 %v4168, %v4312
      %v4314 = vpop.f32.mrb[0].mxu0
      %4315 = vmatprep.mubr.f32.mxu0 0.0
      %4316 = vmatmul.mubr.f32.gmra.mrb[0].mxu0 %v3758
      %v4317 = vpop.f32.mrb[0].mxu0
      %v4318 = vadd.f32 %v4173, %v4317
      %v4319 = vpop.f32.mrb[0].mxu0
      %4320 = vmatprep.mubr.f32.mxu0 0.0
      %4321 = vmatmul.mubr.f32.gmra.mrb[0].mxu0 %v3759
      %v4322 = vpop.f32.mrb[0].mxu0
      %v4323 = vadd.f32 %v4178, %v4322
      %v4324 = vpop.f32.mrb[0].mxu0
      %4325 = vmatprep.mubr.f32.mxu0 0.0
      %4326 = vmatmul.mubr.f32.gmra.mrb[0].mxu0 %v3760
      %v4327 = vpop.f32.mrb[0].mxu0
      %v4328 = vadd.f32 %v4183, %v4327
      %v4329 = vpop.f32.mrb[0].mxu0
      %4330 = vmatprep.mubr.f32.mxu0 0.0
      %4331 = vmatmul.mubr.f32.gmra.mrb[0].mxu0 %v3761
      %v4332 = vpop.f32.mrb[0].mxu0
      %v4333 = vadd.f32 %v4188, %v4332
      %v4334 = vpop.f32.mrb[0].mxu0
      %4335 = vmatprep.mubr.f32.mxu0 0.0
      %4336 = vmatmul.mubr.f32.gmra.mrb[0].mxu0 %v3762
      %v4337 = vpop.f32.mrb[0].mxu0
      %v4338 = vadd.f32 %v4193, %v4337
      %v4339 = vpop.f32.mrb[0].mxu0
      %4340 = vdwg.mxu0
      %v4341 = vsel %vm2029, %v3461, -1e+30
      %v4342 = vsel %vm2030, %v3466, -1e+30
      %v4343 = vsel %vm2031, %v3471, -1e+30
      %v4344 = vsel %vm2032, %v3476, -1e+30
      %v4345 = vsel %vm2033, %v3481, -1e+30
      %v4346 = vsel %vm2034, %v3486, -1e+30
      %v4347 = vsel %vm2035, %v3491, -1e+30
      %v4348 = vsel %vm2036, %v3496, -1e+30
      %v4349 = vsel %vm2037, %v3501, -1e+30
      %v4350 = vsel %vm2038, %v3506, -1e+30
      %v4351 = vsel %vm2039, %v3511, -1e+30
      %v4352 = vsel %vm2040, %v3516, -1e+30
      %v4353 = vsel %vm2041, %v3521, -1e+30
      %v4354 = vsel %vm2042, %v3526, -1e+30
      %v4355 = vsel %vm2043, %v3531, -1e+30
      %v4356 = vsel %vm2044, %v3536, -1e+30
      %4357 = vmax.xlane.f32.xlu0 %v4341
      %v4358 = vpop.xlane.xlu0 %4357
      %4359 = vmax.xlane.f32.xlu0 %v4342
      %v4360 = vpop.xlane.xlu0 %4359
      %4361 = vmax.xlane.f32.xlu0 %v4343
      %v4362 = vpop.xlane.xlu0 %4361
      %4363 = vmax.xlane.f32.xlu0 %v4344
      %v4364 = vpop.xlane.xlu0 %4363
      %4365 = vmax.xlane.f32.xlu0 %v4345
      %v4366 = vpop.xlane.xlu0 %4365
      %4367 = vmax.xlane.f32.xlu0 %v4346
      %v4368 = vpop.xlane.xlu0 %4367
      %4369 = vmax.xlane.f32.xlu0 %v4347
      %v4370 = vpop.xlane.xlu0 %4369
      %4371 = vmax.xlane.f32.xlu0 %v4348
      %v4372 = vpop.xlane.xlu0 %4371
      %4373 = vmax.xlane.f32.xlu0 %v4349
      %v4374 = vpop.xlane.xlu0 %4373
      %4375 = vmax.xlane.f32.xlu0 %v4350
      %v4376 = vpop.xlane.xlu0 %4375
      %4377 = vmax.xlane.f32.xlu0 %v4351
      %v4378 = vpop.xlane.xlu0 %4377
      %4379 = vmax.xlane.f32.xlu0 %v4352
      %v4380 = vpop.xlane.xlu0 %4379
      %4381 = vmax.xlane.f32.xlu0 %v4353
      %v4382 = vpop.xlane.xlu0 %4381
      %4383 = vmax.xlane.f32.xlu0 %v4354
      %v4384 = vpop.xlane.xlu0 %4383
      %4385 = vmax.xlane.f32.xlu0 %v4355
      %v4386 = vpop.xlane.xlu0 %4385
      %4387 = vmax.xlane.f32.xlu0 %v4356
      %v4388 = vpop.xlane.xlu0 %4387
      %v4389 = vsub.f32 %v4341, %v4358
      %v4390 = vsub.f32 %v4342, %v4360
      %v4391 = vsub.f32 %v4343, %v4362
      %v4392 = vsub.f32 %v4344, %v4364
      %v4393 = vsub.f32 %v4345, %v4366
      %v4394 = vsub.f32 %v4346, %v4368
      %v4395 = vsub.f32 %v4347, %v4370
      %v4396 = vsub.f32 %v4348, %v4372
      %v4397 = vsub.f32 %v4349, %v4374
      %v4398 = vsub.f32 %v4350, %v4376
      %v4399 = vsub.f32 %v4351, %v4378
      %v4400 = vsub.f32 %v4352, %v4380
      %v4401 = vsub.f32 %v4353, %v4382
      %v4402 = vsub.f32 %v4354, %v4384
      %v4403 = vsub.f32 %v4355, %v4386
      %v4404 = vsub.f32 %v4356, %v4388
      %v4405 = vmul.f32 %v4389, 1.442695
      %v4406 = vpow.pop %v4405
      %v4407 = vmul.f32 %v4390, 1.442695
      %v4408 = vpow.pop %v4407
      %v4409 = vmul.f32 %v4391, 1.442695
      %v4410 = vpow.pop %v4409
      %v4411 = vmul.f32 %v4392, 1.442695
      %v4412 = vpow.pop %v4411
      %v4413 = vmul.f32 %v4393, 1.442695
      %v4414 = vpow.pop %v4413
      %v4415 = vmul.f32 %v4394, 1.442695
      %v4416 = vpow.pop %v4415
      %v4417 = vmul.f32 %v4395, 1.442695
      %v4418 = vpow.pop %v4417
      %v4419 = vmul.f32 %v4396, 1.442695
      %v4420 = vpow.pop %v4419
      %v4421 = vmul.f32 %v4397, 1.442695
      %v4422 = vpow.pop %v4421
      %v4423 = vmul.f32 %v4398, 1.442695
      %v4424 = vpow.pop %v4423
      %v4425 = vmul.f32 %v4399, 1.442695
      %v4426 = vpow.pop %v4425
      %v4427 = vmul.f32 %v4400, 1.442695
      %v4428 = vpow.pop %v4427
      %v4429 = vmul.f32 %v4401, 1.442695
      %v4430 = vpow.pop %v4429
      %v4431 = vmul.f32 %v4402, 1.442695
      %v4432 = vpow.pop %v4431
      %v4433 = vmul.f32 %v4403, 1.442695
      %v4434 = vpow.pop %v4433
      %v4435 = vmul.f32 %v4404, 1.442695
      %v4436 = vpow.pop %v4435
      %v4437 = vmul.f32 %v4406, %v2013
      %v4438 = vmul.f32 %v4408, %v2014
      %v4439 = vmul.f32 %v4410, %v2015
      %v4440 = vmul.f32 %v4412, %v2016
      %v4441 = vmul.f32 %v4414, %v2017
      %v4442 = vmul.f32 %v4416, %v2018
      %v4443 = vmul.f32 %v4418, %v2019
      %v4444 = vmul.f32 %v4420, %v2020
      %v4445 = vmul.f32 %v4422, %v2021
      %v4446 = vmul.f32 %v4424, %v2022
      %v4447 = vmul.f32 %v4426, %v2023
      %v4448 = vmul.f32 %v4428, %v2024
      %v4449 = vmul.f32 %v4430, %v2025
      %v4450 = vmul.f32 %v4432, %v2026
      %v4451 = vmul.f32 %v4434, %v2027
      %v4452 = vmul.f32 %v4436, %v2028
      %4453 = vadd.xlane.f32.xlu0 %v4437
      %v4454 = vpop.xlane.xlu0 %4453
      %4455 = vadd.xlane.f32.xlu0 %v4438
      %v4456 = vpop.xlane.xlu0 %4455
      %4457 = vadd.xlane.f32.xlu0 %v4439
      %v4458 = vpop.xlane.xlu0 %4457
      %4459 = vadd.xlane.f32.xlu0 %v4440
      %v4460 = vpop.xlane.xlu0 %4459
      %4461 = vadd.xlane.f32.xlu0 %v4441
      %v4462 = vpop.xlane.xlu0 %4461
      %4463 = vadd.xlane.f32.xlu0 %v4442
      %v4464 = vpop.xlane.xlu0 %4463
      %4465 = vadd.xlane.f32.xlu0 %v4443
      %v4466 = vpop.xlane.xlu0 %4465
      %4467 = vadd.xlane.f32.xlu0 %v4444
      %v4468 = vpop.xlane.xlu0 %4467
      %4469 = vadd.xlane.f32.xlu0 %v4445
      %v4470 = vpop.xlane.xlu0 %4469
      %4471 = vadd.xlane.f32.xlu0 %v4446
      %v4472 = vpop.xlane.xlu0 %4471
      %4473 = vadd.xlane.f32.xlu0 %v4447
      %v4474 = vpop.xlane.xlu0 %4473
      %4475 = vadd.xlane.f32.xlu0 %v4448
      %v4476 = vpop.xlane.xlu0 %4475
      %4477 = vadd.xlane.f32.xlu0 %v4449
      %v4478 = vpop.xlane.xlu0 %4477
      %4479 = vadd.xlane.f32.xlu0 %v4450
      %v4480 = vpop.xlane.xlu0 %4479
      %4481 = vadd.xlane.f32.xlu0 %v4451
      %v4482 = vpop.xlane.xlu0 %4481
      %4483 = vadd.xlane.f32.xlu0 %v4452
      %v4484 = vpop.xlane.xlu0 %4483
      %vm4485 = vcmp.gt.f32.partialorder %v4454, 0.0
      %vm4486 = vcmp.gt.f32.partialorder %v4456, 0.0
      %vm4487 = vcmp.gt.f32.partialorder %v4458, 0.0
      %vm4488 = vcmp.gt.f32.partialorder %v4460, 0.0
      %vm4489 = vcmp.gt.f32.partialorder %v4462, 0.0
      %vm4490 = vcmp.gt.f32.partialorder %v4464, 0.0
      %vm4491 = vcmp.gt.f32.partialorder %v4466, 0.0
      %vm4492 = vcmp.gt.f32.partialorder %v4468, 0.0
      %vm4493 = vcmp.gt.f32.partialorder %v4470, 0.0
      %vm4494 = vcmp.gt.f32.partialorder %v4472, 0.0
      %vm4495 = vcmp.gt.f32.partialorder %v4474, 0.0
      %vm4496 = vcmp.gt.f32.partialorder %v4476, 0.0
      %vm4497 = vcmp.gt.f32.partialorder %v4478, 0.0
      %vm4498 = vcmp.gt.f32.partialorder %v4480, 0.0
      %vm4499 = vcmp.gt.f32.partialorder %v4482, 0.0
      %vm4500 = vcmp.gt.f32.partialorder %v4484, 0.0
      %v4501 = vmax.f32 %v4454, 1e-30
      %v4502 = vmax.f32 %v4456, 1e-30
      %v4503 = vmax.f32 %v4458, 1e-30
      %v4504 = vmax.f32 %v4460, 1e-30
      %v4505 = vmax.f32 %v4462, 1e-30
      %v4506 = vmax.f32 %v4464, 1e-30
      %v4507 = vmax.f32 %v4466, 1e-30
      %v4508 = vmax.f32 %v4468, 1e-30
      %v4509 = vmax.f32 %v4470, 1e-30
      %v4510 = vmax.f32 %v4472, 1e-30
      %v4511 = vmax.f32 %v4474, 1e-30
      %v4512 = vmax.f32 %v4476, 1e-30
      %v4513 = vmax.f32 %v4478, 1e-30
      %v4514 = vmax.f32 %v4480, 1e-30
      %v4515 = vmax.f32 %v4482, 1e-30
      %v4516 = vmax.f32 %v4484, 1e-30
      %v4517 = vrcp.pop %v4501
      %v4518 = vrcp.pop %v4502
      %v4519 = vrcp.pop %v4503
      %v4520 = vrcp.pop %v4504
      %v4521 = vrcp.pop %v4505
      %v4522 = vrcp.pop %v4506
      %v4523 = vrcp.pop %v4507
      %v4524 = vrcp.pop %v4508
      %v4525 = vrcp.pop %v4509
      %v4526 = vrcp.pop %v4510
      %v4527 = vrcp.pop %v4511
      %v4528 = vrcp.pop %v4512
      %v4529 = vrcp.pop %v4513
      %v4530 = vrcp.pop %v4514
      %v4531 = vrcp.pop %v4515
      %v4532 = vrcp.pop %v4516
      %v4533 = vsel %vm4485, %v4517, 0.0
      %v4534 = vsel %vm4486, %v4518, 0.0
      %v4535 = vsel %vm4487, %v4519, 0.0
      %v4536 = vsel %vm4488, %v4520, 0.0
      %v4537 = vsel %vm4489, %v4521, 0.0
      %v4538 = vsel %vm4490, %v4522, 0.0
      %v4539 = vsel %vm4491, %v4523, 0.0
      %v4540 = vsel %vm4492, %v4524, 0.0
      %v4541 = vsel %vm4493, %v4525, 0.0
      %v4542 = vsel %vm4494, %v4526, 0.0
      %v4543 = vsel %vm4495, %v4527, 0.0
      %v4544 = vsel %vm4496, %v4528, 0.0
      %v4545 = vsel %vm4497, %v4529, 0.0
      %v4546 = vsel %vm4498, %v4530, 0.0
      %v4547 = vsel %vm4499, %v4531, 0.0
      %v4548 = vsel %vm4500, %v4532, 0.0
      %v4549 = vmul.f32 %v4437, %v4533
      %v4550 = vmul.f32 %v4438, %v4534
      %v4551 = vmul.f32 %v4439, %v4535
      %v4552 = vmul.f32 %v4440, %v4536
      %v4553 = vmul.f32 %v4441, %v4537
      %v4554 = vmul.f32 %v4442, %v4538
      %v4555 = vmul.f32 %v4443, %v4539
      %v4556 = vmul.f32 %v4444, %v4540
      %v4557 = vmul.f32 %v4445, %v4541
      %v4558 = vmul.f32 %v4446, %v4542
      %v4559 = vmul.f32 %v4447, %v4543
      %v4560 = vmul.f32 %v4448, %v4544
      %v4561 = vmul.f32 %v4449, %v4545
      %v4562 = vmul.f32 %v4450, %v4546
      %v4563 = vmul.f32 %v4451, %v4547
      %v4564 = vmul.f32 %v4452, %v4548
      %4565 = vmatprep.subr.mxu0 0.0
      %4566 = vmatpush1.msra.mxu0 %v4004
      %4567 = vmatprep.subr.mxu0 0.0
      %4568 = vmatpush1.msra.mxu0 %v4006
      %4569 = vmatprep.subr.mxu0 0.0
      %4570 = vmatpush1.msra.mxu0 %v4008
      %4571 = vmatprep.subr.mxu0 0.0
      %4572 = vmatpush1.msra.mxu0 %v4010
      %4573 = vmatprep.subr.mxu0 0.0
      %4574 = vmatpush1.msra.mxu0 %v4012
      %4575 = vmatprep.subr.mxu0 0.0
      %4576 = vmatpush1.msra.mxu0 %v4014
      %4577 = vmatprep.subr.mxu0 0.0
      %4578 = vmatpush1.msra.mxu0 %v4016
      %4579 = vmatprep.subr.mxu0 0.0
      %4580 = vmatpush1.msra.mxu0 %v4018
      %4581 = vmatprep.subr.mxu0 0.0
      %4582 = vmatpush1.msra.mxu0 %v4020
      %4583 = vmatprep.subr.mxu0 0.0
      %4584 = vmatpush1.msra.mxu0 %v4022
      %4585 = vmatprep.subr.mxu0 0.0
      %4586 = vmatpush1.msra.mxu0 %v4024
      %4587 = vmatprep.subr.mxu0 0.0
      %4588 = vmatpush1.msra.mxu0 %v4026
      %4589 = vmatprep.subr.mxu0 0.0
      %4590 = vmatpush1.msra.mxu0 %v4028
      %4591 = vmatprep.subr.mxu0 0.0
      %4592 = vmatpush1.msra.mxu0 %v4030
      %4593 = vmatprep.subr.mxu0 0.0
      %4594 = vmatpush1.msra.mxu0 %v4032
      %4595 = vmatprep.subr.mxu0 0.0
      %4596 = vmatpush1.msra.mxu0 %v4034
      %4597 = vmatprep.subr.mxu0 0.0
      %4598 = vmatpush1.msra.mxu0 0.0
      %4599 = vmatprep.subr.mxu0 0.0
      %4600 = vmatpush1.msra.mxu0 0.0
      %4601 = vmatprep.subr.mxu0 0.0
      %4602 = vmatpush1.msra.mxu0 0.0
      %4603 = vmatprep.subr.mxu0 0.0
      %4604 = vmatpush1.msra.mxu0 0.0
      %4605 = vmatprep.subr.mxu0 0.0
      %4606 = vmatpush1.msra.mxu0 0.0
      %4607 = vmatprep.subr.mxu0 0.0
      %4608 = vmatpush1.msra.mxu0 0.0
      %4609 = vmatprep.subr.mxu0 0.0
      %4610 = vmatpush1.msra.mxu0 0.0
      %4611 = vmatprep.subr.mxu0 0.0
      %4612 = vmatpush1.msra.mxu0 0.0
      %4613 = vmatprep.subr.mxu0 0.0
      %4614 = vmatpush1.msra.mxu0 0.0
      %4615 = vmatprep.subr.mxu0 0.0
      %4616 = vmatpush1.msra.mxu0 0.0
      %4617 = vmatprep.subr.mxu0 0.0
      %4618 = vmatpush1.msra.mxu0 0.0
      %4619 = vmatprep.subr.mxu0 0.0
      %4620 = vmatpush1.msra.mxu0 0.0
      %4621 = vmatprep.subr.mxu0 0.0
      %4622 = vmatpush1.msra.mxu0 0.0
      %4623 = vmatprep.subr.mxu0 0.0
      %4624 = vmatpush1.msra.mxu0 0.0
      %4625 = vmatprep.subr.mxu0 0.0
      %4626 = vmatpush1.msra.mxu0 0.0
      %4627 = vmatprep.subr.mxu0 0.0
      %4628 = vmatpush1.msra.mxu0 0.0
      %4629 = vmatprep.mubr.f32.mxu0 0.0
      %4630 = vmatmul.mubr.f32.gmra.mrb[0].mxu0 %v4549
      %v4631 = vpop.f32.mrb[0].mxu0
      %v4632 = vadd.f32 0.0, %v4631
      %v4633 = vpop.f32.mrb[0].mxu0
      %4634 = vmatprep.mubr.f32.mxu0 0.0
      %4635 = vmatmul.mubr.f32.gmra.mrb[0].mxu0 %v4550
      %v4636 = vpop.f32.mrb[0].mxu0
      %v4637 = vadd.f32 0.0, %v4636
      %v4638 = vpop.f32.mrb[0].mxu0
      %4639 = vmatprep.mubr.f32.mxu0 0.0
      %4640 = vmatmul.mubr.f32.gmra.mrb[0].mxu0 %v4551
      %v4641 = vpop.f32.mrb[0].mxu0
      %v4642 = vadd.f32 0.0, %v4641
      %v4643 = vpop.f32.mrb[0].mxu0
      %4644 = vmatprep.mubr.f32.mxu0 0.0
      %4645 = vmatmul.mubr.f32.gmra.mrb[0].mxu0 %v4552
      %v4646 = vpop.f32.mrb[0].mxu0
      %v4647 = vadd.f32 0.0, %v4646
      %v4648 = vpop.f32.mrb[0].mxu0
      %4649 = vmatprep.mubr.f32.mxu0 0.0
      %4650 = vmatmul.mubr.f32.gmra.mrb[0].mxu0 %v4553
      %v4651 = vpop.f32.mrb[0].mxu0
      %v4652 = vadd.f32 0.0, %v4651
      %v4653 = vpop.f32.mrb[0].mxu0
      %4654 = vmatprep.mubr.f32.mxu0 0.0
      %4655 = vmatmul.mubr.f32.gmra.mrb[0].mxu0 %v4554
      %v4656 = vpop.f32.mrb[0].mxu0
      %v4657 = vadd.f32 0.0, %v4656
      %v4658 = vpop.f32.mrb[0].mxu0
      %4659 = vmatprep.mubr.f32.mxu0 0.0
      %4660 = vmatmul.mubr.f32.gmra.mrb[0].mxu0 %v4555
      %v4661 = vpop.f32.mrb[0].mxu0
      %v4662 = vadd.f32 0.0, %v4661
      %v4663 = vpop.f32.mrb[0].mxu0
      %4664 = vmatprep.mubr.f32.mxu0 0.0
      %4665 = vmatmul.mubr.f32.gmra.mrb[0].mxu0 %v4556
      %v4666 = vpop.f32.mrb[0].mxu0
      %v4667 = vadd.f32 0.0, %v4666
      %v4668 = vpop.f32.mrb[0].mxu0
      %4669 = vmatprep.mubr.f32.mxu0 0.0
      %4670 = vmatmul.mubr.f32.gmra.mrb[0].mxu0 %v4557
      %v4671 = vpop.f32.mrb[0].mxu0
      %v4672 = vadd.f32 0.0, %v4671
      %v4673 = vpop.f32.mrb[0].mxu0
      %4674 = vmatprep.mubr.f32.mxu0 0.0
      %4675 = vmatmul.mubr.f32.gmra.mrb[0].mxu0 %v4558
      %v4676 = vpop.f32.mrb[0].mxu0
      %v4677 = vadd.f32 0.0, %v4676
      %v4678 = vpop.f32.mrb[0].mxu0
      %4679 = vmatprep.mubr.f32.mxu0 0.0
      %4680 = vmatmul.mubr.f32.gmra.mrb[0].mxu0 %v4559
      %v4681 = vpop.f32.mrb[0].mxu0
      %v4682 = vadd.f32 0.0, %v4681
      %v4683 = vpop.f32.mrb[0].mxu0
      %4684 = vmatprep.mubr.f32.mxu0 0.0
      %4685 = vmatmul.mubr.f32.gmra.mrb[0].mxu0 %v4560
      %v4686 = vpop.f32.mrb[0].mxu0
      %v4687 = vadd.f32 0.0, %v4686
      %v4688 = vpop.f32.mrb[0].mxu0
      %4689 = vmatprep.mubr.f32.mxu0 0.0
      %4690 = vmatmul.mubr.f32.gmra.mrb[0].mxu0 %v4561
      %v4691 = vpop.f32.mrb[0].mxu0
      %v4692 = vadd.f32 0.0, %v4691
      %v4693 = vpop.f32.mrb[0].mxu0
      %4694 = vmatprep.mubr.f32.mxu0 0.0
      %4695 = vmatmul.mubr.f32.gmra.mrb[0].mxu0 %v4562
      %v4696 = vpop.f32.mrb[0].mxu0
      %v4697 = vadd.f32 0.0, %v4696
      %v4698 = vpop.f32.mrb[0].mxu0
      %4699 = vmatprep.mubr.f32.mxu0 0.0
      %4700 = vmatmul.mubr.f32.gmra.mrb[0].mxu0 %v4563
      %v4701 = vpop.f32.mrb[0].mxu0
      %v4702 = vadd.f32 0.0, %v4701
      %v4703 = vpop.f32.mrb[0].mxu0
      %4704 = vmatprep.mubr.f32.mxu0 0.0
      %4705 = vmatmul.mubr.f32.gmra.mrb[0].mxu0 %v4564
      %v4706 = vpop.f32.mrb[0].mxu0
      %v4707 = vadd.f32 0.0, %v4706
      %v4708 = vpop.f32.mrb[0].mxu0
      %4709 = vdwg.mxu0
      %v4710 = vadd.f32 %v4263, %v4632
      %v4711 = vadd.f32 %v4268, %v4637
      %v4712 = vadd.f32 %v4273, %v4642
      %v4713 = vadd.f32 %v4278, %v4647
      %v4714 = vadd.f32 %v4283, %v4652
      %v4715 = vadd.f32 %v4288, %v4657
      %v4716 = vadd.f32 %v4293, %v4662
      %v4717 = vadd.f32 %v4298, %v4667
      %v4718 = vadd.f32 %v4303, %v4672
      %v4719 = vadd.f32 %v4308, %v4677
      %v4720 = vadd.f32 %v4313, %v4682
      %v4721 = vadd.f32 %v4318, %v4687
      %v4722 = vadd.f32 %v4323, %v4692
      %v4723 = vadd.f32 %v4328, %v4697
      %v4724 = vadd.f32 %v4333, %v4702
      %v4725 = vadd.f32 %v4338, %v4707
      %v4726 = vsel %vm2447, %v3461, -1e+30
      %v4727 = vsel %vm2448, %v3466, -1e+30
      %v4728 = vsel %vm2449, %v3471, -1e+30
      %v4729 = vsel %vm2450, %v3476, -1e+30
      %v4730 = vsel %vm2451, %v3481, -1e+30
      %v4731 = vsel %vm2452, %v3486, -1e+30
      %v4732 = vsel %vm2453, %v3491, -1e+30
      %v4733 = vsel %vm2454, %v3496, -1e+30
      %v4734 = vsel %vm2455, %v3501, -1e+30
      %v4735 = vsel %vm2456, %v3506, -1e+30
      %v4736 = vsel %vm2457, %v3511, -1e+30
      %v4737 = vsel %vm2458, %v3516, -1e+30
      %v4738 = vsel %vm2459, %v3521, -1e+30
      %v4739 = vsel %vm2460, %v3526, -1e+30
      %v4740 = vsel %vm2461, %v3531, -1e+30
      %v4741 = vsel %vm2462, %v3536, -1e+30
      %4742 = vmax.xlane.f32.xlu0 %v4726
      %v4743 = vpop.xlane.xlu0 %4742
      %4744 = vmax.xlane.f32.xlu0 %v4727
      %v4745 = vpop.xlane.xlu0 %4744
      %4746 = vmax.xlane.f32.xlu0 %v4728
      %v4747 = vpop.xlane.xlu0 %4746
      %4748 = vmax.xlane.f32.xlu0 %v4729
      %v4749 = vpop.xlane.xlu0 %4748
      %4750 = vmax.xlane.f32.xlu0 %v4730
      %v4751 = vpop.xlane.xlu0 %4750
      %4752 = vmax.xlane.f32.xlu0 %v4731
      %v4753 = vpop.xlane.xlu0 %4752
      %4754 = vmax.xlane.f32.xlu0 %v4732
      %v4755 = vpop.xlane.xlu0 %4754
      %4756 = vmax.xlane.f32.xlu0 %v4733
      %v4757 = vpop.xlane.xlu0 %4756
      %4758 = vmax.xlane.f32.xlu0 %v4734
      %v4759 = vpop.xlane.xlu0 %4758
      %4760 = vmax.xlane.f32.xlu0 %v4735
      %v4761 = vpop.xlane.xlu0 %4760
      %4762 = vmax.xlane.f32.xlu0 %v4736
      %v4763 = vpop.xlane.xlu0 %4762
      %4764 = vmax.xlane.f32.xlu0 %v4737
      %v4765 = vpop.xlane.xlu0 %4764
      %4766 = vmax.xlane.f32.xlu0 %v4738
      %v4767 = vpop.xlane.xlu0 %4766
      %4768 = vmax.xlane.f32.xlu0 %v4739
      %v4769 = vpop.xlane.xlu0 %4768
      %4770 = vmax.xlane.f32.xlu0 %v4740
      %v4771 = vpop.xlane.xlu0 %4770
      %4772 = vmax.xlane.f32.xlu0 %v4741
      %v4773 = vpop.xlane.xlu0 %4772
      %v4774 = vsub.f32 %v4726, %v4743
      %v4775 = vsub.f32 %v4727, %v4745
      %v4776 = vsub.f32 %v4728, %v4747
      %v4777 = vsub.f32 %v4729, %v4749
      %v4778 = vsub.f32 %v4730, %v4751
      %v4779 = vsub.f32 %v4731, %v4753
      %v4780 = vsub.f32 %v4732, %v4755
      %v4781 = vsub.f32 %v4733, %v4757
      %v4782 = vsub.f32 %v4734, %v4759
      %v4783 = vsub.f32 %v4735, %v4761
      %v4784 = vsub.f32 %v4736, %v4763
      %v4785 = vsub.f32 %v4737, %v4765
      %v4786 = vsub.f32 %v4738, %v4767
      %v4787 = vsub.f32 %v4739, %v4769
      %v4788 = vsub.f32 %v4740, %v4771
      %v4789 = vsub.f32 %v4741, %v4773
      %v4790 = vmul.f32 %v4774, 1.442695
      %v4791 = vpow.pop %v4790
      %v4792 = vmul.f32 %v4775, 1.442695
      %v4793 = vpow.pop %v4792
      %v4794 = vmul.f32 %v4776, 1.442695
      %v4795 = vpow.pop %v4794
      %v4796 = vmul.f32 %v4777, 1.442695
      %v4797 = vpow.pop %v4796
      %v4798 = vmul.f32 %v4778, 1.442695
      %v4799 = vpow.pop %v4798
      %v4800 = vmul.f32 %v4779, 1.442695
      %v4801 = vpow.pop %v4800
      %v4802 = vmul.f32 %v4780, 1.442695
      %v4803 = vpow.pop %v4802
      %v4804 = vmul.f32 %v4781, 1.442695
      %v4805 = vpow.pop %v4804
      %v4806 = vmul.f32 %v4782, 1.442695
      %v4807 = vpow.pop %v4806
      %v4808 = vmul.f32 %v4783, 1.442695
      %v4809 = vpow.pop %v4808
      %v4810 = vmul.f32 %v4784, 1.442695
      %v4811 = vpow.pop %v4810
      %v4812 = vmul.f32 %v4785, 1.442695
      %v4813 = vpow.pop %v4812
      %v4814 = vmul.f32 %v4786, 1.442695
      %v4815 = vpow.pop %v4814
      %v4816 = vmul.f32 %v4787, 1.442695
      %v4817 = vpow.pop %v4816
      %v4818 = vmul.f32 %v4788, 1.442695
      %v4819 = vpow.pop %v4818
      %v4820 = vmul.f32 %v4789, 1.442695
      %v4821 = vpow.pop %v4820
      %v4822 = vmul.f32 %v4791, %v2431
      %v4823 = vmul.f32 %v4793, %v2432
      %v4824 = vmul.f32 %v4795, %v2433
      %v4825 = vmul.f32 %v4797, %v2434
      %v4826 = vmul.f32 %v4799, %v2435
      %v4827 = vmul.f32 %v4801, %v2436
      %v4828 = vmul.f32 %v4803, %v2437
      %v4829 = vmul.f32 %v4805, %v2438
      %v4830 = vmul.f32 %v4807, %v2439
      %v4831 = vmul.f32 %v4809, %v2440
      %v4832 = vmul.f32 %v4811, %v2441
      %v4833 = vmul.f32 %v4813, %v2442
      %v4834 = vmul.f32 %v4815, %v2443
      %v4835 = vmul.f32 %v4817, %v2444
      %v4836 = vmul.f32 %v4819, %v2445
      %v4837 = vmul.f32 %v4821, %v2446
      %4838 = vadd.xlane.f32.xlu0 %v4822
      %v4839 = vpop.xlane.xlu0 %4838
      %4840 = vadd.xlane.f32.xlu0 %v4823
      %v4841 = vpop.xlane.xlu0 %4840
      %4842 = vadd.xlane.f32.xlu0 %v4824
      %v4843 = vpop.xlane.xlu0 %4842
      %4844 = vadd.xlane.f32.xlu0 %v4825
      %v4845 = vpop.xlane.xlu0 %4844
      %4846 = vadd.xlane.f32.xlu0 %v4826
      %v4847 = vpop.xlane.xlu0 %4846
      %4848 = vadd.xlane.f32.xlu0 %v4827
      %v4849 = vpop.xlane.xlu0 %4848
      %4850 = vadd.xlane.f32.xlu0 %v4828
      %v4851 = vpop.xlane.xlu0 %4850
      %4852 = vadd.xlane.f32.xlu0 %v4829
      %v4853 = vpop.xlane.xlu0 %4852
      %4854 = vadd.xlane.f32.xlu0 %v4830
      %v4855 = vpop.xlane.xlu0 %4854
      %4856 = vadd.xlane.f32.xlu0 %v4831
      %v4857 = vpop.xlane.xlu0 %4856
      %4858 = vadd.xlane.f32.xlu0 %v4832
      %v4859 = vpop.xlane.xlu0 %4858
      %4860 = vadd.xlane.f32.xlu0 %v4833
      %v4861 = vpop.xlane.xlu0 %4860
      %4862 = vadd.xlane.f32.xlu0 %v4834
      %v4863 = vpop.xlane.xlu0 %4862
      %4864 = vadd.xlane.f32.xlu0 %v4835
      %v4865 = vpop.xlane.xlu0 %4864
      %4866 = vadd.xlane.f32.xlu0 %v4836
      %v4867 = vpop.xlane.xlu0 %4866
      %4868 = vadd.xlane.f32.xlu0 %v4837
      %v4869 = vpop.xlane.xlu0 %4868
      %vm4870 = vcmp.gt.f32.partialorder %v4839, 0.0
      %vm4871 = vcmp.gt.f32.partialorder %v4841, 0.0
      %vm4872 = vcmp.gt.f32.partialorder %v4843, 0.0
      %vm4873 = vcmp.gt.f32.partialorder %v4845, 0.0
      %vm4874 = vcmp.gt.f32.partialorder %v4847, 0.0
      %vm4875 = vcmp.gt.f32.partialorder %v4849, 0.0
      %vm4876 = vcmp.gt.f32.partialorder %v4851, 0.0
      %vm4877 = vcmp.gt.f32.partialorder %v4853, 0.0
      %vm4878 = vcmp.gt.f32.partialorder %v4855, 0.0
      %vm4879 = vcmp.gt.f32.partialorder %v4857, 0.0
      %vm4880 = vcmp.gt.f32.partialorder %v4859, 0.0
      %vm4881 = vcmp.gt.f32.partialorder %v4861, 0.0
      %vm4882 = vcmp.gt.f32.partialorder %v4863, 0.0
      %vm4883 = vcmp.gt.f32.partialorder %v4865, 0.0
      %vm4884 = vcmp.gt.f32.partialorder %v4867, 0.0
      %vm4885 = vcmp.gt.f32.partialorder %v4869, 0.0
      %v4886 = vmax.f32 %v4839, 1e-30
      %v4887 = vmax.f32 %v4841, 1e-30
      %v4888 = vmax.f32 %v4843, 1e-30
      %v4889 = vmax.f32 %v4845, 1e-30
      %v4890 = vmax.f32 %v4847, 1e-30
      %v4891 = vmax.f32 %v4849, 1e-30
      %v4892 = vmax.f32 %v4851, 1e-30
      %v4893 = vmax.f32 %v4853, 1e-30
      %v4894 = vmax.f32 %v4855, 1e-30
      %v4895 = vmax.f32 %v4857, 1e-30
      %v4896 = vmax.f32 %v4859, 1e-30
      %v4897 = vmax.f32 %v4861, 1e-30
      %v4898 = vmax.f32 %v4863, 1e-30
      %v4899 = vmax.f32 %v4865, 1e-30
      %v4900 = vmax.f32 %v4867, 1e-30
      %v4901 = vmax.f32 %v4869, 1e-30
      %v4902 = vrcp.pop %v4886
      %v4903 = vrcp.pop %v4887
      %v4904 = vrcp.pop %v4888
      %v4905 = vrcp.pop %v4889
      %v4906 = vrcp.pop %v4890
      %v4907 = vrcp.pop %v4891
      %v4908 = vrcp.pop %v4892
      %v4909 = vrcp.pop %v4893
      %v4910 = vrcp.pop %v4894
      %v4911 = vrcp.pop %v4895
      %v4912 = vrcp.pop %v4896
      %v4913 = vrcp.pop %v4897
      %v4914 = vrcp.pop %v4898
      %v4915 = vrcp.pop %v4899
      %v4916 = vrcp.pop %v4900
      %v4917 = vrcp.pop %v4901
      %v4918 = vsel %vm4870, %v4902, 0.0
      %v4919 = vsel %vm4871, %v4903, 0.0
      %v4920 = vsel %vm4872, %v4904, 0.0
      %v4921 = vsel %vm4873, %v4905, 0.0
      %v4922 = vsel %vm4874, %v4906, 0.0
      %v4923 = vsel %vm4875, %v4907, 0.0
      %v4924 = vsel %vm4876, %v4908, 0.0
      %v4925 = vsel %vm4877, %v4909, 0.0
      %v4926 = vsel %vm4878, %v4910, 0.0
      %v4927 = vsel %vm4879, %v4911, 0.0
      %v4928 = vsel %vm4880, %v4912, 0.0
      %v4929 = vsel %vm4881, %v4913, 0.0
      %v4930 = vsel %vm4882, %v4914, 0.0
      %v4931 = vsel %vm4883, %v4915, 0.0
      %v4932 = vsel %vm4884, %v4916, 0.0
      %v4933 = vsel %vm4885, %v4917, 0.0
      %v4934 = vmul.f32 %v4822, %v4918
      %v4935 = vmul.f32 %v4823, %v4919
      %v4936 = vmul.f32 %v4824, %v4920
      %v4937 = vmul.f32 %v4825, %v4921
      %v4938 = vmul.f32 %v4826, %v4922
      %v4939 = vmul.f32 %v4827, %v4923
      %v4940 = vmul.f32 %v4828, %v4924
      %v4941 = vmul.f32 %v4829, %v4925
      %v4942 = vmul.f32 %v4830, %v4926
      %v4943 = vmul.f32 %v4831, %v4927
      %v4944 = vmul.f32 %v4832, %v4928
      %v4945 = vmul.f32 %v4833, %v4929
      %v4946 = vmul.f32 %v4834, %v4930
      %v4947 = vmul.f32 %v4835, %v4931
      %v4948 = vmul.f32 %v4836, %v4932
      %v4949 = vmul.f32 %v4837, %v4933
      %4950 = vmatprep.subr.mxu0 0.0
      %4951 = vmatpush1.msra.mxu0 %v4004
      %4952 = vmatprep.subr.mxu0 0.0
      %4953 = vmatpush1.msra.mxu0 %v4006
      %4954 = vmatprep.subr.mxu0 0.0
      %4955 = vmatpush1.msra.mxu0 %v4008
      %4956 = vmatprep.subr.mxu0 0.0
      %4957 = vmatpush1.msra.mxu0 %v4010
      %4958 = vmatprep.subr.mxu0 0.0
      %4959 = vmatpush1.msra.mxu0 %v4012
      %4960 = vmatprep.subr.mxu0 0.0
      %4961 = vmatpush1.msra.mxu0 %v4014
      %4962 = vmatprep.subr.mxu0 0.0
      %4963 = vmatpush1.msra.mxu0 %v4016
      %4964 = vmatprep.subr.mxu0 0.0
      %4965 = vmatpush1.msra.mxu0 %v4018
      %4966 = vmatprep.subr.mxu0 0.0
      %4967 = vmatpush1.msra.mxu0 %v4020
      %4968 = vmatprep.subr.mxu0 0.0
      %4969 = vmatpush1.msra.mxu0 %v4022
      %4970 = vmatprep.subr.mxu0 0.0
      %4971 = vmatpush1.msra.mxu0 %v4024
      %4972 = vmatprep.subr.mxu0 0.0
      %4973 = vmatpush1.msra.mxu0 %v4026
      %4974 = vmatprep.subr.mxu0 0.0
      %4975 = vmatpush1.msra.mxu0 %v4028
      %4976 = vmatprep.subr.mxu0 0.0
      %4977 = vmatpush1.msra.mxu0 %v4030
      %4978 = vmatprep.subr.mxu0 0.0
      %4979 = vmatpush1.msra.mxu0 %v4032
      %4980 = vmatprep.subr.mxu0 0.0
      %4981 = vmatpush1.msra.mxu0 %v4034
      %4982 = vmatprep.subr.mxu0 0.0
      %4983 = vmatpush1.msra.mxu0 0.0
      %4984 = vmatprep.subr.mxu0 0.0
      %4985 = vmatpush1.msra.mxu0 0.0
      %4986 = vmatprep.subr.mxu0 0.0
      %4987 = vmatpush1.msra.mxu0 0.0
      %4988 = vmatprep.subr.mxu0 0.0
      %4989 = vmatpush1.msra.mxu0 0.0
      %4990 = vmatprep.subr.mxu0 0.0
      %4991 = vmatpush1.msra.mxu0 0.0
      %4992 = vmatprep.subr.mxu0 0.0
      %4993 = vmatpush1.msra.mxu0 0.0
      %4994 = vmatprep.subr.mxu0 0.0
      %4995 = vmatpush1.msra.mxu0 0.0
      %4996 = vmatprep.subr.mxu0 0.0
      %4997 = vmatpush1.msra.mxu0 0.0
      %4998 = vmatprep.subr.mxu0 0.0
      %4999 = vmatpush1.msra.mxu0 0.0
      %5000 = vmatprep.subr.mxu0 0.0
      %5001 = vmatpush1.msra.mxu0 0.0
      %5002 = vmatprep.subr.mxu0 0.0
      %5003 = vmatpush1.msra.mxu0 0.0
      %5004 = vmatprep.subr.mxu0 0.0
      %5005 = vmatpush1.msra.mxu0 0.0
      %5006 = vmatprep.subr.mxu0 0.0
      %5007 = vmatpush1.msra.mxu0 0.0
      %5008 = vmatprep.subr.mxu0 0.0
      %5009 = vmatpush1.msra.mxu0 0.0
      %5010 = vmatprep.subr.mxu0 0.0
      %5011 = vmatpush1.msra.mxu0 0.0
      %5012 = vmatprep.subr.mxu0 0.0
      %5013 = vmatpush1.msra.mxu0 0.0
      %5014 = vmatprep.mubr.f32.mxu0 0.0
      %5015 = vmatmul.mubr.f32.gmra.mrb[0].mxu0 %v4934
      %v5016 = vpop.f32.mrb[0].mxu0
      %v5017 = vadd.f32 0.0, %v5016
      %v5018 = vpop.f32.mrb[0].mxu0
      %5019 = vmatprep.mubr.f32.mxu0 0.0
      %5020 = vmatmul.mubr.f32.gmra.mrb[0].mxu0 %v4935
      %v5021 = vpop.f32.mrb[0].mxu0
      %v5022 = vadd.f32 0.0, %v5021
      %v5023 = vpop.f32.mrb[0].mxu0
      %5024 = vmatprep.mubr.f32.mxu0 0.0
      %5025 = vmatmul.mubr.f32.gmra.mrb[0].mxu0 %v4936
      %v5026 = vpop.f32.mrb[0].mxu0
      %v5027 = vadd.f32 0.0, %v5026
      %v5028 = vpop.f32.mrb[0].mxu0
      %5029 = vmatprep.mubr.f32.mxu0 0.0
      %5030 = vmatmul.mubr.f32.gmra.mrb[0].mxu0 %v4937
      %v5031 = vpop.f32.mrb[0].mxu0
      %v5032 = vadd.f32 0.0, %v5031
      %v5033 = vpop.f32.mrb[0].mxu0
      %5034 = vmatprep.mubr.f32.mxu0 0.0
      %5035 = vmatmul.mubr.f32.gmra.mrb[0].mxu0 %v4938
      %v5036 = vpop.f32.mrb[0].mxu0
      %v5037 = vadd.f32 0.0, %v5036
      %v5038 = vpop.f32.mrb[0].mxu0
      %5039 = vmatprep.mubr.f32.mxu0 0.0
      %5040 = vmatmul.mubr.f32.gmra.mrb[0].mxu0 %v4939
      %v5041 = vpop.f32.mrb[0].mxu0
      %v5042 = vadd.f32 0.0, %v5041
      %v5043 = vpop.f32.mrb[0].mxu0
      %5044 = vmatprep.mubr.f32.mxu0 0.0
      %5045 = vmatmul.mubr.f32.gmra.mrb[0].mxu0 %v4940
      %v5046 = vpop.f32.mrb[0].mxu0
      %v5047 = vadd.f32 0.0, %v5046
      %v5048 = vpop.f32.mrb[0].mxu0
      %5049 = vmatprep.mubr.f32.mxu0 0.0
      %5050 = vmatmul.mubr.f32.gmra.mrb[0].mxu0 %v4941
      %v5051 = vpop.f32.mrb[0].mxu0
      %v5052 = vadd.f32 0.0, %v5051
      %v5053 = vpop.f32.mrb[0].mxu0
      %5054 = vmatprep.mubr.f32.mxu0 0.0
      %5055 = vmatmul.mubr.f32.gmra.mrb[0].mxu0 %v4942
      %v5056 = vpop.f32.mrb[0].mxu0
      %v5057 = vadd.f32 0.0, %v5056
      %v5058 = vpop.f32.mrb[0].mxu0
      %5059 = vmatprep.mubr.f32.mxu0 0.0
      %5060 = vmatmul.mubr.f32.gmra.mrb[0].mxu0 %v4943
      %v5061 = vpop.f32.mrb[0].mxu0
      %v5062 = vadd.f32 0.0, %v5061
      %v5063 = vpop.f32.mrb[0].mxu0
      %5064 = vmatprep.mubr.f32.mxu0 0.0
      %5065 = vmatmul.mubr.f32.gmra.mrb[0].mxu0 %v4944
      %v5066 = vpop.f32.mrb[0].mxu0
      %v5067 = vadd.f32 0.0, %v5066
      %v5068 = vpop.f32.mrb[0].mxu0
      %5069 = vmatprep.mubr.f32.mxu0 0.0
      %5070 = vmatmul.mubr.f32.gmra.mrb[0].mxu0 %v4945
      %v5071 = vpop.f32.mrb[0].mxu0
      %v5072 = vadd.f32 0.0, %v5071
      %v5073 = vpop.f32.mrb[0].mxu0
      %5074 = vmatprep.mubr.f32.mxu0 0.0
      %5075 = vmatmul.mubr.f32.gmra.mrb[0].mxu0 %v4946
      %v5076 = vpop.f32.mrb[0].mxu0
      %v5077 = vadd.f32 0.0, %v5076
      %v5078 = vpop.f32.mrb[0].mxu0
      %5079 = vmatprep.mubr.f32.mxu0 0.0
      %5080 = vmatmul.mubr.f32.gmra.mrb[0].mxu0 %v4947
      %v5081 = vpop.f32.mrb[0].mxu0
      %v5082 = vadd.f32 0.0, %v5081
      %v5083 = vpop.f32.mrb[0].mxu0
      %5084 = vmatprep.mubr.f32.mxu0 0.0
      %5085 = vmatmul.mubr.f32.gmra.mrb[0].mxu0 %v4948
      %v5086 = vpop.f32.mrb[0].mxu0
      %v5087 = vadd.f32 0.0, %v5086
      %v5088 = vpop.f32.mrb[0].mxu0
      %5089 = vmatprep.mubr.f32.mxu0 0.0
      %5090 = vmatmul.mubr.f32.gmra.mrb[0].mxu0 %v4949
      %v5091 = vpop.f32.mrb[0].mxu0
      %v5092 = vadd.f32 0.0, %v5091
      %v5093 = vpop.f32.mrb[0].mxu0
      %5094 = vdwg.mxu0
      %v5095 = vadd.f32 %v4710, %v5017
      %v5096 = vadd.f32 %v4711, %v5022
      %v5097 = vadd.f32 %v4712, %v5027
      %v5098 = vadd.f32 %v4713, %v5032
      %v5099 = vadd.f32 %v4714, %v5037
      %v5100 = vadd.f32 %v4715, %v5042
      %v5101 = vadd.f32 %v4716, %v5047
      %v5102 = vadd.f32 %v4717, %v5052
      %v5103 = vadd.f32 %v4718, %v5057
      %v5104 = vadd.f32 %v4719, %v5062
      %v5105 = vadd.f32 %v4720, %v5067
      %v5106 = vadd.f32 %v4721, %v5072
      %v5107 = vadd.f32 %v4722, %v5077
      %v5108 = vadd.f32 %v4723, %v5082
      %v5109 = vadd.f32 %v4724, %v5087
      %v5110 = vadd.f32 %v4725, %v5092
      %v5111 = vsel %vm2865, %v3461, -1e+30
      %v5112 = vsel %vm2866, %v3466, -1e+30
      %v5113 = vsel %vm2867, %v3471, -1e+30
      %v5114 = vsel %vm2868, %v3476, -1e+30
      %v5115 = vsel %vm2869, %v3481, -1e+30
      %v5116 = vsel %vm2870, %v3486, -1e+30
      %v5117 = vsel %vm2871, %v3491, -1e+30
      %v5118 = vsel %vm2872, %v3496, -1e+30
      %v5119 = vsel %vm2873, %v3501, -1e+30
      %v5120 = vsel %vm2874, %v3506, -1e+30
      %v5121 = vsel %vm2875, %v3511, -1e+30
      %v5122 = vsel %vm2876, %v3516, -1e+30
      %v5123 = vsel %vm2877, %v3521, -1e+30
      %v5124 = vsel %vm2878, %v3526, -1e+30
      %v5125 = vsel %vm2879, %v3531, -1e+30
      %v5126 = vsel %vm2880, %v3536, -1e+30
      %5127 = vmax.xlane.f32.xlu0 %v5111
      %v5128 = vpop.xlane.xlu0 %5127
      %5129 = vmax.xlane.f32.xlu0 %v5112
      %v5130 = vpop.xlane.xlu0 %5129
      %5131 = vmax.xlane.f32.xlu0 %v5113
      %v5132 = vpop.xlane.xlu0 %5131
      %5133 = vmax.xlane.f32.xlu0 %v5114
      %v5134 = vpop.xlane.xlu0 %5133
      %5135 = vmax.xlane.f32.xlu0 %v5115
      %v5136 = vpop.xlane.xlu0 %5135
      %5137 = vmax.xlane.f32.xlu0 %v5116
      %v5138 = vpop.xlane.xlu0 %5137
      %5139 = vmax.xlane.f32.xlu0 %v5117
      %v5140 = vpop.xlane.xlu0 %5139
      %5141 = vmax.xlane.f32.xlu0 %v5118
      %v5142 = vpop.xlane.xlu0 %5141
      %5143 = vmax.xlane.f32.xlu0 %v5119
      %v5144 = vpop.xlane.xlu0 %5143
      %5145 = vmax.xlane.f32.xlu0 %v5120
      %v5146 = vpop.xlane.xlu0 %5145
      %5147 = vmax.xlane.f32.xlu0 %v5121
      %v5148 = vpop.xlane.xlu0 %5147
      %5149 = vmax.xlane.f32.xlu0 %v5122
      %v5150 = vpop.xlane.xlu0 %5149
      %5151 = vmax.xlane.f32.xlu0 %v5123
      %v5152 = vpop.xlane.xlu0 %5151
      %5153 = vmax.xlane.f32.xlu0 %v5124
      %v5154 = vpop.xlane.xlu0 %5153
      %5155 = vmax.xlane.f32.xlu0 %v5125
      %v5156 = vpop.xlane.xlu0 %5155
      %5157 = vmax.xlane.f32.xlu0 %v5126
      %v5158 = vpop.xlane.xlu0 %5157
      %v5159 = vsub.f32 %v5111, %v5128
      %v5160 = vsub.f32 %v5112, %v5130
      %v5161 = vsub.f32 %v5113, %v5132
      %v5162 = vsub.f32 %v5114, %v5134
      %v5163 = vsub.f32 %v5115, %v5136
      %v5164 = vsub.f32 %v5116, %v5138
      %v5165 = vsub.f32 %v5117, %v5140
      %v5166 = vsub.f32 %v5118, %v5142
      %v5167 = vsub.f32 %v5119, %v5144
      %v5168 = vsub.f32 %v5120, %v5146
      %v5169 = vsub.f32 %v5121, %v5148
      %v5170 = vsub.f32 %v5122, %v5150
      %v5171 = vsub.f32 %v5123, %v5152
      %v5172 = vsub.f32 %v5124, %v5154
      %v5173 = vsub.f32 %v5125, %v5156
      %v5174 = vsub.f32 %v5126, %v5158
      %v5175 = vmul.f32 %v5159, 1.442695
      %v5176 = vpow.pop %v5175
      %v5177 = vmul.f32 %v5160, 1.442695
      %v5178 = vpow.pop %v5177
      %v5179 = vmul.f32 %v5161, 1.442695
      %v5180 = vpow.pop %v5179
      %v5181 = vmul.f32 %v5162, 1.442695
      %v5182 = vpow.pop %v5181
      %v5183 = vmul.f32 %v5163, 1.442695
      %v5184 = vpow.pop %v5183
      %v5185 = vmul.f32 %v5164, 1.442695
      %v5186 = vpow.pop %v5185
      %v5187 = vmul.f32 %v5165, 1.442695
      %v5188 = vpow.pop %v5187
      %v5189 = vmul.f32 %v5166, 1.442695
      %v5190 = vpow.pop %v5189
      %v5191 = vmul.f32 %v5167, 1.442695
      %v5192 = vpow.pop %v5191
      %v5193 = vmul.f32 %v5168, 1.442695
      %v5194 = vpow.pop %v5193
      %v5195 = vmul.f32 %v5169, 1.442695
      %v5196 = vpow.pop %v5195
      %v5197 = vmul.f32 %v5170, 1.442695
      %v5198 = vpow.pop %v5197
      %v5199 = vmul.f32 %v5171, 1.442695
      %v5200 = vpow.pop %v5199
      %v5201 = vmul.f32 %v5172, 1.442695
      %v5202 = vpow.pop %v5201
      %v5203 = vmul.f32 %v5173, 1.442695
      %v5204 = vpow.pop %v5203
      %v5205 = vmul.f32 %v5174, 1.442695
      %v5206 = vpow.pop %v5205
      %v5207 = vmul.f32 %v5176, %v2849
      %v5208 = vmul.f32 %v5178, %v2850
      %v5209 = vmul.f32 %v5180, %v2851
      %v5210 = vmul.f32 %v5182, %v2852
      %v5211 = vmul.f32 %v5184, %v2853
      %v5212 = vmul.f32 %v5186, %v2854
      %v5213 = vmul.f32 %v5188, %v2855
      %v5214 = vmul.f32 %v5190, %v2856
      %v5215 = vmul.f32 %v5192, %v2857
      %v5216 = vmul.f32 %v5194, %v2858
      %v5217 = vmul.f32 %v5196, %v2859
      %v5218 = vmul.f32 %v5198, %v2860
      %v5219 = vmul.f32 %v5200, %v2861
      %v5220 = vmul.f32 %v5202, %v2862
      %v5221 = vmul.f32 %v5204, %v2863
      %v5222 = vmul.f32 %v5206, %v2864
      %5223 = vadd.xlane.f32.xlu0 %v5207
      %v5224 = vpop.xlane.xlu0 %5223
      %5225 = vadd.xlane.f32.xlu0 %v5208
      %v5226 = vpop.xlane.xlu0 %5225
      %5227 = vadd.xlane.f32.xlu0 %v5209
      %v5228 = vpop.xlane.xlu0 %5227
      %5229 = vadd.xlane.f32.xlu0 %v5210
      %v5230 = vpop.xlane.xlu0 %5229
      %5231 = vadd.xlane.f32.xlu0 %v5211
      %v5232 = vpop.xlane.xlu0 %5231
      %5233 = vadd.xlane.f32.xlu0 %v5212
      %v5234 = vpop.xlane.xlu0 %5233
      %5235 = vadd.xlane.f32.xlu0 %v5213
      %v5236 = vpop.xlane.xlu0 %5235
      %5237 = vadd.xlane.f32.xlu0 %v5214
      %v5238 = vpop.xlane.xlu0 %5237
      %5239 = vadd.xlane.f32.xlu0 %v5215
      %v5240 = vpop.xlane.xlu0 %5239
      %5241 = vadd.xlane.f32.xlu0 %v5216
      %v5242 = vpop.xlane.xlu0 %5241
      %5243 = vadd.xlane.f32.xlu0 %v5217
      %v5244 = vpop.xlane.xlu0 %5243
      %5245 = vadd.xlane.f32.xlu0 %v5218
      %v5246 = vpop.xlane.xlu0 %5245
      %5247 = vadd.xlane.f32.xlu0 %v5219
      %v5248 = vpop.xlane.xlu0 %5247
      %5249 = vadd.xlane.f32.xlu0 %v5220
      %v5250 = vpop.xlane.xlu0 %5249
      %5251 = vadd.xlane.f32.xlu0 %v5221
      %v5252 = vpop.xlane.xlu0 %5251
      %5253 = vadd.xlane.f32.xlu0 %v5222
      %v5254 = vpop.xlane.xlu0 %5253
      %vm5255 = vcmp.gt.f32.partialorder %v5224, 0.0
      %vm5256 = vcmp.gt.f32.partialorder %v5226, 0.0
      %vm5257 = vcmp.gt.f32.partialorder %v5228, 0.0
      %vm5258 = vcmp.gt.f32.partialorder %v5230, 0.0
      %vm5259 = vcmp.gt.f32.partialorder %v5232, 0.0
      %vm5260 = vcmp.gt.f32.partialorder %v5234, 0.0
      %vm5261 = vcmp.gt.f32.partialorder %v5236, 0.0
      %vm5262 = vcmp.gt.f32.partialorder %v5238, 0.0
      %vm5263 = vcmp.gt.f32.partialorder %v5240, 0.0
      %vm5264 = vcmp.gt.f32.partialorder %v5242, 0.0
      %vm5265 = vcmp.gt.f32.partialorder %v5244, 0.0
      %vm5266 = vcmp.gt.f32.partialorder %v5246, 0.0
      %vm5267 = vcmp.gt.f32.partialorder %v5248, 0.0
      %vm5268 = vcmp.gt.f32.partialorder %v5250, 0.0
      %vm5269 = vcmp.gt.f32.partialorder %v5252, 0.0
      %vm5270 = vcmp.gt.f32.partialorder %v5254, 0.0
      %v5271 = vmax.f32 %v5224, 1e-30
      %v5272 = vmax.f32 %v5226, 1e-30
      %v5273 = vmax.f32 %v5228, 1e-30
      %v5274 = vmax.f32 %v5230, 1e-30
      %v5275 = vmax.f32 %v5232, 1e-30
      %v5276 = vmax.f32 %v5234, 1e-30
      %v5277 = vmax.f32 %v5236, 1e-30
      %v5278 = vmax.f32 %v5238, 1e-30
      %v5279 = vmax.f32 %v5240, 1e-30
      %v5280 = vmax.f32 %v5242, 1e-30
      %v5281 = vmax.f32 %v5244, 1e-30
      %v5282 = vmax.f32 %v5246, 1e-30
      %v5283 = vmax.f32 %v5248, 1e-30
      %v5284 = vmax.f32 %v5250, 1e-30
      %v5285 = vmax.f32 %v5252, 1e-30
      %v5286 = vmax.f32 %v5254, 1e-30
      %v5287 = vrcp.pop %v5271
      %v5288 = vrcp.pop %v5272
      %v5289 = vrcp.pop %v5273
      %v5290 = vrcp.pop %v5274
      %v5291 = vrcp.pop %v5275
      %v5292 = vrcp.pop %v5276
      %v5293 = vrcp.pop %v5277
      %v5294 = vrcp.pop %v5278
      %v5295 = vrcp.pop %v5279
      %v5296 = vrcp.pop %v5280
      %v5297 = vrcp.pop %v5281
      %v5298 = vrcp.pop %v5282
      %v5299 = vrcp.pop %v5283
      %v5300 = vrcp.pop %v5284
      %v5301 = vrcp.pop %v5285
      %v5302 = vrcp.pop %v5286
      %v5303 = vsel %vm5255, %v5287, 0.0
      %v5304 = vsel %vm5256, %v5288, 0.0
      %v5305 = vsel %vm5257, %v5289, 0.0
      %v5306 = vsel %vm5258, %v5290, 0.0
      %v5307 = vsel %vm5259, %v5291, 0.0
      %v5308 = vsel %vm5260, %v5292, 0.0
      %v5309 = vsel %vm5261, %v5293, 0.0
      %v5310 = vsel %vm5262, %v5294, 0.0
      %v5311 = vsel %vm5263, %v5295, 0.0
      %v5312 = vsel %vm5264, %v5296, 0.0
      %v5313 = vsel %vm5265, %v5297, 0.0
      %v5314 = vsel %vm5266, %v5298, 0.0
      %v5315 = vsel %vm5267, %v5299, 0.0
      %v5316 = vsel %vm5268, %v5300, 0.0
      %v5317 = vsel %vm5269, %v5301, 0.0
      %v5318 = vsel %vm5270, %v5302, 0.0
      %v5319 = vmul.f32 %v5207, %v5303
      %v5320 = vmul.f32 %v5208, %v5304
      %v5321 = vmul.f32 %v5209, %v5305
      %v5322 = vmul.f32 %v5210, %v5306
      %v5323 = vmul.f32 %v5211, %v5307
      %v5324 = vmul.f32 %v5212, %v5308
      %v5325 = vmul.f32 %v5213, %v5309
      %v5326 = vmul.f32 %v5214, %v5310
      %v5327 = vmul.f32 %v5215, %v5311
      %v5328 = vmul.f32 %v5216, %v5312
      %v5329 = vmul.f32 %v5217, %v5313
      %v5330 = vmul.f32 %v5218, %v5314
      %v5331 = vmul.f32 %v5219, %v5315
      %v5332 = vmul.f32 %v5220, %v5316
      %v5333 = vmul.f32 %v5221, %v5317
      %v5334 = vmul.f32 %v5222, %v5318
      %5335 = vmatprep.subr.mxu0 0.0
      %5336 = vmatpush1.msra.mxu0 %v4004
      %5337 = vmatprep.subr.mxu0 0.0
      %5338 = vmatpush1.msra.mxu0 %v4006
      %5339 = vmatprep.subr.mxu0 0.0
      %5340 = vmatpush1.msra.mxu0 %v4008
      %5341 = vmatprep.subr.mxu0 0.0
      %5342 = vmatpush1.msra.mxu0 %v4010
      %5343 = vmatprep.subr.mxu0 0.0
      %5344 = vmatpush1.msra.mxu0 %v4012
      %5345 = vmatprep.subr.mxu0 0.0
      %5346 = vmatpush1.msra.mxu0 %v4014
      %5347 = vmatprep.subr.mxu0 0.0
      %5348 = vmatpush1.msra.mxu0 %v4016
      %5349 = vmatprep.subr.mxu0 0.0
      %5350 = vmatpush1.msra.mxu0 %v4018
      %5351 = vmatprep.subr.mxu0 0.0
      %5352 = vmatpush1.msra.mxu0 %v4020
      %5353 = vmatprep.subr.mxu0 0.0
      %5354 = vmatpush1.msra.mxu0 %v4022
      %5355 = vmatprep.subr.mxu0 0.0
      %5356 = vmatpush1.msra.mxu0 %v4024
      %5357 = vmatprep.subr.mxu0 0.0
      %5358 = vmatpush1.msra.mxu0 %v4026
      %5359 = vmatprep.subr.mxu0 0.0
      %5360 = vmatpush1.msra.mxu0 %v4028
      %5361 = vmatprep.subr.mxu0 0.0
      %5362 = vmatpush1.msra.mxu0 %v4030
      %5363 = vmatprep.subr.mxu0 0.0
      %5364 = vmatpush1.msra.mxu0 %v4032
      %5365 = vmatprep.subr.mxu0 0.0
      %5366 = vmatpush1.msra.mxu0 %v4034
      %5367 = vmatprep.subr.mxu0 0.0
      %5368 = vmatpush1.msra.mxu0 0.0
      %5369 = vmatprep.subr.mxu0 0.0
      %5370 = vmatpush1.msra.mxu0 0.0
      %5371 = vmatprep.subr.mxu0 0.0
      %5372 = vmatpush1.msra.mxu0 0.0
      %5373 = vmatprep.subr.mxu0 0.0
      %5374 = vmatpush1.msra.mxu0 0.0
      %5375 = vmatprep.subr.mxu0 0.0
      %5376 = vmatpush1.msra.mxu0 0.0
      %5377 = vmatprep.subr.mxu0 0.0
      %5378 = vmatpush1.msra.mxu0 0.0
      %5379 = vmatprep.subr.mxu0 0.0
      %5380 = vmatpush1.msra.mxu0 0.0
      %5381 = vmatprep.subr.mxu0 0.0
      %5382 = vmatpush1.msra.mxu0 0.0
      %5383 = vmatprep.subr.mxu0 0.0
      %5384 = vmatpush1.msra.mxu0 0.0
      %5385 = vmatprep.subr.mxu0 0.0
      %5386 = vmatpush1.msra.mxu0 0.0
      %5387 = vmatprep.subr.mxu0 0.0
      %5388 = vmatpush1.msra.mxu0 0.0
      %5389 = vmatprep.subr.mxu0 0.0
      %5390 = vmatpush1.msra.mxu0 0.0
      %5391 = vmatprep.subr.mxu0 0.0
      %5392 = vmatpush1.msra.mxu0 0.0
      %5393 = vmatprep.subr.mxu0 0.0
      %5394 = vmatpush1.msra.mxu0 0.0
      %5395 = vmatprep.subr.mxu0 0.0
      %5396 = vmatpush1.msra.mxu0 0.0
      %5397 = vmatprep.subr.mxu0 0.0
      %5398 = vmatpush1.msra.mxu0 0.0
      %5399 = vmatprep.mubr.f32.mxu0 0.0
      %5400 = vmatmul.mubr.f32.gmra.mrb[0].mxu0 %v5319
      %v5401 = vpop.f32.mrb[0].mxu0
      %v5402 = vadd.f32 0.0, %v5401
      %v5403 = vpop.f32.mrb[0].mxu0
      %5404 = vmatprep.mubr.f32.mxu0 0.0
      %5405 = vmatmul.mubr.f32.gmra.mrb[0].mxu0 %v5320
      %v5406 = vpop.f32.mrb[0].mxu0
      %v5407 = vadd.f32 0.0, %v5406
      %v5408 = vpop.f32.mrb[0].mxu0
      %5409 = vmatprep.mubr.f32.mxu0 0.0
      %5410 = vmatmul.mubr.f32.gmra.mrb[0].mxu0 %v5321
      %v5411 = vpop.f32.mrb[0].mxu0
      %v5412 = vadd.f32 0.0, %v5411
      %v5413 = vpop.f32.mrb[0].mxu0
      %5414 = vmatprep.mubr.f32.mxu0 0.0
      %5415 = vmatmul.mubr.f32.gmra.mrb[0].mxu0 %v5322
      %v5416 = vpop.f32.mrb[0].mxu0
      %v5417 = vadd.f32 0.0, %v5416
      %v5418 = vpop.f32.mrb[0].mxu0
      %5419 = vmatprep.mubr.f32.mxu0 0.0
      %5420 = vmatmul.mubr.f32.gmra.mrb[0].mxu0 %v5323
      %v5421 = vpop.f32.mrb[0].mxu0
      %v5422 = vadd.f32 0.0, %v5421
      %v5423 = vpop.f32.mrb[0].mxu0
      %5424 = vmatprep.mubr.f32.mxu0 0.0
      %5425 = vmatmul.mubr.f32.gmra.mrb[0].mxu0 %v5324
      %v5426 = vpop.f32.mrb[0].mxu0
      %v5427 = vadd.f32 0.0, %v5426
      %v5428 = vpop.f32.mrb[0].mxu0
      %5429 = vmatprep.mubr.f32.mxu0 0.0
      %5430 = vmatmul.mubr.f32.gmra.mrb[0].mxu0 %v5325
      %v5431 = vpop.f32.mrb[0].mxu0
      %v5432 = vadd.f32 0.0, %v5431
      %v5433 = vpop.f32.mrb[0].mxu0
      %5434 = vmatprep.mubr.f32.mxu0 0.0
      %5435 = vmatmul.mubr.f32.gmra.mrb[0].mxu0 %v5326
      %v5436 = vpop.f32.mrb[0].mxu0
      %v5437 = vadd.f32 0.0, %v5436
      %v5438 = vpop.f32.mrb[0].mxu0
      %5439 = vmatprep.mubr.f32.mxu0 0.0
      %5440 = vmatmul.mubr.f32.gmra.mrb[0].mxu0 %v5327
      %v5441 = vpop.f32.mrb[0].mxu0
      %v5442 = vadd.f32 0.0, %v5441
      %v5443 = vpop.f32.mrb[0].mxu0
      %5444 = vmatprep.mubr.f32.mxu0 0.0
      %5445 = vmatmul.mubr.f32.gmra.mrb[0].mxu0 %v5328
      %v5446 = vpop.f32.mrb[0].mxu0
      %v5447 = vadd.f32 0.0, %v5446
      %v5448 = vpop.f32.mrb[0].mxu0
      %5449 = vmatprep.mubr.f32.mxu0 0.0
      %5450 = vmatmul.mubr.f32.gmra.mrb[0].mxu0 %v5329
      %v5451 = vpop.f32.mrb[0].mxu0
      %v5452 = vadd.f32 0.0, %v5451
      %v5453 = vpop.f32.mrb[0].mxu0
      %5454 = vmatprep.mubr.f32.mxu0 0.0
      %5455 = vmatmul.mubr.f32.gmra.mrb[0].mxu0 %v5330
      %v5456 = vpop.f32.mrb[0].mxu0
      %v5457 = vadd.f32 0.0, %v5456
      %v5458 = vpop.f32.mrb[0].mxu0
      %5459 = vmatprep.mubr.f32.mxu0 0.0
      %5460 = vmatmul.mubr.f32.gmra.mrb[0].mxu0 %v5331
      %v5461 = vpop.f32.mrb[0].mxu0
      %v5462 = vadd.f32 0.0, %v5461
      %v5463 = vpop.f32.mrb[0].mxu0
      %5464 = vmatprep.mubr.f32.mxu0 0.0
      %5465 = vmatmul.mubr.f32.gmra.mrb[0].mxu0 %v5332
      %v5466 = vpop.f32.mrb[0].mxu0
      %v5467 = vadd.f32 0.0, %v5466
      %v5468 = vpop.f32.mrb[0].mxu0
      %5469 = vmatprep.mubr.f32.mxu0 0.0
      %5470 = vmatmul.mubr.f32.gmra.mrb[0].mxu0 %v5333
      %v5471 = vpop.f32.mrb[0].mxu0
      %v5472 = vadd.f32 0.0, %v5471
      %v5473 = vpop.f32.mrb[0].mxu0
      %5474 = vmatprep.mubr.f32.mxu0 0.0
      %5475 = vmatmul.mubr.f32.gmra.mrb[0].mxu0 %v5334
      %v5476 = vpop.f32.mrb[0].mxu0
      %v5477 = vadd.f32 0.0, %v5476
      %v5478 = vpop.f32.mrb[0].mxu0
      %5479 = vdwg.mxu0
      %v5480 = vadd.f32 %v5095, %v5402
      %v5481 = vadd.f32 %v5096, %v5407
      %v5482 = vadd.f32 %v5097, %v5412
      %v5483 = vadd.f32 %v5098, %v5417
      %v5484 = vadd.f32 %v5099, %v5422
      %v5485 = vadd.f32 %v5100, %v5427
      %v5486 = vadd.f32 %v5101, %v5432
      %v5487 = vadd.f32 %v5102, %v5437
      %v5488 = vadd.f32 %v5103, %v5442
      %v5489 = vadd.f32 %v5104, %v5447
      %v5490 = vadd.f32 %v5105, %v5452
      %v5491 = vadd.f32 %v5106, %v5457
      %v5492 = vadd.f32 %v5107, %v5462
      %v5493 = vadd.f32 %v5108, %v5467
      %v5494 = vadd.f32 %v5109, %v5472
      %v5495 = vadd.f32 %v5110, %v5477
      %5512 = vrot.lane.b32.xlu0 %v5480, 16
      %v5513 = vpop.permute.xlu0 %5512
      %5514 = vrot.lane.b32.xlu0 %v5481, 16
      %v5515 = vpop.permute.xlu0 %5514
      %5516 = vrot.lane.b32.xlu0 %v5482, 16
      %v5517 = vpop.permute.xlu0 %5516
      %5518 = vrot.lane.b32.xlu0 %v5483, 16
      %v5519 = vpop.permute.xlu0 %5518
      %5520 = vrot.lane.b32.xlu0 %v5484, 16
      %v5521 = vpop.permute.xlu0 %5520
      %5522 = vrot.lane.b32.xlu0 %v5485, 16
      %v5523 = vpop.permute.xlu0 %5522
      %5524 = vrot.lane.b32.xlu0 %v5486, 16
      %v5525 = vpop.permute.xlu0 %5524
      %5526 = vrot.lane.b32.xlu0 %v5487, 16
      %v5527 = vpop.permute.xlu0 %5526
      %5528 = vrot.lane.b32.xlu0 %v5488, 16
      %v5529 = vpop.permute.xlu0 %5528
      %5530 = vrot.lane.b32.xlu0 %v5489, 16
      %v5531 = vpop.permute.xlu0 %5530
      %5532 = vrot.lane.b32.xlu0 %v5490, 16
      %v5533 = vpop.permute.xlu0 %5532
      %5534 = vrot.lane.b32.xlu0 %v5491, 16
      %v5535 = vpop.permute.xlu0 %5534
      %5536 = vrot.lane.b32.xlu0 %v5492, 16
      %v5537 = vpop.permute.xlu0 %5536
      %5538 = vrot.lane.b32.xlu0 %v5493, 16
      %v5539 = vpop.permute.xlu0 %5538
      %5540 = vrot.lane.b32.xlu0 %v5494, 16
      %v5541 = vpop.permute.xlu0 %5540
      %5542 = vrot.lane.b32.xlu0 %v5495, 16
      %v5543 = vpop.permute.xlu0 %5542
      %v5560 = vsel %vm967, %v3250, %v5513
      %v5561 = vsel %vm967, %v3251, %v5515
      %v5562 = vsel %vm967, %v3252, %v5517
      %v5563 = vsel %vm967, %v3253, %v5519
      %v5564 = vsel %vm967, %v3254, %v5521
      %v5565 = vsel %vm967, %v3255, %v5523
      %v5566 = vsel %vm967, %v3256, %v5525
      %v5567 = vsel %vm967, %v3257, %v5527
      %v5568 = vsel %vm967, %v3258, %v5529
      %v5569 = vsel %vm967, %v3259, %v5531
      %v5570 = vsel %vm967, %v3260, %v5533
      %v5571 = vsel %vm967, %v3261, %v5535
      %v5572 = vsel %vm967, %v3262, %v5537
      %v5573 = vsel %vm967, %v3263, %v5539
      %v5574 = vsel %vm967, %v3264, %v5541
      %v5575 = vsel %vm967, %v3265, %v5543
      %v5576 = vmul.f32 %v5560, 0.2
      %v5577 = vmul.f32 %v5561, 0.2
      %v5578 = vmul.f32 %v5562, 0.2
      %v5579 = vmul.f32 %v5563, 0.2
      %v5580 = vmul.f32 %v5564, 0.2
      %v5581 = vmul.f32 %v5565, 0.2
      %v5582 = vmul.f32 %v5566, 0.2
      %v5583 = vmul.f32 %v5567, 0.2
      %v5584 = vmul.f32 %v5568, 0.2
      %v5585 = vmul.f32 %v5569, 0.2
      %v5586 = vmul.f32 %v5570, 0.2
      %v5587 = vmul.f32 %v5571, 0.2
      %v5588 = vmul.f32 %v5572, 0.2
      %v5589 = vmul.f32 %v5573, 0.2
      %v5590 = vmul.f32 %v5574, 0.2
      %v5591 = vmul.f32 %v5575, 0.2
      %v5592 = vld [vmem:[%s9] sm:$0xff]
      %v5593 = vld [vmem:[%s9 + $0x8] sm:$0xff]
      %v5594 = vld [vmem:[%s9 + $0x10] sm:$0xff]
      %v5595 = vld [vmem:[%s9 + $0x18] sm:$0xff]
      %v5596 = vld [vmem:[%s10] sm:$0x1]
      %v5598 = vlaneseq
      %v5599 = vshrl.u32 %v5598, 7
      %v5600 = vsub.s32 0, %v5599
      %v5601 = vrot.slane %v5596, %v5600
      %vm5603 = vcmask 261120
      %v5605 = vsel %vm5603, %v5576, 0
      %v5608 = vsel %vm5603, %v5577, 0
      %v5611 = vsel %vm5603, %v5578, 0
      %v5614 = vsel %vm5603, %v5579, 0
      %v5617 = vsel %vm5603, %v5580, 0
      %v5620 = vsel %vm5603, %v5581, 0
      %v5623 = vsel %vm5603, %v5582, 0
      %v5626 = vsel %vm5603, %v5583, 0
      %v5629 = vsel %vm5603, %v5584, 0
      %v5632 = vsel %vm5603, %v5585, 0
      %v5635 = vsel %vm5603, %v5586, 0
      %v5638 = vsel %vm5603, %v5587, 0
      %v5641 = vsel %vm5603, %v5588, 0
      %v5644 = vsel %vm5603, %v5589, 0
      %v5647 = vsel %vm5603, %v5590, 0
      %v5650 = vsel %vm5603, %v5591, 0
      %5652 = vmatprep.subr.mxu0 0.0
      %5653 = vmatpush1.msra.mxu0 %v5592
      %5654 = vmatprep.subr.mxu0 0.0
      %5655 = vmatpush1.msra.mxu0 %v5593
      %5656 = vmatprep.subr.mxu0 0.0
      %5657 = vmatpush1.msra.mxu0 %v5594
      %5658 = vmatprep.subr.mxu0 0.0
      %5659 = vmatpush1.msra.mxu0 %v5595
      %5660 = vmatprep.subr.mxu0 0.0
      %5661 = vmatpush1.msra.mxu0 0.0
      %5662 = vmatprep.subr.mxu0 0.0
      %5663 = vmatpush1.msra.mxu0 0.0
      %5664 = vmatprep.subr.mxu0 0.0
      %5665 = vmatpush1.msra.mxu0 0.0
      %5666 = vmatprep.subr.mxu0 0.0
      %5667 = vmatpush1.msra.mxu0 0.0
      %5668 = vmatprep.subr.mxu0 0.0
      %5669 = vmatpush1.msra.mxu0 0.0
      %5670 = vmatprep.subr.mxu0 0.0
      %5671 = vmatpush1.msra.mxu0 0.0
      %5672 = vmatprep.subr.mxu0 0.0
      %5673 = vmatpush1.msra.mxu0 0.0
      %5674 = vmatprep.subr.mxu0 0.0
      %5675 = vmatpush1.msra.mxu0 0.0
      %5676 = vmatprep.subr.mxu0 0.0
      %5677 = vmatpush1.msra.mxu0 0.0
      %5678 = vmatprep.subr.mxu0 0.0
      %5679 = vmatpush1.msra.mxu0 0.0
      %5680 = vmatprep.subr.mxu0 0.0
      %5681 = vmatpush1.msra.mxu0 0.0
      %5682 = vmatprep.subr.mxu0 0.0
      %5683 = vmatpush1.msra.mxu0 0.0
      %5684 = vmatprep.subr.mxu0 0.0
      %5685 = vmatpush1.msra.mxu0 0.0
      %5686 = vmatprep.subr.mxu0 0.0
      %5687 = vmatpush1.msra.mxu0 0.0
      %5688 = vmatprep.subr.mxu0 0.0
      %5689 = vmatpush1.msra.mxu0 0.0
      %5690 = vmatprep.subr.mxu0 0.0
      %5691 = vmatpush1.msra.mxu0 0.0
      %5692 = vmatprep.subr.mxu0 0.0
      %5693 = vmatpush1.msra.mxu0 0.0
      %5694 = vmatprep.subr.mxu0 0.0
      %5695 = vmatpush1.msra.mxu0 0.0
      %5696 = vmatprep.subr.mxu0 0.0
      %5697 = vmatpush1.msra.mxu0 0.0
      %5698 = vmatprep.subr.mxu0 0.0
      %5699 = vmatpush1.msra.mxu0 0.0
      %5700 = vmatprep.subr.mxu0 0.0
      %5701 = vmatpush1.msra.mxu0 0.0
      %5702 = vmatprep.subr.mxu0 0.0
      %5703 = vmatpush1.msra.mxu0 0.0
      %5704 = vmatprep.subr.mxu0 0.0
      %5705 = vmatpush1.msra.mxu0 0.0
      %5706 = vmatprep.subr.mxu0 0.0
      %5707 = vmatpush1.msra.mxu0 0.0
      %5708 = vmatprep.subr.mxu0 0.0
      %5709 = vmatpush1.msra.mxu0 0.0
      %5710 = vmatprep.subr.mxu0 0.0
      %5711 = vmatpush1.msra.mxu0 0.0
      %5712 = vmatprep.subr.mxu0 0.0
      %5713 = vmatpush1.msra.mxu0 0.0
      %5714 = vmatprep.subr.mxu0 0.0
      %5715 = vmatpush1.msra.mxu0 0.0
      %5716 = vmatprep.mubr.f32.mxu0 0.0
      %5717 = vmatmul.mubr.f32.gmra.mrb[0].mxu0 %v5605
      %v5718 = vpop.f32.mrb[0].mxu0
      %v5719 = vadd.f32 %v5601, %v5718
      %v5720 = vpop.f32.mrb[0].mxu0
      %5721 = vmatprep.mubr.f32.mxu0 0.0
      %5722 = vmatmul.mubr.f32.gmra.mrb[0].mxu0 %v5608
      %v5723 = vpop.f32.mrb[0].mxu0
      %v5724 = vadd.f32 %v5601, %v5723
      %v5725 = vpop.f32.mrb[0].mxu0
      %5726 = vmatprep.mubr.f32.mxu0 0.0
      %5727 = vmatmul.mubr.f32.gmra.mrb[0].mxu0 %v5611
      %v5728 = vpop.f32.mrb[0].mxu0
      %v5729 = vadd.f32 %v5601, %v5728
      %v5730 = vpop.f32.mrb[0].mxu0
      %5731 = vmatprep.mubr.f32.mxu0 0.0
      %5732 = vmatmul.mubr.f32.gmra.mrb[0].mxu0 %v5614
      %v5733 = vpop.f32.mrb[0].mxu0
      %v5734 = vadd.f32 %v5601, %v5733
      %v5735 = vpop.f32.mrb[0].mxu0
      %5736 = vmatprep.mubr.f32.mxu0 0.0
      %5737 = vmatmul.mubr.f32.gmra.mrb[0].mxu0 %v5617
      %v5738 = vpop.f32.mrb[0].mxu0
      %v5739 = vadd.f32 %v5601, %v5738
      %v5740 = vpop.f32.mrb[0].mxu0
      %5741 = vmatprep.mubr.f32.mxu0 0.0
      %5742 = vmatmul.mubr.f32.gmra.mrb[0].mxu0 %v5620
      %v5743 = vpop.f32.mrb[0].mxu0
      %v5744 = vadd.f32 %v5601, %v5743
      %v5745 = vpop.f32.mrb[0].mxu0
      %5746 = vmatprep.mubr.f32.mxu0 0.0
      %5747 = vmatmul.mubr.f32.gmra.mrb[0].mxu0 %v5623
      %v5748 = vpop.f32.mrb[0].mxu0
      %v5749 = vadd.f32 %v5601, %v5748
      %v5750 = vpop.f32.mrb[0].mxu0
      %5751 = vmatprep.mubr.f32.mxu0 0.0
      %5752 = vmatmul.mubr.f32.gmra.mrb[0].mxu0 %v5626
      %v5753 = vpop.f32.mrb[0].mxu0
      %v5754 = vadd.f32 %v5601, %v5753
      %v5755 = vpop.f32.mrb[0].mxu0
      %5756 = vmatprep.mubr.f32.mxu0 0.0
      %5757 = vmatmul.mubr.f32.gmra.mrb[0].mxu0 %v5629
      %v5758 = vpop.f32.mrb[0].mxu0
      %v5759 = vadd.f32 %v5601, %v5758
      %v5760 = vpop.f32.mrb[0].mxu0
      %5761 = vmatprep.mubr.f32.mxu0 0.0
      %5762 = vmatmul.mubr.f32.gmra.mrb[0].mxu0 %v5632
      %v5763 = vpop.f32.mrb[0].mxu0
      %v5764 = vadd.f32 %v5601, %v5763
      %v5765 = vpop.f32.mrb[0].mxu0
      %5766 = vmatprep.mubr.f32.mxu0 0.0
      %5767 = vmatmul.mubr.f32.gmra.mrb[0].mxu0 %v5635
      %v5768 = vpop.f32.mrb[0].mxu0
      %v5769 = vadd.f32 %v5601, %v5768
      %v5770 = vpop.f32.mrb[0].mxu0
      %5771 = vmatprep.mubr.f32.mxu0 0.0
      %5772 = vmatmul.mubr.f32.gmra.mrb[0].mxu0 %v5638
      %v5773 = vpop.f32.mrb[0].mxu0
      %v5774 = vadd.f32 %v5601, %v5773
      %v5775 = vpop.f32.mrb[0].mxu0
      %5776 = vmatprep.mubr.f32.mxu0 0.0
      %5777 = vmatmul.mubr.f32.gmra.mrb[0].mxu0 %v5641
      %v5778 = vpop.f32.mrb[0].mxu0
      %v5779 = vadd.f32 %v5601, %v5778
      %v5780 = vpop.f32.mrb[0].mxu0
      %5781 = vmatprep.mubr.f32.mxu0 0.0
      %5782 = vmatmul.mubr.f32.gmra.mrb[0].mxu0 %v5644
      %v5783 = vpop.f32.mrb[0].mxu0
      %v5784 = vadd.f32 %v5601, %v5783
      %v5785 = vpop.f32.mrb[0].mxu0
      %5786 = vmatprep.mubr.f32.mxu0 0.0
      %5787 = vmatmul.mubr.f32.gmra.mrb[0].mxu0 %v5647
      %v5788 = vpop.f32.mrb[0].mxu0
      %v5789 = vadd.f32 %v5601, %v5788
      %v5790 = vpop.f32.mrb[0].mxu0
      %5791 = vmatprep.mubr.f32.mxu0 0.0
      %5792 = vmatmul.mubr.f32.gmra.mrb[0].mxu0 %v5650
      %v5793 = vpop.f32.mrb[0].mxu0
      %v5794 = vadd.f32 %v5601, %v5793
      %v5795 = vpop.f32.mrb[0].mxu0
      %5796 = vdwg.mxu0
      %v5797 = vld [vmem:[%s455] sm:$0xff]
      %v5798 = vld [vmem:[%s455 + $0x8] sm:$0xff]
      %v5799 = vld [vmem:[%s455 + $0x10] sm:$0xff]
      %v5800 = vld [vmem:[%s455 + $0x18] sm:$0xff]
      %v5801 = vld [vmem:[%s455 + $0x20] sm:$0xff]
      %v5802 = vld [vmem:[%s455 + $0x28] sm:$0xff]
      %v5803 = vld [vmem:[%s455 + $0x30] sm:$0xff]
      %v5804 = vld [vmem:[%s455 + $0x38] sm:$0xff]
      %v5805 = vld [vmem:[%s455 + $0x40] sm:$0xff]
      %v5806 = vld [vmem:[%s455 + $0x48] sm:$0xff]
      %v5807 = vld [vmem:[%s455 + $0x50] sm:$0xff]
      %v5808 = vld [vmem:[%s455 + $0x58] sm:$0xff]
      %v5809 = vld [vmem:[%s455 + $0x60] sm:$0xff]
      %v5810 = vld [vmem:[%s455 + $0x68] sm:$0xff]
      %v5811 = vld [vmem:[%s455 + $0x70] sm:$0xff]
      %v5812 = vld [vmem:[%s455 + $0x78] sm:$0xff]
      %v5813 = vadd.f32 %v5719, %v5797
      %v5814 = vadd.f32 %v5724, %v5798
      %v5815 = vadd.f32 %v5729, %v5799
      %v5816 = vadd.f32 %v5734, %v5800
      %v5817 = vadd.f32 %v5739, %v5801
      %v5818 = vadd.f32 %v5744, %v5802
      %v5819 = vadd.f32 %v5749, %v5803
      %v5820 = vadd.f32 %v5754, %v5804
      %v5821 = vadd.f32 %v5759, %v5805
      %v5822 = vadd.f32 %v5764, %v5806
      %v5823 = vadd.f32 %v5769, %v5807
      %v5824 = vadd.f32 %v5774, %v5808
      %v5825 = vadd.f32 %v5779, %v5809
      %v5826 = vadd.f32 %v5784, %v5810
      %v5827 = vadd.f32 %v5789, %v5811
      %v5828 = vadd.f32 %v5794, %v5812
      %v5829 = vsel %vm5603, %v5813, 0.0
      %5830 = vadd.xlane.f32.xlu0 %v5829
      %v5831 = vpop.xlane.xlu0 %5830
      %v5832 = vsel %vm5603, %v5814, 0.0
      %5833 = vadd.xlane.f32.xlu0 %v5832
      %v5834 = vpop.xlane.xlu0 %5833
      %v5835 = vsel %vm5603, %v5815, 0.0
      %5836 = vadd.xlane.f32.xlu0 %v5835
      %v5837 = vpop.xlane.xlu0 %5836
      %v5838 = vsel %vm5603, %v5816, 0.0
      %5839 = vadd.xlane.f32.xlu0 %v5838
      %v5840 = vpop.xlane.xlu0 %5839
      %v5841 = vsel %vm5603, %v5817, 0.0
      %5842 = vadd.xlane.f32.xlu0 %v5841
      %v5843 = vpop.xlane.xlu0 %5842
      %v5844 = vsel %vm5603, %v5818, 0.0
      %5845 = vadd.xlane.f32.xlu0 %v5844
      %v5846 = vpop.xlane.xlu0 %5845
      %v5847 = vsel %vm5603, %v5819, 0.0
      %5848 = vadd.xlane.f32.xlu0 %v5847
      %v5849 = vpop.xlane.xlu0 %5848
      %v5850 = vsel %vm5603, %v5820, 0.0
      %5851 = vadd.xlane.f32.xlu0 %v5850
      %v5852 = vpop.xlane.xlu0 %5851
      %v5853 = vsel %vm5603, %v5821, 0.0
      %5854 = vadd.xlane.f32.xlu0 %v5853
      %v5855 = vpop.xlane.xlu0 %5854
      %v5856 = vsel %vm5603, %v5822, 0.0
      %5857 = vadd.xlane.f32.xlu0 %v5856
      %v5858 = vpop.xlane.xlu0 %5857
      %v5859 = vsel %vm5603, %v5823, 0.0
      %5860 = vadd.xlane.f32.xlu0 %v5859
      %v5861 = vpop.xlane.xlu0 %5860
      %v5862 = vsel %vm5603, %v5824, 0.0
      %5863 = vadd.xlane.f32.xlu0 %v5862
      %v5864 = vpop.xlane.xlu0 %5863
      %v5865 = vsel %vm5603, %v5825, 0.0
      %5866 = vadd.xlane.f32.xlu0 %v5865
      %v5867 = vpop.xlane.xlu0 %5866
      %v5868 = vsel %vm5603, %v5826, 0.0
      %5869 = vadd.xlane.f32.xlu0 %v5868
      %v5870 = vpop.xlane.xlu0 %5869
      %v5871 = vsel %vm5603, %v5827, 0.0
      %5872 = vadd.xlane.f32.xlu0 %v5871
      %v5873 = vpop.xlane.xlu0 %5872
      %v5874 = vsel %vm5603, %v5828, 0.0
      %5875 = vadd.xlane.f32.xlu0 %v5874
      %v5876 = vpop.xlane.xlu0 %5875
      %v5877 = vrcp.pop 32.0
      %v5878 = vmul.f32 %v5831, %v5877
      %v5879 = vmul.f32 %v5834, %v5877
      %v5880 = vmul.f32 %v5837, %v5877
      %v5881 = vmul.f32 %v5840, %v5877
      %v5882 = vmul.f32 %v5843, %v5877
      %v5883 = vmul.f32 %v5846, %v5877
      %v5884 = vmul.f32 %v5849, %v5877
      %v5885 = vmul.f32 %v5852, %v5877
      %v5886 = vmul.f32 %v5855, %v5877
      %v5887 = vmul.f32 %v5858, %v5877
      %v5888 = vmul.f32 %v5861, %v5877
      %v5889 = vmul.f32 %v5864, %v5877
      %v5890 = vmul.f32 %v5867, %v5877
      %v5891 = vmul.f32 %v5870, %v5877
      %v5892 = vmul.f32 %v5873, %v5877
      %v5893 = vmul.f32 %v5876, %v5877
      %v5894 = vsub.f32 %v5813, %v5878
      %v5895 = vsub.f32 %v5814, %v5879
      %v5896 = vsub.f32 %v5815, %v5880
      %v5897 = vsub.f32 %v5816, %v5881
      %v5898 = vsub.f32 %v5817, %v5882
      %v5899 = vsub.f32 %v5818, %v5883
      %v5900 = vsub.f32 %v5819, %v5884
      %v5901 = vsub.f32 %v5820, %v5885
      %v5902 = vsub.f32 %v5821, %v5886
      %v5903 = vsub.f32 %v5822, %v5887
      %v5904 = vsub.f32 %v5823, %v5888
      %v5905 = vsub.f32 %v5824, %v5889
      %v5906 = vsub.f32 %v5825, %v5890
      %v5907 = vsub.f32 %v5826, %v5891
      %v5908 = vsub.f32 %v5827, %v5892
      %v5909 = vsub.f32 %v5828, %v5893
      %v5910 = vmul.f32 %v5894, %v5894
      %v5911 = vmul.f32 %v5895, %v5895
      %v5912 = vmul.f32 %v5896, %v5896
      %v5913 = vmul.f32 %v5897, %v5897
      %v5914 = vmul.f32 %v5898, %v5898
      %v5915 = vmul.f32 %v5899, %v5899
      %v5916 = vmul.f32 %v5900, %v5900
      %v5917 = vmul.f32 %v5901, %v5901
      %v5918 = vmul.f32 %v5902, %v5902
      %v5919 = vmul.f32 %v5903, %v5903
      %v5920 = vmul.f32 %v5904, %v5904
      %v5921 = vmul.f32 %v5905, %v5905
      %v5922 = vmul.f32 %v5906, %v5906
      %v5923 = vmul.f32 %v5907, %v5907
      %v5924 = vmul.f32 %v5908, %v5908
      %v5925 = vmul.f32 %v5909, %v5909
      %v5926 = vsel %vm5603, %v5910, 0.0
      %5927 = vadd.xlane.f32.xlu0 %v5926
      %v5928 = vpop.xlane.xlu0 %5927
      %v5929 = vsel %vm5603, %v5911, 0.0
      %5930 = vadd.xlane.f32.xlu0 %v5929
      %v5931 = vpop.xlane.xlu0 %5930
      %v5932 = vsel %vm5603, %v5912, 0.0
      %5933 = vadd.xlane.f32.xlu0 %v5932
      %v5934 = vpop.xlane.xlu0 %5933
      %v5935 = vsel %vm5603, %v5913, 0.0
      %5936 = vadd.xlane.f32.xlu0 %v5935
      %v5937 = vpop.xlane.xlu0 %5936
      %v5938 = vsel %vm5603, %v5914, 0.0
      %5939 = vadd.xlane.f32.xlu0 %v5938
      %v5940 = vpop.xlane.xlu0 %5939
      %v5941 = vsel %vm5603, %v5915, 0.0
      %5942 = vadd.xlane.f32.xlu0 %v5941
      %v5943 = vpop.xlane.xlu0 %5942
      %v5944 = vsel %vm5603, %v5916, 0.0
      %5945 = vadd.xlane.f32.xlu0 %v5944
      %v5946 = vpop.xlane.xlu0 %5945
      %v5947 = vsel %vm5603, %v5917, 0.0
      %5948 = vadd.xlane.f32.xlu0 %v5947
      %v5949 = vpop.xlane.xlu0 %5948
      %v5950 = vsel %vm5603, %v5918, 0.0
      %5951 = vadd.xlane.f32.xlu0 %v5950
      %v5952 = vpop.xlane.xlu0 %5951
      %v5953 = vsel %vm5603, %v5919, 0.0
      %5954 = vadd.xlane.f32.xlu0 %v5953
      %v5955 = vpop.xlane.xlu0 %5954
      %v5956 = vsel %vm5603, %v5920, 0.0
      %5957 = vadd.xlane.f32.xlu0 %v5956
      %v5958 = vpop.xlane.xlu0 %5957
      %v5959 = vsel %vm5603, %v5921, 0.0
      %5960 = vadd.xlane.f32.xlu0 %v5959
      %v5961 = vpop.xlane.xlu0 %5960
      %v5962 = vsel %vm5603, %v5922, 0.0
      %5963 = vadd.xlane.f32.xlu0 %v5962
      %v5964 = vpop.xlane.xlu0 %5963
      %v5965 = vsel %vm5603, %v5923, 0.0
      %5966 = vadd.xlane.f32.xlu0 %v5965
      %v5967 = vpop.xlane.xlu0 %5966
      %v5968 = vsel %vm5603, %v5924, 0.0
      %5969 = vadd.xlane.f32.xlu0 %v5968
      %v5970 = vpop.xlane.xlu0 %5969
      %v5971 = vsel %vm5603, %v5925, 0.0
      %5972 = vadd.xlane.f32.xlu0 %v5971
      %v5973 = vpop.xlane.xlu0 %5972
      %v5974 = vmul.f32 %v5928, %v5877
      %v5975 = vmul.f32 %v5931, %v5877
      %v5976 = vmul.f32 %v5934, %v5877
      %v5977 = vmul.f32 %v5937, %v5877
      %v5978 = vmul.f32 %v5940, %v5877
      %v5979 = vmul.f32 %v5943, %v5877
      %v5980 = vmul.f32 %v5946, %v5877
      %v5981 = vmul.f32 %v5949, %v5877
      %v5982 = vmul.f32 %v5952, %v5877
      %v5983 = vmul.f32 %v5955, %v5877
      %v5984 = vmul.f32 %v5958, %v5877
      %v5985 = vmul.f32 %v5961, %v5877
      %v5986 = vmul.f32 %v5964, %v5877
      %v5987 = vmul.f32 %v5967, %v5877
      %v5988 = vmul.f32 %v5970, %v5877
      %v5989 = vmul.f32 %v5973, %v5877
      %v5990 = vadd.f32 %v5974, 1e-12
      %v5991 = vadd.f32 %v5975, 1e-12
      %v5992 = vadd.f32 %v5976, 1e-12
      %v5993 = vadd.f32 %v5977, 1e-12
      %v5994 = vadd.f32 %v5978, 1e-12
      %v5995 = vadd.f32 %v5979, 1e-12
      %v5996 = vadd.f32 %v5980, 1e-12
      %v5997 = vadd.f32 %v5981, 1e-12
      %v5998 = vadd.f32 %v5982, 1e-12
      %v5999 = vadd.f32 %v5983, 1e-12
      %v6000 = vadd.f32 %v5984, 1e-12
      %v6001 = vadd.f32 %v5985, 1e-12
      %v6002 = vadd.f32 %v5986, 1e-12
      %v6003 = vadd.f32 %v5987, 1e-12
      %v6004 = vadd.f32 %v5988, 1e-12
      %v6005 = vadd.f32 %v5989, 1e-12
      %v6006 = vrsqrt.pop %v5990
      %v6007 = vrsqrt.pop %v5991
      %v6008 = vrsqrt.pop %v5992
      %v6009 = vrsqrt.pop %v5993
      %v6010 = vrsqrt.pop %v5994
      %v6011 = vrsqrt.pop %v5995
      %v6012 = vrsqrt.pop %v5996
      %v6013 = vrsqrt.pop %v5997
      %v6014 = vrsqrt.pop %v5998
      %v6015 = vrsqrt.pop %v5999
      %v6016 = vrsqrt.pop %v6000
      %v6017 = vrsqrt.pop %v6001
      %v6018 = vrsqrt.pop %v6002
      %v6019 = vrsqrt.pop %v6003
      %v6020 = vrsqrt.pop %v6004
      %v6021 = vrsqrt.pop %v6005
      %v6022 = vmul.f32 %v5894, %v6006
      %v6023 = vmul.f32 %v5895, %v6007
      %v6024 = vmul.f32 %v5896, %v6008
      %v6025 = vmul.f32 %v5897, %v6009
      %v6026 = vmul.f32 %v5898, %v6010
      %v6027 = vmul.f32 %v5899, %v6011
      %v6028 = vmul.f32 %v5900, %v6012
      %v6029 = vmul.f32 %v5901, %v6013
      %v6030 = vmul.f32 %v5902, %v6014
      %v6031 = vmul.f32 %v5903, %v6015
      %v6032 = vmul.f32 %v5904, %v6016
      %v6033 = vmul.f32 %v5905, %v6017
      %v6034 = vmul.f32 %v5906, %v6018
      %v6035 = vmul.f32 %v5907, %v6019
      %v6036 = vmul.f32 %v5908, %v6020
      %v6037 = vmul.f32 %v5909, %v6021
      %v6038 = vld [vmem:[%s11] sm:$0x1]
      %v6040 = vlaneseq
      %v6041 = vshrl.u32 %v6040, 7
      %v6042 = vsub.s32 0, %v6041
      %v6043 = vrot.slane %v6038, %v6042
      %v6045 = vmul.f32 %v6022, %v6043
      %v6046 = vmul.f32 %v6023, %v6043
      %v6047 = vmul.f32 %v6024, %v6043
      %v6048 = vmul.f32 %v6025, %v6043
      %v6049 = vmul.f32 %v6026, %v6043
      %v6050 = vmul.f32 %v6027, %v6043
      %v6051 = vmul.f32 %v6028, %v6043
      %v6052 = vmul.f32 %v6029, %v6043
      %v6053 = vmul.f32 %v6030, %v6043
      %v6054 = vmul.f32 %v6031, %v6043
      %v6055 = vmul.f32 %v6032, %v6043
      %v6056 = vmul.f32 %v6033, %v6043
      %v6057 = vmul.f32 %v6034, %v6043
      %v6058 = vmul.f32 %v6035, %v6043
      %v6059 = vmul.f32 %v6036, %v6043
      %v6060 = vmul.f32 %v6037, %v6043
      %v6061 = vld [vmem:[%s12] sm:$0x1]
      %v6063 = vlaneseq
      %v6064 = vshrl.u32 %v6063, 7
      %v6065 = vsub.s32 0, %v6064
      %v6066 = vrot.slane %v6061, %v6065
      %v6068 = vadd.f32 %v6045, %v6066
      %v6069 = vadd.f32 %v6046, %v6066
      %v6070 = vadd.f32 %v6047, %v6066
      %v6071 = vadd.f32 %v6048, %v6066
      %v6072 = vadd.f32 %v6049, %v6066
      %v6073 = vadd.f32 %v6050, %v6066
      %v6074 = vadd.f32 %v6051, %v6066
      %v6075 = vadd.f32 %v6052, %v6066
      %v6076 = vadd.f32 %v6053, %v6066
      %v6077 = vadd.f32 %v6054, %v6066
      %v6078 = vadd.f32 %v6055, %v6066
      %v6079 = vadd.f32 %v6056, %v6066
      %v6080 = vadd.f32 %v6057, %v6066
      %v6081 = vadd.f32 %v6058, %v6066
      %v6082 = vadd.f32 %v6059, %v6066
      %v6083 = vadd.f32 %v6060, %v6066
      %6084 = vst.msk [vmem:[%s460] sm:$0xff] %vm5603, %v6068
      %6085 = vst.msk [vmem:[%s460 + $0x8] sm:$0xff] %vm5603, %v6069
      %6086 = vst.msk [vmem:[%s460 + $0x10] sm:$0xff] %vm5603, %v6070
      %6087 = vst.msk [vmem:[%s460 + $0x18] sm:$0xff] %vm5603, %v6071
      %6088 = vst.msk [vmem:[%s460 + $0x20] sm:$0xff] %vm5603, %v6072
      %6089 = vst.msk [vmem:[%s460 + $0x28] sm:$0xff] %vm5603, %v6073
      %6090 = vst.msk [vmem:[%s460 + $0x30] sm:$0xff] %vm5603, %v6074
      %6091 = vst.msk [vmem:[%s460 + $0x38] sm:$0xff] %vm5603, %v6075
      %6092 = vst.msk [vmem:[%s460 + $0x40] sm:$0xff] %vm5603, %v6076
      %6093 = vst.msk [vmem:[%s460 + $0x48] sm:$0xff] %vm5603, %v6077
      %6094 = vst.msk [vmem:[%s460 + $0x50] sm:$0xff] %vm5603, %v6078
      %6095 = vst.msk [vmem:[%s460 + $0x58] sm:$0xff] %vm5603, %v6079
      %6096 = vst.msk [vmem:[%s460 + $0x60] sm:$0xff] %vm5603, %v6080
      %6097 = vst.msk [vmem:[%s460 + $0x68] sm:$0xff] %vm5603, %v6081
      %6098 = vst.msk [vmem:[%s460 + $0x70] sm:$0xff] %vm5603, %v6082
      %6099 = vst.msk [vmem:[%s460 + $0x78] sm:$0xff] %vm5603, %v6083
      %p6100 = scmp.lt.s32.totalorder %s24, 1
      %s6101 = scalar_select %p6100, %s24, 1
      %s6102 = smul.addr %s6101, 16
      %s6103 = smul.addr %s6102, 8
      %s6104 = scalar_lea.vmem %s13, %s6103
      // Predicated region
      $region73: #{tpu_custom_call.1} parent=71 // pred_check
        %p6105 = pneg %p325
      $region74: #{tpu_custom_call.1} parent=71 // pred_check_branch
        %6107 = sbr.rel (%p6105) target = $region76
      $region75: #{tpu_custom_call.1} parent=71 // pred_region
        _
      $region76: #{tpu_custom_call.1} parent=71 // pred_fallthru
        _
    $region72: #{tpu_custom_call.1} parent=5 // pred_fallthru
      _
    %p6108 = scmp.le.s32.totalorder 2, %s19
    // Predicated region
    $region77: #{tpu_custom_call.1} parent=5 // pred_check
      %p6109 = pneg %p6108
    $region78: #{tpu_custom_call.1} parent=5 // pred_check_branch
      %6111 = sbr.rel (%p6109) target = $region80
    $region79: #{tpu_custom_call.1} parent=5 // pred_region
      %s6112 = ssub.s32 %s19, 2
      // Predicated region
      $region81: #{tpu_custom_call.1} parent=79 // pred_check
        %p6113 = pneg %p331
      $region82: #{tpu_custom_call.1} parent=79 // pred_check_branch
        %6115 = sbr.rel (%p6113) target = $region84
      $region83: #{tpu_custom_call.1} parent=79 // pred_region
        %p6116 = scmp.lt.s32.totalorder %s25, 1
        %s6117 = scalar_select %p6116, %s25, 1
        %s6118 = smul.addr %s6117, 16
        %s6119 = smul.addr %s6118, 8
        %s6120 = scalar_lea.vmem %s13, %s6119
      $region84: #{tpu_custom_call.1} parent=79 // pred_fallthru
        _
    $region80: #{tpu_custom_call.1} parent=5 // pred_fallthru
      _
  $region6: #{tpu_custom_call.1} parent=0 // loop_footer
    %s23 = sadd.s32 1, %s19
  $region7: #{tpu_custom_call.1} parent=0 // loop_footer_branch
    %18 = sbr.rel target = $region3
  $region8: #{tpu_custom_call.1} parent=0 // loop_exit
    _

</llo_original>
